<compile_context>
chip_gen: v6e
topology: v6e:2x2x1
jax: 0.10.0
libtpu: 0.0.40
codegen_flags: <defaults>
</compile_context>

<pallas_src>
import numpy as np
import jax
import jax.numpy as jnp
from jax import lax
from jax.experimental import pallas as pl
from jax.experimental.pallas import tpu as pltpu

LANES = 128            # padded channel width (vreg lane width)
C1, C2 = 32, 64        # real conv channel counts
K1 = 16                # conv1 im2col taps, 9 real padded to 16
ROWS1 = 896            # conv1 im2col rows / image : 4 pool quadrants * 224
P1ROWS = 224           # pooled conv1 rows / image : 2 col-parity halves * 14 * 8
ROWS2 = 112            # conv2 output rows / parity / image : 14 * 8
K2 = 9 * LANES         # 1152 : folded long-K conv2 matmul
P2ROWS = 56            # pooled conv2 rows / image : 7 * 8
FCK = P2ROWS * LANES   # 7168 : fc1 input width (64 real channels, 49 real positions)


# ---------------- constant conv1 im2col index tables (built once with numpy) ----

def _conv1_im2col_tables():
    idx = np.zeros((ROWS1, K1), np.int32)
    msk = np.zeros((ROWS1, K1), np.float32)
    for q1 in range(4):                      # conv1 2x2 pool quadrant (a1, b1)
        a1, b1 = q1 // 2, q1 % 2
        for jp in range(2):                  # pooled-column parity
            for i in range(14):              # pooled row
                for v in range(8):           # pooled column pair index (7 = pad)
                    r = q1 * 224 + jp * 112 + i * 8 + v
                    j = 2 * v + jp
                    if j > 13:
                        continue             # pad row: stays (index 0, mask 0)
                    h1, w1 = 2 * i + a1, 2 * j + b1
                    for k in range(9):
                        dy, dx = k // 3, k % 3
                        idx[r, k] = (h1 + dy) * 30 + (w1 + dx)
                        msk[r, k] = 1.0
    return jnp.asarray(idx), jnp.asarray(msk)


_IDX1, _MSK1 = _conv1_im2col_tables()


# ---------------- Pallas kernels ----------------

def _conv_stack_kernel(x_ref, w1_ref, b1_ref, w2_ref, b2_ref, o_ref):
    """conv1 + ReLU + pool + conv2 + ReLU + pool for a tile of B images.

    x_ref : (B, 896, 16)    conv1 im2col (quadrant / column-parity row order)
    w1_ref: (16, 128)       conv1 taps (dy*3+dx, cout_pad)
    b1_ref: (1, 128)
    w2_ref: (1152, 128)     conv2 (k*128 + cin_pad, cout_pad)
    b2_ref: (1, 128)
    o_ref : (B, 56, 128)    pooled conv2, rows ph2*8+pw2 (pw2==7 pad), lanes = cout
    """
    B = x_ref.shape[0]

    # ---- conv1: one MXU matmul, then 2x2 max-pool as a max over 4 row blocks ----
    a1 = jnp.dot(x_ref[...].reshape(B * ROWS1, K1), w1_ref[...],
                 preferred_element_type=jnp.float32)
    a1 = a1.reshape(B, 4, P1ROWS, LANES)
    p1 = jnp.maximum(jnp.maximum(a1[:, 0], a1[:, 1]),
                     jnp.maximum(a1[:, 2], a1[:, 3]))          # (B, 224, 128)
    p1 = jnp.maximum(p1 + b1_ref[...], 0.0)                    # bias+ReLU commute with max
    # zero the column-pad rows (v == 7): they double as conv2's zero padding.
    ri = lax.broadcasted_iota(jnp.int32, (P1ROWS, 1), 0)
    p1 = jnp.where((ri % 8) < 7, p1, 0.0)

    # ---- zero-bordered conv2 input: [pad | even cols | pad | odd cols | pad] ----
    z8 = jnp.zeros((B, 8, LANES), jnp.float32)
    grid2 = jnp.concatenate(
        [z8, p1[:, 0:112, :], z8, p1[:, 112:224, :], z8], axis=1)   # (B, 248, 128)

    # ---- conv2: long-K (1152) MXU matmul, one per output-column parity ----
    def conv2_parity(b2):
        pieces = []
        for dy in range(3):
            for dx in range(3):
                t = b2 + dx - 1
                tp = t % 2                       # source column parity
                tau = (t - tp) // 2              # source pair shift (-1, 0 or +1)
                start = (8 if tp == 0 else 128) + (dy - 1) * 8 + tau
                pieces.append(grid2[:, start:start + ROWS2, :])
        im2 = jnp.concatenate(pieces, axis=-1).reshape(B * ROWS2, K2)
        return jnp.dot(im2, w2_ref[...], preferred_element_type=jnp.float32)

    ev = conv2_parity(0)                                   # even output columns
    od = conv2_parity(1)                                   # odd  output columns
    wmax = jnp.maximum(ev, od).reshape(B, 7, 2, 8, LANES)  # width pool = parity max
    hmax = jnp.maximum(wmax[:, :, 0], wmax[:, :, 1])       # height pool (B,7,8,128)
    p2 = jnp.maximum(hmax + b2_ref[...], 0.0)              # bias+ReLU after pool
    o_ref[...] = p2.reshape(B, P2ROWS, LANES)              # single lane-dense store


def _fc_kernel(x_ref, w1_ref, b1_ref, w2_ref, b2_ref, o_ref):
    """fc1 + ReLU + fc2 fused; the hidden activation never leaves VMEM."""
    h = jnp.dot(x_ref[...], w1_ref[...], preferred_element_type=jnp.float32)
    h = jnp.maximum(h + b1_ref[...], 0.0)
    out = jnp.dot(h, w2_ref[...], preferred_element_type=jnp.float32) + b2_ref[...]
    o_ref[...] = out.astype(o_ref.dtype)


# ---------------- parameters ----------------

def init_params(key):
    """PyTorch-layout parameters with nn.Conv2d / nn.Linear default init."""
    ks = jax.random.split(key, 8)

    def u(k, shape, fan_in):
        bound = 1.0 / jnp.sqrt(jnp.float32(fan_in))
        return jax.random.uniform(k, shape, jnp.float32, -bound, bound)

    return {
        "conv1_w": u(ks[0], (C1, 1, 3, 3), 1 * 9),
        "conv1_b": u(ks[1], (C1,), 1 * 9),
        "conv2_w": u(ks[2], (C2, C1, 3, 3), C1 * 9),
        "conv2_b": u(ks[3], (C2,), C1 * 9),
        "fc1_w": u(ks[4], (128, C2 * 7 * 7), C2 * 7 * 7),
        "fc1_b": u(ks[5], (128,), C2 * 7 * 7),
        "fc2_w": u(ks[6], (10, 128), 128),
        "fc2_b": u(ks[7], (10,), 128),
    }


def prepare_kernel_params(p):
    """One-time (outside jit) re-layout of the PyTorch params for the kernels."""
    # conv1: (32,1,3,3) -> (16, 128): rows = tap k (9 real), cols = cout padded.
    w1 = jnp.pad(p["conv1_w"].reshape(C1, 9).T, ((0, K1 - 9), (0, LANES - C1)))
    b1 = jnp.pad(p["conv1_b"], (0, LANES - C1)).reshape(1, LANES)
    # conv2: (64,32,3,3) -> (1152,128): rows = (dy*3+dx)*128 + cin_pad, cols = cout_pad.
    w2 = jnp.transpose(p["conv2_w"], (2, 3, 1, 0))                  # (dy,dx,cin,cout)
    w2 = jnp.pad(w2, ((0, 0), (0, 0), (0, LANES - C1), (0, LANES - C2)))
    w2 = w2.reshape(K2, LANES)
    b2 = jnp.pad(p["conv2_b"], (0, LANES - C2)).reshape(1, LANES)
    # fc1: PyTorch column index c*49 + ph*7 + pw  ->  kernel row (ph*8+pw)*128 + c.
    f1 = p["fc1_w"].reshape(128, C2, 7, 7)                          # (out, c, ph, pw)
    f1 = jnp.transpose(f1, (2, 3, 1, 0))                            # (ph, pw, c, out)
    f1 = jnp.pad(f1, ((0, 0), (0, 1), (0, LANES - C2), (0, 0)))     # (7, 8, 128, 128)
    f1 = f1.reshape(FCK, 128)                                       # pad rows are zero
    fb1 = p["fc1_b"].reshape(1, 128)
    # fc2: (10,128) -> (128,128), logits padded to 128 lanes.
    f2 = jnp.pad(p["fc2_w"].T, ((0, 0), (0, LANES - 10)))
    fb2 = jnp.pad(p["fc2_b"], (0, LANES - 10)).reshape(1, LANES)
    return {"conv1_w": w1, "conv1_b": b1, "conv2_w": w2, "conv2_b": b2,
            "fc1_w": f1, "fc1_b": fb1, "fc2_w": f2, "fc2_b": fb2}


# ---------------- forward ----------------

def _compiler_params():
    return pltpu.CompilerParams(dimension_semantics=("parallel",),
                                vmem_limit_bytes=32 * 1024 * 1024)


def _conv_batch_tile(n):
    # B <= 8 images per grid step; keep >= 2 grid steps when possible so the
    # 'parallel' grid axis can still be split across v7x's two TensorCores.
    return max(1, min(8, -(-n // 2)))


@jax.jit
def mnist_cnn_forward(x_nchw, kp):
    N = x_nchw.shape[0]
    assert x_nchw.shape[1:] == (1, 28, 28)
    x = x_nchw.astype(jnp.float32).reshape(N, 28, 28)
    # XLA prep (tiny): pad by 1, gather the conv1 im2col with constant indices.
    xp = jnp.pad(x, ((0, 0), (1, 1), (1, 1))).reshape(N, 30 * 30)
    im1 = jnp.take(xp, _IDX1, axis=1) * _MSK1                 # (N, 896, 16)

    B = _conv_batch_tile(N)
    pooled = pl.pallas_call(
        _conv_stack_kernel,
        out_shape=jax.ShapeDtypeStruct((N, P2ROWS, LANES), jnp.float32),
        grid=(pl.cdiv(N, B),),
        in_specs=[
            pl.BlockSpec((B, ROWS1, K1), lambda n: (n, 0, 0)),
            pl.BlockSpec((K1, LANES), lambda n: (0, 0)),
            pl.BlockSpec((1, LANES), lambda n: (0, 0)),
            pl.BlockSpec((K2, LANES), lambda n: (0, 0)),
            pl.BlockSpec((1, LANES), lambda n: (0, 0)),
        ],
        out_specs=pl.BlockSpec((B, P2ROWS, LANES), lambda n: (n, 0, 0)),
        compiler_params=_compiler_params(),
    )(im1, kp["conv1_w"], kp["conv1_b"], kp["conv2_w"], kp["conv2_b"])

    xf = pooled.reshape(N, FCK)                               # contiguous collapse
    tm = N if N <= 128 else 128                               # VMEM-safe fc row tile
    logits = pl.pallas_call(
        _fc_kernel,
        out_shape=jax.ShapeDtypeStruct((N, LANES), jnp.float32),
        grid=(pl.cdiv(N, tm),),
        in_specs=[
            pl.BlockSpec((tm, FCK), lambda i: (i, 0)),
            pl.BlockSpec((FCK, 128), lambda i: (0, 0)),
            pl.BlockSpec((1, 128), lambda i: (0, 0)),
            pl.BlockSpec((128, LANES), lambda i: (0, 0)),
            pl.BlockSpec((1, LANES), lambda i: (0, 0)),
        ],
        out_specs=pl.BlockSpec((tm, LANES), lambda i: (i, 0)),
        compiler_params=_compiler_params(),
    )(xf, kp["fc1_w"], kp["fc1_b"], kp["fc2_w"], kp["fc2_b"])
    return logits[:, :10]


# ---------------- pure-JAX reference (self-check) ----------------

def reference_forward(x_nchw, p):
    def conv(x, w, b):
        y = lax.conv_general_dilated(
            x, jnp.transpose(w, (2, 3, 1, 0)), (1, 1), "SAME",
            dimension_numbers=("NHWC", "HWIO", "NHWC"),
            precision=lax.Precision.HIGHEST)
        return jnp.maximum(y + b, 0.0)

    def pool(x):
        n, h, w, c = x.shape
        return x.reshape(n, h // 2, 2, w // 2, 2, c).max(axis=(2, 4))

    x = jnp.transpose(x_nchw, (0, 2, 3, 1)).astype(jnp.float32)
    x = pool(conv(x, p["conv1_w"], p["conv1_b"]))
    x = pool(conv(x, p["conv2_w"], p["conv2_b"]))
    n = x.shape[0]
    x = jnp.transpose(x, (0, 3, 1, 2)).reshape(n, C2 * 7 * 7)   # PyTorch view order
    x = jnp.maximum(jnp.dot(x, p["fc1_w"].T, precision=lax.Precision.HIGHEST)
                    + p["fc1_b"], 0.0)
    return jnp.dot(x, p["fc2_w"].T, precision=lax.Precision.HIGHEST) + p["fc2_b"]


if __name__ == "__main__":
    key = jax.random.PRNGKey(0)
    k_x, k_p = jax.random.split(key)
    # spatial must be 28x28 (fc1's 64*7*7 encodes it); small batch for the demo.
    x = jax.random.normal(k_x, (2, 1, 28, 28), dtype=jnp.float32)
    params = init_params(k_p)
    kparams = prepare_kernel_params(params)    # one-time weight re-layout, outside jit

    out = jax.block_until_ready(mnist_cnn_forward(x, kparams))
    assert out.shape == (2, 10), out.shape

    ref = jax.block_until_ready(reference_forward(x, params))
    # Tolerance covers MXU f32 pass rounding; typically matches to ~1e-5.
    assert jnp.allclose(out, ref, atol=2e-3, rtol=2e-3), (
        float(jnp.max(jnp.abs(out - ref))))

    print("KERNEL_OK")
</pallas_src>

<mosaic_0001>
module attributes {stable_mosaic.version = 11 : i64} {
  func.func @_conv_stack_kernel(%arg0: i32, %arg1: memref<1x896x16xf32, #tpu.memory_space<vmem>>, %arg2: memref<16x128xf32, #tpu.memory_space<vmem>>, %arg3: memref<1x128xf32, #tpu.memory_space<vmem>>, %arg4: memref<1152x128xf32, #tpu.memory_space<vmem>>, %arg5: memref<1x128xf32, #tpu.memory_space<vmem>>, %arg6: memref<1x56x128xf32, #tpu.memory_space<vmem>>) attributes {dimension_semantics = [#tpu.dimension_semantics<parallel>], iteration_bounds = array<i64: 2>, scalar_prefetch = 0 : i64, scratch_operands = 0 : i64, tpu.core_type = #tpu.core_type<tc>, window_params = [{transform_indices = @transform_0, window_bounds = array<i64: 1, 896, 16>}, {pipeline_mode = #tpu.pipeline_mode<synchronous>, transform_indices = @transform_1, window_bounds = array<i64: 16, 128>}, {pipeline_mode = #tpu.pipeline_mode<synchronous>, transform_indices = @transform_2, window_bounds = array<i64: 1, 128>}, {pipeline_mode = #tpu.pipeline_mode<synchronous>, transform_indices = @transform_3, window_bounds = array<i64: 1152, 128>}, {pipeline_mode = #tpu.pipeline_mode<synchronous>, transform_indices = @transform_4, window_bounds = array<i64: 1, 128>}, {transform_indices = @transform_5, window_bounds = array<i64: 1, 56, 128>}]} {
    %c0 = arith.constant 0 : index
    %c0_0 = arith.constant 0 : index
    %c0_1 = arith.constant 0 : index
    %0 = vector.load %arg1[%c0, %c0_0, %c0_1] : memref<1x896x16xf32, #tpu.memory_space<vmem>>, vector<1x896x16xf32>
    %1 = vector.shape_cast %0 : vector<1x896x16xf32> to vector<896x16xf32>
    %c0_2 = arith.constant 0 : index
    %c0_3 = arith.constant 0 : index
    %2 = vector.load %arg2[%c0_2, %c0_3] : memref<16x128xf32, #tpu.memory_space<vmem>>, vector<16x128xf32>
    %cst = arith.constant dense<0.000000e+00> : vector<896x128xf32>
    %3 = tpu.matmul %1, %2, %cst {dimension_numbers = #tpu.dot_dimension_numbers<[1], [0], [0], [1], [0, 0, 1, 1], [], []>} : vector<896x16xf32>, vector<16x128xf32>, vector<896x128xf32> -> vector<896x128xf32>
    %4 = vector.shape_cast %3 : vector<896x128xf32> to vector<1x4x224x128xf32>
    %5 = vector.extract_strided_slice %4 {offsets = [0, 0, 0, 0], sizes = [1, 1, 224, 128], strides = [1, 1, 1, 1]} : vector<1x4x224x128xf32> to vector<1x1x224x128xf32>
    %6 = vector.shape_cast %5 : vector<1x1x224x128xf32> to vector<1x224x128xf32>
    %7 = vector.extract_strided_slice %4 {offsets = [0, 1, 0, 0], sizes = [1, 1, 224, 128], strides = [1, 1, 1, 1]} : vector<1x4x224x128xf32> to vector<1x1x224x128xf32>
    %8 = vector.shape_cast %7 : vector<1x1x224x128xf32> to vector<1x224x128xf32>
    %9 = arith.maximumf %6, %8 : vector<1x224x128xf32>
    %10 = vector.extract_strided_slice %4 {offsets = [0, 2, 0, 0], sizes = [1, 1, 224, 128], strides = [1, 1, 1, 1]} : vector<1x4x224x128xf32> to vector<1x1x224x128xf32>
    %11 = vector.shape_cast %10 : vector<1x1x224x128xf32> to vector<1x224x128xf32>
    %12 = vector.extract_strided_slice %4 {offsets = [0, 3, 0, 0], sizes = [1, 1, 224, 128], strides = [1, 1, 1, 1]} : vector<1x4x224x128xf32> to vector<1x1x224x128xf32>
    %13 = vector.shape_cast %12 : vector<1x1x224x128xf32> to vector<1x224x128xf32>
    %14 = arith.maximumf %11, %13 : vector<1x224x128xf32>
    %15 = arith.maximumf %9, %14 : vector<1x224x128xf32>
    %c0_4 = arith.constant 0 : index
    %c0_5 = arith.constant 0 : index
    %16 = vector.load %arg3[%c0_4, %c0_5] : memref<1x128xf32, #tpu.memory_space<vmem>>, vector<1x128xf32>
    %17 = vector.shape_cast %16 : vector<1x128xf32> to vector<1x1x128xf32>
    %18 = vector.broadcast %17 : vector<1x1x128xf32> to vector<1x224x128xf32>
    %19 = arith.addf %15, %18 : vector<1x224x128xf32>
    %cst_6 = arith.constant 0.000000e+00 : f32
    %20 = vector.broadcast %cst_6 : f32 to vector<1x224x128xf32>
    %21 = arith.maximumf %19, %20 : vector<1x224x128xf32>
    %22 = tpu.iota {dimensions = array<i32: 0>} : vector<224x1xi32>
    %c8_i32 = arith.constant 8 : i32
    %c0_i32 = arith.constant 0 : i32
    %23 = arith.cmpi eq, %c8_i32, %c0_i32 : i32
    %c1_i32 = arith.constant 1 : i32
    %24 = arith.select %23, %c1_i32, %c8_i32 : i32
    %25 = vector.broadcast %24 : i32 to vector<224x1xi32>
    %26 = arith.remsi %22, %25 : vector<224x1xi32>
    %c0_i32_7 = arith.constant 0 : i32
    %27 = vector.broadcast %c0_i32_7 : i32 to vector<224x1xi32>
    %28 = arith.cmpi ne, %26, %27 : vector<224x1xi32>
    %c0_i32_8 = arith.constant 0 : i32
    %29 = vector.broadcast %c0_i32_8 : i32 to vector<224x1xi32>
    %30 = arith.cmpi slt, %26, %29 : vector<224x1xi32>
    %c0_i32_9 = arith.constant 0 : i32
    %31 = arith.cmpi slt, %24, %c0_i32_9 : i32
    %32 = vector.broadcast %31 : i1 to vector<224x1xi1>
    %33 = vector.broadcast %32 : vector<224x1xi1> to vector<224x1xi1>
    %34 = arith.xori %30, %33 : vector<224x1xi1>
    %35 = arith.andi %34, %28 : vector<224x1xi1>
    %36 = vector.broadcast %24 : i32 to vector<224x1xi32>
    %37 = arith.addi %26, %36 : vector<224x1xi32>
    %38 = arith.select %35, %37, %26 : vector<224x1xi1>, vector<224x1xi32>
    %c7_i32 = arith.constant 7 : i32
    %39 = vector.broadcast %c7_i32 : i32 to vector<224x1xi32>
    %40 = arith.cmpi slt, %38, %39 : vector<224x1xi32>
    %cst_10 = arith.constant 0.000000e+00 : f32
    %41 = vector.shape_cast %40 : vector<224x1xi1> to vector<1x224x1xi1>
    %42 = vector.broadcast %41 : vector<1x224x1xi1> to vector<1x224x128xi1>
    %43 = vector.broadcast %cst_10 : f32 to vector<1x224x128xf32>
    %44 = arith.select %42, %21, %43 : vector<1x224x128xi1>, vector<1x224x128xf32>
    %cst_11 = arith.constant 0.000000e+00 : f32
    %45 = vector.broadcast %cst_11 : f32 to vector<1x8x128xf32>
    %46 = vector.extract_strided_slice %44 {offsets = [0, 0, 0], sizes = [1, 112, 128], strides = [1, 1, 1]} : vector<1x224x128xf32> to vector<1x112x128xf32>
    %47 = vector.extract_strided_slice %44 {offsets = [0, 112, 0], sizes = [1, 112, 128], strides = [1, 1, 1]} : vector<1x224x128xf32> to vector<1x112x128xf32>
    %48 = tpu.concatenate %45, %46, %45, %47, %45 in 1 : vector<1x8x128xf32>, vector<1x112x128xf32>, vector<1x8x128xf32>, vector<1x112x128xf32>, vector<1x8x128xf32> -> vector<1x248x128xf32>
    %49 = vector.extract_strided_slice %48 {offsets = [0, 119, 0], sizes = [1, 112, 128], strides = [1, 1, 1]} : vector<1x248x128xf32> to vector<1x112x128xf32>
    %50 = vector.extract_strided_slice %48 {offsets = [0, 0, 0], sizes = [1, 112, 128], strides = [1, 1, 1]} : vector<1x248x128xf32> to vector<1x112x128xf32>
    %51 = vector.extract_strided_slice %48 {offsets = [0, 120, 0], sizes = [1, 112, 128], strides = [1, 1, 1]} : vector<1x248x128xf32> to vector<1x112x128xf32>
    %52 = vector.extract_strided_slice %48 {offsets = [0, 127, 0], sizes = [1, 112, 128], strides = [1, 1, 1]} : vector<1x248x128xf32> to vector<1x112x128xf32>
    %53 = vector.extract_strided_slice %48 {offsets = [0, 8, 0], sizes = [1, 112, 128], strides = [1, 1, 1]} : vector<1x248x128xf32> to vector<1x112x128xf32>
    %54 = vector.extract_strided_slice %48 {offsets = [0, 128, 0], sizes = [1, 112, 128], strides = [1, 1, 1]} : vector<1x248x128xf32> to vector<1x112x128xf32>
    %55 = vector.extract_strided_slice %48 {offsets = [0, 135, 0], sizes = [1, 112, 128], strides = [1, 1, 1]} : vector<1x248x128xf32> to vector<1x112x128xf32>
    %56 = vector.extract_strided_slice %48 {offsets = [0, 16, 0], sizes = [1, 112, 128], strides = [1, 1, 1]} : vector<1x248x128xf32> to vector<1x112x128xf32>
    %57 = vector.extract_strided_slice %48 {offsets = [0, 136, 0], sizes = [1, 112, 128], strides = [1, 1, 1]} : vector<1x248x128xf32> to vector<1x112x128xf32>
    %58 = tpu.concatenate %49, %50, %51, %52, %53, %54, %55, %56, %57 in 2 : vector<1x112x128xf32>, vector<1x112x128xf32>, vector<1x112x128xf32>, vector<1x112x128xf32>, vector<1x112x128xf32>, vector<1x112x128xf32>, vector<1x112x128xf32>, vector<1x112x128xf32>, vector<1x112x128xf32> -> vector<1x112x1152xf32>
    %59 = vector.shape_cast %58 : vector<1x112x1152xf32> to vector<112x1152xf32>
    %c0_12 = arith.constant 0 : index
    %c0_13 = arith.constant 0 : index
    %60 = vector.load %arg4[%c0_12, %c0_13] : memref<1152x128xf32, #tpu.memory_space<vmem>>, vector<1152x128xf32>
    %cst_14 = arith.constant dense<0.000000e+00> : vector<112x128xf32>
    %61 = tpu.matmul %59, %60, %cst_14 {dimension_numbers = #tpu.dot_dimension_numbers<[1], [0], [0], [1], [0, 0, 1, 1], [], []>} : vector<112x1152xf32>, vector<1152x128xf32>, vector<112x128xf32> -> vector<112x128xf32>
    %62 = vector.extract_strided_slice %48 {offsets = [0, 0, 0], sizes = [1, 112, 128], strides = [1, 1, 1]} : vector<1x248x128xf32> to vector<1x112x128xf32>
    %63 = vector.extract_strided_slice %48 {offsets = [0, 120, 0], sizes = [1, 112, 128], strides = [1, 1, 1]} : vector<1x248x128xf32> to vector<1x112x128xf32>
    %64 = vector.extract_strided_slice %48 {offsets = [0, 1, 0], sizes = [1, 112, 128], strides = [1, 1, 1]} : vector<1x248x128xf32> to vector<1x112x128xf32>
    %65 = vector.extract_strided_slice %48 {offsets = [0, 8, 0], sizes = [1, 112, 128], strides = [1, 1, 1]} : vector<1x248x128xf32> to vector<1x112x128xf32>
    %66 = vector.extract_strided_slice %48 {offsets = [0, 128, 0], sizes = [1, 112, 128], strides = [1, 1, 1]} : vector<1x248x128xf32> to vector<1x112x128xf32>
    %67 = vector.extract_strided_slice %48 {offsets = [0, 9, 0], sizes = [1, 112, 128], strides = [1, 1, 1]} : vector<1x248x128xf32> to vector<1x112x128xf32>
    %68 = vector.extract_strided_slice %48 {offsets = [0, 16, 0], sizes = [1, 112, 128], strides = [1, 1, 1]} : vector<1x248x128xf32> to vector<1x112x128xf32>
    %69 = vector.extract_strided_slice %48 {offsets = [0, 136, 0], sizes = [1, 112, 128], strides = [1, 1, 1]} : vector<1x248x128xf32> to vector<1x112x128xf32>
    %70 = vector.extract_strided_slice %48 {offsets = [0, 17, 0], sizes = [1, 112, 128], strides = [1, 1, 1]} : vector<1x248x128xf32> to vector<1x112x128xf32>
    %71 = tpu.concatenate %62, %63, %64, %65, %66, %67, %68, %69, %70 in 2 : vector<1x112x128xf32>, vector<1x112x128xf32>, vector<1x112x128xf32>, vector<1x112x128xf32>, vector<1x112x128xf32>, vector<1x112x128xf32>, vector<1x112x128xf32>, vector<1x112x128xf32>, vector<1x112x128xf32> -> vector<1x112x1152xf32>
    %72 = vector.shape_cast %71 : vector<1x112x1152xf32> to vector<112x1152xf32>
    %c0_15 = arith.constant 0 : index
    %c0_16 = arith.constant 0 : index
    %73 = vector.load %arg4[%c0_15, %c0_16] : memref<1152x128xf32, #tpu.memory_space<vmem>>, vector<1152x128xf32>
    %cst_17 = arith.constant dense<0.000000e+00> : vector<112x128xf32>
    %74 = tpu.matmul %72, %73, %cst_17 {dimension_numbers = #tpu.dot_dimension_numbers<[1], [0], [0], [1], [0, 0, 1, 1], [], []>} : vector<112x1152xf32>, vector<1152x128xf32>, vector<112x128xf32> -> vector<112x128xf32>
    %75 = arith.maximumf %61, %74 : vector<112x128xf32>
    %76 = vector.shape_cast %75 : vector<112x128xf32> to vector<1x7x2x8x128xf32>
    %77 = vector.extract_strided_slice %76 {offsets = [0, 0, 0, 0, 0], sizes = [1, 7, 1, 8, 128], strides = [1, 1, 1, 1, 1]} : vector<1x7x2x8x128xf32> to vector<1x7x1x8x128xf32>
    %78 = vector.shape_cast %77 : vector<1x7x1x8x128xf32> to vector<1x7x8x128xf32>
    %79 = vector.extract_strided_slice %76 {offsets = [0, 0, 1, 0, 0], sizes = [1, 7, 1, 8, 128], strides = [1, 1, 1, 1, 1]} : vector<1x7x2x8x128xf32> to vector<1x7x1x8x128xf32>
    %80 = vector.shape_cast %79 : vector<1x7x1x8x128xf32> to vector<1x7x8x128xf32>
    %81 = arith.maximumf %78, %80 : vector<1x7x8x128xf32>
    %c0_18 = arith.constant 0 : index
    %c0_19 = arith.constant 0 : index
    %82 = vector.load %arg5[%c0_18, %c0_19] : memref<1x128xf32, #tpu.memory_space<vmem>>, vector<1x128xf32>
    %83 = vector.shape_cast %82 : vector<1x128xf32> to vector<1x1x1x128xf32>
    %84 = vector.broadcast %83 : vector<1x1x1x128xf32> to vector<1x7x8x128xf32>
    %85 = arith.addf %81, %84 : vector<1x7x8x128xf32>
    %cst_20 = arith.constant 0.000000e+00 : f32
    %86 = vector.broadcast %cst_20 : f32 to vector<1x7x8x128xf32>
    %87 = arith.maximumf %85, %86 : vector<1x7x8x128xf32>
    %88 = vector.shape_cast %87 : vector<1x7x8x128xf32> to vector<1x56x128xf32>
    %c0_21 = arith.constant 0 : index
    %c0_22 = arith.constant 0 : index
    %c0_23 = arith.constant 0 : index
    %89 = vector.load %arg6[%c0_21, %c0_22, %c0_23] : memref<1x56x128xf32, #tpu.memory_space<vmem>>, vector<1x56x128xf32>
    tpu.vector_store %arg6[%c0_21, %c0_22, %c0_23], %88 {strides = array<i32>} : memref<1x56x128xf32, #tpu.memory_space<vmem>>, vector<1x56x128xf32>,
    return
  }
  func.func @transform_0(%arg0: i32) -> (i32, i32, i32) {
    %c0_i32 = arith.constant 0 : i32
    %c0_i32_0 = arith.constant 0 : i32
    %c0_i32_1 = arith.constant 0 : i32
    return %arg0, %c0_i32, %c0_i32_0 : i32, i32, i32
  }
  func.func @transform_1(%arg0: i32) -> (i32, i32) {
    %c0_i32 = arith.constant 0 : i32
    %c0_i32_0 = arith.constant 0 : i32
    %c0_i32_1 = arith.constant 0 : i32
    return %c0_i32, %c0_i32_0 : i32, i32
  }
  func.func @transform_2(%arg0: i32) -> (i32, i32) {
    %c0_i32 = arith.constant 0 : i32
    %c0_i32_0 = arith.constant 0 : i32
    %c0_i32_1 = arith.constant 0 : i32
    return %c0_i32, %c0_i32_0 : i32, i32
  }
  func.func @transform_3(%arg0: i32) -> (i32, i32) {
    %c0_i32 = arith.constant 0 : i32
    %c0_i32_0 = arith.constant 0 : i32
    %c0_i32_1 = arith.constant 0 : i32
    return %c0_i32, %c0_i32_0 : i32, i32
  }
  func.func @transform_4(%arg0: i32) -> (i32, i32) {
    %c0_i32 = arith.constant 0 : i32
    %c0_i32_0 = arith.constant 0 : i32
    %c0_i32_1 = arith.constant 0 : i32
    return %c0_i32, %c0_i32_0 : i32, i32
  }
  func.func @transform_5(%arg0: i32) -> (i32, i32, i32) {
    %c0_i32 = arith.constant 0 : i32
    %c0_i32_0 = arith.constant 0 : i32
    %c0_i32_1 = arith.constant 0 : i32
    return %arg0, %c0_i32, %c0_i32_0 : i32, i32, i32
  }
}

module attributes {stable_mosaic.version = 11 : i64} {
  func.func @_fc_kernel(%arg0: i32, %arg1: memref<2x7168xf32, #tpu.memory_space<vmem>>, %arg2: memref<7168x128xf32, #tpu.memory_space<vmem>>, %arg3: memref<1x128xf32, #tpu.memory_space<vmem>>, %arg4: memref<128x128xf32, #tpu.memory_space<vmem>>, %arg5: memref<1x128xf32, #tpu.memory_space<vmem>>, %arg6: memref<2x128xf32, #tpu.memory_space<vmem>>) attributes {dimension_semantics = [#tpu.dimension_semantics<parallel>], iteration_bounds = array<i64: 1>, scalar_prefetch = 0 : i64, scratch_operands = 0 : i64, tpu.core_type = #tpu.core_type<tc>, window_params = [{transform_indices = @transform_0, window_bounds = array<i64: 2, 7168>}, {pipeline_mode = #tpu.pipeline_mode<synchronous>, transform_indices = @transform_1, window_bounds = array<i64: 7168, 128>}, {pipeline_mode = #tpu.pipeline_mode<synchronous>, transform_indices = @transform_2, window_bounds = array<i64: 1, 128>}, {pipeline_mode = #tpu.pipeline_mode<synchronous>, transform_indices = @transform_3, window_bounds = array<i64: 128, 128>}, {pipeline_mode = #tpu.pipeline_mode<synchronous>, transform_indices = @transform_4, window_bounds = array<i64: 1, 128>}, {transform_indices = @transform_5, window_bounds = array<i64: 2, 128>}]} {
    %c0 = arith.constant 0 : index
    %c0_0 = arith.constant 0 : index
    %0 = vector.load %arg1[%c0, %c0_0] : memref<2x7168xf32, #tpu.memory_space<vmem>>, vector<2x7168xf32>
    %c0_1 = arith.constant 0 : index
    %c0_2 = arith.constant 0 : index
    %1 = vector.load %arg2[%c0_1, %c0_2] : memref<7168x128xf32, #tpu.memory_space<vmem>>, vector<7168x128xf32>
    %cst = arith.constant dense<0.000000e+00> : vector<2x128xf32>
    %2 = tpu.matmul %0, %1, %cst {dimension_numbers = #tpu.dot_dimension_numbers<[1], [0], [0], [1], [0, 0, 1, 1], [], []>} : vector<2x7168xf32>, vector<7168x128xf32>, vector<2x128xf32> -> vector<2x128xf32>
    %c0_3 = arith.constant 0 : index
    %c0_4 = arith.constant 0 : index
    %3 = vector.load %arg3[%c0_3, %c0_4] : memref<1x128xf32, #tpu.memory_space<vmem>>, vector<1x128xf32>
    %4 = vector.broadcast %3 : vector<1x128xf32> to vector<2x128xf32>
    %5 = arith.addf %2, %4 : vector<2x128xf32>
    %cst_5 = arith.constant 0.000000e+00 : f32
    %6 = vector.broadcast %cst_5 : f32 to vector<2x128xf32>
    %7 = arith.maximumf %5, %6 : vector<2x128xf32>
    %c0_6 = arith.constant 0 : index
    %c0_7 = arith.constant 0 : index
    %8 = vector.load %arg4[%c0_6, %c0_7] : memref<128x128xf32, #tpu.memory_space<vmem>>, vector<128x128xf32>
    %cst_8 = arith.constant dense<0.000000e+00> : vector<2x128xf32>
    %9 = tpu.matmul %7, %8, %cst_8 {dimension_numbers = #tpu.dot_dimension_numbers<[1], [0], [0], [1], [0, 0, 1, 1], [], []>} : vector<2x128xf32>, vector<128x128xf32>, vector<2x128xf32> -> vector<2x128xf32>
    %c0_9 = arith.constant 0 : index
    %c0_10 = arith.constant 0 : index
    %10 = vector.load %arg5[%c0_9, %c0_10] : memref<1x128xf32, #tpu.memory_space<vmem>>, vector<1x128xf32>
    %11 = vector.broadcast %10 : vector<1x128xf32> to vector<2x128xf32>
    %12 = arith.addf %9, %11 : vector<2x128xf32>
    %c0_11 = arith.constant 0 : index
    %c0_12 = arith.constant 0 : index
    %13 = vector.load %arg6[%c0_11, %c0_12] : memref<2x128xf32, #tpu.memory_space<vmem>>, vector<2x128xf32>
    tpu.vector_store %arg6[%c0_11, %c0_12], %12 {strides = array<i32>} : memref<2x128xf32, #tpu.memory_space<vmem>>, vector<2x128xf32>,
    return
  }
  func.func @transform_0(%arg0: i32) -> (i32, i32) {
    %c0_i32 = arith.constant 0 : i32
    %c0_i32_0 = arith.constant 0 : i32
    return %arg0, %c0_i32 : i32, i32
  }
  func.func @transform_1(%arg0: i32) -> (i32, i32) {
    %c0_i32 = arith.constant 0 : i32
    %c0_i32_0 = arith.constant 0 : i32
    %c0_i32_1 = arith.constant 0 : i32
    return %c0_i32, %c0_i32_0 : i32, i32
  }
  func.func @transform_2(%arg0: i32) -> (i32, i32) {
    %c0_i32 = arith.constant 0 : i32
    %c0_i32_0 = arith.constant 0 : i32
    %c0_i32_1 = arith.constant 0 : i32
    return %c0_i32, %c0_i32_0 : i32, i32
  }
  func.func @transform_3(%arg0: i32) -> (i32, i32) {
    %c0_i32 = arith.constant 0 : i32
    %c0_i32_0 = arith.constant 0 : i32
    %c0_i32_1 = arith.constant 0 : i32
    return %c0_i32, %c0_i32_0 : i32, i32
  }
  func.func @transform_4(%arg0: i32) -> (i32, i32) {
    %c0_i32 = arith.constant 0 : i32
    %c0_i32_0 = arith.constant 0 : i32
    %c0_i32_1 = arith.constant 0 : i32
    return %c0_i32, %c0_i32_0 : i32, i32
  }
  func.func @transform_5(%arg0: i32) -> (i32, i32) {
    %c0_i32 = arith.constant 0 : i32
    %c0_i32_0 = arith.constant 0 : i32
    return %arg0, %c0_i32 : i32, i32
  }
}

</mosaic_0001>

<llo_original>
// kernel: mnist_cnn_forward.2
$region0: #{mnist_cnn_forward.2}
  #allocation0 [shape = 'u32[]', space=smem, size = 0x4, offset = 0x4, fixed_abs, tag = 'smem constant byte address 0x4 - core index']
  #allocation1 [shape = 'u32[144,128]{1,0:T(1,128)}', space=vmem, size = 0x12000, scoped, tag = 'internal scratch']
  %s0 = inlined_call_operand.vmem [shape: f32[2,896,16], index: 0, kind: input, shape index: {}]
  %s1 = inlined_call_operand.vmem [shape: f32[16,128], index: 1, kind: input, shape index: {}]
  %s2 = inlined_call_operand.vmem [shape: f32[1,128], index: 2, kind: input, shape index: {}]
  %s3 = inlined_call_operand.vmem [shape: f32[1152,128], index: 3, kind: input, shape index: {}]
  %s4 = inlined_call_operand.vmem [shape: f32[1,128], index: 4, kind: input, shape index: {}]
  %s5 = inlined_call_operand.vmem [shape: f32[2,56,128], index: 5, kind: output, shape index: {}]
  %s6 = sld [smem:[#allocation0]]
  $region53: #{mnist_cnn_forward.2} parent=0
    _
  %s8 = ssub.s32 1, %s6
  %s9 = scalar_select 0, %s8, %s6
  loop: start=0, step=1, limit=4
  $region2: #{mnist_cnn_forward.2} parent=0 // loop_pre_header
    _
  $region3: #{mnist_cnn_forward.2} parent=0 // loop_header
    %s11 = sphi 0, %s15
    %p12 = scmp.ge.s32.totalorder %s11, 4
    %s21 = sphi 0, %s23
    %s24 = sphi 0, %s21
    %s25 = sphi 0, %s24
    %s41 = sphi 0, %s25
    %s45 = sphi 0, %s45
    %s47 = sphi 0, %s45
    %s48 = sphi 0, %s47
    %s62 = sphi 0, %s48
    %s66 = sphi 0, %s66
    %s68 = sphi 0, %s66
    %s69 = sphi 0, %s68
    %s83 = sphi 0, %s69
    %s87 = sphi 0, %s87
    %s89 = sphi 0, %s87
    %s90 = sphi 0, %s89
    %s104 = sphi 0, %s90
    %s108 = sphi 0, %s108
    %s110 = sphi 0, %s108
    %s111 = sphi 0, %s110
    %s125 = sphi 0, %s111
    %s131 = sphi 0, %s133
    %s134 = sphi 0, %s131
    %s135 = sphi 0, %s134
    %s151 = sphi 0, %s135
  $region4: #{mnist_cnn_forward.2} parent=0 // loop_header_branch
    %14 = sbr.rel (%p12) target = $region8
  $region5: #{mnist_cnn_forward.2} parent=0 // loop_body
    %s16 = ssub.s32 %s11, 1
    %s17 = ssub.s32 %s11, 2
    %s18 = sadd.s32 %s11, 1
    %s19 = ssub.s32 %s11, %s18
    %p20 = scmp.eq.s32.totalorder %s19, 0
    %s22 = sadd.s32 %s21, 1
    %s23 = scalar_select %p20, %s21, %s22
    %p26 = pneg %p20
    %p27 = scmp.eq.s32.totalorder %s11, 1
    %p28 = por %p26, %p27
    %p29 = scmp.ne.s32.totalorder %s21, %s24
    %p30 = scmp.eq.s32.totalorder %s11, 0
    %p31 = por %p29, %p30
    %p32 = scmp.ne.s32.totalorder %s21, %s24
    %p33 = scmp.eq.s32.totalorder %s16, 1
    %p34 = por %p32, %p33
    %p35 = scmp.ne.s32.totalorder %s24, %s25
    %p36 = scmp.eq.s32.totalorder %s16, 0
    %p37 = por %p35, %p36
    %p38 = scmp.ne.s32.totalorder %s24, %s25
    %p39 = scmp.eq.s32.totalorder %s17, 1
    %p40 = por %p38, %p39
    %p42 = scmp.ne.s32.totalorder %s25, %s41
    %p43 = scmp.eq.s32.totalorder %s17, 0
    %p44 = por %p42, %p43
    %s46 = sadd.s32 %s45, 1
    %p49 = scmp.eq.s32.totalorder %s11, 1
    %p50 = scmp.ne.s32.totalorder %s45, %s47
    %p51 = scmp.eq.s32.totalorder %s11, 0
    %p52 = por %p50, %p51
    %p53 = scmp.ne.s32.totalorder %s45, %s47
    %p54 = scmp.eq.s32.totalorder %s16, 1
    %p55 = por %p53, %p54
    %p56 = scmp.ne.s32.totalorder %s47, %s48
    %p57 = scmp.eq.s32.totalorder %s16, 0
    %p58 = por %p56, %p57
    %p59 = scmp.ne.s32.totalorder %s47, %s48
    %p60 = scmp.eq.s32.totalorder %s17, 1
    %p61 = por %p59, %p60
    %p63 = scmp.ne.s32.totalorder %s48, %s62
    %p64 = scmp.eq.s32.totalorder %s17, 0
    %p65 = por %p63, %p64
    %s67 = sadd.s32 %s66, 1
    %p70 = scmp.eq.s32.totalorder %s11, 1
    %p71 = scmp.ne.s32.totalorder %s66, %s68
    %p72 = scmp.eq.s32.totalorder %s11, 0
    %p73 = por %p71, %p72
    %p74 = scmp.ne.s32.totalorder %s66, %s68
    %p75 = scmp.eq.s32.totalorder %s16, 1
    %p76 = por %p74, %p75
    %p77 = scmp.ne.s32.totalorder %s68, %s69
    %p78 = scmp.eq.s32.totalorder %s16, 0
    %p79 = por %p77, %p78
    %p80 = scmp.ne.s32.totalorder %s68, %s69
    %p81 = scmp.eq.s32.totalorder %s17, 1
    %p82 = por %p80, %p81
    %p84 = scmp.ne.s32.totalorder %s69, %s83
    %p85 = scmp.eq.s32.totalorder %s17, 0
    %p86 = por %p84, %p85
    %s88 = sadd.s32 %s87, 1
    %p91 = scmp.eq.s32.totalorder %s11, 1
    %p92 = scmp.ne.s32.totalorder %s87, %s89
    %p93 = scmp.eq.s32.totalorder %s11, 0
    %p94 = por %p92, %p93
    %p95 = scmp.ne.s32.totalorder %s87, %s89
    %p96 = scmp.eq.s32.totalorder %s16, 1
    %p97 = por %p95, %p96
    %p98 = scmp.ne.s32.totalorder %s89, %s90
    %p99 = scmp.eq.s32.totalorder %s16, 0
    %p100 = por %p98, %p99
    %p101 = scmp.ne.s32.totalorder %s89, %s90
    %p102 = scmp.eq.s32.totalorder %s17, 1
    %p103 = por %p101, %p102
    %p105 = scmp.ne.s32.totalorder %s90, %s104
    %p106 = scmp.eq.s32.totalorder %s17, 0
    %p107 = por %p105, %p106
    %s109 = sadd.s32 %s108, 1
    %p112 = scmp.eq.s32.totalorder %s11, 1
    %p113 = scmp.ne.s32.totalorder %s108, %s110
    %p114 = scmp.eq.s32.totalorder %s11, 0
    %p115 = por %p113, %p114
    %p116 = scmp.ne.s32.totalorder %s108, %s110
    %p117 = scmp.eq.s32.totalorder %s16, 1
    %p118 = por %p116, %p117
    %p119 = scmp.ne.s32.totalorder %s110, %s111
    %p120 = scmp.eq.s32.totalorder %s16, 0
    %p121 = por %p119, %p120
    %p122 = scmp.ne.s32.totalorder %s110, %s111
    %p123 = scmp.eq.s32.totalorder %s17, 1
    %p124 = por %p122, %p123
    %p126 = scmp.ne.s32.totalorder %s111, %s125
    %p127 = scmp.eq.s32.totalorder %s17, 0
    %p128 = por %p126, %p127
    %s129 = ssub.s32 %s11, %s18
    %p130 = scmp.eq.s32.totalorder %s129, 0
    %s132 = sadd.s32 %s131, 1
    %s133 = scalar_select %p130, %s131, %s132
    %p136 = pneg %p130
    %p137 = scmp.eq.s32.totalorder %s11, 1
    %p138 = por %p136, %p137
    %p139 = scmp.ne.s32.totalorder %s131, %s134
    %p140 = scmp.eq.s32.totalorder %s11, 0
    %p141 = por %p139, %p140
    %p142 = scmp.ne.s32.totalorder %s131, %s134
    %p143 = scmp.eq.s32.totalorder %s16, 1
    %p144 = por %p142, %p143
    %p145 = scmp.ne.s32.totalorder %s134, %s135
    %p146 = scmp.eq.s32.totalorder %s16, 0
    %p147 = por %p145, %p146
    %p148 = scmp.ne.s32.totalorder %s134, %s135
    %p149 = scmp.eq.s32.totalorder %s17, 1
    %p150 = por %p148, %p149
    %p152 = scmp.ne.s32.totalorder %s135, %s151
    %p153 = scmp.eq.s32.totalorder %s17, 0
    %p154 = por %p152, %p153
    %p155 = scmp.le.s32.totalorder 1, %s11
    %p156 = scmp.lt.s32.totalorder %s11, 3
    %p157 = pnand %p155, %p156
    %p158 = pneg %p157
    // Predicated region
    $region9: #{mnist_cnn_forward.2} parent=5 // pred_check
      _
    $region10: #{mnist_cnn_forward.2} parent=5 // pred_check_branch
      %160 = sbr.rel (%p157) target = $region12
    $region11: #{mnist_cnn_forward.2} parent=5 // pred_region
      %s161 = ssub.s32 %s11, 1
      // Predicated region
      $region13: #{mnist_cnn_forward.2} parent=11 // pred_check
        %p162 = pneg %p58
      $region14: #{mnist_cnn_forward.2} parent=11 // pred_check_branch
        %164 = sbr.rel (%p162) target = $region16
      $region15: #{mnist_cnn_forward.2} parent=11 // pred_region
        _
      $region16: #{mnist_cnn_forward.2} parent=11 // pred_fallthru
        _
      // Predicated region
      $region17: #{mnist_cnn_forward.2} parent=11 // pred_check
        %p165 = pneg %p79
      $region18: #{mnist_cnn_forward.2} parent=11 // pred_check_branch
        %167 = sbr.rel (%p165) target = $region20
      $region19: #{mnist_cnn_forward.2} parent=11 // pred_region
        _
      $region20: #{mnist_cnn_forward.2} parent=11 // pred_fallthru
        _
      // Predicated region
      $region21: #{mnist_cnn_forward.2} parent=11 // pred_check
        %p168 = pneg %p100
      $region22: #{mnist_cnn_forward.2} parent=11 // pred_check_branch
        %170 = sbr.rel (%p168) target = $region24
      $region23: #{mnist_cnn_forward.2} parent=11 // pred_region
        _
      $region24: #{mnist_cnn_forward.2} parent=11 // pred_fallthru
        _
      // Predicated region
      $region25: #{mnist_cnn_forward.2} parent=11 // pred_check
        %p171 = pneg %p121
      $region26: #{mnist_cnn_forward.2} parent=11 // pred_check_branch
        %173 = sbr.rel (%p171) target = $region28
      $region27: #{mnist_cnn_forward.2} parent=11 // pred_region
        _
      $region28: #{mnist_cnn_forward.2} parent=11 // pred_fallthru
        _
    $region12: #{mnist_cnn_forward.2} parent=5 // pred_fallthru
      _
    %p174 = scmp.lt.s32.totalorder %s11, 2
    // Predicated region
    $region29: #{mnist_cnn_forward.2} parent=5 // pred_check
      %p175 = pneg %p174
    $region30: #{mnist_cnn_forward.2} parent=5 // pred_check_branch
      %177 = sbr.rel (%p175) target = $region32
    $region31: #{mnist_cnn_forward.2} parent=5 // pred_region
      // Predicated region
      $region33: #{mnist_cnn_forward.2} parent=31 // pred_check
        %p178 = pneg %p31
      $region34: #{mnist_cnn_forward.2} parent=31 // pred_check_branch
        %180 = sbr.rel (%p178) target = $region36
      $region35: #{mnist_cnn_forward.2} parent=31 // pred_region
        %p181 = scmp.lt.s32.totalorder %s11, 1
        %s182 = scalar_select %p181, %s11, 1
        %s183 = smul.addr %s182, 112
        %s184 = smul.addr %s183, 8
        %s185 = scalar_lea.vmem %s0, %s184
      $region36: #{mnist_cnn_forward.2} parent=31 // pred_fallthru
        _
    $region32: #{mnist_cnn_forward.2} parent=5 // pred_fallthru
      _
    %p186 = scmp.le.s32.totalorder 1, %s11
    %p187 = scmp.lt.s32.totalorder %s11, 3
    %p188 = pnand %p186, %p187
    %p189 = pneg %p188
    // Predicated region
    $region37: #{mnist_cnn_forward.2} parent=5 // pred_check
      _
    $region38: #{mnist_cnn_forward.2} parent=5 // pred_check_branch
      %191 = sbr.rel (%p188) target = $region40
    $region39: #{mnist_cnn_forward.2} parent=5 // pred_region
      %s192 = ssub.s32 %s11, 1
      %p193 = scmp.lt.s32.totalorder %s16, 1
      %s194 = scalar_select %p193, %s16, 1
      %s195 = smul.addr %s194, 112
      %s196 = smul.addr %s195, 8
      %s197 = scalar_lea.vmem %s0, %s196
      %p198 = pneg %p37
      %p199 = pneg %p34
      %p200 = pneg %p58
      %p201 = pneg %p55
      %p202 = pneg %p79
      %p203 = pneg %p76
      %p204 = pneg %p100
      %p205 = pneg %p97
      %p206 = pneg %p121
      %p207 = pneg %p118
      %p208 = pneg %p147
      %p209 = pneg %p144
      %p210 = scmp.lt.s32.totalorder %s16, 1
      %s211 = scalar_select %p210, %s16, 1
      %s212 = smul.addr %s211, 7
      %s213 = smul.addr %s212, 8
      %s214 = scalar_lea.vmem %s5, %s213
      %p215 = scmp.lt.s32.totalorder %s16, 1
      %s216 = scalar_select %p215, %s16, 1
      %s217 = smul.addr %s216, 112
      %s218 = smul.addr %s217, 8
      %s219 = scalar_lea.vmem %s0, %s218
      %p220 = scmp.lt.s32.totalorder %s16, 1
      %s221 = scalar_select %p220, %s16, 1
      %s222 = smul.addr %s221, 7
      %s223 = smul.addr %s222, 8
      %s224 = scalar_lea.vmem %s5, %s223
      %v225 = vld [vmem:[%s219] sm:$0xff]
      %v226 = vld [vmem:[%s219 + $0x8] sm:$0xff]
      %v227 = vld [vmem:[%s219 + $0x10] sm:$0xff]
      %v228 = vld [vmem:[%s219 + $0x18] sm:$0xff]
      %v229 = vld [vmem:[%s219 + $0x20] sm:$0xff]
      %v230 = vld [vmem:[%s219 + $0x28] sm:$0xff]
      %v231 = vld [vmem:[%s219 + $0x30] sm:$0xff]
      %v232 = vld [vmem:[%s219 + $0x38] sm:$0xff]
      %v233 = vld [vmem:[%s219 + $0x40] sm:$0xff]
      %v234 = vld [vmem:[%s219 + $0x48] sm:$0xff]
      %v235 = vld [vmem:[%s219 + $0x50] sm:$0xff]
      %v236 = vld [vmem:[%s219 + $0x58] sm:$0xff]
      %v237 = vld [vmem:[%s219 + $0x60] sm:$0xff]
      %v238 = vld [vmem:[%s219 + $0x68] sm:$0xff]
      %v239 = vld [vmem:[%s219 + $0x70] sm:$0xff]
      %v240 = vld [vmem:[%s219 + $0x78] sm:$0xff]
      %v241 = vld [vmem:[%s219 + $0x80] sm:$0xff]
      %v242 = vld [vmem:[%s219 + $0x88] sm:$0xff]
      %v243 = vld [vmem:[%s219 + $0x90] sm:$0xff]
      %v244 = vld [vmem:[%s219 + $0x98] sm:$0xff]
      %v245 = vld [vmem:[%s219 + $0xa0] sm:$0xff]
      %v246 = vld [vmem:[%s219 + $0xa8] sm:$0xff]
      %v247 = vld [vmem:[%s219 + $0xb0] sm:$0xff]
      %v248 = vld [vmem:[%s219 + $0xb8] sm:$0xff]
      %v249 = vld [vmem:[%s219 + $0xc0] sm:$0xff]
      %v250 = vld [vmem:[%s219 + $0xc8] sm:$0xff]
      %v251 = vld [vmem:[%s219 + $0xd0] sm:$0xff]
      %v252 = vld [vmem:[%s219 + $0xd8] sm:$0xff]
      %v253 = vld [vmem:[%s219 + $0xe0] sm:$0xff]
      %v254 = vld [vmem:[%s219 + $0xe8] sm:$0xff]
      %v255 = vld [vmem:[%s219 + $0xf0] sm:$0xff]
      %v256 = vld [vmem:[%s219 + $0xf8] sm:$0xff]
      %v257 = vld [vmem:[%s219 + $0x100] sm:$0xff]
      %v258 = vld [vmem:[%s219 + $0x108] sm:$0xff]
      %v259 = vld [vmem:[%s219 + $0x110] sm:$0xff]
      %v260 = vld [vmem:[%s219 + $0x118] sm:$0xff]
      %v261 = vld [vmem:[%s219 + $0x120] sm:$0xff]
      %v262 = vld [vmem:[%s219 + $0x128] sm:$0xff]
      %v263 = vld [vmem:[%s219 + $0x130] sm:$0xff]
      %v264 = vld [vmem:[%s219 + $0x138] sm:$0xff]
      %v265 = vld [vmem:[%s219 + $0x140] sm:$0xff]
      %v266 = vld [vmem:[%s219 + $0x148] sm:$0xff]
      %v267 = vld [vmem:[%s219 + $0x150] sm:$0xff]
      %v268 = vld [vmem:[%s219 + $0x158] sm:$0xff]
      %v269 = vld [vmem:[%s219 + $0x160] sm:$0xff]
      %v270 = vld [vmem:[%s219 + $0x168] sm:$0xff]
      %v271 = vld [vmem:[%s219 + $0x170] sm:$0xff]
      %v272 = vld [vmem:[%s219 + $0x178] sm:$0xff]
      %v273 = vld [vmem:[%s219 + $0x180] sm:$0xff]
      %v274 = vld [vmem:[%s219 + $0x188] sm:$0xff]
      %v275 = vld [vmem:[%s219 + $0x190] sm:$0xff]
      %v276 = vld [vmem:[%s219 + $0x198] sm:$0xff]
      %v277 = vld [vmem:[%s219 + $0x1a0] sm:$0xff]
      %v278 = vld [vmem:[%s219 + $0x1a8] sm:$0xff]
      %v279 = vld [vmem:[%s219 + $0x1b0] sm:$0xff]
      %v280 = vld [vmem:[%s219 + $0x1b8] sm:$0xff]
      %v281 = vld [vmem:[%s219 + $0x1c0] sm:$0xff]
      %v282 = vld [vmem:[%s219 + $0x1c8] sm:$0xff]
      %v283 = vld [vmem:[%s219 + $0x1d0] sm:$0xff]
      %v284 = vld [vmem:[%s219 + $0x1d8] sm:$0xff]
      %v285 = vld [vmem:[%s219 + $0x1e0] sm:$0xff]
      %v286 = vld [vmem:[%s219 + $0x1e8] sm:$0xff]
      %v287 = vld [vmem:[%s219 + $0x1f0] sm:$0xff]
      %v288 = vld [vmem:[%s219 + $0x1f8] sm:$0xff]
      %v289 = vld [vmem:[%s219 + $0x200] sm:$0xff]
      %v290 = vld [vmem:[%s219 + $0x208] sm:$0xff]
      %v291 = vld [vmem:[%s219 + $0x210] sm:$0xff]
      %v292 = vld [vmem:[%s219 + $0x218] sm:$0xff]
      %v293 = vld [vmem:[%s219 + $0x220] sm:$0xff]
      %v294 = vld [vmem:[%s219 + $0x228] sm:$0xff]
      %v295 = vld [vmem:[%s219 + $0x230] sm:$0xff]
      %v296 = vld [vmem:[%s219 + $0x238] sm:$0xff]
      %v297 = vld [vmem:[%s219 + $0x240] sm:$0xff]
      %v298 = vld [vmem:[%s219 + $0x248] sm:$0xff]
      %v299 = vld [vmem:[%s219 + $0x250] sm:$0xff]
      %v300 = vld [vmem:[%s219 + $0x258] sm:$0xff]
      %v301 = vld [vmem:[%s219 + $0x260] sm:$0xff]
      %v302 = vld [vmem:[%s219 + $0x268] sm:$0xff]
      %v303 = vld [vmem:[%s219 + $0x270] sm:$0xff]
      %v304 = vld [vmem:[%s219 + $0x278] sm:$0xff]
      %v305 = vld [vmem:[%s219 + $0x280] sm:$0xff]
      %v306 = vld [vmem:[%s219 + $0x288] sm:$0xff]
      %v307 = vld [vmem:[%s219 + $0x290] sm:$0xff]
      %v308 = vld [vmem:[%s219 + $0x298] sm:$0xff]
      %v309 = vld [vmem:[%s219 + $0x2a0] sm:$0xff]
      %v310 = vld [vmem:[%s219 + $0x2a8] sm:$0xff]
      %v311 = vld [vmem:[%s219 + $0x2b0] sm:$0xff]
      %v312 = vld [vmem:[%s219 + $0x2b8] sm:$0xff]
      %v313 = vld [vmem:[%s219 + $0x2c0] sm:$0xff]
      %v314 = vld [vmem:[%s219 + $0x2c8] sm:$0xff]
      %v315 = vld [vmem:[%s219 + $0x2d0] sm:$0xff]
      %v316 = vld [vmem:[%s219 + $0x2d8] sm:$0xff]
      %v317 = vld [vmem:[%s219 + $0x2e0] sm:$0xff]
      %v318 = vld [vmem:[%s219 + $0x2e8] sm:$0xff]
      %v319 = vld [vmem:[%s219 + $0x2f0] sm:$0xff]
      %v320 = vld [vmem:[%s219 + $0x2f8] sm:$0xff]
      %v321 = vld [vmem:[%s219 + $0x300] sm:$0xff]
      %v322 = vld [vmem:[%s219 + $0x308] sm:$0xff]
      %v323 = vld [vmem:[%s219 + $0x310] sm:$0xff]
      %v324 = vld [vmem:[%s219 + $0x318] sm:$0xff]
      %v325 = vld [vmem:[%s219 + $0x320] sm:$0xff]
      %v326 = vld [vmem:[%s219 + $0x328] sm:$0xff]
      %v327 = vld [vmem:[%s219 + $0x330] sm:$0xff]
      %v328 = vld [vmem:[%s219 + $0x338] sm:$0xff]
      %v329 = vld [vmem:[%s219 + $0x340] sm:$0xff]
      %v330 = vld [vmem:[%s219 + $0x348] sm:$0xff]
      %v331 = vld [vmem:[%s219 + $0x350] sm:$0xff]
      %v332 = vld [vmem:[%s219 + $0x358] sm:$0xff]
      %v333 = vld [vmem:[%s219 + $0x360] sm:$0xff]
      %v334 = vld [vmem:[%s219 + $0x368] sm:$0xff]
      %v335 = vld [vmem:[%s219 + $0x370] sm:$0xff]
      %v336 = vld [vmem:[%s219 + $0x378] sm:$0xff]
      %v337 = vld [vmem:[%s1] sm:$0xff]
      %v338 = vld [vmem:[%s1 + $0x8] sm:$0xff]
      %vm339 = vcmask 130048
      %v341 = vsel %vm339, %v225, 0
      %v344 = vsel %vm339, %v226, 0
      %v347 = vsel %vm339, %v227, 0
      %v350 = vsel %vm339, %v228, 0
      %v353 = vsel %vm339, %v229, 0
      %v356 = vsel %vm339, %v230, 0
      %v359 = vsel %vm339, %v231, 0
      %v362 = vsel %vm339, %v232, 0
      %v365 = vsel %vm339, %v233, 0
      %v368 = vsel %vm339, %v234, 0
      %v371 = vsel %vm339, %v235, 0
      %v374 = vsel %vm339, %v236, 0
      %v377 = vsel %vm339, %v237, 0
      %v380 = vsel %vm339, %v238, 0
      %v383 = vsel %vm339, %v239, 0
      %v386 = vsel %vm339, %v240, 0
      %v389 = vsel %vm339, %v241, 0
      %v392 = vsel %vm339, %v242, 0
      %v395 = vsel %vm339, %v243, 0
      %v398 = vsel %vm339, %v244, 0
      %v401 = vsel %vm339, %v245, 0
      %v404 = vsel %vm339, %v246, 0
      %v407 = vsel %vm339, %v247, 0
      %v410 = vsel %vm339, %v248, 0
      %v413 = vsel %vm339, %v249, 0
      %v416 = vsel %vm339, %v250, 0
      %v419 = vsel %vm339, %v251, 0
      %v422 = vsel %vm339, %v252, 0
      %v425 = vsel %vm339, %v253, 0
      %v428 = vsel %vm339, %v254, 0
      %v431 = vsel %vm339, %v255, 0
      %v434 = vsel %vm339, %v256, 0
      %v437 = vsel %vm339, %v257, 0
      %v440 = vsel %vm339, %v258, 0
      %v443 = vsel %vm339, %v259, 0
      %v446 = vsel %vm339, %v260, 0
      %v449 = vsel %vm339, %v261, 0
      %v452 = vsel %vm339, %v262, 0
      %v455 = vsel %vm339, %v263, 0
      %v458 = vsel %vm339, %v264, 0
      %v461 = vsel %vm339, %v265, 0
      %v464 = vsel %vm339, %v266, 0
      %v467 = vsel %vm339, %v267, 0
      %v470 = vsel %vm339, %v268, 0
      %v473 = vsel %vm339, %v269, 0
      %v476 = vsel %vm339, %v270, 0
      %v479 = vsel %vm339, %v271, 0
      %v482 = vsel %vm339, %v272, 0
      %v485 = vsel %vm339, %v273, 0
      %v488 = vsel %vm339, %v274, 0
      %v491 = vsel %vm339, %v275, 0
      %v494 = vsel %vm339, %v276, 0
      %v497 = vsel %vm339, %v277, 0
      %v500 = vsel %vm339, %v278, 0
      %v503 = vsel %vm339, %v279, 0
      %v506 = vsel %vm339, %v280, 0
      %v509 = vsel %vm339, %v281, 0
      %v512 = vsel %vm339, %v282, 0
      %v515 = vsel %vm339, %v283, 0
      %v518 = vsel %vm339, %v284, 0
      %v521 = vsel %vm339, %v285, 0
      %v524 = vsel %vm339, %v286, 0
      %v527 = vsel %vm339, %v287, 0
      %v530 = vsel %vm339, %v288, 0
      %v533 = vsel %vm339, %v289, 0
      %v536 = vsel %vm339, %v290, 0
      %v539 = vsel %vm339, %v291, 0
      %v542 = vsel %vm339, %v292, 0
      %v545 = vsel %vm339, %v293, 0
      %v548 = vsel %vm339, %v294, 0
      %v551 = vsel %vm339, %v295, 0
      %v554 = vsel %vm339, %v296, 0
      %v557 = vsel %vm339, %v297, 0
      %v560 = vsel %vm339, %v298, 0
      %v563 = vsel %vm339, %v299, 0
      %v566 = vsel %vm339, %v300, 0
      %v569 = vsel %vm339, %v301, 0
      %v572 = vsel %vm339, %v302, 0
      %v575 = vsel %vm339, %v303, 0
      %v578 = vsel %vm339, %v304, 0
      %v581 = vsel %vm339, %v305, 0
      %v584 = vsel %vm339, %v306, 0
      %v587 = vsel %vm339, %v307, 0
      %v590 = vsel %vm339, %v308, 0
      %v593 = vsel %vm339, %v309, 0
      %v596 = vsel %vm339, %v310, 0
      %v599 = vsel %vm339, %v311, 0
      %v602 = vsel %vm339, %v312, 0
      %v605 = vsel %vm339, %v313, 0
      %v608 = vsel %vm339, %v314, 0
      %v611 = vsel %vm339, %v315, 0
      %v614 = vsel %vm339, %v316, 0
      %v617 = vsel %vm339, %v317, 0
      %v620 = vsel %vm339, %v318, 0
      %v623 = vsel %vm339, %v319, 0
      %v626 = vsel %vm339, %v320, 0
      %v629 = vsel %vm339, %v321, 0
      %v632 = vsel %vm339, %v322, 0
      %v635 = vsel %vm339, %v323, 0
      %v638 = vsel %vm339, %v324, 0
      %v641 = vsel %vm339, %v325, 0
      %v644 = vsel %vm339, %v326, 0
      %v647 = vsel %vm339, %v327, 0
      %v650 = vsel %vm339, %v328, 0
      %v653 = vsel %vm339, %v329, 0
      %v656 = vsel %vm339, %v330, 0
      %v659 = vsel %vm339, %v331, 0
      %v662 = vsel %vm339, %v332, 0
      %v665 = vsel %vm339, %v333, 0
      %v668 = vsel %vm339, %v334, 0
      %v671 = vsel %vm339, %v335, 0
      %v674 = vsel %vm339, %v336, 0
      %676 = vmatprep.subr.mxu0 0.0
      %677 = vmatpush1.msra.mxu0 0.0
      %678 = vmatprep.subr.mxu0 0.0
      %679 = vmatpush1.msra.mxu0 0.0
      %680 = vmatprep.subr.mxu0 0.0
      %681 = vmatpush1.msra.mxu0 0.0
      %682 = vmatprep.subr.mxu0 0.0
      %683 = vmatpush1.msra.mxu0 0.0
      %684 = vmatprep.subr.mxu0 0.0
      %685 = vmatpush1.msra.mxu0 0.0
      %686 = vmatprep.subr.mxu0 0.0
      %687 = vmatpush1.msra.mxu0 0.0
      %688 = vmatprep.subr.mxu0 0.0
      %689 = vmatpush1.msra.mxu0 0.0
      %690 = vmatprep.subr.mxu0 0.0
      %691 = vmatpush1.msra.mxu0 0.0
      %692 = vmatprep.subr.mxu0 0.0
      %693 = vmatpush1.msra.mxu0 0.0
      %694 = vmatprep.subr.mxu0 0.0
      %695 = vmatpush1.msra.mxu0 0.0
      %696 = vmatprep.subr.mxu0 0.0
      %697 = vmatpush1.msra.mxu0 0.0
      %698 = vmatprep.subr.mxu0 0.0
      %699 = vmatpush1.msra.mxu0 0.0
      %700 = vmatprep.subr.mxu0 0.0
      %701 = vmatpush1.msra.mxu0 0.0
      %702 = vmatprep.subr.mxu0 0.0
      %703 = vmatpush1.msra.mxu0 0.0
      %704 = vmatprep.subr.mxu0 0.0
      %705 = vmatpush1.msra.mxu0 %v338
      %706 = vmatprep.subr.mxu0 0.0
      %707 = vmatpush1.msra.mxu0 %v337
      %708 = vmatprep.subr.mxu0 0.0
      %709 = vmatpush2.msra.mxu0 0.0
      %710 = vmatprep.subr.mxu0 0.0
      %711 = vmatpush2.msra.mxu0 0.0
      %712 = vmatprep.subr.mxu0 0.0
      %713 = vmatpush2.msra.mxu0 0.0
      %714 = vmatprep.subr.mxu0 0.0
      %715 = vmatpush2.msra.mxu0 0.0
      %716 = vmatprep.subr.mxu0 0.0
      %717 = vmatpush2.msra.mxu0 0.0
      %718 = vmatprep.subr.mxu0 0.0
      %719 = vmatpush2.msra.mxu0 0.0
      %720 = vmatprep.subr.mxu0 0.0
      %721 = vmatpush2.msra.mxu0 0.0
      %722 = vmatprep.subr.mxu0 0.0
      %723 = vmatpush2.msra.mxu0 0.0
      %724 = vmatprep.subr.mxu0 0.0
      %725 = vmatpush2.msra.mxu0 0.0
      %726 = vmatprep.subr.mxu0 0.0
      %727 = vmatpush2.msra.mxu0 0.0
      %728 = vmatprep.subr.mxu0 0.0
      %729 = vmatpush2.msra.mxu0 0.0
      %730 = vmatprep.subr.mxu0 0.0
      %731 = vmatpush2.msra.mxu0 0.0
      %732 = vmatprep.subr.mxu0 0.0
      %733 = vmatpush2.msra.mxu0 0.0
      %734 = vmatprep.subr.mxu0 0.0
      %735 = vmatpush2.msra.mxu0 0.0
      %736 = vmatprep.subr.mxu0 0.0
      %737 = vmatpush2.msra.mxu0 0.0
      %738 = vmatprep.subr.mxu0 0.0
      %739 = vmatpush2.msra.mxu0 0.0
      %740 = vmatprep.mubr.f32.mxu0 0.0
      %741 = vmatmul.mubr.f32.gmra.mxu0 %v341
      %v742 = vpop.f32.mrf.mxu0
      %v743 = vadd.f32 0.0, %v742
      %v744 = vpop.f32.mrf.mxu0
      %745 = vmatprep.mubr.f32.mxu0 0.0
      %746 = vmatmul.mubr.f32.gmra.mxu0 %v344
      %v747 = vpop.f32.mrf.mxu0
      %v748 = vadd.f32 0.0, %v747
      %v749 = vpop.f32.mrf.mxu0
      %750 = vmatprep.mubr.f32.mxu0 0.0
      %751 = vmatmul.mubr.f32.gmra.mxu0 %v347
      %v752 = vpop.f32.mrf.mxu0
      %v753 = vadd.f32 0.0, %v752
      %v754 = vpop.f32.mrf.mxu0
      %755 = vmatprep.mubr.f32.mxu0 0.0
      %756 = vmatmul.mubr.f32.gmra.mxu0 %v350
      %v757 = vpop.f32.mrf.mxu0
      %v758 = vadd.f32 0.0, %v757
      %v759 = vpop.f32.mrf.mxu0
      %760 = vmatprep.mubr.f32.mxu0 0.0
      %761 = vmatmul.mubr.f32.gmra.mxu0 %v353
      %v762 = vpop.f32.mrf.mxu0
      %v763 = vadd.f32 0.0, %v762
      %v764 = vpop.f32.mrf.mxu0
      %765 = vmatprep.mubr.f32.mxu0 0.0
      %766 = vmatmul.mubr.f32.gmra.mxu0 %v356
      %v767 = vpop.f32.mrf.mxu0
      %v768 = vadd.f32 0.0, %v767
      %v769 = vpop.f32.mrf.mxu0
      %770 = vmatprep.mubr.f32.mxu0 0.0
      %771 = vmatmul.mubr.f32.gmra.mxu0 %v359
      %v772 = vpop.f32.mrf.mxu0
      %v773 = vadd.f32 0.0, %v772
      %v774 = vpop.f32.mrf.mxu0
      %775 = vmatprep.mubr.f32.mxu0 0.0
      %776 = vmatmul.mubr.f32.gmra.mxu0 %v362
      %v777 = vpop.f32.mrf.mxu0
      %v778 = vadd.f32 0.0, %v777
      %v779 = vpop.f32.mrf.mxu0
      %780 = vmatprep.mubr.f32.mxu0 0.0
      %781 = vmatmul.mubr.f32.gmra.mxu0 %v365
      %v782 = vpop.f32.mrf.mxu0
      %v783 = vadd.f32 0.0, %v782
      %v784 = vpop.f32.mrf.mxu0
      %785 = vmatprep.mubr.f32.mxu0 0.0
      %786 = vmatmul.mubr.f32.gmra.mxu0 %v368
      %v787 = vpop.f32.mrf.mxu0
      %v788 = vadd.f32 0.0, %v787
      %v789 = vpop.f32.mrf.mxu0
      %790 = vmatprep.mubr.f32.mxu0 0.0
      %791 = vmatmul.mubr.f32.gmra.mxu0 %v371
      %v792 = vpop.f32.mrf.mxu0
      %v793 = vadd.f32 0.0, %v792
      %v794 = vpop.f32.mrf.mxu0
      %795 = vmatprep.mubr.f32.mxu0 0.0
      %796 = vmatmul.mubr.f32.gmra.mxu0 %v374
      %v797 = vpop.f32.mrf.mxu0
      %v798 = vadd.f32 0.0, %v797
      %v799 = vpop.f32.mrf.mxu0
      %800 = vmatprep.mubr.f32.mxu0 0.0
      %801 = vmatmul.mubr.f32.gmra.mxu0 %v377
      %v802 = vpop.f32.mrf.mxu0
      %v803 = vadd.f32 0.0, %v802
      %v804 = vpop.f32.mrf.mxu0
      %805 = vmatprep.mubr.f32.mxu0 0.0
      %806 = vmatmul.mubr.f32.gmra.mxu0 %v380
      %v807 = vpop.f32.mrf.mxu0
      %v808 = vadd.f32 0.0, %v807
      %v809 = vpop.f32.mrf.mxu0
      %810 = vmatprep.mubr.f32.mxu0 0.0
      %811 = vmatmul.mubr.f32.gmra.mxu0 %v383
      %v812 = vpop.f32.mrf.mxu0
      %v813 = vadd.f32 0.0, %v812
      %v814 = vpop.f32.mrf.mxu0
      %815 = vmatprep.mubr.f32.mxu0 0.0
      %816 = vmatmul.mubr.f32.gmra.mxu0 %v386
      %v817 = vpop.f32.mrf.mxu0
      %v818 = vadd.f32 0.0, %v817
      %v819 = vpop.f32.mrf.mxu0
      %820 = vmatprep.mubr.f32.mxu0 0.0
      %821 = vmatmul.mubr.f32.gmra.mxu0 %v389
      %v822 = vpop.f32.mrf.mxu0
      %v823 = vadd.f32 0.0, %v822
      %v824 = vpop.f32.mrf.mxu0
      %825 = vmatprep.mubr.f32.mxu0 0.0
      %826 = vmatmul.mubr.f32.gmra.mxu0 %v392
      %v827 = vpop.f32.mrf.mxu0
      %v828 = vadd.f32 0.0, %v827
      %v829 = vpop.f32.mrf.mxu0
      %830 = vmatprep.mubr.f32.mxu0 0.0
      %831 = vmatmul.mubr.f32.gmra.mxu0 %v395
      %v832 = vpop.f32.mrf.mxu0
      %v833 = vadd.f32 0.0, %v832
      %v834 = vpop.f32.mrf.mxu0
      %835 = vmatprep.mubr.f32.mxu0 0.0
      %836 = vmatmul.mubr.f32.gmra.mxu0 %v398
      %v837 = vpop.f32.mrf.mxu0
      %v838 = vadd.f32 0.0, %v837
      %v839 = vpop.f32.mrf.mxu0
      %840 = vmatprep.mubr.f32.mxu0 0.0
      %841 = vmatmul.mubr.f32.gmra.mxu0 %v401
      %v842 = vpop.f32.mrf.mxu0
      %v843 = vadd.f32 0.0, %v842
      %v844 = vpop.f32.mrf.mxu0
      %845 = vmatprep.mubr.f32.mxu0 0.0
      %846 = vmatmul.mubr.f32.gmra.mxu0 %v404
      %v847 = vpop.f32.mrf.mxu0
      %v848 = vadd.f32 0.0, %v847
      %v849 = vpop.f32.mrf.mxu0
      %850 = vmatprep.mubr.f32.mxu0 0.0
      %851 = vmatmul.mubr.f32.gmra.mxu0 %v407
      %v852 = vpop.f32.mrf.mxu0
      %v853 = vadd.f32 0.0, %v852
      %v854 = vpop.f32.mrf.mxu0
      %855 = vmatprep.mubr.f32.mxu0 0.0
      %856 = vmatmul.mubr.f32.gmra.mxu0 %v410
      %v857 = vpop.f32.mrf.mxu0
      %v858 = vadd.f32 0.0, %v857
      %v859 = vpop.f32.mrf.mxu0
      %860 = vmatprep.mubr.f32.mxu0 0.0
      %861 = vmatmul.mubr.f32.gmra.mxu0 %v413
      %v862 = vpop.f32.mrf.mxu0
      %v863 = vadd.f32 0.0, %v862
      %v864 = vpop.f32.mrf.mxu0
      %865 = vmatprep.mubr.f32.mxu0 0.0
      %866 = vmatmul.mubr.f32.gmra.mxu0 %v416
      %v867 = vpop.f32.mrf.mxu0
      %v868 = vadd.f32 0.0, %v867
      %v869 = vpop.f32.mrf.mxu0
      %870 = vmatprep.mubr.f32.mxu0 0.0
      %871 = vmatmul.mubr.f32.gmra.mxu0 %v419
      %v872 = vpop.f32.mrf.mxu0
      %v873 = vadd.f32 0.0, %v872
      %v874 = vpop.f32.mrf.mxu0
      %875 = vmatprep.mubr.f32.mxu0 0.0
      %876 = vmatmul.mubr.f32.gmra.mxu0 %v422
      %v877 = vpop.f32.mrf.mxu0
      %v878 = vadd.f32 0.0, %v877
      %v879 = vpop.f32.mrf.mxu0
      %880 = vmatprep.mubr.f32.mxu0 0.0
      %881 = vmatmul.mubr.f32.gmra.mxu0 %v425
      %v882 = vpop.f32.mrf.mxu0
      %v883 = vadd.f32 0.0, %v882
      %v884 = vpop.f32.mrf.mxu0
      %885 = vmatprep.mubr.f32.mxu0 0.0
      %886 = vmatmul.mubr.f32.gmra.mxu0 %v428
      %v887 = vpop.f32.mrf.mxu0
      %v888 = vadd.f32 0.0, %v887
      %v889 = vpop.f32.mrf.mxu0
      %890 = vmatprep.mubr.f32.mxu0 0.0
      %891 = vmatmul.mubr.f32.gmra.mxu0 %v431
      %v892 = vpop.f32.mrf.mxu0
      %v893 = vadd.f32 0.0, %v892
      %v894 = vpop.f32.mrf.mxu0
      %895 = vmatprep.mubr.f32.mxu0 0.0
      %896 = vmatmul.mubr.f32.gmra.mxu0 %v434
      %v897 = vpop.f32.mrf.mxu0
      %v898 = vadd.f32 0.0, %v897
      %v899 = vpop.f32.mrf.mxu0
      %900 = vmatprep.mubr.f32.mxu0 0.0
      %901 = vmatmul.mubr.f32.gmra.mxu0 %v437
      %v902 = vpop.f32.mrf.mxu0
      %v903 = vadd.f32 0.0, %v902
      %v904 = vpop.f32.mrf.mxu0
      %905 = vmatprep.mubr.f32.mxu0 0.0
      %906 = vmatmul.mubr.f32.gmra.mxu0 %v440
      %v907 = vpop.f32.mrf.mxu0
      %v908 = vadd.f32 0.0, %v907
      %v909 = vpop.f32.mrf.mxu0
      %910 = vmatprep.mubr.f32.mxu0 0.0
      %911 = vmatmul.mubr.f32.gmra.mxu0 %v443
      %v912 = vpop.f32.mrf.mxu0
      %v913 = vadd.f32 0.0, %v912
      %v914 = vpop.f32.mrf.mxu0
      %915 = vmatprep.mubr.f32.mxu0 0.0
      %916 = vmatmul.mubr.f32.gmra.mxu0 %v446
      %v917 = vpop.f32.mrf.mxu0
      %v918 = vadd.f32 0.0, %v917
      %v919 = vpop.f32.mrf.mxu0
      %920 = vmatprep.mubr.f32.mxu0 0.0
      %921 = vmatmul.mubr.f32.gmra.mxu0 %v449
      %v922 = vpop.f32.mrf.mxu0
      %v923 = vadd.f32 0.0, %v922
      %v924 = vpop.f32.mrf.mxu0
      %925 = vmatprep.mubr.f32.mxu0 0.0
      %926 = vmatmul.mubr.f32.gmra.mxu0 %v452
      %v927 = vpop.f32.mrf.mxu0
      %v928 = vadd.f32 0.0, %v927
      %v929 = vpop.f32.mrf.mxu0
      %930 = vmatprep.mubr.f32.mxu0 0.0
      %931 = vmatmul.mubr.f32.gmra.mxu0 %v455
      %v932 = vpop.f32.mrf.mxu0
      %v933 = vadd.f32 0.0, %v932
      %v934 = vpop.f32.mrf.mxu0
      %935 = vmatprep.mubr.f32.mxu0 0.0
      %936 = vmatmul.mubr.f32.gmra.mxu0 %v458
      %v937 = vpop.f32.mrf.mxu0
      %v938 = vadd.f32 0.0, %v937
      %v939 = vpop.f32.mrf.mxu0
      %940 = vmatprep.mubr.f32.mxu0 0.0
      %941 = vmatmul.mubr.f32.gmra.mxu0 %v461
      %v942 = vpop.f32.mrf.mxu0
      %v943 = vadd.f32 0.0, %v942
      %v944 = vpop.f32.mrf.mxu0
      %945 = vmatprep.mubr.f32.mxu0 0.0
      %946 = vmatmul.mubr.f32.gmra.mxu0 %v464
      %v947 = vpop.f32.mrf.mxu0
      %v948 = vadd.f32 0.0, %v947
      %v949 = vpop.f32.mrf.mxu0
      %950 = vmatprep.mubr.f32.mxu0 0.0
      %951 = vmatmul.mubr.f32.gmra.mxu0 %v467
      %v952 = vpop.f32.mrf.mxu0
      %v953 = vadd.f32 0.0, %v952
      %v954 = vpop.f32.mrf.mxu0
      %955 = vmatprep.mubr.f32.mxu0 0.0
      %956 = vmatmul.mubr.f32.gmra.mxu0 %v470
      %v957 = vpop.f32.mrf.mxu0
      %v958 = vadd.f32 0.0, %v957
      %v959 = vpop.f32.mrf.mxu0
      %960 = vmatprep.mubr.f32.mxu0 0.0
      %961 = vmatmul.mubr.f32.gmra.mxu0 %v473
      %v962 = vpop.f32.mrf.mxu0
      %v963 = vadd.f32 0.0, %v962
      %v964 = vpop.f32.mrf.mxu0
      %965 = vmatprep.mubr.f32.mxu0 0.0
      %966 = vmatmul.mubr.f32.gmra.mxu0 %v476
      %v967 = vpop.f32.mrf.mxu0
      %v968 = vadd.f32 0.0, %v967
      %v969 = vpop.f32.mrf.mxu0
      %970 = vmatprep.mubr.f32.mxu0 0.0
      %971 = vmatmul.mubr.f32.gmra.mxu0 %v479
      %v972 = vpop.f32.mrf.mxu0
      %v973 = vadd.f32 0.0, %v972
      %v974 = vpop.f32.mrf.mxu0
      %975 = vmatprep.mubr.f32.mxu0 0.0
      %976 = vmatmul.mubr.f32.gmra.mxu0 %v482
      %v977 = vpop.f32.mrf.mxu0
      %v978 = vadd.f32 0.0, %v977
      %v979 = vpop.f32.mrf.mxu0
      %980 = vmatprep.mubr.f32.mxu0 0.0
      %981 = vmatmul.mubr.f32.gmra.mxu0 %v485
      %v982 = vpop.f32.mrf.mxu0
      %v983 = vadd.f32 0.0, %v982
      %v984 = vpop.f32.mrf.mxu0
      %985 = vmatprep.mubr.f32.mxu0 0.0
      %986 = vmatmul.mubr.f32.gmra.mxu0 %v488
      %v987 = vpop.f32.mrf.mxu0
      %v988 = vadd.f32 0.0, %v987
      %v989 = vpop.f32.mrf.mxu0
      %990 = vmatprep.mubr.f32.mxu0 0.0
      %991 = vmatmul.mubr.f32.gmra.mxu0 %v491
      %v992 = vpop.f32.mrf.mxu0
      %v993 = vadd.f32 0.0, %v992
      %v994 = vpop.f32.mrf.mxu0
      %995 = vmatprep.mubr.f32.mxu0 0.0
      %996 = vmatmul.mubr.f32.gmra.mxu0 %v494
      %v997 = vpop.f32.mrf.mxu0
      %v998 = vadd.f32 0.0, %v997
      %v999 = vpop.f32.mrf.mxu0
      %1000 = vmatprep.mubr.f32.mxu0 0.0
      %1001 = vmatmul.mubr.f32.gmra.mxu0 %v497
      %v1002 = vpop.f32.mrf.mxu0
      %v1003 = vadd.f32 0.0, %v1002
      %v1004 = vpop.f32.mrf.mxu0
      %1005 = vmatprep.mubr.f32.mxu0 0.0
      %1006 = vmatmul.mubr.f32.gmra.mxu0 %v500
      %v1007 = vpop.f32.mrf.mxu0
      %v1008 = vadd.f32 0.0, %v1007
      %v1009 = vpop.f32.mrf.mxu0
      %1010 = vmatprep.mubr.f32.mxu0 0.0
      %1011 = vmatmul.mubr.f32.gmra.mxu0 %v503
      %v1012 = vpop.f32.mrf.mxu0
      %v1013 = vadd.f32 0.0, %v1012
      %v1014 = vpop.f32.mrf.mxu0
      %1015 = vmatprep.mubr.f32.mxu0 0.0
      %1016 = vmatmul.mubr.f32.gmra.mxu0 %v506
      %v1017 = vpop.f32.mrf.mxu0
      %v1018 = vadd.f32 0.0, %v1017
      %v1019 = vpop.f32.mrf.mxu0
      %1020 = vmatprep.mubr.f32.mxu0 0.0
      %1021 = vmatmul.mubr.f32.gmra.mxu0 %v509
      %v1022 = vpop.f32.mrf.mxu0
      %v1023 = vadd.f32 0.0, %v1022
      %v1024 = vpop.f32.mrf.mxu0
      %1025 = vmatprep.mubr.f32.mxu0 0.0
      %1026 = vmatmul.mubr.f32.gmra.mxu0 %v512
      %v1027 = vpop.f32.mrf.mxu0
      %v1028 = vadd.f32 0.0, %v1027
      %v1029 = vpop.f32.mrf.mxu0
      %1030 = vmatprep.mubr.f32.mxu0 0.0
      %1031 = vmatmul.mubr.f32.gmra.mxu0 %v515
      %v1032 = vpop.f32.mrf.mxu0
      %v1033 = vadd.f32 0.0, %v1032
      %v1034 = vpop.f32.mrf.mxu0
      %1035 = vmatprep.mubr.f32.mxu0 0.0
      %1036 = vmatmul.mubr.f32.gmra.mxu0 %v518
      %v1037 = vpop.f32.mrf.mxu0
      %v1038 = vadd.f32 0.0, %v1037
      %v1039 = vpop.f32.mrf.mxu0
      %1040 = vmatprep.mubr.f32.mxu0 0.0
      %1041 = vmatmul.mubr.f32.gmra.mxu0 %v521
      %v1042 = vpop.f32.mrf.mxu0
      %v1043 = vadd.f32 0.0, %v1042
      %v1044 = vpop.f32.mrf.mxu0
      %1045 = vmatprep.mubr.f32.mxu0 0.0
      %1046 = vmatmul.mubr.f32.gmra.mxu0 %v524
      %v1047 = vpop.f32.mrf.mxu0
      %v1048 = vadd.f32 0.0, %v1047
      %v1049 = vpop.f32.mrf.mxu0
      %1050 = vmatprep.mubr.f32.mxu0 0.0
      %1051 = vmatmul.mubr.f32.gmra.mxu0 %v527
      %v1052 = vpop.f32.mrf.mxu0
      %v1053 = vadd.f32 0.0, %v1052
      %v1054 = vpop.f32.mrf.mxu0
      %1055 = vmatprep.mubr.f32.mxu0 0.0
      %1056 = vmatmul.mubr.f32.gmra.mxu0 %v530
      %v1057 = vpop.f32.mrf.mxu0
      %v1058 = vadd.f32 0.0, %v1057
      %v1059 = vpop.f32.mrf.mxu0
      %1060 = vmatprep.mubr.f32.mxu0 0.0
      %1061 = vmatmul.mubr.f32.gmra.mxu0 %v533
      %v1062 = vpop.f32.mrf.mxu0
      %v1063 = vadd.f32 0.0, %v1062
      %v1064 = vpop.f32.mrf.mxu0
      %1065 = vmatprep.mubr.f32.mxu0 0.0
      %1066 = vmatmul.mubr.f32.gmra.mxu0 %v536
      %v1067 = vpop.f32.mrf.mxu0
      %v1068 = vadd.f32 0.0, %v1067
      %v1069 = vpop.f32.mrf.mxu0
      %1070 = vmatprep.mubr.f32.mxu0 0.0
      %1071 = vmatmul.mubr.f32.gmra.mxu0 %v539
      %v1072 = vpop.f32.mrf.mxu0
      %v1073 = vadd.f32 0.0, %v1072
      %v1074 = vpop.f32.mrf.mxu0
      %1075 = vmatprep.mubr.f32.mxu0 0.0
      %1076 = vmatmul.mubr.f32.gmra.mxu0 %v542
      %v1077 = vpop.f32.mrf.mxu0
      %v1078 = vadd.f32 0.0, %v1077
      %v1079 = vpop.f32.mrf.mxu0
      %1080 = vmatprep.mubr.f32.mxu0 0.0
      %1081 = vmatmul.mubr.f32.gmra.mxu0 %v545
      %v1082 = vpop.f32.mrf.mxu0
      %v1083 = vadd.f32 0.0, %v1082
      %v1084 = vpop.f32.mrf.mxu0
      %1085 = vmatprep.mubr.f32.mxu0 0.0
      %1086 = vmatmul.mubr.f32.gmra.mxu0 %v548
      %v1087 = vpop.f32.mrf.mxu0
      %v1088 = vadd.f32 0.0, %v1087
      %v1089 = vpop.f32.mrf.mxu0
      %1090 = vmatprep.mubr.f32.mxu0 0.0
      %1091 = vmatmul.mubr.f32.gmra.mxu0 %v551
      %v1092 = vpop.f32.mrf.mxu0
      %v1093 = vadd.f32 0.0, %v1092
      %v1094 = vpop.f32.mrf.mxu0
      %1095 = vmatprep.mubr.f32.mxu0 0.0
      %1096 = vmatmul.mubr.f32.gmra.mxu0 %v554
      %v1097 = vpop.f32.mrf.mxu0
      %v1098 = vadd.f32 0.0, %v1097
      %v1099 = vpop.f32.mrf.mxu0
      %1100 = vmatprep.mubr.f32.mxu0 0.0
      %1101 = vmatmul.mubr.f32.gmra.mxu0 %v557
      %v1102 = vpop.f32.mrf.mxu0
      %v1103 = vadd.f32 0.0, %v1102
      %v1104 = vpop.f32.mrf.mxu0
      %1105 = vmatprep.mubr.f32.mxu0 0.0
      %1106 = vmatmul.mubr.f32.gmra.mxu0 %v560
      %v1107 = vpop.f32.mrf.mxu0
      %v1108 = vadd.f32 0.0, %v1107
      %v1109 = vpop.f32.mrf.mxu0
      %1110 = vmatprep.mubr.f32.mxu0 0.0
      %1111 = vmatmul.mubr.f32.gmra.mxu0 %v563
      %v1112 = vpop.f32.mrf.mxu0
      %v1113 = vadd.f32 0.0, %v1112
      %v1114 = vpop.f32.mrf.mxu0
      %1115 = vmatprep.mubr.f32.mxu0 0.0
      %1116 = vmatmul.mubr.f32.gmra.mxu0 %v566
      %v1117 = vpop.f32.mrf.mxu0
      %v1118 = vadd.f32 0.0, %v1117
      %v1119 = vpop.f32.mrf.mxu0
      %1120 = vmatprep.mubr.f32.mxu0 0.0
      %1121 = vmatmul.mubr.f32.gmra.mxu0 %v569
      %v1122 = vpop.f32.mrf.mxu0
      %v1123 = vadd.f32 0.0, %v1122
      %v1124 = vpop.f32.mrf.mxu0
      %1125 = vmatprep.mubr.f32.mxu0 0.0
      %1126 = vmatmul.mubr.f32.gmra.mxu0 %v572
      %v1127 = vpop.f32.mrf.mxu0
      %v1128 = vadd.f32 0.0, %v1127
      %v1129 = vpop.f32.mrf.mxu0
      %1130 = vmatprep.mubr.f32.mxu0 0.0
      %1131 = vmatmul.mubr.f32.gmra.mxu0 %v575
      %v1132 = vpop.f32.mrf.mxu0
      %v1133 = vadd.f32 0.0, %v1132
      %v1134 = vpop.f32.mrf.mxu0
      %1135 = vmatprep.mubr.f32.mxu0 0.0
      %1136 = vmatmul.mubr.f32.gmra.mxu0 %v578
      %v1137 = vpop.f32.mrf.mxu0
      %v1138 = vadd.f32 0.0, %v1137
      %v1139 = vpop.f32.mrf.mxu0
      %1140 = vmatprep.mubr.f32.mxu0 0.0
      %1141 = vmatmul.mubr.f32.gmra.mxu0 %v581
      %v1142 = vpop.f32.mrf.mxu0
      %v1143 = vadd.f32 0.0, %v1142
      %v1144 = vpop.f32.mrf.mxu0
      %1145 = vmatprep.mubr.f32.mxu0 0.0
      %1146 = vmatmul.mubr.f32.gmra.mxu0 %v584
      %v1147 = vpop.f32.mrf.mxu0
      %v1148 = vadd.f32 0.0, %v1147
      %v1149 = vpop.f32.mrf.mxu0
      %1150 = vmatprep.mubr.f32.mxu0 0.0
      %1151 = vmatmul.mubr.f32.gmra.mxu0 %v587
      %v1152 = vpop.f32.mrf.mxu0
      %v1153 = vadd.f32 0.0, %v1152
      %v1154 = vpop.f32.mrf.mxu0
      %1155 = vmatprep.mubr.f32.mxu0 0.0
      %1156 = vmatmul.mubr.f32.gmra.mxu0 %v590
      %v1157 = vpop.f32.mrf.mxu0
      %v1158 = vadd.f32 0.0, %v1157
      %v1159 = vpop.f32.mrf.mxu0
      %1160 = vmatprep.mubr.f32.mxu0 0.0
      %1161 = vmatmul.mubr.f32.gmra.mxu0 %v593
      %v1162 = vpop.f32.mrf.mxu0
      %v1163 = vadd.f32 0.0, %v1162
      %v1164 = vpop.f32.mrf.mxu0
      %1165 = vmatprep.mubr.f32.mxu0 0.0
      %1166 = vmatmul.mubr.f32.gmra.mxu0 %v596
      %v1167 = vpop.f32.mrf.mxu0
      %v1168 = vadd.f32 0.0, %v1167
      %v1169 = vpop.f32.mrf.mxu0
      %1170 = vmatprep.mubr.f32.mxu0 0.0
      %1171 = vmatmul.mubr.f32.gmra.mxu0 %v599
      %v1172 = vpop.f32.mrf.mxu0
      %v1173 = vadd.f32 0.0, %v1172
      %v1174 = vpop.f32.mrf.mxu0
      %1175 = vmatprep.mubr.f32.mxu0 0.0
      %1176 = vmatmul.mubr.f32.gmra.mxu0 %v602
      %v1177 = vpop.f32.mrf.mxu0
      %v1178 = vadd.f32 0.0, %v1177
      %v1179 = vpop.f32.mrf.mxu0
      %1180 = vmatprep.mubr.f32.mxu0 0.0
      %1181 = vmatmul.mubr.f32.gmra.mxu0 %v605
      %v1182 = vpop.f32.mrf.mxu0
      %v1183 = vadd.f32 0.0, %v1182
      %v1184 = vpop.f32.mrf.mxu0
      %1185 = vmatprep.mubr.f32.mxu0 0.0
      %1186 = vmatmul.mubr.f32.gmra.mxu0 %v608
      %v1187 = vpop.f32.mrf.mxu0
      %v1188 = vadd.f32 0.0, %v1187
      %v1189 = vpop.f32.mrf.mxu0
      %1190 = vmatprep.mubr.f32.mxu0 0.0
      %1191 = vmatmul.mubr.f32.gmra.mxu0 %v611
      %v1192 = vpop.f32.mrf.mxu0
      %v1193 = vadd.f32 0.0, %v1192
      %v1194 = vpop.f32.mrf.mxu0
      %1195 = vmatprep.mubr.f32.mxu0 0.0
      %1196 = vmatmul.mubr.f32.gmra.mxu0 %v614
      %v1197 = vpop.f32.mrf.mxu0
      %v1198 = vadd.f32 0.0, %v1197
      %v1199 = vpop.f32.mrf.mxu0
      %1200 = vmatprep.mubr.f32.mxu0 0.0
      %1201 = vmatmul.mubr.f32.gmra.mxu0 %v617
      %v1202 = vpop.f32.mrf.mxu0
      %v1203 = vadd.f32 0.0, %v1202
      %v1204 = vpop.f32.mrf.mxu0
      %1205 = vmatprep.mubr.f32.mxu0 0.0
      %1206 = vmatmul.mubr.f32.gmra.mxu0 %v620
      %v1207 = vpop.f32.mrf.mxu0
      %v1208 = vadd.f32 0.0, %v1207
      %v1209 = vpop.f32.mrf.mxu0
      %1210 = vmatprep.mubr.f32.mxu0 0.0
      %1211 = vmatmul.mubr.f32.gmra.mxu0 %v623
      %v1212 = vpop.f32.mrf.mxu0
      %v1213 = vadd.f32 0.0, %v1212
      %v1214 = vpop.f32.mrf.mxu0
      %1215 = vmatprep.mubr.f32.mxu0 0.0
      %1216 = vmatmul.mubr.f32.gmra.mxu0 %v626
      %v1217 = vpop.f32.mrf.mxu0
      %v1218 = vadd.f32 0.0, %v1217
      %v1219 = vpop.f32.mrf.mxu0
      %1220 = vmatprep.mubr.f32.mxu0 0.0
      %1221 = vmatmul.mubr.f32.gmra.mxu0 %v629
      %v1222 = vpop.f32.mrf.mxu0
      %v1223 = vadd.f32 0.0, %v1222
      %v1224 = vpop.f32.mrf.mxu0
      %1225 = vmatprep.mubr.f32.mxu0 0.0
      %1226 = vmatmul.mubr.f32.gmra.mxu0 %v632
      %v1227 = vpop.f32.mrf.mxu0
      %v1228 = vadd.f32 0.0, %v1227
      %v1229 = vpop.f32.mrf.mxu0
      %1230 = vmatprep.mubr.f32.mxu0 0.0
      %1231 = vmatmul.mubr.f32.gmra.mxu0 %v635
      %v1232 = vpop.f32.mrf.mxu0
      %v1233 = vadd.f32 0.0, %v1232
      %v1234 = vpop.f32.mrf.mxu0
      %1235 = vmatprep.mubr.f32.mxu0 0.0
      %1236 = vmatmul.mubr.f32.gmra.mxu0 %v638
      %v1237 = vpop.f32.mrf.mxu0
      %v1238 = vadd.f32 0.0, %v1237
      %v1239 = vpop.f32.mrf.mxu0
      %1240 = vmatprep.mubr.f32.mxu0 0.0
      %1241 = vmatmul.mubr.f32.gmra.mxu0 %v641
      %v1242 = vpop.f32.mrf.mxu0
      %v1243 = vadd.f32 0.0, %v1242
      %v1244 = vpop.f32.mrf.mxu0
      %1245 = vmatprep.mubr.f32.mxu0 0.0
      %1246 = vmatmul.mubr.f32.gmra.mxu0 %v644
      %v1247 = vpop.f32.mrf.mxu0
      %v1248 = vadd.f32 0.0, %v1247
      %v1249 = vpop.f32.mrf.mxu0
      %1250 = vmatprep.mubr.f32.mxu0 0.0
      %1251 = vmatmul.mubr.f32.gmra.mxu0 %v647
      %v1252 = vpop.f32.mrf.mxu0
      %v1253 = vadd.f32 0.0, %v1252
      %v1254 = vpop.f32.mrf.mxu0
      %1255 = vmatprep.mubr.f32.mxu0 0.0
      %1256 = vmatmul.mubr.f32.gmra.mxu0 %v650
      %v1257 = vpop.f32.mrf.mxu0
      %v1258 = vadd.f32 0.0, %v1257
      %v1259 = vpop.f32.mrf.mxu0
      %1260 = vmatprep.mubr.f32.mxu0 0.0
      %1261 = vmatmul.mubr.f32.gmra.mxu0 %v653
      %v1262 = vpop.f32.mrf.mxu0
      %v1263 = vadd.f32 0.0, %v1262
      %v1264 = vpop.f32.mrf.mxu0
      %1265 = vmatprep.mubr.f32.mxu0 0.0
      %1266 = vmatmul.mubr.f32.gmra.mxu0 %v656
      %v1267 = vpop.f32.mrf.mxu0
      %v1268 = vadd.f32 0.0, %v1267
      %v1269 = vpop.f32.mrf.mxu0
      %1270 = vmatprep.mubr.f32.mxu0 0.0
      %1271 = vmatmul.mubr.f32.gmra.mxu0 %v659
      %v1272 = vpop.f32.mrf.mxu0
      %v1273 = vadd.f32 0.0, %v1272
      %v1274 = vpop.f32.mrf.mxu0
      %1275 = vmatprep.mubr.f32.mxu0 0.0
      %1276 = vmatmul.mubr.f32.gmra.mxu0 %v662
      %v1277 = vpop.f32.mrf.mxu0
      %v1278 = vadd.f32 0.0, %v1277
      %v1279 = vpop.f32.mrf.mxu0
      %1280 = vmatprep.mubr.f32.mxu0 0.0
      %1281 = vmatmul.mubr.f32.gmra.mxu0 %v665
      %v1282 = vpop.f32.mrf.mxu0
      %v1283 = vadd.f32 0.0, %v1282
      %v1284 = vpop.f32.mrf.mxu0
      %1285 = vmatprep.mubr.f32.mxu0 0.0
      %1286 = vmatmul.mubr.f32.gmra.mxu0 %v668
      %v1287 = vpop.f32.mrf.mxu0
      %v1288 = vadd.f32 0.0, %v1287
      %v1289 = vpop.f32.mrf.mxu0
      %1290 = vmatprep.mubr.f32.mxu0 0.0
      %1291 = vmatmul.mubr.f32.gmra.mxu0 %v671
      %v1292 = vpop.f32.mrf.mxu0
      %v1293 = vadd.f32 0.0, %v1292
      %v1294 = vpop.f32.mrf.mxu0
      %1295 = vmatprep.mubr.f32.mxu0 0.0
      %1296 = vmatmul.mubr.f32.gmra.mxu0 %v674
      %v1297 = vpop.f32.mrf.mxu0
      %v1298 = vadd.f32 0.0, %v1297
      %v1299 = vpop.f32.mrf.mxu0
      %1300 = vdwg.mxu0
      %v1301 = vmax.f32 %v743, %v883
      %v1302 = vmax.f32 %v748, %v888
      %v1303 = vmax.f32 %v753, %v893
      %v1304 = vmax.f32 %v758, %v898
      %v1305 = vmax.f32 %v763, %v903
      %v1306 = vmax.f32 %v768, %v908
      %v1307 = vmax.f32 %v773, %v913
      %v1308 = vmax.f32 %v778, %v918
      %v1309 = vmax.f32 %v783, %v923
      %v1310 = vmax.f32 %v788, %v928
      %v1311 = vmax.f32 %v793, %v933
      %v1312 = vmax.f32 %v798, %v938
      %v1313 = vmax.f32 %v803, %v943
      %v1314 = vmax.f32 %v808, %v948
      %v1315 = vmax.f32 %v813, %v953
      %v1316 = vmax.f32 %v818, %v958
      %v1317 = vmax.f32 %v823, %v963
      %v1318 = vmax.f32 %v828, %v968
      %v1319 = vmax.f32 %v833, %v973
      %v1320 = vmax.f32 %v838, %v978
      %v1321 = vmax.f32 %v843, %v983
      %v1322 = vmax.f32 %v848, %v988
      %v1323 = vmax.f32 %v853, %v993
      %v1324 = vmax.f32 %v858, %v998
      %v1325 = vmax.f32 %v863, %v1003
      %v1326 = vmax.f32 %v868, %v1008
      %v1327 = vmax.f32 %v873, %v1013
      %v1328 = vmax.f32 %v878, %v1018
      %v1329 = vmax.f32 %v1023, %v1163
      %v1330 = vmax.f32 %v1028, %v1168
      %v1331 = vmax.f32 %v1033, %v1173
      %v1332 = vmax.f32 %v1038, %v1178
      %v1333 = vmax.f32 %v1043, %v1183
      %v1334 = vmax.f32 %v1048, %v1188
      %v1335 = vmax.f32 %v1053, %v1193
      %v1336 = vmax.f32 %v1058, %v1198
      %v1337 = vmax.f32 %v1063, %v1203
      %v1338 = vmax.f32 %v1068, %v1208
      %v1339 = vmax.f32 %v1073, %v1213
      %v1340 = vmax.f32 %v1078, %v1218
      %v1341 = vmax.f32 %v1083, %v1223
      %v1342 = vmax.f32 %v1088, %v1228
      %v1343 = vmax.f32 %v1093, %v1233
      %v1344 = vmax.f32 %v1098, %v1238
      %v1345 = vmax.f32 %v1103, %v1243
      %v1346 = vmax.f32 %v1108, %v1248
      %v1347 = vmax.f32 %v1113, %v1253
      %v1348 = vmax.f32 %v1118, %v1258
      %v1349 = vmax.f32 %v1123, %v1263
      %v1350 = vmax.f32 %v1128, %v1268
      %v1351 = vmax.f32 %v1133, %v1273
      %v1352 = vmax.f32 %v1138, %v1278
      %v1353 = vmax.f32 %v1143, %v1283
      %v1354 = vmax.f32 %v1148, %v1288
      %v1355 = vmax.f32 %v1153, %v1293
      %v1356 = vmax.f32 %v1158, %v1298
      %v1357 = vmax.f32 %v1301, %v1329
      %v1358 = vmax.f32 %v1302, %v1330
      %v1359 = vmax.f32 %v1303, %v1331
      %v1360 = vmax.f32 %v1304, %v1332
      %v1361 = vmax.f32 %v1305, %v1333
      %v1362 = vmax.f32 %v1306, %v1334
      %v1363 = vmax.f32 %v1307, %v1335
      %v1364 = vmax.f32 %v1308, %v1336
      %v1365 = vmax.f32 %v1309, %v1337
      %v1366 = vmax.f32 %v1310, %v1338
      %v1367 = vmax.f32 %v1311, %v1339
      %v1368 = vmax.f32 %v1312, %v1340
      %v1369 = vmax.f32 %v1313, %v1341
      %v1370 = vmax.f32 %v1314, %v1342
      %v1371 = vmax.f32 %v1315, %v1343
      %v1372 = vmax.f32 %v1316, %v1344
      %v1373 = vmax.f32 %v1317, %v1345
      %v1374 = vmax.f32 %v1318, %v1346
      %v1375 = vmax.f32 %v1319, %v1347
      %v1376 = vmax.f32 %v1320, %v1348
      %v1377 = vmax.f32 %v1321, %v1349
      %v1378 = vmax.f32 %v1322, %v1350
      %v1379 = vmax.f32 %v1323, %v1351
      %v1380 = vmax.f32 %v1324, %v1352
      %v1381 = vmax.f32 %v1325, %v1353
      %v1382 = vmax.f32 %v1326, %v1354
      %v1383 = vmax.f32 %v1327, %v1355
      %v1384 = vmax.f32 %v1328, %v1356
      %v1385 = vld [vmem:[%s2] sm:$0x1]
      %v1387 = vlaneseq
      %v1388 = vshrl.u32 %v1387, 7
      %v1389 = vsub.s32 0, %v1388
      %v1390 = vrot.slane %v1385, %v1389
      %v1392 = vadd.f32 %v1357, %v1390
      %v1393 = vadd.f32 %v1358, %v1390
      %v1394 = vadd.f32 %v1359, %v1390
      %v1395 = vadd.f32 %v1360, %v1390
      %v1396 = vadd.f32 %v1361, %v1390
      %v1397 = vadd.f32 %v1362, %v1390
      %v1398 = vadd.f32 %v1363, %v1390
      %v1399 = vadd.f32 %v1364, %v1390
      %v1400 = vadd.f32 %v1365, %v1390
      %v1401 = vadd.f32 %v1366, %v1390
      %v1402 = vadd.f32 %v1367, %v1390
      %v1403 = vadd.f32 %v1368, %v1390
      %v1404 = vadd.f32 %v1369, %v1390
      %v1405 = vadd.f32 %v1370, %v1390
      %v1406 = vadd.f32 %v1371, %v1390
      %v1407 = vadd.f32 %v1372, %v1390
      %v1408 = vadd.f32 %v1373, %v1390
      %v1409 = vadd.f32 %v1374, %v1390
      %v1410 = vadd.f32 %v1375, %v1390
      %v1411 = vadd.f32 %v1376, %v1390
      %v1412 = vadd.f32 %v1377, %v1390
      %v1413 = vadd.f32 %v1378, %v1390
      %v1414 = vadd.f32 %v1379, %v1390
      %v1415 = vadd.f32 %v1380, %v1390
      %v1416 = vadd.f32 %v1381, %v1390
      %v1417 = vadd.f32 %v1382, %v1390
      %v1418 = vadd.f32 %v1383, %v1390
      %v1419 = vadd.f32 %v1384, %v1390
      %v1420 = vmax.f32 %v1392, 0.0
      %v1421 = vmax.f32 %v1393, 0.0
      %v1422 = vmax.f32 %v1394, 0.0
      %v1423 = vmax.f32 %v1395, 0.0
      %v1424 = vmax.f32 %v1396, 0.0
      %v1425 = vmax.f32 %v1397, 0.0
      %v1426 = vmax.f32 %v1398, 0.0
      %v1427 = vmax.f32 %v1399, 0.0
      %v1428 = vmax.f32 %v1400, 0.0
      %v1429 = vmax.f32 %v1401, 0.0
      %v1430 = vmax.f32 %v1402, 0.0
      %v1431 = vmax.f32 %v1403, 0.0
      %v1432 = vmax.f32 %v1404, 0.0
      %v1433 = vmax.f32 %v1405, 0.0
      %v1434 = vmax.f32 %v1406, 0.0
      %v1435 = vmax.f32 %v1407, 0.0
      %v1436 = vmax.f32 %v1408, 0.0
      %v1437 = vmax.f32 %v1409, 0.0
      %v1438 = vmax.f32 %v1410, 0.0
      %v1439 = vmax.f32 %v1411, 0.0
      %v1440 = vmax.f32 %v1412, 0.0
      %v1441 = vmax.f32 %v1413, 0.0
      %v1442 = vmax.f32 %v1414, 0.0
      %v1443 = vmax.f32 %v1415, 0.0
      %v1444 = vmax.f32 %v1416, 0.0
      %v1445 = vmax.f32 %v1417, 0.0
      %v1446 = vmax.f32 %v1418, 0.0
      %v1447 = vmax.f32 %v1419, 0.0
      %v1448 = vlaneseq
      %v1449 = vshrl.u32 %v1448, 7
      %v1450 = vadd.s32 %v1449, 8
      %v1451 = vadd.s32 %v1449, 16
      %v1452 = vadd.s32 %v1449, 24
      %v1453 = vadd.s32 %v1449, 32
      %v1454 = vadd.s32 %v1449, 40
      %v1455 = vadd.s32 %v1449, 48
      %v1456 = vadd.s32 %v1449, 56
      %v1457 = vadd.s32 %v1449, 64
      %v1458 = vadd.s32 %v1449, 72
      %v1459 = vadd.s32 %v1449, 80
      %v1460 = vadd.s32 %v1449, 88
      %v1461 = vadd.s32 %v1449, 96
      %v1462 = vadd.s32 %v1449, 104
      %v1463 = vadd.s32 %v1449, 112
      %v1464 = vadd.s32 %v1449, 120
      %v1465 = vadd.s32 %v1449, 128
      %v1466 = vadd.s32 %v1449, 136
      %v1467 = vadd.s32 %v1449, 144
      %v1468 = vadd.s32 %v1449, 152
      %v1469 = vadd.s32 %v1449, 160
      %v1470 = vadd.s32 %v1449, 168
      %v1471 = vadd.s32 %v1449, 176
      %v1472 = vadd.s32 %v1449, 184
      %v1473 = vadd.s32 %v1449, 192
      %v1474 = vadd.s32 %v1449, 200
      %v1475 = vadd.s32 %v1449, 208
      %v1476 = vadd.s32 %v1449, 216
      %vm1477 = vcmp.lt.s32.totalorder %v1449, 0
      %v1478 = vsub.s32 0, %v1449
      %v1479 = vsel %vm1477, %v1478, %v1449
      %v1480 = vshrl.u32 %v1479, 3
      %v1481 = vand.u32 %v1479, 7
      %v1482 = vsub.s32 0, %v1481
      %v1483 = vsel %vm1477, %v1482, %v1481
      %vm1484 = vcmp.lt.s32.totalorder %v1450, 0
      %v1485 = vsub.s32 0, %v1450
      %v1486 = vsel %vm1484, %v1485, %v1450
      %v1487 = vshrl.u32 %v1486, 3
      %v1488 = vand.u32 %v1486, 7
      %v1489 = vsub.s32 0, %v1488
      %v1490 = vsel %vm1484, %v1489, %v1488
      %vm1491 = vcmp.lt.s32.totalorder %v1451, 0
      %v1492 = vsub.s32 0, %v1451
      %v1493 = vsel %vm1491, %v1492, %v1451
      %v1494 = vshrl.u32 %v1493, 3
      %v1495 = vand.u32 %v1493, 7
      %v1496 = vsub.s32 0, %v1495
      %v1497 = vsel %vm1491, %v1496, %v1495
      %vm1498 = vcmp.lt.s32.totalorder %v1452, 0
      %v1499 = vsub.s32 0, %v1452
      %v1500 = vsel %vm1498, %v1499, %v1452
      %v1501 = vshrl.u32 %v1500, 3
      %v1502 = vand.u32 %v1500, 7
      %v1503 = vsub.s32 0, %v1502
      %v1504 = vsel %vm1498, %v1503, %v1502
      %vm1505 = vcmp.lt.s32.totalorder %v1453, 0
      %v1506 = vsub.s32 0, %v1453
      %v1507 = vsel %vm1505, %v1506, %v1453
      %v1508 = vshrl.u32 %v1507, 3
      %v1509 = vand.u32 %v1507, 7
      %v1510 = vsub.s32 0, %v1509
      %v1511 = vsel %vm1505, %v1510, %v1509
      %vm1512 = vcmp.lt.s32.totalorder %v1454, 0
      %v1513 = vsub.s32 0, %v1454
      %v1514 = vsel %vm1512, %v1513, %v1454
      %v1515 = vshrl.u32 %v1514, 3
      %v1516 = vand.u32 %v1514, 7
      %v1517 = vsub.s32 0, %v1516
      %v1518 = vsel %vm1512, %v1517, %v1516
      %vm1519 = vcmp.lt.s32.totalorder %v1455, 0
      %v1520 = vsub.s32 0, %v1455
      %v1521 = vsel %vm1519, %v1520, %v1455
      %v1522 = vshrl.u32 %v1521, 3
      %v1523 = vand.u32 %v1521, 7
      %v1524 = vsub.s32 0, %v1523
      %v1525 = vsel %vm1519, %v1524, %v1523
      %vm1526 = vcmp.lt.s32.totalorder %v1456, 0
      %v1527 = vsub.s32 0, %v1456
      %v1528 = vsel %vm1526, %v1527, %v1456
      %v1529 = vshrl.u32 %v1528, 3
      %v1530 = vand.u32 %v1528, 7
      %v1531 = vsub.s32 0, %v1530
      %v1532 = vsel %vm1526, %v1531, %v1530
      %vm1533 = vcmp.lt.s32.totalorder %v1457, 0
      %v1534 = vsub.s32 0, %v1457
      %v1535 = vsel %vm1533, %v1534, %v1457
      %v1536 = vshrl.u32 %v1535, 3
      %v1537 = vand.u32 %v1535, 7
      %v1538 = vsub.s32 0, %v1537
      %v1539 = vsel %vm1533, %v1538, %v1537
      %vm1540 = vcmp.lt.s32.totalorder %v1458, 0
      %v1541 = vsub.s32 0, %v1458
      %v1542 = vsel %vm1540, %v1541, %v1458
      %v1543 = vshrl.u32 %v1542, 3
      %v1544 = vand.u32 %v1542, 7
      %v1545 = vsub.s32 0, %v1544
      %v1546 = vsel %vm1540, %v1545, %v1544
      %vm1547 = vcmp.lt.s32.totalorder %v1459, 0
      %v1548 = vsub.s32 0, %v1459
      %v1549 = vsel %vm1547, %v1548, %v1459
      %v1550 = vshrl.u32 %v1549, 3
      %v1551 = vand.u32 %v1549, 7
      %v1552 = vsub.s32 0, %v1551
      %v1553 = vsel %vm1547, %v1552, %v1551
      %vm1554 = vcmp.lt.s32.totalorder %v1460, 0
      %v1555 = vsub.s32 0, %v1460
      %v1556 = vsel %vm1554, %v1555, %v1460
      %v1557 = vshrl.u32 %v1556, 3
      %v1558 = vand.u32 %v1556, 7
      %v1559 = vsub.s32 0, %v1558
      %v1560 = vsel %vm1554, %v1559, %v1558
      %vm1561 = vcmp.lt.s32.totalorder %v1461, 0
      %v1562 = vsub.s32 0, %v1461
      %v1563 = vsel %vm1561, %v1562, %v1461
      %v1564 = vshrl.u32 %v1563, 3
      %v1565 = vand.u32 %v1563, 7
      %v1566 = vsub.s32 0, %v1565
      %v1567 = vsel %vm1561, %v1566, %v1565
      %vm1568 = vcmp.lt.s32.totalorder %v1462, 0
      %v1569 = vsub.s32 0, %v1462
      %v1570 = vsel %vm1568, %v1569, %v1462
      %v1571 = vshrl.u32 %v1570, 3
      %v1572 = vand.u32 %v1570, 7
      %v1573 = vsub.s32 0, %v1572
      %v1574 = vsel %vm1568, %v1573, %v1572
      %vm1575 = vcmp.lt.s32.totalorder %v1463, 0
      %v1576 = vsub.s32 0, %v1463
      %v1577 = vsel %vm1575, %v1576, %v1463
      %v1578 = vshrl.u32 %v1577, 3
      %v1579 = vand.u32 %v1577, 7
      %v1580 = vsub.s32 0, %v1579
      %v1581 = vsel %vm1575, %v1580, %v1579
      %vm1582 = vcmp.lt.s32.totalorder %v1464, 0
      %v1583 = vsub.s32 0, %v1464
      %v1584 = vsel %vm1582, %v1583, %v1464
      %v1585 = vshrl.u32 %v1584, 3
      %v1586 = vand.u32 %v1584, 7
      %v1587 = vsub.s32 0, %v1586
      %v1588 = vsel %vm1582, %v1587, %v1586
      %vm1589 = vcmp.lt.s32.totalorder %v1465, 0
      %v1590 = vsub.s32 0, %v1465
      %v1591 = vsel %vm1589, %v1590, %v1465
      %v1592 = vshrl.u32 %v1591, 3
      %v1593 = vand.u32 %v1591, 7
      %v1594 = vsub.s32 0, %v1593
      %v1595 = vsel %vm1589, %v1594, %v1593
      %vm1596 = vcmp.lt.s32.totalorder %v1466, 0
      %v1597 = vsub.s32 0, %v1466
      %v1598 = vsel %vm1596, %v1597, %v1466
      %v1599 = vshrl.u32 %v1598, 3
      %v1600 = vand.u32 %v1598, 7
      %v1601 = vsub.s32 0, %v1600
      %v1602 = vsel %vm1596, %v1601, %v1600
      %vm1603 = vcmp.lt.s32.totalorder %v1467, 0
      %v1604 = vsub.s32 0, %v1467
      %v1605 = vsel %vm1603, %v1604, %v1467
      %v1606 = vshrl.u32 %v1605, 3
      %v1607 = vand.u32 %v1605, 7
      %v1608 = vsub.s32 0, %v1607
      %v1609 = vsel %vm1603, %v1608, %v1607
      %vm1610 = vcmp.lt.s32.totalorder %v1468, 0
      %v1611 = vsub.s32 0, %v1468
      %v1612 = vsel %vm1610, %v1611, %v1468
      %v1613 = vshrl.u32 %v1612, 3
      %v1614 = vand.u32 %v1612, 7
      %v1615 = vsub.s32 0, %v1614
      %v1616 = vsel %vm1610, %v1615, %v1614
      %vm1617 = vcmp.lt.s32.totalorder %v1469, 0
      %v1618 = vsub.s32 0, %v1469
      %v1619 = vsel %vm1617, %v1618, %v1469
      %v1620 = vshrl.u32 %v1619, 3
      %v1621 = vand.u32 %v1619, 7
      %v1622 = vsub.s32 0, %v1621
      %v1623 = vsel %vm1617, %v1622, %v1621
      %vm1624 = vcmp.lt.s32.totalorder %v1470, 0
      %v1625 = vsub.s32 0, %v1470
      %v1626 = vsel %vm1624, %v1625, %v1470
      %v1627 = vshrl.u32 %v1626, 3
      %v1628 = vand.u32 %v1626, 7
      %v1629 = vsub.s32 0, %v1628
      %v1630 = vsel %vm1624, %v1629, %v1628
      %vm1631 = vcmp.lt.s32.totalorder %v1471, 0
      %v1632 = vsub.s32 0, %v1471
      %v1633 = vsel %vm1631, %v1632, %v1471
      %v1634 = vshrl.u32 %v1633, 3
      %v1635 = vand.u32 %v1633, 7
      %v1636 = vsub.s32 0, %v1635
      %v1637 = vsel %vm1631, %v1636, %v1635
      %vm1638 = vcmp.lt.s32.totalorder %v1472, 0
      %v1639 = vsub.s32 0, %v1472
      %v1640 = vsel %vm1638, %v1639, %v1472
      %v1641 = vshrl.u32 %v1640, 3
      %v1642 = vand.u32 %v1640, 7
      %v1643 = vsub.s32 0, %v1642
      %v1644 = vsel %vm1638, %v1643, %v1642
      %vm1645 = vcmp.lt.s32.totalorder %v1473, 0
      %v1646 = vsub.s32 0, %v1473
      %v1647 = vsel %vm1645, %v1646, %v1473
      %v1648 = vshrl.u32 %v1647, 3
      %v1649 = vand.u32 %v1647, 7
      %v1650 = vsub.s32 0, %v1649
      %v1651 = vsel %vm1645, %v1650, %v1649
      %vm1652 = vcmp.lt.s32.totalorder %v1474, 0
      %v1653 = vsub.s32 0, %v1474
      %v1654 = vsel %vm1652, %v1653, %v1474
      %v1655 = vshrl.u32 %v1654, 3
      %v1656 = vand.u32 %v1654, 7
      %v1657 = vsub.s32 0, %v1656
      %v1658 = vsel %vm1652, %v1657, %v1656
      %vm1659 = vcmp.lt.s32.totalorder %v1475, 0
      %v1660 = vsub.s32 0, %v1475
      %v1661 = vsel %vm1659, %v1660, %v1475
      %v1662 = vshrl.u32 %v1661, 3
      %v1663 = vand.u32 %v1661, 7
      %v1664 = vsub.s32 0, %v1663
      %v1665 = vsel %vm1659, %v1664, %v1663
      %vm1666 = vcmp.lt.s32.totalorder %v1476, 0
      %v1667 = vsub.s32 0, %v1476
      %v1668 = vsel %vm1666, %v1667, %v1476
      %v1669 = vshrl.u32 %v1668, 3
      %v1670 = vand.u32 %v1668, 7
      %v1671 = vsub.s32 0, %v1670
      %v1672 = vsel %vm1666, %v1671, %v1670
      %vm1673 = vcmp.ne.s32.totalorder %v1483, 0
      %vm1674 = vcmp.ne.s32.totalorder %v1490, 0
      %vm1675 = vcmp.ne.s32.totalorder %v1497, 0
      %vm1676 = vcmp.ne.s32.totalorder %v1504, 0
      %vm1677 = vcmp.ne.s32.totalorder %v1511, 0
      %vm1678 = vcmp.ne.s32.totalorder %v1518, 0
      %vm1679 = vcmp.ne.s32.totalorder %v1525, 0
      %vm1680 = vcmp.ne.s32.totalorder %v1532, 0
      %vm1681 = vcmp.ne.s32.totalorder %v1539, 0
      %vm1682 = vcmp.ne.s32.totalorder %v1546, 0
      %vm1683 = vcmp.ne.s32.totalorder %v1553, 0
      %vm1684 = vcmp.ne.s32.totalorder %v1560, 0
      %vm1685 = vcmp.ne.s32.totalorder %v1567, 0
      %vm1686 = vcmp.ne.s32.totalorder %v1574, 0
      %vm1687 = vcmp.ne.s32.totalorder %v1581, 0
      %vm1688 = vcmp.ne.s32.totalorder %v1588, 0
      %vm1689 = vcmp.ne.s32.totalorder %v1595, 0
      %vm1690 = vcmp.ne.s32.totalorder %v1602, 0
      %vm1691 = vcmp.ne.s32.totalorder %v1609, 0
      %vm1692 = vcmp.ne.s32.totalorder %v1616, 0
      %vm1693 = vcmp.ne.s32.totalorder %v1623, 0
      %vm1694 = vcmp.ne.s32.totalorder %v1630, 0
      %vm1695 = vcmp.ne.s32.totalorder %v1637, 0
      %vm1696 = vcmp.ne.s32.totalorder %v1644, 0
      %vm1697 = vcmp.ne.s32.totalorder %v1651, 0
      %vm1698 = vcmp.ne.s32.totalorder %v1658, 0
      %vm1699 = vcmp.ne.s32.totalorder %v1665, 0
      %vm1700 = vcmp.ne.s32.totalorder %v1672, 0
      %vm1701 = vcmp.lt.s32.totalorder %v1483, 0
      %vm1702 = vcmp.lt.s32.totalorder %v1490, 0
      %vm1703 = vcmp.lt.s32.totalorder %v1497, 0
      %vm1704 = vcmp.lt.s32.totalorder %v1504, 0
      %vm1705 = vcmp.lt.s32.totalorder %v1511, 0
      %vm1706 = vcmp.lt.s32.totalorder %v1518, 0
      %vm1707 = vcmp.lt.s32.totalorder %v1525, 0
      %vm1708 = vcmp.lt.s32.totalorder %v1532, 0
      %vm1709 = vcmp.lt.s32.totalorder %v1539, 0
      %vm1710 = vcmp.lt.s32.totalorder %v1546, 0
      %vm1711 = vcmp.lt.s32.totalorder %v1553, 0
      %vm1712 = vcmp.lt.s32.totalorder %v1560, 0
      %vm1713 = vcmp.lt.s32.totalorder %v1567, 0
      %vm1714 = vcmp.lt.s32.totalorder %v1574, 0
      %vm1715 = vcmp.lt.s32.totalorder %v1581, 0
      %vm1716 = vcmp.lt.s32.totalorder %v1588, 0
      %vm1717 = vcmp.lt.s32.totalorder %v1595, 0
      %vm1718 = vcmp.lt.s32.totalorder %v1602, 0
      %vm1719 = vcmp.lt.s32.totalorder %v1609, 0
      %vm1720 = vcmp.lt.s32.totalorder %v1616, 0
      %vm1721 = vcmp.lt.s32.totalorder %v1623, 0
      %vm1722 = vcmp.lt.s32.totalorder %v1630, 0
      %vm1723 = vcmp.lt.s32.totalorder %v1637, 0
      %vm1724 = vcmp.lt.s32.totalorder %v1644, 0
      %vm1725 = vcmp.lt.s32.totalorder %v1651, 0
      %vm1726 = vcmp.lt.s32.totalorder %v1658, 0
      %vm1727 = vcmp.lt.s32.totalorder %v1665, 0
      %vm1728 = vcmp.lt.s32.totalorder %v1672, 0
      %vm1729 = vmand %vm1701, %vm1673
      %vm1730 = vmand %vm1702, %vm1674
      %vm1731 = vmand %vm1703, %vm1675
      %vm1732 = vmand %vm1704, %vm1676
      %vm1733 = vmand %vm1705, %vm1677
      %vm1734 = vmand %vm1706, %vm1678
      %vm1735 = vmand %vm1707, %vm1679
      %vm1736 = vmand %vm1708, %vm1680
      %vm1737 = vmand %vm1709, %vm1681
      %vm1738 = vmand %vm1710, %vm1682
      %vm1739 = vmand %vm1711, %vm1683
      %vm1740 = vmand %vm1712, %vm1684
      %vm1741 = vmand %vm1713, %vm1685
      %vm1742 = vmand %vm1714, %vm1686
      %vm1743 = vmand %vm1715, %vm1687
      %vm1744 = vmand %vm1716, %vm1688
      %vm1745 = vmand %vm1717, %vm1689
      %vm1746 = vmand %vm1718, %vm1690
      %vm1747 = vmand %vm1719, %vm1691
      %vm1748 = vmand %vm1720, %vm1692
      %vm1749 = vmand %vm1721, %vm1693
      %vm1750 = vmand %vm1722, %vm1694
      %vm1751 = vmand %vm1723, %vm1695
      %vm1752 = vmand %vm1724, %vm1696
      %vm1753 = vmand %vm1725, %vm1697
      %vm1754 = vmand %vm1726, %vm1698
      %vm1755 = vmand %vm1727, %vm1699
      %vm1756 = vmand %vm1728, %vm1700
      %v1757 = vadd.s32 %v1483, 8
      %v1758 = vadd.s32 %v1490, 8
      %v1759 = vadd.s32 %v1497, 8
      %v1760 = vadd.s32 %v1504, 8
      %v1761 = vadd.s32 %v1511, 8
      %v1762 = vadd.s32 %v1518, 8
      %v1763 = vadd.s32 %v1525, 8
      %v1764 = vadd.s32 %v1532, 8
      %v1765 = vadd.s32 %v1539, 8
      %v1766 = vadd.s32 %v1546, 8
      %v1767 = vadd.s32 %v1553, 8
      %v1768 = vadd.s32 %v1560, 8
      %v1769 = vadd.s32 %v1567, 8
      %v1770 = vadd.s32 %v1574, 8
      %v1771 = vadd.s32 %v1581, 8
      %v1772 = vadd.s32 %v1588, 8
      %v1773 = vadd.s32 %v1595, 8
      %v1774 = vadd.s32 %v1602, 8
      %v1775 = vadd.s32 %v1609, 8
      %v1776 = vadd.s32 %v1616, 8
      %v1777 = vadd.s32 %v1623, 8
      %v1778 = vadd.s32 %v1630, 8
      %v1779 = vadd.s32 %v1637, 8
      %v1780 = vadd.s32 %v1644, 8
      %v1781 = vadd.s32 %v1651, 8
      %v1782 = vadd.s32 %v1658, 8
      %v1783 = vadd.s32 %v1665, 8
      %v1784 = vadd.s32 %v1672, 8
      %v1785 = vsel %vm1729, %v1757, %v1483
      %v1786 = vsel %vm1730, %v1758, %v1490
      %v1787 = vsel %vm1731, %v1759, %v1497
      %v1788 = vsel %vm1732, %v1760, %v1504
      %v1789 = vsel %vm1733, %v1761, %v1511
      %v1790 = vsel %vm1734, %v1762, %v1518
      %v1791 = vsel %vm1735, %v1763, %v1525
      %v1792 = vsel %vm1736, %v1764, %v1532
      %v1793 = vsel %vm1737, %v1765, %v1539
      %v1794 = vsel %vm1738, %v1766, %v1546
      %v1795 = vsel %vm1739, %v1767, %v1553
      %v1796 = vsel %vm1740, %v1768, %v1560
      %v1797 = vsel %vm1741, %v1769, %v1567
      %v1798 = vsel %vm1742, %v1770, %v1574
      %v1799 = vsel %vm1743, %v1771, %v1581
      %v1800 = vsel %vm1744, %v1772, %v1588
      %v1801 = vsel %vm1745, %v1773, %v1595
      %v1802 = vsel %vm1746, %v1774, %v1602
      %v1803 = vsel %vm1747, %v1775, %v1609
      %v1804 = vsel %vm1748, %v1776, %v1616
      %v1805 = vsel %vm1749, %v1777, %v1623
      %v1806 = vsel %vm1750, %v1778, %v1630
      %v1807 = vsel %vm1751, %v1779, %v1637
      %v1808 = vsel %vm1752, %v1780, %v1644
      %v1809 = vsel %vm1753, %v1781, %v1651
      %v1810 = vsel %vm1754, %v1782, %v1658
      %v1811 = vsel %vm1755, %v1783, %v1665
      %v1812 = vsel %vm1756, %v1784, %v1672
      %vm1813 = vcmp.lt.s32.totalorder %v1785, 7
      %vm1814 = vcmp.lt.s32.totalorder %v1786, 7
      %vm1815 = vcmp.lt.s32.totalorder %v1787, 7
      %vm1816 = vcmp.lt.s32.totalorder %v1788, 7
      %vm1817 = vcmp.lt.s32.totalorder %v1789, 7
      %vm1818 = vcmp.lt.s32.totalorder %v1790, 7
      %vm1819 = vcmp.lt.s32.totalorder %v1791, 7
      %vm1820 = vcmp.lt.s32.totalorder %v1792, 7
      %vm1821 = vcmp.lt.s32.totalorder %v1793, 7
      %vm1822 = vcmp.lt.s32.totalorder %v1794, 7
      %vm1823 = vcmp.lt.s32.totalorder %v1795, 7
      %vm1824 = vcmp.lt.s32.totalorder %v1796, 7
      %vm1825 = vcmp.lt.s32.totalorder %v1797, 7
      %vm1826 = vcmp.lt.s32.totalorder %v1798, 7
      %vm1827 = vcmp.lt.s32.totalorder %v1799, 7
      %vm1828 = vcmp.lt.s32.totalorder %v1800, 7
      %vm1829 = vcmp.lt.s32.totalorder %v1801, 7
      %vm1830 = vcmp.lt.s32.totalorder %v1802, 7
      %vm1831 = vcmp.lt.s32.totalorder %v1803, 7
      %vm1832 = vcmp.lt.s32.totalorder %v1804, 7
      %vm1833 = vcmp.lt.s32.totalorder %v1805, 7
      %vm1834 = vcmp.lt.s32.totalorder %v1806, 7
      %vm1835 = vcmp.lt.s32.totalorder %v1807, 7
      %vm1836 = vcmp.lt.s32.totalorder %v1808, 7
      %vm1837 = vcmp.lt.s32.totalorder %v1809, 7
      %vm1838 = vcmp.lt.s32.totalorder %v1810, 7
      %vm1839 = vcmp.lt.s32.totalorder %v1811, 7
      %vm1840 = vcmp.lt.s32.totalorder %v1812, 7
      %v1841 = vsel %vm1813, 1, 0
      %v1842 = vsel %vm1814, 1, 0
      %v1843 = vsel %vm1815, 1, 0
      %v1844 = vsel %vm1816, 1, 0
      %v1845 = vsel %vm1817, 1, 0
      %v1846 = vsel %vm1818, 1, 0
      %v1847 = vsel %vm1819, 1, 0
      %v1848 = vsel %vm1820, 1, 0
      %v1849 = vsel %vm1821, 1, 0
      %v1850 = vsel %vm1822, 1, 0
      %v1851 = vsel %vm1823, 1, 0
      %v1852 = vsel %vm1824, 1, 0
      %v1853 = vsel %vm1825, 1, 0
      %v1854 = vsel %vm1826, 1, 0
      %v1855 = vsel %vm1827, 1, 0
      %v1856 = vsel %vm1828, 1, 0
      %v1857 = vsel %vm1829, 1, 0
      %v1858 = vsel %vm1830, 1, 0
      %v1859 = vsel %vm1831, 1, 0
      %v1860 = vsel %vm1832, 1, 0
      %v1861 = vsel %vm1833, 1, 0
      %v1862 = vsel %vm1834, 1, 0
      %v1863 = vsel %vm1835, 1, 0
      %v1864 = vsel %vm1836, 1, 0
      %v1865 = vsel %vm1837, 1, 0
      %v1866 = vsel %vm1838, 1, 0
      %v1867 = vsel %vm1839, 1, 0
      %v1868 = vsel %vm1840, 1, 0
      %vm1869 = vcmp.eq.s32.totalorder %v1841, 1
      %vm1870 = vcmp.eq.s32.totalorder %v1842, 1
      %vm1871 = vcmp.eq.s32.totalorder %v1843, 1
      %vm1872 = vcmp.eq.s32.totalorder %v1844, 1
      %vm1873 = vcmp.eq.s32.totalorder %v1845, 1
      %vm1874 = vcmp.eq.s32.totalorder %v1846, 1
      %vm1875 = vcmp.eq.s32.totalorder %v1847, 1
      %vm1876 = vcmp.eq.s32.totalorder %v1848, 1
      %vm1877 = vcmp.eq.s32.totalorder %v1849, 1
      %vm1878 = vcmp.eq.s32.totalorder %v1850, 1
      %vm1879 = vcmp.eq.s32.totalorder %v1851, 1
      %vm1880 = vcmp.eq.s32.totalorder %v1852, 1
      %vm1881 = vcmp.eq.s32.totalorder %v1853, 1
      %vm1882 = vcmp.eq.s32.totalorder %v1854, 1
      %vm1883 = vcmp.eq.s32.totalorder %v1855, 1
      %vm1884 = vcmp.eq.s32.totalorder %v1856, 1
      %vm1885 = vcmp.eq.s32.totalorder %v1857, 1
      %vm1886 = vcmp.eq.s32.totalorder %v1858, 1
      %vm1887 = vcmp.eq.s32.totalorder %v1859, 1
      %vm1888 = vcmp.eq.s32.totalorder %v1860, 1
      %vm1889 = vcmp.eq.s32.totalorder %v1861, 1
      %vm1890 = vcmp.eq.s32.totalorder %v1862, 1
      %vm1891 = vcmp.eq.s32.totalorder %v1863, 1
      %vm1892 = vcmp.eq.s32.totalorder %v1864, 1
      %vm1893 = vcmp.eq.s32.totalorder %v1865, 1
      %vm1894 = vcmp.eq.s32.totalorder %v1866, 1
      %vm1895 = vcmp.eq.s32.totalorder %v1867, 1
      %vm1896 = vcmp.eq.s32.totalorder %v1868, 1
      %v1897 = vsel %vm1869, %v1420, 0.0
      %v1898 = vsel %vm1870, %v1421, 0.0
      %v1899 = vsel %vm1871, %v1422, 0.0
      %v1900 = vsel %vm1872, %v1423, 0.0
      %v1901 = vsel %vm1873, %v1424, 0.0
      %v1902 = vsel %vm1874, %v1425, 0.0
      %v1903 = vsel %vm1875, %v1426, 0.0
      %v1904 = vsel %vm1876, %v1427, 0.0
      %v1905 = vsel %vm1877, %v1428, 0.0
      %v1906 = vsel %vm1878, %v1429, 0.0
      %v1907 = vsel %vm1879, %v1430, 0.0
      %v1908 = vsel %vm1880, %v1431, 0.0
      %v1909 = vsel %vm1881, %v1432, 0.0
      %v1910 = vsel %vm1882, %v1433, 0.0
      %v1911 = vsel %vm1883, %v1434, 0.0
      %v1912 = vsel %vm1884, %v1435, 0.0
      %v1913 = vsel %vm1885, %v1436, 0.0
      %v1914 = vsel %vm1886, %v1437, 0.0
      %v1915 = vsel %vm1887, %v1438, 0.0
      %v1916 = vsel %vm1888, %v1439, 0.0
      %v1917 = vsel %vm1889, %v1440, 0.0
      %v1918 = vsel %vm1890, %v1441, 0.0
      %v1919 = vsel %vm1891, %v1442, 0.0
      %v1920 = vsel %vm1892, %v1443, 0.0
      %v1921 = vsel %vm1893, %v1444, 0.0
      %v1922 = vsel %vm1894, %v1445, 0.0
      %v1923 = vsel %vm1895, %v1446, 0.0
      %v1924 = vsel %vm1896, %v1447, 0.0
      %vm1939 = vcmask 1046528
      %v1940 = vrot.slane 0.0, 1
      %v1941 = vrot.slane %v1897, 1
      %v1942 = vsel %vm1939, %v1940, %v1941
      %v1943 = vrot.slane %v1898, 1
      %v1944 = vsel %vm1939, %v1941, %v1943
      %v1945 = vrot.slane %v1899, 1
      %v1946 = vsel %vm1939, %v1943, %v1945
      %v1947 = vrot.slane %v1900, 1
      %v1948 = vsel %vm1939, %v1945, %v1947
      %v1949 = vrot.slane %v1901, 1
      %v1950 = vsel %vm1939, %v1947, %v1949
      %v1951 = vrot.slane %v1902, 1
      %v1952 = vsel %vm1939, %v1949, %v1951
      %v1953 = vrot.slane %v1903, 1
      %v1954 = vsel %vm1939, %v1951, %v1953
      %v1955 = vrot.slane %v1904, 1
      %v1956 = vsel %vm1939, %v1953, %v1955
      %v1957 = vrot.slane %v1905, 1
      %v1958 = vsel %vm1939, %v1955, %v1957
      %v1959 = vrot.slane %v1906, 1
      %v1960 = vsel %vm1939, %v1957, %v1959
      %v1961 = vrot.slane %v1907, 1
      %v1962 = vsel %vm1939, %v1959, %v1961
      %v1963 = vrot.slane %v1908, 1
      %v1964 = vsel %vm1939, %v1961, %v1963
      %v1965 = vrot.slane %v1909, 1
      %v1966 = vsel %vm1939, %v1963, %v1965
      %v1980 = vrot.slane %v1911, 1
      %v1981 = vsel %vm1939, %v1940, %v1980
      %v1982 = vrot.slane %v1912, 1
      %v1983 = vsel %vm1939, %v1980, %v1982
      %v1984 = vrot.slane %v1913, 1
      %v1985 = vsel %vm1939, %v1982, %v1984
      %v1986 = vrot.slane %v1914, 1
      %v1987 = vsel %vm1939, %v1984, %v1986
      %v1988 = vrot.slane %v1915, 1
      %v1989 = vsel %vm1939, %v1986, %v1988
      %v1990 = vrot.slane %v1916, 1
      %v1991 = vsel %vm1939, %v1988, %v1990
      %v1992 = vrot.slane %v1917, 1
      %v1993 = vsel %vm1939, %v1990, %v1992
      %v1994 = vrot.slane %v1918, 1
      %v1995 = vsel %vm1939, %v1992, %v1994
      %v1996 = vrot.slane %v1919, 1
      %v1997 = vsel %vm1939, %v1994, %v1996
      %v1998 = vrot.slane %v1920, 1
      %v1999 = vsel %vm1939, %v1996, %v1998
      %v2000 = vrot.slane %v1921, 1
      %v2001 = vsel %vm1939, %v1998, %v2000
      %v2002 = vrot.slane %v1922, 1
      %v2003 = vsel %vm1939, %v2000, %v2002
      %v2004 = vrot.slane %v1923, 1
      %v2005 = vsel %vm1939, %v2002, %v2004
      %v2007 = vrot.slane %v1910, 1
      %v2008 = vsel %vm1939, %v1965, %v2007
      %v2010 = vrot.slane %v1924, 1
      %v2011 = vsel %vm1939, %v2004, %v2010
      %v2012 = vsel %vm1939, %v2007, %v1940
      %v2013 = vsel %vm1939, %v2010, %v1940
      %v2014 = vld [vmem:[%s3] sm:$0xff]
      %v2015 = vld [vmem:[%s3 + $0x8] sm:$0xff]
      %v2016 = vld [vmem:[%s3 + $0x10] sm:$0xff]
      %v2017 = vld [vmem:[%s3 + $0x18] sm:$0xff]
      %v2018 = vld [vmem:[%s3 + $0x20] sm:$0xff]
      %v2019 = vld [vmem:[%s3 + $0x28] sm:$0xff]
      %v2020 = vld [vmem:[%s3 + $0x30] sm:$0xff]
      %v2021 = vld [vmem:[%s3 + $0x38] sm:$0xff]
      %v2022 = vld [vmem:[%s3 + $0x40] sm:$0xff]
      %v2023 = vld [vmem:[%s3 + $0x48] sm:$0xff]
      %v2024 = vld [vmem:[%s3 + $0x50] sm:$0xff]
      %v2025 = vld [vmem:[%s3 + $0x58] sm:$0xff]
      %v2026 = vld [vmem:[%s3 + $0x60] sm:$0xff]
      %v2027 = vld [vmem:[%s3 + $0x68] sm:$0xff]
      %v2028 = vld [vmem:[%s3 + $0x70] sm:$0xff]
      %v2029 = vld [vmem:[%s3 + $0x78] sm:$0xff]
      %v2030 = vld [vmem:[%s3 + $0x80] sm:$0xff]
      %v2031 = vld [vmem:[%s3 + $0x88] sm:$0xff]
      %v2032 = vld [vmem:[%s3 + $0x90] sm:$0xff]
      %v2033 = vld [vmem:[%s3 + $0x98] sm:$0xff]
      %v2034 = vld [vmem:[%s3 + $0xa0] sm:$0xff]
      %v2035 = vld [vmem:[%s3 + $0xa8] sm:$0xff]
      %v2036 = vld [vmem:[%s3 + $0xb0] sm:$0xff]
      %v2037 = vld [vmem:[%s3 + $0xb8] sm:$0xff]
      %v2038 = vld [vmem:[%s3 + $0xc0] sm:$0xff]
      %v2039 = vld [vmem:[%s3 + $0xc8] sm:$0xff]
      %v2040 = vld [vmem:[%s3 + $0xd0] sm:$0xff]
      %v2041 = vld [vmem:[%s3 + $0xd8] sm:$0xff]
      %v2042 = vld [vmem:[%s3 + $0xe0] sm:$0xff]
      %v2043 = vld [vmem:[%s3 + $0xe8] sm:$0xff]
      %v2044 = vld [vmem:[%s3 + $0xf0] sm:$0xff]
      %v2045 = vld [vmem:[%s3 + $0xf8] sm:$0xff]
      %v2046 = vld [vmem:[%s3 + $0x100] sm:$0xff]
      %v2047 = vld [vmem:[%s3 + $0x108] sm:$0xff]
      %v2048 = vld [vmem:[%s3 + $0x110] sm:$0xff]
      %v2049 = vld [vmem:[%s3 + $0x118] sm:$0xff]
      %v2050 = vld [vmem:[%s3 + $0x120] sm:$0xff]
      %v2051 = vld [vmem:[%s3 + $0x128] sm:$0xff]
      %v2052 = vld [vmem:[%s3 + $0x130] sm:$0xff]
      %v2053 = vld [vmem:[%s3 + $0x138] sm:$0xff]
      %v2054 = vld [vmem:[%s3 + $0x140] sm:$0xff]
      %v2055 = vld [vmem:[%s3 + $0x148] sm:$0xff]
      %v2056 = vld [vmem:[%s3 + $0x150] sm:$0xff]
      %v2057 = vld [vmem:[%s3 + $0x158] sm:$0xff]
      %v2058 = vld [vmem:[%s3 + $0x160] sm:$0xff]
      %v2059 = vld [vmem:[%s3 + $0x168] sm:$0xff]
      %v2060 = vld [vmem:[%s3 + $0x170] sm:$0xff]
      %v2061 = vld [vmem:[%s3 + $0x178] sm:$0xff]
      %v2062 = vld [vmem:[%s3 + $0x180] sm:$0xff]
      %v2063 = vld [vmem:[%s3 + $0x188] sm:$0xff]
      %v2064 = vld [vmem:[%s3 + $0x190] sm:$0xff]
      %v2065 = vld [vmem:[%s3 + $0x198] sm:$0xff]
      %v2066 = vld [vmem:[%s3 + $0x1a0] sm:$0xff]
      %v2067 = vld [vmem:[%s3 + $0x1a8] sm:$0xff]
      %v2068 = vld [vmem:[%s3 + $0x1b0] sm:$0xff]
      %v2069 = vld [vmem:[%s3 + $0x1b8] sm:$0xff]
      %v2070 = vld [vmem:[%s3 + $0x1c0] sm:$0xff]
      %v2071 = vld [vmem:[%s3 + $0x1c8] sm:$0xff]
      %v2072 = vld [vmem:[%s3 + $0x1d0] sm:$0xff]
      %v2073 = vld [vmem:[%s3 + $0x1d8] sm:$0xff]
      %v2074 = vld [vmem:[%s3 + $0x1e0] sm:$0xff]
      %v2075 = vld [vmem:[%s3 + $0x1e8] sm:$0xff]
      %v2076 = vld [vmem:[%s3 + $0x1f0] sm:$0xff]
      %v2077 = vld [vmem:[%s3 + $0x1f8] sm:$0xff]
      %v2078 = vld [vmem:[%s3 + $0x200] sm:$0xff]
      %v2079 = vld [vmem:[%s3 + $0x208] sm:$0xff]
      %v2080 = vld [vmem:[%s3 + $0x210] sm:$0xff]
      %v2081 = vld [vmem:[%s3 + $0x218] sm:$0xff]
      %v2082 = vld [vmem:[%s3 + $0x220] sm:$0xff]
      %v2083 = vld [vmem:[%s3 + $0x228] sm:$0xff]
      %v2084 = vld [vmem:[%s3 + $0x230] sm:$0xff]
      %v2085 = vld [vmem:[%s3 + $0x238] sm:$0xff]
      %v2086 = vld [vmem:[%s3 + $0x240] sm:$0xff]
      %v2087 = vld [vmem:[%s3 + $0x248] sm:$0xff]
      %v2088 = vld [vmem:[%s3 + $0x250] sm:$0xff]
      %v2089 = vld [vmem:[%s3 + $0x258] sm:$0xff]
      %v2090 = vld [vmem:[%s3 + $0x260] sm:$0xff]
      %v2091 = vld [vmem:[%s3 + $0x268] sm:$0xff]
      %v2092 = vld [vmem:[%s3 + $0x270] sm:$0xff]
      %v2093 = vld [vmem:[%s3 + $0x278] sm:$0xff]
      %v2094 = vld [vmem:[%s3 + $0x280] sm:$0xff]
      %v2095 = vld [vmem:[%s3 + $0x288] sm:$0xff]
      %v2096 = vld [vmem:[%s3 + $0x290] sm:$0xff]
      %v2097 = vld [vmem:[%s3 + $0x298] sm:$0xff]
      %v2098 = vld [vmem:[%s3 + $0x2a0] sm:$0xff]
      %v2099 = vld [vmem:[%s3 + $0x2a8] sm:$0xff]
      %v2100 = vld [vmem:[%s3 + $0x2b0] sm:$0xff]
      %v2101 = vld [vmem:[%s3 + $0x2b8] sm:$0xff]
      %v2102 = vld [vmem:[%s3 + $0x2c0] sm:$0xff]
      %v2103 = vld [vmem:[%s3 + $0x2c8] sm:$0xff]
      %v2104 = vld [vmem:[%s3 + $0x2d0] sm:$0xff]
      %v2105 = vld [vmem:[%s3 + $0x2d8] sm:$0xff]
      %v2106 = vld [vmem:[%s3 + $0x2e0] sm:$0xff]
      %v2107 = vld [vmem:[%s3 + $0x2e8] sm:$0xff]
      %v2108 = vld [vmem:[%s3 + $0x2f0] sm:$0xff]
      %v2109 = vld [vmem:[%s3 + $0x2f8] sm:$0xff]
      %v2110 = vld [vmem:[%s3 + $0x300] sm:$0xff]
      %v2111 = vld [vmem:[%s3 + $0x308] sm:$0xff]
      %v2112 = vld [vmem:[%s3 + $0x310] sm:$0xff]
      %v2113 = vld [vmem:[%s3 + $0x318] sm:$0xff]
      %v2114 = vld [vmem:[%s3 + $0x320] sm:$0xff]
      %v2115 = vld [vmem:[%s3 + $0x328] sm:$0xff]
      %v2116 = vld [vmem:[%s3 + $0x330] sm:$0xff]
      %v2117 = vld [vmem:[%s3 + $0x338] sm:$0xff]
      %v2118 = vld [vmem:[%s3 + $0x340] sm:$0xff]
      %v2119 = vld [vmem:[%s3 + $0x348] sm:$0xff]
      %v2120 = vld [vmem:[%s3 + $0x350] sm:$0xff]
      %v2121 = vld [vmem:[%s3 + $0x358] sm:$0xff]
      %v2122 = vld [vmem:[%s3 + $0x360] sm:$0xff]
      %v2123 = vld [vmem:[%s3 + $0x368] sm:$0xff]
      %v2124 = vld [vmem:[%s3 + $0x370] sm:$0xff]
      %v2125 = vld [vmem:[%s3 + $0x378] sm:$0xff]
      %v2126 = vld [vmem:[%s3 + $0x380] sm:$0xff]
      %v2127 = vld [vmem:[%s3 + $0x388] sm:$0xff]
      %v2128 = vld [vmem:[%s3 + $0x390] sm:$0xff]
      %v2129 = vld [vmem:[%s3 + $0x398] sm:$0xff]
      %v2130 = vld [vmem:[%s3 + $0x3a0] sm:$0xff]
      %v2131 = vld [vmem:[%s3 + $0x3a8] sm:$0xff]
      %v2132 = vld [vmem:[%s3 + $0x3b0] sm:$0xff]
      %v2133 = vld [vmem:[%s3 + $0x3b8] sm:$0xff]
      %v2134 = vld [vmem:[%s3 + $0x3c0] sm:$0xff]
      %v2135 = vld [vmem:[%s3 + $0x3c8] sm:$0xff]
      %v2136 = vld [vmem:[%s3 + $0x3d0] sm:$0xff]
      %v2137 = vld [vmem:[%s3 + $0x3d8] sm:$0xff]
      %v2138 = vld [vmem:[%s3 + $0x3e0] sm:$0xff]
      %v2139 = vld [vmem:[%s3 + $0x3e8] sm:$0xff]
      %v2140 = vld [vmem:[%s3 + $0x3f0] sm:$0xff]
      %v2141 = vld [vmem:[%s3 + $0x3f8] sm:$0xff]
      %v2142 = vld [vmem:[%s3 + $0x400] sm:$0xff]
      %v2143 = vld [vmem:[%s3 + $0x408] sm:$0xff]
      %v2144 = vld [vmem:[%s3 + $0x410] sm:$0xff]
      %v2145 = vld [vmem:[%s3 + $0x418] sm:$0xff]
      %v2146 = vld [vmem:[%s3 + $0x420] sm:$0xff]
      %v2147 = vld [vmem:[%s3 + $0x428] sm:$0xff]
      %v2148 = vld [vmem:[%s3 + $0x430] sm:$0xff]
      %v2149 = vld [vmem:[%s3 + $0x438] sm:$0xff]
      %v2150 = vld [vmem:[%s3 + $0x440] sm:$0xff]
      %v2151 = vld [vmem:[%s3 + $0x448] sm:$0xff]
      %v2152 = vld [vmem:[%s3 + $0x450] sm:$0xff]
      %v2153 = vld [vmem:[%s3 + $0x458] sm:$0xff]
      %v2154 = vld [vmem:[%s3 + $0x460] sm:$0xff]
      %v2155 = vld [vmem:[%s3 + $0x468] sm:$0xff]
      %v2156 = vld [vmem:[%s3 + $0x470] sm:$0xff]
      %v2157 = vld [vmem:[%s3 + $0x478] sm:$0xff]
      %vm2158 = vcmask 1040384
      %v2159 = vrot.slane %v1910, 7
      %v2160 = vrot.slane 0.0, 7
      %v2161 = vsel %vm2158, %v2159, %v2160
      %v2162 = vrot.slane %v1940, 7
      %v2163 = vrot.slane %v1942, 7
      %v2164 = vsel %vm2158, %v2162, %v2163
      %v2165 = vrot.slane %v1981, 7
      %v2166 = vsel %vm2158, %v2162, %v2165
      %v2167 = vrot.slane %v1911, 7
      %v2168 = vsel %vm2158, %v2160, %v2167
      %v2169 = vrot.slane %v1941, 7
      %v2170 = vrot.slane %v1944, 7
      %v2171 = vsel %vm2158, %v2169, %v2170
      %v2172 = vrot.slane %v1980, 7
      %v2173 = vrot.slane %v1983, 7
      %v2174 = vsel %vm2158, %v2172, %v2173
      %v2175 = vrot.slane %v1912, 7
      %v2176 = vsel %vm2158, %v2167, %v2175
      %v2177 = vrot.slane %v1943, 7
      %v2178 = vrot.slane %v1946, 7
      %v2179 = vsel %vm2158, %v2177, %v2178
      %v2180 = vrot.slane %v1982, 7
      %v2181 = vrot.slane %v1985, 7
      %v2182 = vsel %vm2158, %v2180, %v2181
      %v2183 = vsel %vm2158, %v2163, %v2170
      %v2184 = vsel %vm2158, %v2165, %v2173
      %v2185 = vsel %vm2158, %v2170, %v2178
      %v2186 = vsel %vm2158, %v2173, %v2181
      %v2187 = vrot.slane %v1913, 7
      %v2188 = vsel %vm2158, %v2175, %v2187
      %v2189 = vrot.slane %v1948, 7
      %v2190 = vsel %vm2158, %v2178, %v2189
      %v2191 = vrot.slane %v1987, 7
      %v2192 = vsel %vm2158, %v2181, %v2191
      %v2193 = vrot.slane %v1914, 7
      %v2194 = vsel %vm2158, %v2187, %v2193
      %v2195 = vrot.slane %v1950, 7
      %v2196 = vsel %vm2158, %v2189, %v2195
      %v2197 = vrot.slane %v1989, 7
      %v2198 = vsel %vm2158, %v2191, %v2197
      %v2199 = vrot.slane %v1915, 7
      %v2200 = vsel %vm2158, %v2193, %v2199
      %v2201 = vrot.slane %v1952, 7
      %v2202 = vsel %vm2158, %v2195, %v2201
      %v2203 = vrot.slane %v1991, 7
      %v2204 = vsel %vm2158, %v2197, %v2203
      %v2205 = vrot.slane %v1916, 7
      %v2206 = vsel %vm2158, %v2199, %v2205
      %v2207 = vrot.slane %v1954, 7
      %v2208 = vsel %vm2158, %v2201, %v2207
      %v2209 = vrot.slane %v1993, 7
      %v2210 = vsel %vm2158, %v2203, %v2209
      %v2211 = vrot.slane %v1917, 7
      %v2212 = vsel %vm2158, %v2205, %v2211
      %v2213 = vrot.slane %v1956, 7
      %v2214 = vsel %vm2158, %v2207, %v2213
      %v2215 = vrot.slane %v1995, 7
      %v2216 = vsel %vm2158, %v2209, %v2215
      %v2217 = vrot.slane %v1918, 7
      %v2218 = vsel %vm2158, %v2211, %v2217
      %v2219 = vrot.slane %v1958, 7
      %v2220 = vsel %vm2158, %v2213, %v2219
      %v2221 = vrot.slane %v1997, 7
      %v2222 = vsel %vm2158, %v2215, %v2221
      %v2223 = vrot.slane %v1919, 7
      %v2224 = vsel %vm2158, %v2217, %v2223
      %v2225 = vrot.slane %v1960, 7
      %v2226 = vsel %vm2158, %v2219, %v2225
      %v2227 = vrot.slane %v1999, 7
      %v2228 = vsel %vm2158, %v2221, %v2227
      %v2229 = vrot.slane %v1920, 7
      %v2230 = vsel %vm2158, %v2223, %v2229
      %v2231 = vrot.slane %v1962, 7
      %v2232 = vsel %vm2158, %v2225, %v2231
      %v2233 = vrot.slane %v2001, 7
      %v2234 = vsel %vm2158, %v2227, %v2233
      %v2235 = vrot.slane %v1921, 7
      %v2236 = vsel %vm2158, %v2229, %v2235
      %v2237 = vrot.slane %v1964, 7
      %v2238 = vsel %vm2158, %v2231, %v2237
      %v2239 = vrot.slane %v2003, 7
      %v2240 = vsel %vm2158, %v2233, %v2239
      %v2241 = vrot.slane %v1922, 7
      %v2242 = vsel %vm2158, %v2235, %v2241
      %v2243 = vrot.slane %v1966, 7
      %v2244 = vsel %vm2158, %v2237, %v2243
      %v2245 = vrot.slane %v2005, 7
      %v2246 = vsel %vm2158, %v2239, %v2245
      %v2247 = vrot.slane %v1923, 7
      %v2248 = vsel %vm2158, %v2241, %v2247
      %v2249 = vrot.slane %v2008, 7
      %v2250 = vsel %vm2158, %v2243, %v2249
      %v2251 = vrot.slane %v2011, 7
      %v2252 = vsel %vm2158, %v2245, %v2251
      %v2253 = vrot.slane %v1924, 7
      %v2254 = vsel %vm2158, %v2247, %v2253
      %v2255 = vrot.slane %v2012, 7
      %v2256 = vsel %vm2158, %v2249, %v2255
      %v2257 = vrot.slane %v2013, 7
      %v2258 = vsel %vm2158, %v2251, %v2257
      %v2259 = vrot.slane %v1965, 7
      %v2260 = vsel %vm2158, %v2243, %v2259
      %v2261 = vrot.slane %v2004, 7
      %v2262 = vsel %vm2158, %v2245, %v2261
      %v2263 = vrot.slane %v2007, 7
      %v2264 = vsel %vm2158, %v2249, %v2263
      %v2265 = vrot.slane %v2010, 7
      %v2266 = vsel %vm2158, %v2251, %v2265
      %v2267 = vsel %vm2158, %v2253, %v2160
      %v2268 = vsel %vm2158, %v2255, %v2162
      %v2269 = vsel %vm2158, %v2257, %v2162
      %2326 = vmatprep.subr.mxu0 0.0
      %2327 = vmatpush1.msra.mxu0 %v2029
      %2328 = vmatprep.subr.mxu0 0.0
      %2329 = vmatpush1.msra.mxu0 %v2028
      %2330 = vmatprep.subr.mxu0 0.0
      %2331 = vmatpush1.msra.mxu0 %v2027
      %2332 = vmatprep.subr.mxu0 0.0
      %2333 = vmatpush1.msra.mxu0 %v2026
      %2334 = vmatprep.subr.mxu0 0.0
      %2335 = vmatpush1.msra.mxu0 %v2025
      %2336 = vmatprep.subr.mxu0 0.0
      %2337 = vmatpush1.msra.mxu0 %v2024
      %2338 = vmatprep.subr.mxu0 0.0
      %2339 = vmatpush1.msra.mxu0 %v2023
      %2340 = vmatprep.subr.mxu0 0.0
      %2341 = vmatpush1.msra.mxu0 %v2022
      %2342 = vmatprep.subr.mxu0 0.0
      %2343 = vmatpush1.msra.mxu0 %v2021
      %2344 = vmatprep.subr.mxu0 0.0
      %2345 = vmatpush1.msra.mxu0 %v2020
      %2346 = vmatprep.subr.mxu0 0.0
      %2347 = vmatpush1.msra.mxu0 %v2019
      %2348 = vmatprep.subr.mxu0 0.0
      %2349 = vmatpush1.msra.mxu0 %v2018
      %2350 = vmatprep.subr.mxu0 0.0
      %2351 = vmatpush1.msra.mxu0 %v2017
      %2352 = vmatprep.subr.mxu0 0.0
      %2353 = vmatpush1.msra.mxu0 %v2016
      %2354 = vmatprep.subr.mxu0 0.0
      %2355 = vmatpush1.msra.mxu0 %v2015
      %2356 = vmatprep.subr.mxu0 0.0
      %2357 = vmatpush1.msra.mxu0 %v2014
      %2358 = vmatprep.subr.mxu0 0.0
      %2359 = vmatpush2.msra.mxu0 %v2045
      %2360 = vmatprep.subr.mxu0 0.0
      %2361 = vmatpush2.msra.mxu0 %v2044
      %2362 = vmatprep.subr.mxu0 0.0
      %2363 = vmatpush2.msra.mxu0 %v2043
      %2364 = vmatprep.subr.mxu0 0.0
      %2365 = vmatpush2.msra.mxu0 %v2042
      %2366 = vmatprep.subr.mxu0 0.0
      %2367 = vmatpush2.msra.mxu0 %v2041
      %2368 = vmatprep.subr.mxu0 0.0
      %2369 = vmatpush2.msra.mxu0 %v2040
      %2370 = vmatprep.subr.mxu0 0.0
      %2371 = vmatpush2.msra.mxu0 %v2039
      %2372 = vmatprep.subr.mxu0 0.0
      %2373 = vmatpush2.msra.mxu0 %v2038
      %2374 = vmatprep.subr.mxu0 0.0
      %2375 = vmatpush2.msra.mxu0 %v2037
      %2376 = vmatprep.subr.mxu0 0.0
      %2377 = vmatpush2.msra.mxu0 %v2036
      %2378 = vmatprep.subr.mxu0 0.0
      %2379 = vmatpush2.msra.mxu0 %v2035
      %2380 = vmatprep.subr.mxu0 0.0
      %2381 = vmatpush2.msra.mxu0 %v2034
      %2382 = vmatprep.subr.mxu0 0.0
      %2383 = vmatpush2.msra.mxu0 %v2033
      %2384 = vmatprep.subr.mxu0 0.0
      %2385 = vmatpush2.msra.mxu0 %v2032
      %2386 = vmatprep.subr.mxu0 0.0
      %2387 = vmatpush2.msra.mxu0 %v2031
      %2388 = vmatprep.subr.mxu0 0.0
      %2389 = vmatpush2.msra.mxu0 %v2030
      %2390 = vmatprep.mubr.f32.mxu0 %v2164
      %2391 = vmatmul.mubr.f32.gmra.mxu0 %v2161
      %v2392 = vpop.f32.mrf.mxu0
      %v2393 = vadd.f32 0.0, %v2392
      %v2394 = vpop.f32.mrf.mxu0
      %2395 = vmatprep.mubr.f32.mxu0 %v2183
      %2396 = vmatmul.mubr.f32.gmra.mxu0 %v2168
      %v2397 = vpop.f32.mrf.mxu0
      %v2398 = vadd.f32 0.0, %v2397
      %v2399 = vpop.f32.mrf.mxu0
      %2400 = vmatprep.mubr.f32.mxu0 %v2185
      %2401 = vmatmul.mubr.f32.gmra.mxu0 %v2176
      %v2402 = vpop.f32.mrf.mxu0
      %v2403 = vadd.f32 0.0, %v2402
      %v2404 = vpop.f32.mrf.mxu0
      %2405 = vmatprep.mubr.f32.mxu0 %v2190
      %2406 = vmatmul.mubr.f32.gmra.mxu0 %v2188
      %v2407 = vpop.f32.mrf.mxu0
      %v2408 = vadd.f32 0.0, %v2407
      %v2409 = vpop.f32.mrf.mxu0
      %2410 = vmatprep.mubr.f32.mxu0 %v2196
      %2411 = vmatmul.mubr.f32.gmra.mxu0 %v2194
      %v2412 = vpop.f32.mrf.mxu0
      %v2413 = vadd.f32 0.0, %v2412
      %v2414 = vpop.f32.mrf.mxu0
      %2415 = vmatprep.mubr.f32.mxu0 %v2202
      %2416 = vmatmul.mubr.f32.gmra.mxu0 %v2200
      %v2417 = vpop.f32.mrf.mxu0
      %v2418 = vadd.f32 0.0, %v2417
      %v2419 = vpop.f32.mrf.mxu0
      %2420 = vmatprep.mubr.f32.mxu0 %v2208
      %2421 = vmatmul.mubr.f32.gmra.mxu0 %v2206
      %v2422 = vpop.f32.mrf.mxu0
      %v2423 = vadd.f32 0.0, %v2422
      %v2424 = vpop.f32.mrf.mxu0
      %2425 = vmatprep.mubr.f32.mxu0 %v2214
      %2426 = vmatmul.mubr.f32.gmra.mxu0 %v2212
      %v2427 = vpop.f32.mrf.mxu0
      %v2428 = vadd.f32 0.0, %v2427
      %v2429 = vpop.f32.mrf.mxu0
      %2430 = vmatprep.mubr.f32.mxu0 %v2220
      %2431 = vmatmul.mubr.f32.gmra.mxu0 %v2218
      %v2432 = vpop.f32.mrf.mxu0
      %v2433 = vadd.f32 0.0, %v2432
      %v2434 = vpop.f32.mrf.mxu0
      %2435 = vmatprep.mubr.f32.mxu0 %v2226
      %2436 = vmatmul.mubr.f32.gmra.mxu0 %v2224
      %v2437 = vpop.f32.mrf.mxu0
      %v2438 = vadd.f32 0.0, %v2437
      %v2439 = vpop.f32.mrf.mxu0
      %2440 = vmatprep.mubr.f32.mxu0 %v2232
      %2441 = vmatmul.mubr.f32.gmra.mxu0 %v2230
      %v2442 = vpop.f32.mrf.mxu0
      %v2443 = vadd.f32 0.0, %v2442
      %v2444 = vpop.f32.mrf.mxu0
      %2445 = vmatprep.mubr.f32.mxu0 %v2238
      %2446 = vmatmul.mubr.f32.gmra.mxu0 %v2236
      %v2447 = vpop.f32.mrf.mxu0
      %v2448 = vadd.f32 0.0, %v2447
      %v2449 = vpop.f32.mrf.mxu0
      %2450 = vmatprep.mubr.f32.mxu0 %v2244
      %2451 = vmatmul.mubr.f32.gmra.mxu0 %v2242
      %v2452 = vpop.f32.mrf.mxu0
      %v2453 = vadd.f32 0.0, %v2452
      %v2454 = vpop.f32.mrf.mxu0
      %2455 = vmatprep.mubr.f32.mxu0 %v2260
      %2456 = vmatmul.mubr.f32.gmra.mxu0 %v2248
      %v2457 = vpop.f32.mrf.mxu0
      %v2458 = vadd.f32 0.0, %v2457
      %v2459 = vpop.f32.mrf.mxu0
      %2460 = vdwg.mxu0
      %2461 = vmatprep.subr.mxu0 0.0
      %2462 = vmatpush1.msra.mxu0 %v2061
      %2463 = vmatprep.subr.mxu0 0.0
      %2464 = vmatpush1.msra.mxu0 %v2060
      %2465 = vmatprep.subr.mxu0 0.0
      %2466 = vmatpush1.msra.mxu0 %v2059
      %2467 = vmatprep.subr.mxu0 0.0
      %2468 = vmatpush1.msra.mxu0 %v2058
      %2469 = vmatprep.subr.mxu0 0.0
      %2470 = vmatpush1.msra.mxu0 %v2057
      %2471 = vmatprep.subr.mxu0 0.0
      %2472 = vmatpush1.msra.mxu0 %v2056
      %2473 = vmatprep.subr.mxu0 0.0
      %2474 = vmatpush1.msra.mxu0 %v2055
      %2475 = vmatprep.subr.mxu0 0.0
      %2476 = vmatpush1.msra.mxu0 %v2054
      %2477 = vmatprep.subr.mxu0 0.0
      %2478 = vmatpush1.msra.mxu0 %v2053
      %2479 = vmatprep.subr.mxu0 0.0
      %2480 = vmatpush1.msra.mxu0 %v2052
      %2481 = vmatprep.subr.mxu0 0.0
      %2482 = vmatpush1.msra.mxu0 %v2051
      %2483 = vmatprep.subr.mxu0 0.0
      %2484 = vmatpush1.msra.mxu0 %v2050
      %2485 = vmatprep.subr.mxu0 0.0
      %2486 = vmatpush1.msra.mxu0 %v2049
      %2487 = vmatprep.subr.mxu0 0.0
      %2488 = vmatpush1.msra.mxu0 %v2048
      %2489 = vmatprep.subr.mxu0 0.0
      %2490 = vmatpush1.msra.mxu0 %v2047
      %2491 = vmatprep.subr.mxu0 0.0
      %2492 = vmatpush1.msra.mxu0 %v2046
      %2493 = vmatprep.subr.mxu0 0.0
      %2494 = vmatpush2.msra.mxu0 %v2077
      %2495 = vmatprep.subr.mxu0 0.0
      %2496 = vmatpush2.msra.mxu0 %v2076
      %2497 = vmatprep.subr.mxu0 0.0
      %2498 = vmatpush2.msra.mxu0 %v2075
      %2499 = vmatprep.subr.mxu0 0.0
      %2500 = vmatpush2.msra.mxu0 %v2074
      %2501 = vmatprep.subr.mxu0 0.0
      %2502 = vmatpush2.msra.mxu0 %v2073
      %2503 = vmatprep.subr.mxu0 0.0
      %2504 = vmatpush2.msra.mxu0 %v2072
      %2505 = vmatprep.subr.mxu0 0.0
      %2506 = vmatpush2.msra.mxu0 %v2071
      %2507 = vmatprep.subr.mxu0 0.0
      %2508 = vmatpush2.msra.mxu0 %v2070
      %2509 = vmatprep.subr.mxu0 0.0
      %2510 = vmatpush2.msra.mxu0 %v2069
      %2511 = vmatprep.subr.mxu0 0.0
      %2512 = vmatpush2.msra.mxu0 %v2068
      %2513 = vmatprep.subr.mxu0 0.0
      %2514 = vmatpush2.msra.mxu0 %v2067
      %2515 = vmatprep.subr.mxu0 0.0
      %2516 = vmatpush2.msra.mxu0 %v2066
      %2517 = vmatprep.subr.mxu0 0.0
      %2518 = vmatpush2.msra.mxu0 %v2065
      %2519 = vmatprep.subr.mxu0 0.0
      %2520 = vmatpush2.msra.mxu0 %v2064
      %2521 = vmatprep.subr.mxu0 0.0
      %2522 = vmatpush2.msra.mxu0 %v2063
      %2523 = vmatprep.subr.mxu0 0.0
      %2524 = vmatpush2.msra.mxu0 %v2062
      %2525 = vmatprep.mubr.f32.mxu0 %v2168
      %2526 = vmatmul.mubr.f32.gmra.mxu0 %v2166
      %v2527 = vpop.f32.mrf.mxu0
      %v2528 = vadd.f32 %v2393, %v2527
      %v2529 = vpop.f32.mrf.mxu0
      %2530 = vmatprep.mubr.f32.mxu0 %v2176
      %2531 = vmatmul.mubr.f32.gmra.mxu0 %v2184
      %v2532 = vpop.f32.mrf.mxu0
      %v2533 = vadd.f32 %v2398, %v2532
      %v2534 = vpop.f32.mrf.mxu0
      %2535 = vmatprep.mubr.f32.mxu0 %v2188
      %2536 = vmatmul.mubr.f32.gmra.mxu0 %v2186
      %v2537 = vpop.f32.mrf.mxu0
      %v2538 = vadd.f32 %v2403, %v2537
      %v2539 = vpop.f32.mrf.mxu0
      %2540 = vmatprep.mubr.f32.mxu0 %v2194
      %2541 = vmatmul.mubr.f32.gmra.mxu0 %v2192
      %v2542 = vpop.f32.mrf.mxu0
      %v2543 = vadd.f32 %v2408, %v2542
      %v2544 = vpop.f32.mrf.mxu0
      %2545 = vmatprep.mubr.f32.mxu0 %v2200
      %2546 = vmatmul.mubr.f32.gmra.mxu0 %v2198
      %v2547 = vpop.f32.mrf.mxu0
      %v2548 = vadd.f32 %v2413, %v2547
      %v2549 = vpop.f32.mrf.mxu0
      %2550 = vmatprep.mubr.f32.mxu0 %v2206
      %2551 = vmatmul.mubr.f32.gmra.mxu0 %v2204
      %v2552 = vpop.f32.mrf.mxu0
      %v2553 = vadd.f32 %v2418, %v2552
      %v2554 = vpop.f32.mrf.mxu0
      %2555 = vmatprep.mubr.f32.mxu0 %v2212
      %2556 = vmatmul.mubr.f32.gmra.mxu0 %v2210
      %v2557 = vpop.f32.mrf.mxu0
      %v2558 = vadd.f32 %v2423, %v2557
      %v2559 = vpop.f32.mrf.mxu0
      %2560 = vmatprep.mubr.f32.mxu0 %v2218
      %2561 = vmatmul.mubr.f32.gmra.mxu0 %v2216
      %v2562 = vpop.f32.mrf.mxu0
      %v2563 = vadd.f32 %v2428, %v2562
      %v2564 = vpop.f32.mrf.mxu0
      %2565 = vmatprep.mubr.f32.mxu0 %v2224
      %2566 = vmatmul.mubr.f32.gmra.mxu0 %v2222
      %v2567 = vpop.f32.mrf.mxu0
      %v2568 = vadd.f32 %v2433, %v2567
      %v2569 = vpop.f32.mrf.mxu0
      %2570 = vmatprep.mubr.f32.mxu0 %v2230
      %2571 = vmatmul.mubr.f32.gmra.mxu0 %v2228
      %v2572 = vpop.f32.mrf.mxu0
      %v2573 = vadd.f32 %v2438, %v2572
      %v2574 = vpop.f32.mrf.mxu0
      %2575 = vmatprep.mubr.f32.mxu0 %v2236
      %2576 = vmatmul.mubr.f32.gmra.mxu0 %v2234
      %v2577 = vpop.f32.mrf.mxu0
      %v2578 = vadd.f32 %v2443, %v2577
      %v2579 = vpop.f32.mrf.mxu0
      %2580 = vmatprep.mubr.f32.mxu0 %v2242
      %2581 = vmatmul.mubr.f32.gmra.mxu0 %v2240
      %v2582 = vpop.f32.mrf.mxu0
      %v2583 = vadd.f32 %v2448, %v2582
      %v2584 = vpop.f32.mrf.mxu0
      %2585 = vmatprep.mubr.f32.mxu0 %v2248
      %2586 = vmatmul.mubr.f32.gmra.mxu0 %v2246
      %v2587 = vpop.f32.mrf.mxu0
      %v2588 = vadd.f32 %v2453, %v2587
      %v2589 = vpop.f32.mrf.mxu0
      %2590 = vmatprep.mubr.f32.mxu0 %v2254
      %2591 = vmatmul.mubr.f32.gmra.mxu0 %v2262
      %v2592 = vpop.f32.mrf.mxu0
      %v2593 = vadd.f32 %v2458, %v2592
      %v2594 = vpop.f32.mrf.mxu0
      %2595 = vdwg.mxu0
      %2596 = vmatprep.subr.mxu0 0.0
      %2597 = vmatpush1.msra.mxu0 %v2093
      %2598 = vmatprep.subr.mxu0 0.0
      %2599 = vmatpush1.msra.mxu0 %v2092
      %2600 = vmatprep.subr.mxu0 0.0
      %2601 = vmatpush1.msra.mxu0 %v2091
      %2602 = vmatprep.subr.mxu0 0.0
      %2603 = vmatpush1.msra.mxu0 %v2090
      %2604 = vmatprep.subr.mxu0 0.0
      %2605 = vmatpush1.msra.mxu0 %v2089
      %2606 = vmatprep.subr.mxu0 0.0
      %2607 = vmatpush1.msra.mxu0 %v2088
      %2608 = vmatprep.subr.mxu0 0.0
      %2609 = vmatpush1.msra.mxu0 %v2087
      %2610 = vmatprep.subr.mxu0 0.0
      %2611 = vmatpush1.msra.mxu0 %v2086
      %2612 = vmatprep.subr.mxu0 0.0
      %2613 = vmatpush1.msra.mxu0 %v2085
      %2614 = vmatprep.subr.mxu0 0.0
      %2615 = vmatpush1.msra.mxu0 %v2084
      %2616 = vmatprep.subr.mxu0 0.0
      %2617 = vmatpush1.msra.mxu0 %v2083
      %2618 = vmatprep.subr.mxu0 0.0
      %2619 = vmatpush1.msra.mxu0 %v2082
      %2620 = vmatprep.subr.mxu0 0.0
      %2621 = vmatpush1.msra.mxu0 %v2081
      %2622 = vmatprep.subr.mxu0 0.0
      %2623 = vmatpush1.msra.mxu0 %v2080
      %2624 = vmatprep.subr.mxu0 0.0
      %2625 = vmatpush1.msra.mxu0 %v2079
      %2626 = vmatprep.subr.mxu0 0.0
      %2627 = vmatpush1.msra.mxu0 %v2078
      %2628 = vmatprep.subr.mxu0 0.0
      %2629 = vmatpush2.msra.mxu0 %v2109
      %2630 = vmatprep.subr.mxu0 0.0
      %2631 = vmatpush2.msra.mxu0 %v2108
      %2632 = vmatprep.subr.mxu0 0.0
      %2633 = vmatpush2.msra.mxu0 %v2107
      %2634 = vmatprep.subr.mxu0 0.0
      %2635 = vmatpush2.msra.mxu0 %v2106
      %2636 = vmatprep.subr.mxu0 0.0
      %2637 = vmatpush2.msra.mxu0 %v2105
      %2638 = vmatprep.subr.mxu0 0.0
      %2639 = vmatpush2.msra.mxu0 %v2104
      %2640 = vmatprep.subr.mxu0 0.0
      %2641 = vmatpush2.msra.mxu0 %v2103
      %2642 = vmatprep.subr.mxu0 0.0
      %2643 = vmatpush2.msra.mxu0 %v2102
      %2644 = vmatprep.subr.mxu0 0.0
      %2645 = vmatpush2.msra.mxu0 %v2101
      %2646 = vmatprep.subr.mxu0 0.0
      %2647 = vmatpush2.msra.mxu0 %v2100
      %2648 = vmatprep.subr.mxu0 0.0
      %2649 = vmatpush2.msra.mxu0 %v2099
      %2650 = vmatprep.subr.mxu0 0.0
      %2651 = vmatpush2.msra.mxu0 %v2098
      %2652 = vmatprep.subr.mxu0 0.0
      %2653 = vmatpush2.msra.mxu0 %v2097
      %2654 = vmatprep.subr.mxu0 0.0
      %2655 = vmatpush2.msra.mxu0 %v2096
      %2656 = vmatprep.subr.mxu0 0.0
      %2657 = vmatpush2.msra.mxu0 %v2095
      %2658 = vmatprep.subr.mxu0 0.0
      %2659 = vmatpush2.msra.mxu0 %v2094
      %2660 = vmatprep.mubr.f32.mxu0 %v2174
      %2661 = vmatmul.mubr.f32.gmra.mxu0 %v2171
      %v2662 = vpop.f32.mrf.mxu0
      %v2663 = vadd.f32 %v2528, %v2662
      %v2664 = vpop.f32.mrf.mxu0
      %2665 = vmatprep.mubr.f32.mxu0 %v2186
      %2666 = vmatmul.mubr.f32.gmra.mxu0 %v2185
      %v2667 = vpop.f32.mrf.mxu0
      %v2668 = vadd.f32 %v2533, %v2667
      %v2669 = vpop.f32.mrf.mxu0
      %2670 = vmatprep.mubr.f32.mxu0 %v2192
      %2671 = vmatmul.mubr.f32.gmra.mxu0 %v2190
      %v2672 = vpop.f32.mrf.mxu0
      %v2673 = vadd.f32 %v2538, %v2672
      %v2674 = vpop.f32.mrf.mxu0
      %2675 = vmatprep.mubr.f32.mxu0 %v2198
      %2676 = vmatmul.mubr.f32.gmra.mxu0 %v2196
      %v2677 = vpop.f32.mrf.mxu0
      %v2678 = vadd.f32 %v2543, %v2677
      %v2679 = vpop.f32.mrf.mxu0
      %2680 = vmatprep.mubr.f32.mxu0 %v2204
      %2681 = vmatmul.mubr.f32.gmra.mxu0 %v2202
      %v2682 = vpop.f32.mrf.mxu0
      %v2683 = vadd.f32 %v2548, %v2682
      %v2684 = vpop.f32.mrf.mxu0
      %2685 = vmatprep.mubr.f32.mxu0 %v2210
      %2686 = vmatmul.mubr.f32.gmra.mxu0 %v2208
      %v2687 = vpop.f32.mrf.mxu0
      %v2688 = vadd.f32 %v2553, %v2687
      %v2689 = vpop.f32.mrf.mxu0
      %2690 = vmatprep.mubr.f32.mxu0 %v2216
      %2691 = vmatmul.mubr.f32.gmra.mxu0 %v2214
      %v2692 = vpop.f32.mrf.mxu0
      %v2693 = vadd.f32 %v2558, %v2692
      %v2694 = vpop.f32.mrf.mxu0
      %2695 = vmatprep.mubr.f32.mxu0 %v2222
      %2696 = vmatmul.mubr.f32.gmra.mxu0 %v2220
      %v2697 = vpop.f32.mrf.mxu0
      %v2698 = vadd.f32 %v2563, %v2697
      %v2699 = vpop.f32.mrf.mxu0
      %2700 = vmatprep.mubr.f32.mxu0 %v2228
      %2701 = vmatmul.mubr.f32.gmra.mxu0 %v2226
      %v2702 = vpop.f32.mrf.mxu0
      %v2703 = vadd.f32 %v2568, %v2702
      %v2704 = vpop.f32.mrf.mxu0
      %2705 = vmatprep.mubr.f32.mxu0 %v2234
      %2706 = vmatmul.mubr.f32.gmra.mxu0 %v2232
      %v2707 = vpop.f32.mrf.mxu0
      %v2708 = vadd.f32 %v2573, %v2707
      %v2709 = vpop.f32.mrf.mxu0
      %2710 = vmatprep.mubr.f32.mxu0 %v2240
      %2711 = vmatmul.mubr.f32.gmra.mxu0 %v2238
      %v2712 = vpop.f32.mrf.mxu0
      %v2713 = vadd.f32 %v2578, %v2712
      %v2714 = vpop.f32.mrf.mxu0
      %2715 = vmatprep.mubr.f32.mxu0 %v2246
      %2716 = vmatmul.mubr.f32.gmra.mxu0 %v2244
      %v2717 = vpop.f32.mrf.mxu0
      %v2718 = vadd.f32 %v2583, %v2717
      %v2719 = vpop.f32.mrf.mxu0
      %2720 = vmatprep.mubr.f32.mxu0 %v2252
      %2721 = vmatmul.mubr.f32.gmra.mxu0 %v2250
      %v2722 = vpop.f32.mrf.mxu0
      %v2723 = vadd.f32 %v2588, %v2722
      %v2724 = vpop.f32.mrf.mxu0
      %2725 = vmatprep.mubr.f32.mxu0 %v2266
      %2726 = vmatmul.mubr.f32.gmra.mxu0 %v2264
      %v2727 = vpop.f32.mrf.mxu0
      %v2728 = vadd.f32 %v2593, %v2727
      %v2729 = vpop.f32.mrf.mxu0
      %2730 = vdwg.mxu0
      %2731 = vmatprep.subr.mxu0 0.0
      %2732 = vmatpush1.msra.mxu0 %v2125
      %2733 = vmatprep.subr.mxu0 0.0
      %2734 = vmatpush1.msra.mxu0 %v2124
      %2735 = vmatprep.subr.mxu0 0.0
      %2736 = vmatpush1.msra.mxu0 %v2123
      %2737 = vmatprep.subr.mxu0 0.0
      %2738 = vmatpush1.msra.mxu0 %v2122
      %2739 = vmatprep.subr.mxu0 0.0
      %2740 = vmatpush1.msra.mxu0 %v2121
      %2741 = vmatprep.subr.mxu0 0.0
      %2742 = vmatpush1.msra.mxu0 %v2120
      %2743 = vmatprep.subr.mxu0 0.0
      %2744 = vmatpush1.msra.mxu0 %v2119
      %2745 = vmatprep.subr.mxu0 0.0
      %2746 = vmatpush1.msra.mxu0 %v2118
      %2747 = vmatprep.subr.mxu0 0.0
      %2748 = vmatpush1.msra.mxu0 %v2117
      %2749 = vmatprep.subr.mxu0 0.0
      %2750 = vmatpush1.msra.mxu0 %v2116
      %2751 = vmatprep.subr.mxu0 0.0
      %2752 = vmatpush1.msra.mxu0 %v2115
      %2753 = vmatprep.subr.mxu0 0.0
      %2754 = vmatpush1.msra.mxu0 %v2114
      %2755 = vmatprep.subr.mxu0 0.0
      %2756 = vmatpush1.msra.mxu0 %v2113
      %2757 = vmatprep.subr.mxu0 0.0
      %2758 = vmatpush1.msra.mxu0 %v2112
      %2759 = vmatprep.subr.mxu0 0.0
      %2760 = vmatpush1.msra.mxu0 %v2111
      %2761 = vmatprep.subr.mxu0 0.0
      %2762 = vmatpush1.msra.mxu0 %v2110
      %2763 = vmatprep.subr.mxu0 0.0
      %2764 = vmatpush2.msra.mxu0 %v2141
      %2765 = vmatprep.subr.mxu0 0.0
      %2766 = vmatpush2.msra.mxu0 %v2140
      %2767 = vmatprep.subr.mxu0 0.0
      %2768 = vmatpush2.msra.mxu0 %v2139
      %2769 = vmatprep.subr.mxu0 0.0
      %2770 = vmatpush2.msra.mxu0 %v2138
      %2771 = vmatprep.subr.mxu0 0.0
      %2772 = vmatpush2.msra.mxu0 %v2137
      %2773 = vmatprep.subr.mxu0 0.0
      %2774 = vmatpush2.msra.mxu0 %v2136
      %2775 = vmatprep.subr.mxu0 0.0
      %2776 = vmatpush2.msra.mxu0 %v2135
      %2777 = vmatprep.subr.mxu0 0.0
      %2778 = vmatpush2.msra.mxu0 %v2134
      %2779 = vmatprep.subr.mxu0 0.0
      %2780 = vmatpush2.msra.mxu0 %v2133
      %2781 = vmatprep.subr.mxu0 0.0
      %2782 = vmatpush2.msra.mxu0 %v2132
      %2783 = vmatprep.subr.mxu0 0.0
      %2784 = vmatpush2.msra.mxu0 %v2131
      %2785 = vmatprep.subr.mxu0 0.0
      %2786 = vmatpush2.msra.mxu0 %v2130
      %2787 = vmatprep.subr.mxu0 0.0
      %2788 = vmatpush2.msra.mxu0 %v2129
      %2789 = vmatprep.subr.mxu0 0.0
      %2790 = vmatpush2.msra.mxu0 %v2128
      %2791 = vmatprep.subr.mxu0 0.0
      %2792 = vmatpush2.msra.mxu0 %v2127
      %2793 = vmatprep.subr.mxu0 0.0
      %2794 = vmatpush2.msra.mxu0 %v2126
      %2795 = vmatprep.mubr.f32.mxu0 %v2179
      %2796 = vmatmul.mubr.f32.gmra.mxu0 %v2176
      %v2797 = vpop.f32.mrf.mxu0
      %v2798 = vadd.f32 %v2663, %v2797
      %v2799 = vpop.f32.mrf.mxu0
      %2800 = vmatprep.mubr.f32.mxu0 %v2190
      %2801 = vmatmul.mubr.f32.gmra.mxu0 %v2188
      %v2802 = vpop.f32.mrf.mxu0
      %v2803 = vadd.f32 %v2668, %v2802
      %v2804 = vpop.f32.mrf.mxu0
      %2805 = vmatprep.mubr.f32.mxu0 %v2196
      %2806 = vmatmul.mubr.f32.gmra.mxu0 %v2194
      %v2807 = vpop.f32.mrf.mxu0
      %v2808 = vadd.f32 %v2673, %v2807
      %v2809 = vpop.f32.mrf.mxu0
      %2810 = vmatprep.mubr.f32.mxu0 %v2202
      %2811 = vmatmul.mubr.f32.gmra.mxu0 %v2200
      %v2812 = vpop.f32.mrf.mxu0
      %v2813 = vadd.f32 %v2678, %v2812
      %v2814 = vpop.f32.mrf.mxu0
      %2815 = vmatprep.mubr.f32.mxu0 %v2208
      %2816 = vmatmul.mubr.f32.gmra.mxu0 %v2206
      %v2817 = vpop.f32.mrf.mxu0
      %v2818 = vadd.f32 %v2683, %v2817
      %v2819 = vpop.f32.mrf.mxu0
      %2820 = vmatprep.mubr.f32.mxu0 %v2214
      %2821 = vmatmul.mubr.f32.gmra.mxu0 %v2212
      %v2822 = vpop.f32.mrf.mxu0
      %v2823 = vadd.f32 %v2688, %v2822
      %v2824 = vpop.f32.mrf.mxu0
      %2825 = vmatprep.mubr.f32.mxu0 %v2220
      %2826 = vmatmul.mubr.f32.gmra.mxu0 %v2218
      %v2827 = vpop.f32.mrf.mxu0
      %v2828 = vadd.f32 %v2693, %v2827
      %v2829 = vpop.f32.mrf.mxu0
      %2830 = vmatprep.mubr.f32.mxu0 %v2226
      %2831 = vmatmul.mubr.f32.gmra.mxu0 %v2224
      %v2832 = vpop.f32.mrf.mxu0
      %v2833 = vadd.f32 %v2698, %v2832
      %v2834 = vpop.f32.mrf.mxu0
      %2835 = vmatprep.mubr.f32.mxu0 %v2232
      %2836 = vmatmul.mubr.f32.gmra.mxu0 %v2230
      %v2837 = vpop.f32.mrf.mxu0
      %v2838 = vadd.f32 %v2703, %v2837
      %v2839 = vpop.f32.mrf.mxu0
      %2840 = vmatprep.mubr.f32.mxu0 %v2238
      %2841 = vmatmul.mubr.f32.gmra.mxu0 %v2236
      %v2842 = vpop.f32.mrf.mxu0
      %v2843 = vadd.f32 %v2708, %v2842
      %v2844 = vpop.f32.mrf.mxu0
      %2845 = vmatprep.mubr.f32.mxu0 %v2244
      %2846 = vmatmul.mubr.f32.gmra.mxu0 %v2242
      %v2847 = vpop.f32.mrf.mxu0
      %v2848 = vadd.f32 %v2713, %v2847
      %v2849 = vpop.f32.mrf.mxu0
      %2850 = vmatprep.mubr.f32.mxu0 %v2250
      %2851 = vmatmul.mubr.f32.gmra.mxu0 %v2248
      %v2852 = vpop.f32.mrf.mxu0
      %v2853 = vadd.f32 %v2718, %v2852
      %v2854 = vpop.f32.mrf.mxu0
      %2855 = vmatprep.mubr.f32.mxu0 %v2256
      %2856 = vmatmul.mubr.f32.gmra.mxu0 %v2254
      %v2857 = vpop.f32.mrf.mxu0
      %v2858 = vadd.f32 %v2723, %v2857
      %v2859 = vpop.f32.mrf.mxu0
      %2860 = vmatprep.mubr.f32.mxu0 %v2268
      %2861 = vmatmul.mubr.f32.gmra.mxu0 %v2267
      %v2862 = vpop.f32.mrf.mxu0
      %v2863 = vadd.f32 %v2728, %v2862
      %v2864 = vpop.f32.mrf.mxu0
      %2865 = vdwg.mxu0
      %2866 = vmatprep.subr.mxu0 0.0
      %2867 = vmatpush1.msra.mxu0 %v2157
      %2868 = vmatprep.subr.mxu0 0.0
      %2869 = vmatpush1.msra.mxu0 %v2156
      %2870 = vmatprep.subr.mxu0 0.0
      %2871 = vmatpush1.msra.mxu0 %v2155
      %2872 = vmatprep.subr.mxu0 0.0
      %2873 = vmatpush1.msra.mxu0 %v2154
      %2874 = vmatprep.subr.mxu0 0.0
      %2875 = vmatpush1.msra.mxu0 %v2153
      %2876 = vmatprep.subr.mxu0 0.0
      %2877 = vmatpush1.msra.mxu0 %v2152
      %2878 = vmatprep.subr.mxu0 0.0
      %2879 = vmatpush1.msra.mxu0 %v2151
      %2880 = vmatprep.subr.mxu0 0.0
      %2881 = vmatpush1.msra.mxu0 %v2150
      %2882 = vmatprep.subr.mxu0 0.0
      %2883 = vmatpush1.msra.mxu0 %v2149
      %2884 = vmatprep.subr.mxu0 0.0
      %2885 = vmatpush1.msra.mxu0 %v2148
      %2886 = vmatprep.subr.mxu0 0.0
      %2887 = vmatpush1.msra.mxu0 %v2147
      %2888 = vmatprep.subr.mxu0 0.0
      %2889 = vmatpush1.msra.mxu0 %v2146
      %2890 = vmatprep.subr.mxu0 0.0
      %2891 = vmatpush1.msra.mxu0 %v2145
      %2892 = vmatprep.subr.mxu0 0.0
      %2893 = vmatpush1.msra.mxu0 %v2144
      %2894 = vmatprep.subr.mxu0 0.0
      %2895 = vmatpush1.msra.mxu0 %v2143
      %2896 = vmatprep.subr.mxu0 0.0
      %2897 = vmatpush1.msra.mxu0 %v2142
      %2898 = vmatprep.subr.mxu0 0.0
      %2899 = vmatpush2.msra.mxu0 0.0
      %2900 = vmatprep.subr.mxu0 0.0
      %2901 = vmatpush2.msra.mxu0 0.0
      %2902 = vmatprep.subr.mxu0 0.0
      %2903 = vmatpush2.msra.mxu0 0.0
      %2904 = vmatprep.subr.mxu0 0.0
      %2905 = vmatpush2.msra.mxu0 0.0
      %2906 = vmatprep.subr.mxu0 0.0
      %2907 = vmatpush2.msra.mxu0 0.0
      %2908 = vmatprep.subr.mxu0 0.0
      %2909 = vmatpush2.msra.mxu0 0.0
      %2910 = vmatprep.subr.mxu0 0.0
      %2911 = vmatpush2.msra.mxu0 0.0
      %2912 = vmatprep.subr.mxu0 0.0
      %2913 = vmatpush2.msra.mxu0 0.0
      %2914 = vmatprep.subr.mxu0 0.0
      %2915 = vmatpush2.msra.mxu0 0.0
      %2916 = vmatprep.subr.mxu0 0.0
      %2917 = vmatpush2.msra.mxu0 0.0
      %2918 = vmatprep.subr.mxu0 0.0
      %2919 = vmatpush2.msra.mxu0 0.0
      %2920 = vmatprep.subr.mxu0 0.0
      %2921 = vmatpush2.msra.mxu0 0.0
      %2922 = vmatprep.subr.mxu0 0.0
      %2923 = vmatpush2.msra.mxu0 0.0
      %2924 = vmatprep.subr.mxu0 0.0
      %2925 = vmatpush2.msra.mxu0 0.0
      %2926 = vmatprep.subr.mxu0 0.0
      %2927 = vmatpush2.msra.mxu0 0.0
      %2928 = vmatprep.subr.mxu0 0.0
      %2929 = vmatpush2.msra.mxu0 0.0
      %2930 = vmatprep.mubr.f32.mxu0 0.0
      %2931 = vmatmul.mubr.f32.gmra.mxu0 %v2182
      %v2932 = vpop.f32.mrf.mxu0
      %v2933 = vadd.f32 %v2798, %v2932
      %v2934 = vpop.f32.mrf.mxu0
      %2935 = vmatprep.mubr.f32.mxu0 0.0
      %2936 = vmatmul.mubr.f32.gmra.mxu0 %v2192
      %v2937 = vpop.f32.mrf.mxu0
      %v2938 = vadd.f32 %v2803, %v2937
      %v2939 = vpop.f32.mrf.mxu0
      %2940 = vmatprep.mubr.f32.mxu0 0.0
      %2941 = vmatmul.mubr.f32.gmra.mxu0 %v2198
      %v2942 = vpop.f32.mrf.mxu0
      %v2943 = vadd.f32 %v2808, %v2942
      %v2944 = vpop.f32.mrf.mxu0
      %2945 = vmatprep.mubr.f32.mxu0 0.0
      %2946 = vmatmul.mubr.f32.gmra.mxu0 %v2204
      %v2947 = vpop.f32.mrf.mxu0
      %v2948 = vadd.f32 %v2813, %v2947
      %v2949 = vpop.f32.mrf.mxu0
      %2950 = vmatprep.mubr.f32.mxu0 0.0
      %2951 = vmatmul.mubr.f32.gmra.mxu0 %v2210
      %v2952 = vpop.f32.mrf.mxu0
      %v2953 = vadd.f32 %v2818, %v2952
      %v2954 = vpop.f32.mrf.mxu0
      %2955 = vmatprep.mubr.f32.mxu0 0.0
      %2956 = vmatmul.mubr.f32.gmra.mxu0 %v2216
      %v2957 = vpop.f32.mrf.mxu0
      %v2958 = vadd.f32 %v2823, %v2957
      %v2959 = vpop.f32.mrf.mxu0
      %2960 = vmatprep.mubr.f32.mxu0 0.0
      %2961 = vmatmul.mubr.f32.gmra.mxu0 %v2222
      %v2962 = vpop.f32.mrf.mxu0
      %v2963 = vadd.f32 %v2828, %v2962
      %v2964 = vpop.f32.mrf.mxu0
      %2965 = vmatprep.mubr.f32.mxu0 0.0
      %2966 = vmatmul.mubr.f32.gmra.mxu0 %v2228
      %v2967 = vpop.f32.mrf.mxu0
      %v2968 = vadd.f32 %v2833, %v2967
      %v2969 = vpop.f32.mrf.mxu0
      %2970 = vmatprep.mubr.f32.mxu0 0.0
      %2971 = vmatmul.mubr.f32.gmra.mxu0 %v2234
      %v2972 = vpop.f32.mrf.mxu0
      %v2973 = vadd.f32 %v2838, %v2972
      %v2974 = vpop.f32.mrf.mxu0
      %2975 = vmatprep.mubr.f32.mxu0 0.0
      %2976 = vmatmul.mubr.f32.gmra.mxu0 %v2240
      %v2977 = vpop.f32.mrf.mxu0
      %v2978 = vadd.f32 %v2843, %v2977
      %v2979 = vpop.f32.mrf.mxu0
      %2980 = vmatprep.mubr.f32.mxu0 0.0
      %2981 = vmatmul.mubr.f32.gmra.mxu0 %v2246
      %v2982 = vpop.f32.mrf.mxu0
      %v2983 = vadd.f32 %v2848, %v2982
      %v2984 = vpop.f32.mrf.mxu0
      %2985 = vmatprep.mubr.f32.mxu0 0.0
      %2986 = vmatmul.mubr.f32.gmra.mxu0 %v2252
      %v2987 = vpop.f32.mrf.mxu0
      %v2988 = vadd.f32 %v2853, %v2987
      %v2989 = vpop.f32.mrf.mxu0
      %2990 = vmatprep.mubr.f32.mxu0 0.0
      %2991 = vmatmul.mubr.f32.gmra.mxu0 %v2258
      %v2992 = vpop.f32.mrf.mxu0
      %v2993 = vadd.f32 %v2858, %v2992
      %v2994 = vpop.f32.mrf.mxu0
      %2995 = vmatprep.mubr.f32.mxu0 0.0
      %2996 = vmatmul.mubr.f32.gmra.mxu0 %v2269
      %v2997 = vpop.f32.mrf.mxu0
      %v2998 = vadd.f32 %v2863, %v2997
      %v2999 = vpop.f32.mrf.mxu0
      %3000 = vdwg.mxu0
      %3017 = vmatprep.subr.mxu0 0.0
      %3018 = vmatpush1.msra.mxu0 %v2029
      %3019 = vmatprep.subr.mxu0 0.0
      %3020 = vmatpush1.msra.mxu0 %v2028
      %3021 = vmatprep.subr.mxu0 0.0
      %3022 = vmatpush1.msra.mxu0 %v2027
      %3023 = vmatprep.subr.mxu0 0.0
      %3024 = vmatpush1.msra.mxu0 %v2026
      %3025 = vmatprep.subr.mxu0 0.0
      %3026 = vmatpush1.msra.mxu0 %v2025
      %3027 = vmatprep.subr.mxu0 0.0
      %3028 = vmatpush1.msra.mxu0 %v2024
      %3029 = vmatprep.subr.mxu0 0.0
      %3030 = vmatpush1.msra.mxu0 %v2023
      %3031 = vmatprep.subr.mxu0 0.0
      %3032 = vmatpush1.msra.mxu0 %v2022
      %3033 = vmatprep.subr.mxu0 0.0
      %3034 = vmatpush1.msra.mxu0 %v2021
      %3035 = vmatprep.subr.mxu0 0.0
      %3036 = vmatpush1.msra.mxu0 %v2020
      %3037 = vmatprep.subr.mxu0 0.0
      %3038 = vmatpush1.msra.mxu0 %v2019
      %3039 = vmatprep.subr.mxu0 0.0
      %3040 = vmatpush1.msra.mxu0 %v2018
      %3041 = vmatprep.subr.mxu0 0.0
      %3042 = vmatpush1.msra.mxu0 %v2017
      %3043 = vmatprep.subr.mxu0 0.0
      %3044 = vmatpush1.msra.mxu0 %v2016
      %3045 = vmatprep.subr.mxu0 0.0
      %3046 = vmatpush1.msra.mxu0 %v2015
      %3047 = vmatprep.subr.mxu0 0.0
      %3048 = vmatpush1.msra.mxu0 %v2014
      %3049 = vmatprep.subr.mxu0 0.0
      %3050 = vmatpush2.msra.mxu0 %v2045
      %3051 = vmatprep.subr.mxu0 0.0
      %3052 = vmatpush2.msra.mxu0 %v2044
      %3053 = vmatprep.subr.mxu0 0.0
      %3054 = vmatpush2.msra.mxu0 %v2043
      %3055 = vmatprep.subr.mxu0 0.0
      %3056 = vmatpush2.msra.mxu0 %v2042
      %3057 = vmatprep.subr.mxu0 0.0
      %3058 = vmatpush2.msra.mxu0 %v2041
      %3059 = vmatprep.subr.mxu0 0.0
      %3060 = vmatpush2.msra.mxu0 %v2040
      %3061 = vmatprep.subr.mxu0 0.0
      %3062 = vmatpush2.msra.mxu0 %v2039
      %3063 = vmatprep.subr.mxu0 0.0
      %3064 = vmatpush2.msra.mxu0 %v2038
      %3065 = vmatprep.subr.mxu0 0.0
      %3066 = vmatpush2.msra.mxu0 %v2037
      %3067 = vmatprep.subr.mxu0 0.0
      %3068 = vmatpush2.msra.mxu0 %v2036
      %3069 = vmatprep.subr.mxu0 0.0
      %3070 = vmatpush2.msra.mxu0 %v2035
      %3071 = vmatprep.subr.mxu0 0.0
      %3072 = vmatpush2.msra.mxu0 %v2034
      %3073 = vmatprep.subr.mxu0 0.0
      %3074 = vmatpush2.msra.mxu0 %v2033
      %3075 = vmatprep.subr.mxu0 0.0
      %3076 = vmatpush2.msra.mxu0 %v2032
      %3077 = vmatprep.subr.mxu0 0.0
      %3078 = vmatpush2.msra.mxu0 %v2031
      %3079 = vmatprep.subr.mxu0 0.0
      %3080 = vmatpush2.msra.mxu0 %v2030
      %3081 = vmatprep.mubr.f32.mxu0 0.0
      %3082 = vmatmul.mubr.f32.gmra.mxu0 0.0
      %v3083 = vpop.f32.mrf.mxu0
      %v3084 = vadd.f32 0.0, %v3083
      %v3085 = vpop.f32.mrf.mxu0
      %3086 = vmatprep.mubr.f32.mxu0 %v1911
      %3087 = vmatmul.mubr.f32.gmra.mxu0 %v1897
      %v3088 = vpop.f32.mrf.mxu0
      %v3089 = vadd.f32 0.0, %v3088
      %v3090 = vpop.f32.mrf.mxu0
      %3091 = vmatprep.mubr.f32.mxu0 %v1912
      %3092 = vmatmul.mubr.f32.gmra.mxu0 %v1898
      %v3093 = vpop.f32.mrf.mxu0
      %v3094 = vadd.f32 0.0, %v3093
      %v3095 = vpop.f32.mrf.mxu0
      %3096 = vmatprep.mubr.f32.mxu0 %v1913
      %3097 = vmatmul.mubr.f32.gmra.mxu0 %v1899
      %v3098 = vpop.f32.mrf.mxu0
      %v3099 = vadd.f32 0.0, %v3098
      %v3100 = vpop.f32.mrf.mxu0
      %3101 = vmatprep.mubr.f32.mxu0 %v1914
      %3102 = vmatmul.mubr.f32.gmra.mxu0 %v1900
      %v3103 = vpop.f32.mrf.mxu0
      %v3104 = vadd.f32 0.0, %v3103
      %v3105 = vpop.f32.mrf.mxu0
      %3106 = vmatprep.mubr.f32.mxu0 %v1915
      %3107 = vmatmul.mubr.f32.gmra.mxu0 %v1901
      %v3108 = vpop.f32.mrf.mxu0
      %v3109 = vadd.f32 0.0, %v3108
      %v3110 = vpop.f32.mrf.mxu0
      %3111 = vmatprep.mubr.f32.mxu0 %v1916
      %3112 = vmatmul.mubr.f32.gmra.mxu0 %v1902
      %v3113 = vpop.f32.mrf.mxu0
      %v3114 = vadd.f32 0.0, %v3113
      %v3115 = vpop.f32.mrf.mxu0
      %3116 = vmatprep.mubr.f32.mxu0 %v1917
      %3117 = vmatmul.mubr.f32.gmra.mxu0 %v1903
      %v3118 = vpop.f32.mrf.mxu0
      %v3119 = vadd.f32 0.0, %v3118
      %v3120 = vpop.f32.mrf.mxu0
      %3121 = vmatprep.mubr.f32.mxu0 %v1918
      %3122 = vmatmul.mubr.f32.gmra.mxu0 %v1904
      %v3123 = vpop.f32.mrf.mxu0
      %v3124 = vadd.f32 0.0, %v3123
      %v3125 = vpop.f32.mrf.mxu0
      %3126 = vmatprep.mubr.f32.mxu0 %v1919
      %3127 = vmatmul.mubr.f32.gmra.mxu0 %v1905
      %v3128 = vpop.f32.mrf.mxu0
      %v3129 = vadd.f32 0.0, %v3128
      %v3130 = vpop.f32.mrf.mxu0
      %3131 = vmatprep.mubr.f32.mxu0 %v1920
      %3132 = vmatmul.mubr.f32.gmra.mxu0 %v1906
      %v3133 = vpop.f32.mrf.mxu0
      %v3134 = vadd.f32 0.0, %v3133
      %v3135 = vpop.f32.mrf.mxu0
      %3136 = vmatprep.mubr.f32.mxu0 %v1921
      %3137 = vmatmul.mubr.f32.gmra.mxu0 %v1907
      %v3138 = vpop.f32.mrf.mxu0
      %v3139 = vadd.f32 0.0, %v3138
      %v3140 = vpop.f32.mrf.mxu0
      %3141 = vmatprep.mubr.f32.mxu0 %v1922
      %3142 = vmatmul.mubr.f32.gmra.mxu0 %v1908
      %v3143 = vpop.f32.mrf.mxu0
      %v3144 = vadd.f32 0.0, %v3143
      %v3145 = vpop.f32.mrf.mxu0
      %3146 = vmatprep.mubr.f32.mxu0 %v1923
      %3147 = vmatmul.mubr.f32.gmra.mxu0 %v1909
      %v3148 = vpop.f32.mrf.mxu0
      %v3149 = vadd.f32 0.0, %v3148
      %v3150 = vpop.f32.mrf.mxu0
      %3151 = vdwg.mxu0
      %3152 = vmatprep.subr.mxu0 0.0
      %3153 = vmatpush1.msra.mxu0 %v2061
      %3154 = vmatprep.subr.mxu0 0.0
      %3155 = vmatpush1.msra.mxu0 %v2060
      %3156 = vmatprep.subr.mxu0 0.0
      %3157 = vmatpush1.msra.mxu0 %v2059
      %3158 = vmatprep.subr.mxu0 0.0
      %3159 = vmatpush1.msra.mxu0 %v2058
      %3160 = vmatprep.subr.mxu0 0.0
      %3161 = vmatpush1.msra.mxu0 %v2057
      %3162 = vmatprep.subr.mxu0 0.0
      %3163 = vmatpush1.msra.mxu0 %v2056
      %3164 = vmatprep.subr.mxu0 0.0
      %3165 = vmatpush1.msra.mxu0 %v2055
      %3166 = vmatprep.subr.mxu0 0.0
      %3167 = vmatpush1.msra.mxu0 %v2054
      %3168 = vmatprep.subr.mxu0 0.0
      %3169 = vmatpush1.msra.mxu0 %v2053
      %3170 = vmatprep.subr.mxu0 0.0
      %3171 = vmatpush1.msra.mxu0 %v2052
      %3172 = vmatprep.subr.mxu0 0.0
      %3173 = vmatpush1.msra.mxu0 %v2051
      %3174 = vmatprep.subr.mxu0 0.0
      %3175 = vmatpush1.msra.mxu0 %v2050
      %3176 = vmatprep.subr.mxu0 0.0
      %3177 = vmatpush1.msra.mxu0 %v2049
      %3178 = vmatprep.subr.mxu0 0.0
      %3179 = vmatpush1.msra.mxu0 %v2048
      %3180 = vmatprep.subr.mxu0 0.0
      %3181 = vmatpush1.msra.mxu0 %v2047
      %3182 = vmatprep.subr.mxu0 0.0
      %3183 = vmatpush1.msra.mxu0 %v2046
      %3184 = vmatprep.subr.mxu0 0.0
      %3185 = vmatpush2.msra.mxu0 %v2077
      %3186 = vmatprep.subr.mxu0 0.0
      %3187 = vmatpush2.msra.mxu0 %v2076
      %3188 = vmatprep.subr.mxu0 0.0
      %3189 = vmatpush2.msra.mxu0 %v2075
      %3190 = vmatprep.subr.mxu0 0.0
      %3191 = vmatpush2.msra.mxu0 %v2074
      %3192 = vmatprep.subr.mxu0 0.0
      %3193 = vmatpush2.msra.mxu0 %v2073
      %3194 = vmatprep.subr.mxu0 0.0
      %3195 = vmatpush2.msra.mxu0 %v2072
      %3196 = vmatprep.subr.mxu0 0.0
      %3197 = vmatpush2.msra.mxu0 %v2071
      %3198 = vmatprep.subr.mxu0 0.0
      %3199 = vmatpush2.msra.mxu0 %v2070
      %3200 = vmatprep.subr.mxu0 0.0
      %3201 = vmatpush2.msra.mxu0 %v2069
      %3202 = vmatprep.subr.mxu0 0.0
      %3203 = vmatpush2.msra.mxu0 %v2068
      %3204 = vmatprep.subr.mxu0 0.0
      %3205 = vmatpush2.msra.mxu0 %v2067
      %3206 = vmatprep.subr.mxu0 0.0
      %3207 = vmatpush2.msra.mxu0 %v2066
      %3208 = vmatprep.subr.mxu0 0.0
      %3209 = vmatpush2.msra.mxu0 %v2065
      %3210 = vmatprep.subr.mxu0 0.0
      %3211 = vmatpush2.msra.mxu0 %v2064
      %3212 = vmatprep.subr.mxu0 0.0
      %3213 = vmatpush2.msra.mxu0 %v2063
      %3214 = vmatprep.subr.mxu0 0.0
      %3215 = vmatpush2.msra.mxu0 %v2062
      %3216 = vmatprep.mubr.f32.mxu0 %v1897
      %3217 = vmatmul.mubr.f32.gmra.mxu0 %v1942
      %v3218 = vpop.f32.mrf.mxu0
      %v3219 = vadd.f32 %v3084, %v3218
      %v3220 = vpop.f32.mrf.mxu0
      %3221 = vmatprep.mubr.f32.mxu0 %v1898
      %3222 = vmatmul.mubr.f32.gmra.mxu0 %v1944
      %v3223 = vpop.f32.mrf.mxu0
      %v3224 = vadd.f32 %v3089, %v3223
      %v3225 = vpop.f32.mrf.mxu0
      %3226 = vmatprep.mubr.f32.mxu0 %v1899
      %3227 = vmatmul.mubr.f32.gmra.mxu0 %v1946
      %v3228 = vpop.f32.mrf.mxu0
      %v3229 = vadd.f32 %v3094, %v3228
      %v3230 = vpop.f32.mrf.mxu0
      %3231 = vmatprep.mubr.f32.mxu0 %v1900
      %3232 = vmatmul.mubr.f32.gmra.mxu0 %v1948
      %v3233 = vpop.f32.mrf.mxu0
      %v3234 = vadd.f32 %v3099, %v3233
      %v3235 = vpop.f32.mrf.mxu0
      %3236 = vmatprep.mubr.f32.mxu0 %v1901
      %3237 = vmatmul.mubr.f32.gmra.mxu0 %v1950
      %v3238 = vpop.f32.mrf.mxu0
      %v3239 = vadd.f32 %v3104, %v3238
      %v3240 = vpop.f32.mrf.mxu0
      %3241 = vmatprep.mubr.f32.mxu0 %v1902
      %3242 = vmatmul.mubr.f32.gmra.mxu0 %v1952
      %v3243 = vpop.f32.mrf.mxu0
      %v3244 = vadd.f32 %v3109, %v3243
      %v3245 = vpop.f32.mrf.mxu0
      %3246 = vmatprep.mubr.f32.mxu0 %v1903
      %3247 = vmatmul.mubr.f32.gmra.mxu0 %v1954
      %v3248 = vpop.f32.mrf.mxu0
      %v3249 = vadd.f32 %v3114, %v3248
      %v3250 = vpop.f32.mrf.mxu0
      %3251 = vmatprep.mubr.f32.mxu0 %v1904
      %3252 = vmatmul.mubr.f32.gmra.mxu0 %v1956
      %v3253 = vpop.f32.mrf.mxu0
      %v3254 = vadd.f32 %v3119, %v3253
      %v3255 = vpop.f32.mrf.mxu0
      %3256 = vmatprep.mubr.f32.mxu0 %v1905
      %3257 = vmatmul.mubr.f32.gmra.mxu0 %v1958
      %v3258 = vpop.f32.mrf.mxu0
      %v3259 = vadd.f32 %v3124, %v3258
      %v3260 = vpop.f32.mrf.mxu0
      %3261 = vmatprep.mubr.f32.mxu0 %v1906
      %3262 = vmatmul.mubr.f32.gmra.mxu0 %v1960
      %v3263 = vpop.f32.mrf.mxu0
      %v3264 = vadd.f32 %v3129, %v3263
      %v3265 = vpop.f32.mrf.mxu0
      %3266 = vmatprep.mubr.f32.mxu0 %v1907
      %3267 = vmatmul.mubr.f32.gmra.mxu0 %v1962
      %v3268 = vpop.f32.mrf.mxu0
      %v3269 = vadd.f32 %v3134, %v3268
      %v3270 = vpop.f32.mrf.mxu0
      %3271 = vmatprep.mubr.f32.mxu0 %v1908
      %3272 = vmatmul.mubr.f32.gmra.mxu0 %v1964
      %v3273 = vpop.f32.mrf.mxu0
      %v3274 = vadd.f32 %v3139, %v3273
      %v3275 = vpop.f32.mrf.mxu0
      %3276 = vmatprep.mubr.f32.mxu0 %v1909
      %3277 = vmatmul.mubr.f32.gmra.mxu0 %v1966
      %v3278 = vpop.f32.mrf.mxu0
      %v3279 = vadd.f32 %v3144, %v3278
      %v3280 = vpop.f32.mrf.mxu0
      %3281 = vmatprep.mubr.f32.mxu0 %v1910
      %3282 = vmatmul.mubr.f32.gmra.mxu0 %v2008
      %v3283 = vpop.f32.mrf.mxu0
      %v3284 = vadd.f32 %v3149, %v3283
      %v3285 = vpop.f32.mrf.mxu0
      %3286 = vdwg.mxu0
      %3287 = vmatprep.subr.mxu0 0.0
      %3288 = vmatpush1.msra.mxu0 %v2093
      %3289 = vmatprep.subr.mxu0 0.0
      %3290 = vmatpush1.msra.mxu0 %v2092
      %3291 = vmatprep.subr.mxu0 0.0
      %3292 = vmatpush1.msra.mxu0 %v2091
      %3293 = vmatprep.subr.mxu0 0.0
      %3294 = vmatpush1.msra.mxu0 %v2090
      %3295 = vmatprep.subr.mxu0 0.0
      %3296 = vmatpush1.msra.mxu0 %v2089
      %3297 = vmatprep.subr.mxu0 0.0
      %3298 = vmatpush1.msra.mxu0 %v2088
      %3299 = vmatprep.subr.mxu0 0.0
      %3300 = vmatpush1.msra.mxu0 %v2087
      %3301 = vmatprep.subr.mxu0 0.0
      %3302 = vmatpush1.msra.mxu0 %v2086
      %3303 = vmatprep.subr.mxu0 0.0
      %3304 = vmatpush1.msra.mxu0 %v2085
      %3305 = vmatprep.subr.mxu0 0.0
      %3306 = vmatpush1.msra.mxu0 %v2084
      %3307 = vmatprep.subr.mxu0 0.0
      %3308 = vmatpush1.msra.mxu0 %v2083
      %3309 = vmatprep.subr.mxu0 0.0
      %3310 = vmatpush1.msra.mxu0 %v2082
      %3311 = vmatprep.subr.mxu0 0.0
      %3312 = vmatpush1.msra.mxu0 %v2081
      %3313 = vmatprep.subr.mxu0 0.0
      %3314 = vmatpush1.msra.mxu0 %v2080
      %3315 = vmatprep.subr.mxu0 0.0
      %3316 = vmatpush1.msra.mxu0 %v2079
      %3317 = vmatprep.subr.mxu0 0.0
      %3318 = vmatpush1.msra.mxu0 %v2078
      %3319 = vmatprep.subr.mxu0 0.0
      %3320 = vmatpush2.msra.mxu0 %v2109
      %3321 = vmatprep.subr.mxu0 0.0
      %3322 = vmatpush2.msra.mxu0 %v2108
      %3323 = vmatprep.subr.mxu0 0.0
      %3324 = vmatpush2.msra.mxu0 %v2107
      %3325 = vmatprep.subr.mxu0 0.0
      %3326 = vmatpush2.msra.mxu0 %v2106
      %3327 = vmatprep.subr.mxu0 0.0
      %3328 = vmatpush2.msra.mxu0 %v2105
      %3329 = vmatprep.subr.mxu0 0.0
      %3330 = vmatpush2.msra.mxu0 %v2104
      %3331 = vmatprep.subr.mxu0 0.0
      %3332 = vmatpush2.msra.mxu0 %v2103
      %3333 = vmatprep.subr.mxu0 0.0
      %3334 = vmatpush2.msra.mxu0 %v2102
      %3335 = vmatprep.subr.mxu0 0.0
      %3336 = vmatpush2.msra.mxu0 %v2101
      %3337 = vmatprep.subr.mxu0 0.0
      %3338 = vmatpush2.msra.mxu0 %v2100
      %3339 = vmatprep.subr.mxu0 0.0
      %3340 = vmatpush2.msra.mxu0 %v2099
      %3341 = vmatprep.subr.mxu0 0.0
      %3342 = vmatpush2.msra.mxu0 %v2098
      %3343 = vmatprep.subr.mxu0 0.0
      %3344 = vmatpush2.msra.mxu0 %v2097
      %3345 = vmatprep.subr.mxu0 0.0
      %3346 = vmatpush2.msra.mxu0 %v2096
      %3347 = vmatprep.subr.mxu0 0.0
      %3348 = vmatpush2.msra.mxu0 %v2095
      %3349 = vmatprep.subr.mxu0 0.0
      %3350 = vmatpush2.msra.mxu0 %v2094
      %3351 = vmatprep.mubr.f32.mxu0 %v1944
      %3352 = vmatmul.mubr.f32.gmra.mxu0 %v1911
      %v3353 = vpop.f32.mrf.mxu0
      %v3354 = vadd.f32 %v3219, %v3353
      %v3355 = vpop.f32.mrf.mxu0
      %3356 = vmatprep.mubr.f32.mxu0 %v1946
      %3357 = vmatmul.mubr.f32.gmra.mxu0 %v1912
      %v3358 = vpop.f32.mrf.mxu0
      %v3359 = vadd.f32 %v3224, %v3358
      %v3360 = vpop.f32.mrf.mxu0
      %3361 = vmatprep.mubr.f32.mxu0 %v1948
      %3362 = vmatmul.mubr.f32.gmra.mxu0 %v1913
      %v3363 = vpop.f32.mrf.mxu0
      %v3364 = vadd.f32 %v3229, %v3363
      %v3365 = vpop.f32.mrf.mxu0
      %3366 = vmatprep.mubr.f32.mxu0 %v1950
      %3367 = vmatmul.mubr.f32.gmra.mxu0 %v1914
      %v3368 = vpop.f32.mrf.mxu0
      %v3369 = vadd.f32 %v3234, %v3368
      %v3370 = vpop.f32.mrf.mxu0
      %3371 = vmatprep.mubr.f32.mxu0 %v1952
      %3372 = vmatmul.mubr.f32.gmra.mxu0 %v1915
      %v3373 = vpop.f32.mrf.mxu0
      %v3374 = vadd.f32 %v3239, %v3373
      %v3375 = vpop.f32.mrf.mxu0
      %3376 = vmatprep.mubr.f32.mxu0 %v1954
      %3377 = vmatmul.mubr.f32.gmra.mxu0 %v1916
      %v3378 = vpop.f32.mrf.mxu0
      %v3379 = vadd.f32 %v3244, %v3378
      %v3380 = vpop.f32.mrf.mxu0
      %3381 = vmatprep.mubr.f32.mxu0 %v1956
      %3382 = vmatmul.mubr.f32.gmra.mxu0 %v1917
      %v3383 = vpop.f32.mrf.mxu0
      %v3384 = vadd.f32 %v3249, %v3383
      %v3385 = vpop.f32.mrf.mxu0
      %3386 = vmatprep.mubr.f32.mxu0 %v1958
      %3387 = vmatmul.mubr.f32.gmra.mxu0 %v1918
      %v3388 = vpop.f32.mrf.mxu0
      %v3389 = vadd.f32 %v3254, %v3388
      %v3390 = vpop.f32.mrf.mxu0
      %3391 = vmatprep.mubr.f32.mxu0 %v1960
      %3392 = vmatmul.mubr.f32.gmra.mxu0 %v1919
      %v3393 = vpop.f32.mrf.mxu0
      %v3394 = vadd.f32 %v3259, %v3393
      %v3395 = vpop.f32.mrf.mxu0
      %3396 = vmatprep.mubr.f32.mxu0 %v1962
      %3397 = vmatmul.mubr.f32.gmra.mxu0 %v1920
      %v3398 = vpop.f32.mrf.mxu0
      %v3399 = vadd.f32 %v3264, %v3398
      %v3400 = vpop.f32.mrf.mxu0
      %3401 = vmatprep.mubr.f32.mxu0 %v1964
      %3402 = vmatmul.mubr.f32.gmra.mxu0 %v1921
      %v3403 = vpop.f32.mrf.mxu0
      %v3404 = vadd.f32 %v3269, %v3403
      %v3405 = vpop.f32.mrf.mxu0
      %3406 = vmatprep.mubr.f32.mxu0 %v1966
      %3407 = vmatmul.mubr.f32.gmra.mxu0 %v1922
      %v3408 = vpop.f32.mrf.mxu0
      %v3409 = vadd.f32 %v3274, %v3408
      %v3410 = vpop.f32.mrf.mxu0
      %3411 = vmatprep.mubr.f32.mxu0 %v2008
      %3412 = vmatmul.mubr.f32.gmra.mxu0 %v1923
      %v3413 = vpop.f32.mrf.mxu0
      %v3414 = vadd.f32 %v3279, %v3413
      %v3415 = vpop.f32.mrf.mxu0
      %3416 = vmatprep.mubr.f32.mxu0 %v2012
      %3417 = vmatmul.mubr.f32.gmra.mxu0 %v1924
      %v3418 = vpop.f32.mrf.mxu0
      %v3419 = vadd.f32 %v3284, %v3418
      %v3420 = vpop.f32.mrf.mxu0
      %3421 = vdwg.mxu0
      %3422 = vmatprep.subr.mxu0 0.0
      %3423 = vmatpush1.msra.mxu0 %v2125
      %3424 = vmatprep.subr.mxu0 0.0
      %3425 = vmatpush1.msra.mxu0 %v2124
      %3426 = vmatprep.subr.mxu0 0.0
      %3427 = vmatpush1.msra.mxu0 %v2123
      %3428 = vmatprep.subr.mxu0 0.0
      %3429 = vmatpush1.msra.mxu0 %v2122
      %3430 = vmatprep.subr.mxu0 0.0
      %3431 = vmatpush1.msra.mxu0 %v2121
      %3432 = vmatprep.subr.mxu0 0.0
      %3433 = vmatpush1.msra.mxu0 %v2120
      %3434 = vmatprep.subr.mxu0 0.0
      %3435 = vmatpush1.msra.mxu0 %v2119
      %3436 = vmatprep.subr.mxu0 0.0
      %3437 = vmatpush1.msra.mxu0 %v2118
      %3438 = vmatprep.subr.mxu0 0.0
      %3439 = vmatpush1.msra.mxu0 %v2117
      %3440 = vmatprep.subr.mxu0 0.0
      %3441 = vmatpush1.msra.mxu0 %v2116
      %3442 = vmatprep.subr.mxu0 0.0
      %3443 = vmatpush1.msra.mxu0 %v2115
      %3444 = vmatprep.subr.mxu0 0.0
      %3445 = vmatpush1.msra.mxu0 %v2114
      %3446 = vmatprep.subr.mxu0 0.0
      %3447 = vmatpush1.msra.mxu0 %v2113
      %3448 = vmatprep.subr.mxu0 0.0
      %3449 = vmatpush1.msra.mxu0 %v2112
      %3450 = vmatprep.subr.mxu0 0.0
      %3451 = vmatpush1.msra.mxu0 %v2111
      %3452 = vmatprep.subr.mxu0 0.0
      %3453 = vmatpush1.msra.mxu0 %v2110
      %3454 = vmatprep.subr.mxu0 0.0
      %3455 = vmatpush2.msra.mxu0 %v2141
      %3456 = vmatprep.subr.mxu0 0.0
      %3457 = vmatpush2.msra.mxu0 %v2140
      %3458 = vmatprep.subr.mxu0 0.0
      %3459 = vmatpush2.msra.mxu0 %v2139
      %3460 = vmatprep.subr.mxu0 0.0
      %3461 = vmatpush2.msra.mxu0 %v2138
      %3462 = vmatprep.subr.mxu0 0.0
      %3463 = vmatpush2.msra.mxu0 %v2137
      %3464 = vmatprep.subr.mxu0 0.0
      %3465 = vmatpush2.msra.mxu0 %v2136
      %3466 = vmatprep.subr.mxu0 0.0
      %3467 = vmatpush2.msra.mxu0 %v2135
      %3468 = vmatprep.subr.mxu0 0.0
      %3469 = vmatpush2.msra.mxu0 %v2134
      %3470 = vmatprep.subr.mxu0 0.0
      %3471 = vmatpush2.msra.mxu0 %v2133
      %3472 = vmatprep.subr.mxu0 0.0
      %3473 = vmatpush2.msra.mxu0 %v2132
      %3474 = vmatprep.subr.mxu0 0.0
      %3475 = vmatpush2.msra.mxu0 %v2131
      %3476 = vmatprep.subr.mxu0 0.0
      %3477 = vmatpush2.msra.mxu0 %v2130
      %3478 = vmatprep.subr.mxu0 0.0
      %3479 = vmatpush2.msra.mxu0 %v2129
      %3480 = vmatprep.subr.mxu0 0.0
      %3481 = vmatpush2.msra.mxu0 %v2128
      %3482 = vmatprep.subr.mxu0 0.0
      %3483 = vmatpush2.msra.mxu0 %v2127
      %3484 = vmatprep.subr.mxu0 0.0
      %3485 = vmatpush2.msra.mxu0 %v2126
      %3486 = vmatprep.mubr.f32.mxu0 %v1912
      %3487 = vmatmul.mubr.f32.gmra.mxu0 %v1898
      %v3488 = vpop.f32.mrf.mxu0
      %v3489 = vadd.f32 %v3354, %v3488
      %v3490 = vpop.f32.mrf.mxu0
      %3491 = vmatprep.mubr.f32.mxu0 %v1913
      %3492 = vmatmul.mubr.f32.gmra.mxu0 %v1899
      %v3493 = vpop.f32.mrf.mxu0
      %v3494 = vadd.f32 %v3359, %v3493
      %v3495 = vpop.f32.mrf.mxu0
      %3496 = vmatprep.mubr.f32.mxu0 %v1914
      %3497 = vmatmul.mubr.f32.gmra.mxu0 %v1900
      %v3498 = vpop.f32.mrf.mxu0
      %v3499 = vadd.f32 %v3364, %v3498
      %v3500 = vpop.f32.mrf.mxu0
      %3501 = vmatprep.mubr.f32.mxu0 %v1915
      %3502 = vmatmul.mubr.f32.gmra.mxu0 %v1901
      %v3503 = vpop.f32.mrf.mxu0
      %v3504 = vadd.f32 %v3369, %v3503
      %v3505 = vpop.f32.mrf.mxu0
      %3506 = vmatprep.mubr.f32.mxu0 %v1916
      %3507 = vmatmul.mubr.f32.gmra.mxu0 %v1902
      %v3508 = vpop.f32.mrf.mxu0
      %v3509 = vadd.f32 %v3374, %v3508
      %v3510 = vpop.f32.mrf.mxu0
      %3511 = vmatprep.mubr.f32.mxu0 %v1917
      %3512 = vmatmul.mubr.f32.gmra.mxu0 %v1903
      %v3513 = vpop.f32.mrf.mxu0
      %v3514 = vadd.f32 %v3379, %v3513
      %v3515 = vpop.f32.mrf.mxu0
      %3516 = vmatprep.mubr.f32.mxu0 %v1918
      %3517 = vmatmul.mubr.f32.gmra.mxu0 %v1904
      %v3518 = vpop.f32.mrf.mxu0
      %v3519 = vadd.f32 %v3384, %v3518
      %v3520 = vpop.f32.mrf.mxu0
      %3521 = vmatprep.mubr.f32.mxu0 %v1919
      %3522 = vmatmul.mubr.f32.gmra.mxu0 %v1905
      %v3523 = vpop.f32.mrf.mxu0
      %v3524 = vadd.f32 %v3389, %v3523
      %v3525 = vpop.f32.mrf.mxu0
      %3526 = vmatprep.mubr.f32.mxu0 %v1920
      %3527 = vmatmul.mubr.f32.gmra.mxu0 %v1906
      %v3528 = vpop.f32.mrf.mxu0
      %v3529 = vadd.f32 %v3394, %v3528
      %v3530 = vpop.f32.mrf.mxu0
      %3531 = vmatprep.mubr.f32.mxu0 %v1921
      %3532 = vmatmul.mubr.f32.gmra.mxu0 %v1907
      %v3533 = vpop.f32.mrf.mxu0
      %v3534 = vadd.f32 %v3399, %v3533
      %v3535 = vpop.f32.mrf.mxu0
      %3536 = vmatprep.mubr.f32.mxu0 %v1922
      %3537 = vmatmul.mubr.f32.gmra.mxu0 %v1908
      %v3538 = vpop.f32.mrf.mxu0
      %v3539 = vadd.f32 %v3404, %v3538
      %v3540 = vpop.f32.mrf.mxu0
      %3541 = vmatprep.mubr.f32.mxu0 %v1923
      %3542 = vmatmul.mubr.f32.gmra.mxu0 %v1909
      %v3543 = vpop.f32.mrf.mxu0
      %v3544 = vadd.f32 %v3409, %v3543
      %v3545 = vpop.f32.mrf.mxu0
      %3546 = vmatprep.mubr.f32.mxu0 %v1924
      %3547 = vmatmul.mubr.f32.gmra.mxu0 %v1910
      %v3548 = vpop.f32.mrf.mxu0
      %v3549 = vadd.f32 %v3414, %v3548
      %v3550 = vpop.f32.mrf.mxu0
      %3551 = vmatprep.mubr.f32.mxu0 0.0
      %3552 = vmatmul.mubr.f32.gmra.mxu0 0.0
      %v3553 = vpop.f32.mrf.mxu0
      %v3554 = vadd.f32 %v3419, %v3553
      %v3555 = vpop.f32.mrf.mxu0
      %3556 = vdwg.mxu0
      %3557 = vmatprep.subr.mxu0 0.0
      %3558 = vmatpush1.msra.mxu0 %v2157
      %3559 = vmatprep.subr.mxu0 0.0
      %3560 = vmatpush1.msra.mxu0 %v2156
      %3561 = vmatprep.subr.mxu0 0.0
      %3562 = vmatpush1.msra.mxu0 %v2155
      %3563 = vmatprep.subr.mxu0 0.0
      %3564 = vmatpush1.msra.mxu0 %v2154
      %3565 = vmatprep.subr.mxu0 0.0
      %3566 = vmatpush1.msra.mxu0 %v2153
      %3567 = vmatprep.subr.mxu0 0.0
      %3568 = vmatpush1.msra.mxu0 %v2152
      %3569 = vmatprep.subr.mxu0 0.0
      %3570 = vmatpush1.msra.mxu0 %v2151
      %3571 = vmatprep.subr.mxu0 0.0
      %3572 = vmatpush1.msra.mxu0 %v2150
      %3573 = vmatprep.subr.mxu0 0.0
      %3574 = vmatpush1.msra.mxu0 %v2149
      %3575 = vmatprep.subr.mxu0 0.0
      %3576 = vmatpush1.msra.mxu0 %v2148
      %3577 = vmatprep.subr.mxu0 0.0
      %3578 = vmatpush1.msra.mxu0 %v2147
      %3579 = vmatprep.subr.mxu0 0.0
      %3580 = vmatpush1.msra.mxu0 %v2146
      %3581 = vmatprep.subr.mxu0 0.0
      %3582 = vmatpush1.msra.mxu0 %v2145
      %3583 = vmatprep.subr.mxu0 0.0
      %3584 = vmatpush1.msra.mxu0 %v2144
      %3585 = vmatprep.subr.mxu0 0.0
      %3586 = vmatpush1.msra.mxu0 %v2143
      %3587 = vmatprep.subr.mxu0 0.0
      %3588 = vmatpush1.msra.mxu0 %v2142
      %3589 = vmatprep.subr.mxu0 0.0
      %3590 = vmatpush2.msra.mxu0 0.0
      %3591 = vmatprep.subr.mxu0 0.0
      %3592 = vmatpush2.msra.mxu0 0.0
      %3593 = vmatprep.subr.mxu0 0.0
      %3594 = vmatpush2.msra.mxu0 0.0
      %3595 = vmatprep.subr.mxu0 0.0
      %3596 = vmatpush2.msra.mxu0 0.0
      %3597 = vmatprep.subr.mxu0 0.0
      %3598 = vmatpush2.msra.mxu0 0.0
      %3599 = vmatprep.subr.mxu0 0.0
      %3600 = vmatpush2.msra.mxu0 0.0
      %3601 = vmatprep.subr.mxu0 0.0
      %3602 = vmatpush2.msra.mxu0 0.0
      %3603 = vmatprep.subr.mxu0 0.0
      %3604 = vmatpush2.msra.mxu0 0.0
      %3605 = vmatprep.subr.mxu0 0.0
      %3606 = vmatpush2.msra.mxu0 0.0
      %3607 = vmatprep.subr.mxu0 0.0
      %3608 = vmatpush2.msra.mxu0 0.0
      %3609 = vmatprep.subr.mxu0 0.0
      %3610 = vmatpush2.msra.mxu0 0.0
      %3611 = vmatprep.subr.mxu0 0.0
      %3612 = vmatpush2.msra.mxu0 0.0
      %3613 = vmatprep.subr.mxu0 0.0
      %3614 = vmatpush2.msra.mxu0 0.0
      %3615 = vmatprep.subr.mxu0 0.0
      %3616 = vmatpush2.msra.mxu0 0.0
      %3617 = vmatprep.subr.mxu0 0.0
      %3618 = vmatpush2.msra.mxu0 0.0
      %3619 = vmatprep.subr.mxu0 0.0
      %3620 = vmatpush2.msra.mxu0 0.0
      %3621 = vmatprep.mubr.f32.mxu0 0.0
      %3622 = vmatmul.mubr.f32.gmra.mxu0 %v1946
      %v3623 = vpop.f32.mrf.mxu0
      %v3624 = vadd.f32 %v3489, %v3623
      %v3625 = vpop.f32.mrf.mxu0
      %3626 = vmatprep.mubr.f32.mxu0 0.0
      %3627 = vmatmul.mubr.f32.gmra.mxu0 %v1948
      %v3628 = vpop.f32.mrf.mxu0
      %v3629 = vadd.f32 %v3494, %v3628
      %v3630 = vpop.f32.mrf.mxu0
      %3631 = vmatprep.mubr.f32.mxu0 0.0
      %3632 = vmatmul.mubr.f32.gmra.mxu0 %v1950
      %v3633 = vpop.f32.mrf.mxu0
      %v3634 = vadd.f32 %v3499, %v3633
      %v3635 = vpop.f32.mrf.mxu0
      %3636 = vmatprep.mubr.f32.mxu0 0.0
      %3637 = vmatmul.mubr.f32.gmra.mxu0 %v1952
      %v3638 = vpop.f32.mrf.mxu0
      %v3639 = vadd.f32 %v3504, %v3638
      %v3640 = vpop.f32.mrf.mxu0
      %3641 = vmatprep.mubr.f32.mxu0 0.0
      %3642 = vmatmul.mubr.f32.gmra.mxu0 %v1954
      %v3643 = vpop.f32.mrf.mxu0
      %v3644 = vadd.f32 %v3509, %v3643
      %v3645 = vpop.f32.mrf.mxu0
      %3646 = vmatprep.mubr.f32.mxu0 0.0
      %3647 = vmatmul.mubr.f32.gmra.mxu0 %v1956
      %v3648 = vpop.f32.mrf.mxu0
      %v3649 = vadd.f32 %v3514, %v3648
      %v3650 = vpop.f32.mrf.mxu0
      %3651 = vmatprep.mubr.f32.mxu0 0.0
      %3652 = vmatmul.mubr.f32.gmra.mxu0 %v1958
      %v3653 = vpop.f32.mrf.mxu0
      %v3654 = vadd.f32 %v3519, %v3653
      %v3655 = vpop.f32.mrf.mxu0
      %3656 = vmatprep.mubr.f32.mxu0 0.0
      %3657 = vmatmul.mubr.f32.gmra.mxu0 %v1960
      %v3658 = vpop.f32.mrf.mxu0
      %v3659 = vadd.f32 %v3524, %v3658
      %v3660 = vpop.f32.mrf.mxu0
      %3661 = vmatprep.mubr.f32.mxu0 0.0
      %3662 = vmatmul.mubr.f32.gmra.mxu0 %v1962
      %v3663 = vpop.f32.mrf.mxu0
      %v3664 = vadd.f32 %v3529, %v3663
      %v3665 = vpop.f32.mrf.mxu0
      %3666 = vmatprep.mubr.f32.mxu0 0.0
      %3667 = vmatmul.mubr.f32.gmra.mxu0 %v1964
      %v3668 = vpop.f32.mrf.mxu0
      %v3669 = vadd.f32 %v3534, %v3668
      %v3670 = vpop.f32.mrf.mxu0
      %3671 = vmatprep.mubr.f32.mxu0 0.0
      %3672 = vmatmul.mubr.f32.gmra.mxu0 %v1966
      %v3673 = vpop.f32.mrf.mxu0
      %v3674 = vadd.f32 %v3539, %v3673
      %v3675 = vpop.f32.mrf.mxu0
      %3676 = vmatprep.mubr.f32.mxu0 0.0
      %3677 = vmatmul.mubr.f32.gmra.mxu0 %v2008
      %v3678 = vpop.f32.mrf.mxu0
      %v3679 = vadd.f32 %v3544, %v3678
      %v3680 = vpop.f32.mrf.mxu0
      %3681 = vmatprep.mubr.f32.mxu0 0.0
      %3682 = vmatmul.mubr.f32.gmra.mxu0 %v2012
      %v3683 = vpop.f32.mrf.mxu0
      %v3684 = vadd.f32 %v3549, %v3683
      %v3685 = vpop.f32.mrf.mxu0
      %3686 = vmatprep.mubr.f32.mxu0 0.0
      %3687 = vmatmul.mubr.f32.gmra.mxu0 %v1981
      %v3688 = vpop.f32.mrf.mxu0
      %v3689 = vadd.f32 %v3554, %v3688
      %v3690 = vpop.f32.mrf.mxu0
      %3691 = vdwg.mxu0
      %v3692 = vmax.f32 %v2933, %v3624
      %v3693 = vmax.f32 %v2938, %v3629
      %v3694 = vmax.f32 %v2943, %v3634
      %v3695 = vmax.f32 %v2948, %v3639
      %v3696 = vmax.f32 %v2953, %v3644
      %v3697 = vmax.f32 %v2958, %v3649
      %v3698 = vmax.f32 %v2963, %v3654
      %v3699 = vmax.f32 %v2968, %v3659
      %v3700 = vmax.f32 %v2973, %v3664
      %v3701 = vmax.f32 %v2978, %v3669
      %v3702 = vmax.f32 %v2983, %v3674
      %v3703 = vmax.f32 %v2988, %v3679
      %v3704 = vmax.f32 %v2993, %v3684
      %v3705 = vmax.f32 %v2998, %v3689
      %v3706 = vmax.f32 %v3692, %v3693
      %v3707 = vmax.f32 %v3694, %v3695
      %v3708 = vmax.f32 %v3696, %v3697
      %v3709 = vmax.f32 %v3698, %v3699
      %v3710 = vmax.f32 %v3700, %v3701
      %v3711 = vmax.f32 %v3702, %v3703
      %v3712 = vmax.f32 %v3704, %v3705
      %v3713 = vld [vmem:[%s4] sm:$0x1]
      %v3715 = vlaneseq
      %v3716 = vshrl.u32 %v3715, 7
      %v3717 = vsub.s32 0, %v3716
      %v3718 = vrot.slane %v3713, %v3717
      %v3720 = vadd.f32 %v3706, %v3718
      %v3721 = vadd.f32 %v3707, %v3718
      %v3722 = vadd.f32 %v3708, %v3718
      %v3723 = vadd.f32 %v3709, %v3718
      %v3724 = vadd.f32 %v3710, %v3718
      %v3725 = vadd.f32 %v3711, %v3718
      %v3726 = vadd.f32 %v3712, %v3718
      %v3727 = vmax.f32 %v3720, 0.0
      %v3728 = vmax.f32 %v3721, 0.0
      %v3729 = vmax.f32 %v3722, 0.0
      %v3730 = vmax.f32 %v3723, 0.0
      %v3731 = vmax.f32 %v3724, 0.0
      %v3732 = vmax.f32 %v3725, 0.0
      %v3733 = vmax.f32 %v3726, 0.0
      %3734 = vst [vmem:[%s224] sm:$0xff] %v3727
      %3735 = vst [vmem:[%s224 + $0x8] sm:$0xff] %v3728
      %3736 = vst [vmem:[%s224 + $0x10] sm:$0xff] %v3729
      %3737 = vst [vmem:[%s224 + $0x18] sm:$0xff] %v3730
      %3738 = vst [vmem:[%s224 + $0x20] sm:$0xff] %v3731
      %3739 = vst [vmem:[%s224 + $0x28] sm:$0xff] %v3732
      %3740 = vst [vmem:[%s224 + $0x30] sm:$0xff] %v3733
      %p3741 = scmp.lt.s32.totalorder %s16, 1
      %s3742 = scalar_select %p3741, %s16, 1
      %s3743 = smul.addr %s3742, 7
      %s3744 = smul.addr %s3743, 8
      %s3745 = scalar_lea.vmem %s5, %s3744
      // Predicated region
      $region41: #{mnist_cnn_forward.2} parent=39 // pred_check
        %p3746 = pneg %p144
      $region42: #{mnist_cnn_forward.2} parent=39 // pred_check_branch
        %3748 = sbr.rel (%p3746) target = $region44
      $region43: #{mnist_cnn_forward.2} parent=39 // pred_region
        _
      $region44: #{mnist_cnn_forward.2} parent=39 // pred_fallthru
        _
    $region40: #{mnist_cnn_forward.2} parent=5 // pred_fallthru
      _
    %p3749 = scmp.le.s32.totalorder 2, %s11
    // Predicated region
    $region45: #{mnist_cnn_forward.2} parent=5 // pred_check
      %p3750 = pneg %p3749
    $region46: #{mnist_cnn_forward.2} parent=5 // pred_check_branch
      %3752 = sbr.rel (%p3750) target = $region48
    $region47: #{mnist_cnn_forward.2} parent=5 // pred_region
      %s3753 = ssub.s32 %s11, 2
      // Predicated region
      $region49: #{mnist_cnn_forward.2} parent=47 // pred_check
        %p3754 = pneg %p150
      $region50: #{mnist_cnn_forward.2} parent=47 // pred_check_branch
        %3756 = sbr.rel (%p3754) target = $region52
      $region51: #{mnist_cnn_forward.2} parent=47 // pred_region
        %p3757 = scmp.lt.s32.totalorder %s17, 1
        %s3758 = scalar_select %p3757, %s17, 1
        %s3759 = smul.addr %s3758, 7
        %s3760 = smul.addr %s3759, 8
        %s3761 = scalar_lea.vmem %s5, %s3760
      $region52: #{mnist_cnn_forward.2} parent=47 // pred_fallthru
        _
    $region48: #{mnist_cnn_forward.2} parent=5 // pred_fallthru
      _
  $region6: #{mnist_cnn_forward.2} parent=0 // loop_footer
    %s15 = sadd.s32 1, %s11
  $region7: #{mnist_cnn_forward.2} parent=0 // loop_footer_branch
    %10 = sbr.rel target = $region3
  $region8: #{mnist_cnn_forward.2} parent=0 // loop_exit
    _

// kernel: mnist_cnn_forward.3
$region0: #{mnist_cnn_forward.3}
  #allocation0 [shape = 'u32[]', space=smem, size = 0x4, offset = 0x4, fixed_abs, tag = 'smem constant byte address 0x4 - core index']
  #allocation1 [shape = 'u32[144,128]{1,0:T(1,128)}', space=vmem, size = 0x12000, scoped, tag = 'internal scratch']
  %s0 = inlined_call_operand.vmem [shape: f32[2,7168], index: 0, kind: input, shape index: {}]
  %s1 = inlined_call_operand.vmem [shape: f32[7168,128], index: 1, kind: input, shape index: {}]
  %s2 = inlined_call_operand.vmem [shape: f32[1,128], index: 2, kind: input, shape index: {}]
  %s3 = inlined_call_operand.vmem [shape: f32[128,128], index: 3, kind: input, shape index: {}]
  %s4 = inlined_call_operand.vmem [shape: f32[1,128], index: 4, kind: input, shape index: {}]
  %s5 = inlined_call_operand.hbm [shape: f32[2,128], index: 5, kind: output, shape index: {}]
  %s6 = sld [smem:[#allocation0]]
  $region30: #{mnist_cnn_forward.3} parent=0
    _
  %s8 = ssub.s32 1, %s6
  %s9 = scalar_select 0, %s8, %s6
  $region1: #{mnist_cnn_forward.3} parent=0
    #allocation2 [shape = 'u8[1024]{0}', space=vmem, size = 0x400, scoped, tag = 'output window, operand 0, single buffered']
    #allocation3 [shape = 's32[1]{0}', space=sflag, size = 0x4, scoped, tag = 'scoped memory for mnist_cnn_forward.3']
    %10 = vsyncpa [#allocation3], 0
    // Predicated region
    $region2: #{mnist_cnn_forward.3} parent=1 // pred_check
      _
    $region3: #{mnist_cnn_forward.3} parent=1 // pred_check_branch
      %12 = sbr.rel (0) target = $region5
    $region4: #{mnist_cnn_forward.3} parent=1 // pred_region
      _
    $region5: #{mnist_cnn_forward.3} parent=1 // pred_fallthru
      _
    // Predicated region
    $region6: #{mnist_cnn_forward.3} parent=1 // pred_check
      _
    $region7: #{mnist_cnn_forward.3} parent=1 // pred_check_branch
      %14 = sbr.rel (0) target = $region9
    $region8: #{mnist_cnn_forward.3} parent=1 // pred_region
      _
    $region9: #{mnist_cnn_forward.3} parent=1 // pred_fallthru
      _
    // Predicated region
    $region10: #{mnist_cnn_forward.3} parent=1 // pred_check
      _
    $region11: #{mnist_cnn_forward.3} parent=1 // pred_check_branch
      %16 = sbr.rel (0) target = $region13
    $region12: #{mnist_cnn_forward.3} parent=1 // pred_region
      _
    $region13: #{mnist_cnn_forward.3} parent=1 // pred_fallthru
      _
    // Predicated region
    $region14: #{mnist_cnn_forward.3} parent=1 // pred_check
      _
    $region15: #{mnist_cnn_forward.3} parent=1 // pred_check_branch
      %18 = sbr.rel (0) target = $region17
    $region16: #{mnist_cnn_forward.3} parent=1 // pred_region
      _
    $region17: #{mnist_cnn_forward.3} parent=1 // pred_fallthru
      _
    // Predicated region
    $region18: #{mnist_cnn_forward.3} parent=1 // pred_check
      _
    $region19: #{mnist_cnn_forward.3} parent=1 // pred_check_branch
      %20 = sbr.rel (0) target = $region21
    $region20: #{mnist_cnn_forward.3} parent=1 // pred_region
      _
    $region21: #{mnist_cnn_forward.3} parent=1 // pred_fallthru
      _
    %v21 = vld [vmem:[%s0] sm:$0xff]
    %v22 = vld [vmem:[%s0 + $0x8] sm:$0xff]
    %v23 = vld [vmem:[%s0 + $0x10] sm:$0xff]
    %v24 = vld [vmem:[%s0 + $0x18] sm:$0xff]
    %v25 = vld [vmem:[%s0 + $0x20] sm:$0xff]
    %v26 = vld [vmem:[%s0 + $0x28] sm:$0xff]
    %v27 = vld [vmem:[%s0 + $0x30] sm:$0xff]
    %v28 = vld [vmem:[%s0 + $0x38] sm:$0xff]
    %v29 = vld [vmem:[%s0 + $0x40] sm:$0xff]
    %v30 = vld [vmem:[%s0 + $0x48] sm:$0xff]
    %v31 = vld [vmem:[%s0 + $0x50] sm:$0xff]
    %v32 = vld [vmem:[%s0 + $0x58] sm:$0xff]
    %v33 = vld [vmem:[%s0 + $0x60] sm:$0xff]
    %v34 = vld [vmem:[%s0 + $0x68] sm:$0xff]
    %v35 = vld [vmem:[%s1] sm:$0xff]
    %v36 = vld [vmem:[%s1 + $0x8] sm:$0xff]
    %v37 = vld [vmem:[%s1 + $0x10] sm:$0xff]
    %v38 = vld [vmem:[%s1 + $0x18] sm:$0xff]
    %v39 = vld [vmem:[%s1 + $0x20] sm:$0xff]
    %v40 = vld [vmem:[%s1 + $0x28] sm:$0xff]
    %v41 = vld [vmem:[%s1 + $0x30] sm:$0xff]
    %v42 = vld [vmem:[%s1 + $0x38] sm:$0xff]
    %v43 = vld [vmem:[%s1 + $0x40] sm:$0xff]
    %v44 = vld [vmem:[%s1 + $0x48] sm:$0xff]
    %v45 = vld [vmem:[%s1 + $0x50] sm:$0xff]
    %v46 = vld [vmem:[%s1 + $0x58] sm:$0xff]
    %v47 = vld [vmem:[%s1 + $0x60] sm:$0xff]
    %v48 = vld [vmem:[%s1 + $0x68] sm:$0xff]
    %v49 = vld [vmem:[%s1 + $0x70] sm:$0xff]
    %v50 = vld [vmem:[%s1 + $0x78] sm:$0xff]
    %v51 = vld [vmem:[%s1 + $0x80] sm:$0xff]
    %v52 = vld [vmem:[%s1 + $0x88] sm:$0xff]
    %v53 = vld [vmem:[%s1 + $0x90] sm:$0xff]
    %v54 = vld [vmem:[%s1 + $0x98] sm:$0xff]
    %v55 = vld [vmem:[%s1 + $0xa0] sm:$0xff]
    %v56 = vld [vmem:[%s1 + $0xa8] sm:$0xff]
    %v57 = vld [vmem:[%s1 + $0xb0] sm:$0xff]
    %v58 = vld [vmem:[%s1 + $0xb8] sm:$0xff]
    %v59 = vld [vmem:[%s1 + $0xc0] sm:$0xff]
    %v60 = vld [vmem:[%s1 + $0xc8] sm:$0xff]
    %v61 = vld [vmem:[%s1 + $0xd0] sm:$0xff]
    %v62 = vld [vmem:[%s1 + $0xd8] sm:$0xff]
    %v63 = vld [vmem:[%s1 + $0xe0] sm:$0xff]
    %v64 = vld [vmem:[%s1 + $0xe8] sm:$0xff]
    %v65 = vld [vmem:[%s1 + $0xf0] sm:$0xff]
    %v66 = vld [vmem:[%s1 + $0xf8] sm:$0xff]
    %v67 = vld [vmem:[%s1 + $0x100] sm:$0xff]
    %v68 = vld [vmem:[%s1 + $0x108] sm:$0xff]
    %v69 = vld [vmem:[%s1 + $0x110] sm:$0xff]
    %v70 = vld [vmem:[%s1 + $0x118] sm:$0xff]
    %v71 = vld [vmem:[%s1 + $0x120] sm:$0xff]
    %v72 = vld [vmem:[%s1 + $0x128] sm:$0xff]
    %v73 = vld [vmem:[%s1 + $0x130] sm:$0xff]
    %v74 = vld [vmem:[%s1 + $0x138] sm:$0xff]
    %v75 = vld [vmem:[%s1 + $0x140] sm:$0xff]
    %v76 = vld [vmem:[%s1 + $0x148] sm:$0xff]
    %v77 = vld [vmem:[%s1 + $0x150] sm:$0xff]
    %v78 = vld [vmem:[%s1 + $0x158] sm:$0xff]
    %v79 = vld [vmem:[%s1 + $0x160] sm:$0xff]
    %v80 = vld [vmem:[%s1 + $0x168] sm:$0xff]
    %v81 = vld [vmem:[%s1 + $0x170] sm:$0xff]
    %v82 = vld [vmem:[%s1 + $0x178] sm:$0xff]
    %v83 = vld [vmem:[%s1 + $0x180] sm:$0xff]
    %v84 = vld [vmem:[%s1 + $0x188] sm:$0xff]
    %v85 = vld [vmem:[%s1 + $0x190] sm:$0xff]
    %v86 = vld [vmem:[%s1 + $0x198] sm:$0xff]
    %v87 = vld [vmem:[%s1 + $0x1a0] sm:$0xff]
    %v88 = vld [vmem:[%s1 + $0x1a8] sm:$0xff]
    %v89 = vld [vmem:[%s1 + $0x1b0] sm:$0xff]
    %v90 = vld [vmem:[%s1 + $0x1b8] sm:$0xff]
    %v91 = vld [vmem:[%s1 + $0x1c0] sm:$0xff]
    %v92 = vld [vmem:[%s1 + $0x1c8] sm:$0xff]
    %v93 = vld [vmem:[%s1 + $0x1d0] sm:$0xff]
    %v94 = vld [vmem:[%s1 + $0x1d8] sm:$0xff]
    %v95 = vld [vmem:[%s1 + $0x1e0] sm:$0xff]
    %v96 = vld [vmem:[%s1 + $0x1e8] sm:$0xff]
    %v97 = vld [vmem:[%s1 + $0x1f0] sm:$0xff]
    %v98 = vld [vmem:[%s1 + $0x1f8] sm:$0xff]
    %v99 = vld [vmem:[%s1 + $0x200] sm:$0xff]
    %v100 = vld [vmem:[%s1 + $0x208] sm:$0xff]
    %v101 = vld [vmem:[%s1 + $0x210] sm:$0xff]
    %v102 = vld [vmem:[%s1 + $0x218] sm:$0xff]
    %v103 = vld [vmem:[%s1 + $0x220] sm:$0xff]
    %v104 = vld [vmem:[%s1 + $0x228] sm:$0xff]
    %v105 = vld [vmem:[%s1 + $0x230] sm:$0xff]
    %v106 = vld [vmem:[%s1 + $0x238] sm:$0xff]
    %v107 = vld [vmem:[%s1 + $0x240] sm:$0xff]
    %v108 = vld [vmem:[%s1 + $0x248] sm:$0xff]
    %v109 = vld [vmem:[%s1 + $0x250] sm:$0xff]
    %v110 = vld [vmem:[%s1 + $0x258] sm:$0xff]
    %v111 = vld [vmem:[%s1 + $0x260] sm:$0xff]
    %v112 = vld [vmem:[%s1 + $0x268] sm:$0xff]
    %v113 = vld [vmem:[%s1 + $0x270] sm:$0xff]
    %v114 = vld [vmem:[%s1 + $0x278] sm:$0xff]
    %v115 = vld [vmem:[%s1 + $0x280] sm:$0xff]
    %v116 = vld [vmem:[%s1 + $0x288] sm:$0xff]
    %v117 = vld [vmem:[%s1 + $0x290] sm:$0xff]
    %v118 = vld [vmem:[%s1 + $0x298] sm:$0xff]
    %v119 = vld [vmem:[%s1 + $0x2a0] sm:$0xff]
    %v120 = vld [vmem:[%s1 + $0x2a8] sm:$0xff]
    %v121 = vld [vmem:[%s1 + $0x2b0] sm:$0xff]
    %v122 = vld [vmem:[%s1 + $0x2b8] sm:$0xff]
    %v123 = vld [vmem:[%s1 + $0x2c0] sm:$0xff]
    %v124 = vld [vmem:[%s1 + $0x2c8] sm:$0xff]
    %v125 = vld [vmem:[%s1 + $0x2d0] sm:$0xff]
    %v126 = vld [vmem:[%s1 + $0x2d8] sm:$0xff]
    %v127 = vld [vmem:[%s1 + $0x2e0] sm:$0xff]
    %v128 = vld [vmem:[%s1 + $0x2e8] sm:$0xff]
    %v129 = vld [vmem:[%s1 + $0x2f0] sm:$0xff]
    %v130 = vld [vmem:[%s1 + $0x2f8] sm:$0xff]
    %v131 = vld [vmem:[%s1 + $0x300] sm:$0xff]
    %v132 = vld [vmem:[%s1 + $0x308] sm:$0xff]
    %v133 = vld [vmem:[%s1 + $0x310] sm:$0xff]
    %v134 = vld [vmem:[%s1 + $0x318] sm:$0xff]
    %v135 = vld [vmem:[%s1 + $0x320] sm:$0xff]
    %v136 = vld [vmem:[%s1 + $0x328] sm:$0xff]
    %v137 = vld [vmem:[%s1 + $0x330] sm:$0xff]
    %v138 = vld [vmem:[%s1 + $0x338] sm:$0xff]
    %v139 = vld [vmem:[%s1 + $0x340] sm:$0xff]
    %v140 = vld [vmem:[%s1 + $0x348] sm:$0xff]
    %v141 = vld [vmem:[%s1 + $0x350] sm:$0xff]
    %v142 = vld [vmem:[%s1 + $0x358] sm:$0xff]
    %v143 = vld [vmem:[%s1 + $0x360] sm:$0xff]
    %v144 = vld [vmem:[%s1 + $0x368] sm:$0xff]
    %v145 = vld [vmem:[%s1 + $0x370] sm:$0xff]
    %v146 = vld [vmem:[%s1 + $0x378] sm:$0xff]
    %v147 = vld [vmem:[%s1 + $0x380] sm:$0xff]
    %v148 = vld [vmem:[%s1 + $0x388] sm:$0xff]
    %v149 = vld [vmem:[%s1 + $0x390] sm:$0xff]
    %v150 = vld [vmem:[%s1 + $0x398] sm:$0xff]
    %v151 = vld [vmem:[%s1 + $0x3a0] sm:$0xff]
    %v152 = vld [vmem:[%s1 + $0x3a8] sm:$0xff]
    %v153 = vld [vmem:[%s1 + $0x3b0] sm:$0xff]
    %v154 = vld [vmem:[%s1 + $0x3b8] sm:$0xff]
    %v155 = vld [vmem:[%s1 + $0x3c0] sm:$0xff]
    %v156 = vld [vmem:[%s1 + $0x3c8] sm:$0xff]
    %v157 = vld [vmem:[%s1 + $0x3d0] sm:$0xff]
    %v158 = vld [vmem:[%s1 + $0x3d8] sm:$0xff]
    %v159 = vld [vmem:[%s1 + $0x3e0] sm:$0xff]
    %v160 = vld [vmem:[%s1 + $0x3e8] sm:$0xff]
    %v161 = vld [vmem:[%s1 + $0x3f0] sm:$0xff]
    %v162 = vld [vmem:[%s1 + $0x3f8] sm:$0xff]
    %v163 = vld [vmem:[%s1 + $0x400] sm:$0xff]
    %v164 = vld [vmem:[%s1 + $0x408] sm:$0xff]
    %v165 = vld [vmem:[%s1 + $0x410] sm:$0xff]
    %v166 = vld [vmem:[%s1 + $0x418] sm:$0xff]
    %v167 = vld [vmem:[%s1 + $0x420] sm:$0xff]
    %v168 = vld [vmem:[%s1 + $0x428] sm:$0xff]
    %v169 = vld [vmem:[%s1 + $0x430] sm:$0xff]
    %v170 = vld [vmem:[%s1 + $0x438] sm:$0xff]
    %v171 = vld [vmem:[%s1 + $0x440] sm:$0xff]
    %v172 = vld [vmem:[%s1 + $0x448] sm:$0xff]
    %v173 = vld [vmem:[%s1 + $0x450] sm:$0xff]
    %v174 = vld [vmem:[%s1 + $0x458] sm:$0xff]
    %v175 = vld [vmem:[%s1 + $0x460] sm:$0xff]
    %v176 = vld [vmem:[%s1 + $0x468] sm:$0xff]
    %v177 = vld [vmem:[%s1 + $0x470] sm:$0xff]
    %v178 = vld [vmem:[%s1 + $0x478] sm:$0xff]
    %v179 = vld [vmem:[%s1 + $0x480] sm:$0xff]
    %v180 = vld [vmem:[%s1 + $0x488] sm:$0xff]
    %v181 = vld [vmem:[%s1 + $0x490] sm:$0xff]
    %v182 = vld [vmem:[%s1 + $0x498] sm:$0xff]
    %v183 = vld [vmem:[%s1 + $0x4a0] sm:$0xff]
    %v184 = vld [vmem:[%s1 + $0x4a8] sm:$0xff]
    %v185 = vld [vmem:[%s1 + $0x4b0] sm:$0xff]
    %v186 = vld [vmem:[%s1 + $0x4b8] sm:$0xff]
    %v187 = vld [vmem:[%s1 + $0x4c0] sm:$0xff]
    %v188 = vld [vmem:[%s1 + $0x4c8] sm:$0xff]
    %v189 = vld [vmem:[%s1 + $0x4d0] sm:$0xff]
    %v190 = vld [vmem:[%s1 + $0x4d8] sm:$0xff]
    %v191 = vld [vmem:[%s1 + $0x4e0] sm:$0xff]
    %v192 = vld [vmem:[%s1 + $0x4e8] sm:$0xff]
    %v193 = vld [vmem:[%s1 + $0x4f0] sm:$0xff]
    %v194 = vld [vmem:[%s1 + $0x4f8] sm:$0xff]
    %v195 = vld [vmem:[%s1 + $0x500] sm:$0xff]
    %v196 = vld [vmem:[%s1 + $0x508] sm:$0xff]
    %v197 = vld [vmem:[%s1 + $0x510] sm:$0xff]
    %v198 = vld [vmem:[%s1 + $0x518] sm:$0xff]
    %v199 = vld [vmem:[%s1 + $0x520] sm:$0xff]
    %v200 = vld [vmem:[%s1 + $0x528] sm:$0xff]
    %v201 = vld [vmem:[%s1 + $0x530] sm:$0xff]
    %v202 = vld [vmem:[%s1 + $0x538] sm:$0xff]
    %v203 = vld [vmem:[%s1 + $0x540] sm:$0xff]
    %v204 = vld [vmem:[%s1 + $0x548] sm:$0xff]
    %v205 = vld [vmem:[%s1 + $0x550] sm:$0xff]
    %v206 = vld [vmem:[%s1 + $0x558] sm:$0xff]
    %v207 = vld [vmem:[%s1 + $0x560] sm:$0xff]
    %v208 = vld [vmem:[%s1 + $0x568] sm:$0xff]
    %v209 = vld [vmem:[%s1 + $0x570] sm:$0xff]
    %v210 = vld [vmem:[%s1 + $0x578] sm:$0xff]
    %v211 = vld [vmem:[%s1 + $0x580] sm:$0xff]
    %v212 = vld [vmem:[%s1 + $0x588] sm:$0xff]
    %v213 = vld [vmem:[%s1 + $0x590] sm:$0xff]
    %v214 = vld [vmem:[%s1 + $0x598] sm:$0xff]
    %v215 = vld [vmem:[%s1 + $0x5a0] sm:$0xff]
    %v216 = vld [vmem:[%s1 + $0x5a8] sm:$0xff]
    %v217 = vld [vmem:[%s1 + $0x5b0] sm:$0xff]
    %v218 = vld [vmem:[%s1 + $0x5b8] sm:$0xff]
    %v219 = vld [vmem:[%s1 + $0x5c0] sm:$0xff]
    %v220 = vld [vmem:[%s1 + $0x5c8] sm:$0xff]
    %v221 = vld [vmem:[%s1 + $0x5d0] sm:$0xff]
    %v222 = vld [vmem:[%s1 + $0x5d8] sm:$0xff]
    %v223 = vld [vmem:[%s1 + $0x5e0] sm:$0xff]
    %v224 = vld [vmem:[%s1 + $0x5e8] sm:$0xff]
    %v225 = vld [vmem:[%s1 + $0x5f0] sm:$0xff]
    %v226 = vld [vmem:[%s1 + $0x5f8] sm:$0xff]
    %v227 = vld [vmem:[%s1 + $0x600] sm:$0xff]
    %v228 = vld [vmem:[%s1 + $0x608] sm:$0xff]
    %v229 = vld [vmem:[%s1 + $0x610] sm:$0xff]
    %v230 = vld [vmem:[%s1 + $0x618] sm:$0xff]
    %v231 = vld [vmem:[%s1 + $0x620] sm:$0xff]
    %v232 = vld [vmem:[%s1 + $0x628] sm:$0xff]
    %v233 = vld [vmem:[%s1 + $0x630] sm:$0xff]
    %v234 = vld [vmem:[%s1 + $0x638] sm:$0xff]
    %v235 = vld [vmem:[%s1 + $0x640] sm:$0xff]
    %v236 = vld [vmem:[%s1 + $0x648] sm:$0xff]
    %v237 = vld [vmem:[%s1 + $0x650] sm:$0xff]
    %v238 = vld [vmem:[%s1 + $0x658] sm:$0xff]
    %v239 = vld [vmem:[%s1 + $0x660] sm:$0xff]
    %v240 = vld [vmem:[%s1 + $0x668] sm:$0xff]
    %v241 = vld [vmem:[%s1 + $0x670] sm:$0xff]
    %v242 = vld [vmem:[%s1 + $0x678] sm:$0xff]
    %v243 = vld [vmem:[%s1 + $0x680] sm:$0xff]
    %v244 = vld [vmem:[%s1 + $0x688] sm:$0xff]
    %v245 = vld [vmem:[%s1 + $0x690] sm:$0xff]
    %v246 = vld [vmem:[%s1 + $0x698] sm:$0xff]
    %v247 = vld [vmem:[%s1 + $0x6a0] sm:$0xff]
    %v248 = vld [vmem:[%s1 + $0x6a8] sm:$0xff]
    %v249 = vld [vmem:[%s1 + $0x6b0] sm:$0xff]
    %v250 = vld [vmem:[%s1 + $0x6b8] sm:$0xff]
    %v251 = vld [vmem:[%s1 + $0x6c0] sm:$0xff]
    %v252 = vld [vmem:[%s1 + $0x6c8] sm:$0xff]
    %v253 = vld [vmem:[%s1 + $0x6d0] sm:$0xff]
    %v254 = vld [vmem:[%s1 + $0x6d8] sm:$0xff]
    %v255 = vld [vmem:[%s1 + $0x6e0] sm:$0xff]
    %v256 = vld [vmem:[%s1 + $0x6e8] sm:$0xff]
    %v257 = vld [vmem:[%s1 + $0x6f0] sm:$0xff]
    %v258 = vld [vmem:[%s1 + $0x6f8] sm:$0xff]
    %v259 = vld [vmem:[%s1 + $0x700] sm:$0xff]
    %v260 = vld [vmem:[%s1 + $0x708] sm:$0xff]
    %v261 = vld [vmem:[%s1 + $0x710] sm:$0xff]
    %v262 = vld [vmem:[%s1 + $0x718] sm:$0xff]
    %v263 = vld [vmem:[%s1 + $0x720] sm:$0xff]
    %v264 = vld [vmem:[%s1 + $0x728] sm:$0xff]
    %v265 = vld [vmem:[%s1 + $0x730] sm:$0xff]
    %v266 = vld [vmem:[%s1 + $0x738] sm:$0xff]
    %v267 = vld [vmem:[%s1 + $0x740] sm:$0xff]
    %v268 = vld [vmem:[%s1 + $0x748] sm:$0xff]
    %v269 = vld [vmem:[%s1 + $0x750] sm:$0xff]
    %v270 = vld [vmem:[%s1 + $0x758] sm:$0xff]
    %v271 = vld [vmem:[%s1 + $0x760] sm:$0xff]
    %v272 = vld [vmem:[%s1 + $0x768] sm:$0xff]
    %v273 = vld [vmem:[%s1 + $0x770] sm:$0xff]
    %v274 = vld [vmem:[%s1 + $0x778] sm:$0xff]
    %v275 = vld [vmem:[%s1 + $0x780] sm:$0xff]
    %v276 = vld [vmem:[%s1 + $0x788] sm:$0xff]
    %v277 = vld [vmem:[%s1 + $0x790] sm:$0xff]
    %v278 = vld [vmem:[%s1 + $0x798] sm:$0xff]
    %v279 = vld [vmem:[%s1 + $0x7a0] sm:$0xff]
    %v280 = vld [vmem:[%s1 + $0x7a8] sm:$0xff]
    %v281 = vld [vmem:[%s1 + $0x7b0] sm:$0xff]
    %v282 = vld [vmem:[%s1 + $0x7b8] sm:$0xff]
    %v283 = vld [vmem:[%s1 + $0x7c0] sm:$0xff]
    %v284 = vld [vmem:[%s1 + $0x7c8] sm:$0xff]
    %v285 = vld [vmem:[%s1 + $0x7d0] sm:$0xff]
    %v286 = vld [vmem:[%s1 + $0x7d8] sm:$0xff]
    %v287 = vld [vmem:[%s1 + $0x7e0] sm:$0xff]
    %v288 = vld [vmem:[%s1 + $0x7e8] sm:$0xff]
    %v289 = vld [vmem:[%s1 + $0x7f0] sm:$0xff]
    %v290 = vld [vmem:[%s1 + $0x7f8] sm:$0xff]
    %v291 = vld [vmem:[%s1 + $0x800] sm:$0xff]
    %v292 = vld [vmem:[%s1 + $0x808] sm:$0xff]
    %v293 = vld [vmem:[%s1 + $0x810] sm:$0xff]
    %v294 = vld [vmem:[%s1 + $0x818] sm:$0xff]
    %v295 = vld [vmem:[%s1 + $0x820] sm:$0xff]
    %v296 = vld [vmem:[%s1 + $0x828] sm:$0xff]
    %v297 = vld [vmem:[%s1 + $0x830] sm:$0xff]
    %v298 = vld [vmem:[%s1 + $0x838] sm:$0xff]
    %v299 = vld [vmem:[%s1 + $0x840] sm:$0xff]
    %v300 = vld [vmem:[%s1 + $0x848] sm:$0xff]
    %v301 = vld [vmem:[%s1 + $0x850] sm:$0xff]
    %v302 = vld [vmem:[%s1 + $0x858] sm:$0xff]
    %v303 = vld [vmem:[%s1 + $0x860] sm:$0xff]
    %v304 = vld [vmem:[%s1 + $0x868] sm:$0xff]
    %v305 = vld [vmem:[%s1 + $0x870] sm:$0xff]
    %v306 = vld [vmem:[%s1 + $0x878] sm:$0xff]
    %v307 = vld [vmem:[%s1 + $0x880] sm:$0xff]
    %v308 = vld [vmem:[%s1 + $0x888] sm:$0xff]
    %v309 = vld [vmem:[%s1 + $0x890] sm:$0xff]
    %v310 = vld [vmem:[%s1 + $0x898] sm:$0xff]
    %v311 = vld [vmem:[%s1 + $0x8a0] sm:$0xff]
    %v312 = vld [vmem:[%s1 + $0x8a8] sm:$0xff]
    %v313 = vld [vmem:[%s1 + $0x8b0] sm:$0xff]
    %v314 = vld [vmem:[%s1 + $0x8b8] sm:$0xff]
    %v315 = vld [vmem:[%s1 + $0x8c0] sm:$0xff]
    %v316 = vld [vmem:[%s1 + $0x8c8] sm:$0xff]
    %v317 = vld [vmem:[%s1 + $0x8d0] sm:$0xff]
    %v318 = vld [vmem:[%s1 + $0x8d8] sm:$0xff]
    %v319 = vld [vmem:[%s1 + $0x8e0] sm:$0xff]
    %v320 = vld [vmem:[%s1 + $0x8e8] sm:$0xff]
    %v321 = vld [vmem:[%s1 + $0x8f0] sm:$0xff]
    %v322 = vld [vmem:[%s1 + $0x8f8] sm:$0xff]
    %v323 = vld [vmem:[%s1 + $0x900] sm:$0xff]
    %v324 = vld [vmem:[%s1 + $0x908] sm:$0xff]
    %v325 = vld [vmem:[%s1 + $0x910] sm:$0xff]
    %v326 = vld [vmem:[%s1 + $0x918] sm:$0xff]
    %v327 = vld [vmem:[%s1 + $0x920] sm:$0xff]
    %v328 = vld [vmem:[%s1 + $0x928] sm:$0xff]
    %v329 = vld [vmem:[%s1 + $0x930] sm:$0xff]
    %v330 = vld [vmem:[%s1 + $0x938] sm:$0xff]
    %v331 = vld [vmem:[%s1 + $0x940] sm:$0xff]
    %v332 = vld [vmem:[%s1 + $0x948] sm:$0xff]
    %v333 = vld [vmem:[%s1 + $0x950] sm:$0xff]
    %v334 = vld [vmem:[%s1 + $0x958] sm:$0xff]
    %v335 = vld [vmem:[%s1 + $0x960] sm:$0xff]
    %v336 = vld [vmem:[%s1 + $0x968] sm:$0xff]
    %v337 = vld [vmem:[%s1 + $0x970] sm:$0xff]
    %v338 = vld [vmem:[%s1 + $0x978] sm:$0xff]
    %v339 = vld [vmem:[%s1 + $0x980] sm:$0xff]
    %v340 = vld [vmem:[%s1 + $0x988] sm:$0xff]
    %v341 = vld [vmem:[%s1 + $0x990] sm:$0xff]
    %v342 = vld [vmem:[%s1 + $0x998] sm:$0xff]
    %v343 = vld [vmem:[%s1 + $0x9a0] sm:$0xff]
    %v344 = vld [vmem:[%s1 + $0x9a8] sm:$0xff]
    %v345 = vld [vmem:[%s1 + $0x9b0] sm:$0xff]
    %v346 = vld [vmem:[%s1 + $0x9b8] sm:$0xff]
    %v347 = vld [vmem:[%s1 + $0x9c0] sm:$0xff]
    %v348 = vld [vmem:[%s1 + $0x9c8] sm:$0xff]
    %v349 = vld [vmem:[%s1 + $0x9d0] sm:$0xff]
    %v350 = vld [vmem:[%s1 + $0x9d8] sm:$0xff]
    %v351 = vld [vmem:[%s1 + $0x9e0] sm:$0xff]
    %v352 = vld [vmem:[%s1 + $0x9e8] sm:$0xff]
    %v353 = vld [vmem:[%s1 + $0x9f0] sm:$0xff]
    %v354 = vld [vmem:[%s1 + $0x9f8] sm:$0xff]
    %v355 = vld [vmem:[%s1 + $0xa00] sm:$0xff]
    %v356 = vld [vmem:[%s1 + $0xa08] sm:$0xff]
    %v357 = vld [vmem:[%s1 + $0xa10] sm:$0xff]
    %v358 = vld [vmem:[%s1 + $0xa18] sm:$0xff]
    %v359 = vld [vmem:[%s1 + $0xa20] sm:$0xff]
    %v360 = vld [vmem:[%s1 + $0xa28] sm:$0xff]
    %v361 = vld [vmem:[%s1 + $0xa30] sm:$0xff]
    %v362 = vld [vmem:[%s1 + $0xa38] sm:$0xff]
    %v363 = vld [vmem:[%s1 + $0xa40] sm:$0xff]
    %v364 = vld [vmem:[%s1 + $0xa48] sm:$0xff]
    %v365 = vld [vmem:[%s1 + $0xa50] sm:$0xff]
    %v366 = vld [vmem:[%s1 + $0xa58] sm:$0xff]
    %v367 = vld [vmem:[%s1 + $0xa60] sm:$0xff]
    %v368 = vld [vmem:[%s1 + $0xa68] sm:$0xff]
    %v369 = vld [vmem:[%s1 + $0xa70] sm:$0xff]
    %v370 = vld [vmem:[%s1 + $0xa78] sm:$0xff]
    %v371 = vld [vmem:[%s1 + $0xa80] sm:$0xff]
    %v372 = vld [vmem:[%s1 + $0xa88] sm:$0xff]
    %v373 = vld [vmem:[%s1 + $0xa90] sm:$0xff]
    %v374 = vld [vmem:[%s1 + $0xa98] sm:$0xff]
    %v375 = vld [vmem:[%s1 + $0xaa0] sm:$0xff]
    %v376 = vld [vmem:[%s1 + $0xaa8] sm:$0xff]
    %v377 = vld [vmem:[%s1 + $0xab0] sm:$0xff]
    %v378 = vld [vmem:[%s1 + $0xab8] sm:$0xff]
    %v379 = vld [vmem:[%s1 + $0xac0] sm:$0xff]
    %v380 = vld [vmem:[%s1 + $0xac8] sm:$0xff]
    %v381 = vld [vmem:[%s1 + $0xad0] sm:$0xff]
    %v382 = vld [vmem:[%s1 + $0xad8] sm:$0xff]
    %v383 = vld [vmem:[%s1 + $0xae0] sm:$0xff]
    %v384 = vld [vmem:[%s1 + $0xae8] sm:$0xff]
    %v385 = vld [vmem:[%s1 + $0xaf0] sm:$0xff]
    %v386 = vld [vmem:[%s1 + $0xaf8] sm:$0xff]
    %v387 = vld [vmem:[%s1 + $0xb00] sm:$0xff]
    %v388 = vld [vmem:[%s1 + $0xb08] sm:$0xff]
    %v389 = vld [vmem:[%s1 + $0xb10] sm:$0xff]
    %v390 = vld [vmem:[%s1 + $0xb18] sm:$0xff]
    %v391 = vld [vmem:[%s1 + $0xb20] sm:$0xff]
    %v392 = vld [vmem:[%s1 + $0xb28] sm:$0xff]
    %v393 = vld [vmem:[%s1 + $0xb30] sm:$0xff]
    %v394 = vld [vmem:[%s1 + $0xb38] sm:$0xff]
    %v395 = vld [vmem:[%s1 + $0xb40] sm:$0xff]
    %v396 = vld [vmem:[%s1 + $0xb48] sm:$0xff]
    %v397 = vld [vmem:[%s1 + $0xb50] sm:$0xff]
    %v398 = vld [vmem:[%s1 + $0xb58] sm:$0xff]
    %v399 = vld [vmem:[%s1 + $0xb60] sm:$0xff]
    %v400 = vld [vmem:[%s1 + $0xb68] sm:$0xff]
    %v401 = vld [vmem:[%s1 + $0xb70] sm:$0xff]
    %v402 = vld [vmem:[%s1 + $0xb78] sm:$0xff]
    %v403 = vld [vmem:[%s1 + $0xb80] sm:$0xff]
    %v404 = vld [vmem:[%s1 + $0xb88] sm:$0xff]
    %v405 = vld [vmem:[%s1 + $0xb90] sm:$0xff]
    %v406 = vld [vmem:[%s1 + $0xb98] sm:$0xff]
    %v407 = vld [vmem:[%s1 + $0xba0] sm:$0xff]
    %v408 = vld [vmem:[%s1 + $0xba8] sm:$0xff]
    %v409 = vld [vmem:[%s1 + $0xbb0] sm:$0xff]
    %v410 = vld [vmem:[%s1 + $0xbb8] sm:$0xff]
    %v411 = vld [vmem:[%s1 + $0xbc0] sm:$0xff]
    %v412 = vld [vmem:[%s1 + $0xbc8] sm:$0xff]
    %v413 = vld [vmem:[%s1 + $0xbd0] sm:$0xff]
    %v414 = vld [vmem:[%s1 + $0xbd8] sm:$0xff]
    %v415 = vld [vmem:[%s1 + $0xbe0] sm:$0xff]
    %v416 = vld [vmem:[%s1 + $0xbe8] sm:$0xff]
    %v417 = vld [vmem:[%s1 + $0xbf0] sm:$0xff]
    %v418 = vld [vmem:[%s1 + $0xbf8] sm:$0xff]
    %v419 = vld [vmem:[%s1 + $0xc00] sm:$0xff]
    %v420 = vld [vmem:[%s1 + $0xc08] sm:$0xff]
    %v421 = vld [vmem:[%s1 + $0xc10] sm:$0xff]
    %v422 = vld [vmem:[%s1 + $0xc18] sm:$0xff]
    %v423 = vld [vmem:[%s1 + $0xc20] sm:$0xff]
    %v424 = vld [vmem:[%s1 + $0xc28] sm:$0xff]
    %v425 = vld [vmem:[%s1 + $0xc30] sm:$0xff]
    %v426 = vld [vmem:[%s1 + $0xc38] sm:$0xff]
    %v427 = vld [vmem:[%s1 + $0xc40] sm:$0xff]
    %v428 = vld [vmem:[%s1 + $0xc48] sm:$0xff]
    %v429 = vld [vmem:[%s1 + $0xc50] sm:$0xff]
    %v430 = vld [vmem:[%s1 + $0xc58] sm:$0xff]
    %v431 = vld [vmem:[%s1 + $0xc60] sm:$0xff]
    %v432 = vld [vmem:[%s1 + $0xc68] sm:$0xff]
    %v433 = vld [vmem:[%s1 + $0xc70] sm:$0xff]
    %v434 = vld [vmem:[%s1 + $0xc78] sm:$0xff]
    %v435 = vld [vmem:[%s1 + $0xc80] sm:$0xff]
    %v436 = vld [vmem:[%s1 + $0xc88] sm:$0xff]
    %v437 = vld [vmem:[%s1 + $0xc90] sm:$0xff]
    %v438 = vld [vmem:[%s1 + $0xc98] sm:$0xff]
    %v439 = vld [vmem:[%s1 + $0xca0] sm:$0xff]
    %v440 = vld [vmem:[%s1 + $0xca8] sm:$0xff]
    %v441 = vld [vmem:[%s1 + $0xcb0] sm:$0xff]
    %v442 = vld [vmem:[%s1 + $0xcb8] sm:$0xff]
    %v443 = vld [vmem:[%s1 + $0xcc0] sm:$0xff]
    %v444 = vld [vmem:[%s1 + $0xcc8] sm:$0xff]
    %v445 = vld [vmem:[%s1 + $0xcd0] sm:$0xff]
    %v446 = vld [vmem:[%s1 + $0xcd8] sm:$0xff]
    %v447 = vld [vmem:[%s1 + $0xce0] sm:$0xff]
    %v448 = vld [vmem:[%s1 + $0xce8] sm:$0xff]
    %v449 = vld [vmem:[%s1 + $0xcf0] sm:$0xff]
    %v450 = vld [vmem:[%s1 + $0xcf8] sm:$0xff]
    %v451 = vld [vmem:[%s1 + $0xd00] sm:$0xff]
    %v452 = vld [vmem:[%s1 + $0xd08] sm:$0xff]
    %v453 = vld [vmem:[%s1 + $0xd10] sm:$0xff]
    %v454 = vld [vmem:[%s1 + $0xd18] sm:$0xff]
    %v455 = vld [vmem:[%s1 + $0xd20] sm:$0xff]
    %v456 = vld [vmem:[%s1 + $0xd28] sm:$0xff]
    %v457 = vld [vmem:[%s1 + $0xd30] sm:$0xff]
    %v458 = vld [vmem:[%s1 + $0xd38] sm:$0xff]
    %v459 = vld [vmem:[%s1 + $0xd40] sm:$0xff]
    %v460 = vld [vmem:[%s1 + $0xd48] sm:$0xff]
    %v461 = vld [vmem:[%s1 + $0xd50] sm:$0xff]
    %v462 = vld [vmem:[%s1 + $0xd58] sm:$0xff]
    %v463 = vld [vmem:[%s1 + $0xd60] sm:$0xff]
    %v464 = vld [vmem:[%s1 + $0xd68] sm:$0xff]
    %v465 = vld [vmem:[%s1 + $0xd70] sm:$0xff]
    %v466 = vld [vmem:[%s1 + $0xd78] sm:$0xff]
    %v467 = vld [vmem:[%s1 + $0xd80] sm:$0xff]
    %v468 = vld [vmem:[%s1 + $0xd88] sm:$0xff]
    %v469 = vld [vmem:[%s1 + $0xd90] sm:$0xff]
    %v470 = vld [vmem:[%s1 + $0xd98] sm:$0xff]
    %v471 = vld [vmem:[%s1 + $0xda0] sm:$0xff]
    %v472 = vld [vmem:[%s1 + $0xda8] sm:$0xff]
    %v473 = vld [vmem:[%s1 + $0xdb0] sm:$0xff]
    %v474 = vld [vmem:[%s1 + $0xdb8] sm:$0xff]
    %v475 = vld [vmem:[%s1 + $0xdc0] sm:$0xff]
    %v476 = vld [vmem:[%s1 + $0xdc8] sm:$0xff]
    %v477 = vld [vmem:[%s1 + $0xdd0] sm:$0xff]
    %v478 = vld [vmem:[%s1 + $0xdd8] sm:$0xff]
    %v479 = vld [vmem:[%s1 + $0xde0] sm:$0xff]
    %v480 = vld [vmem:[%s1 + $0xde8] sm:$0xff]
    %v481 = vld [vmem:[%s1 + $0xdf0] sm:$0xff]
    %v482 = vld [vmem:[%s1 + $0xdf8] sm:$0xff]
    %v483 = vld [vmem:[%s1 + $0xe00] sm:$0xff]
    %v484 = vld [vmem:[%s1 + $0xe08] sm:$0xff]
    %v485 = vld [vmem:[%s1 + $0xe10] sm:$0xff]
    %v486 = vld [vmem:[%s1 + $0xe18] sm:$0xff]
    %v487 = vld [vmem:[%s1 + $0xe20] sm:$0xff]
    %v488 = vld [vmem:[%s1 + $0xe28] sm:$0xff]
    %v489 = vld [vmem:[%s1 + $0xe30] sm:$0xff]
    %v490 = vld [vmem:[%s1 + $0xe38] sm:$0xff]
    %v491 = vld [vmem:[%s1 + $0xe40] sm:$0xff]
    %v492 = vld [vmem:[%s1 + $0xe48] sm:$0xff]
    %v493 = vld [vmem:[%s1 + $0xe50] sm:$0xff]
    %v494 = vld [vmem:[%s1 + $0xe58] sm:$0xff]
    %v495 = vld [vmem:[%s1 + $0xe60] sm:$0xff]
    %v496 = vld [vmem:[%s1 + $0xe68] sm:$0xff]
    %v497 = vld [vmem:[%s1 + $0xe70] sm:$0xff]
    %v498 = vld [vmem:[%s1 + $0xe78] sm:$0xff]
    %v499 = vld [vmem:[%s1 + $0xe80] sm:$0xff]
    %v500 = vld [vmem:[%s1 + $0xe88] sm:$0xff]
    %v501 = vld [vmem:[%s1 + $0xe90] sm:$0xff]
    %v502 = vld [vmem:[%s1 + $0xe98] sm:$0xff]
    %v503 = vld [vmem:[%s1 + $0xea0] sm:$0xff]
    %v504 = vld [vmem:[%s1 + $0xea8] sm:$0xff]
    %v505 = vld [vmem:[%s1 + $0xeb0] sm:$0xff]
    %v506 = vld [vmem:[%s1 + $0xeb8] sm:$0xff]
    %v507 = vld [vmem:[%s1 + $0xec0] sm:$0xff]
    %v508 = vld [vmem:[%s1 + $0xec8] sm:$0xff]
    %v509 = vld [vmem:[%s1 + $0xed0] sm:$0xff]
    %v510 = vld [vmem:[%s1 + $0xed8] sm:$0xff]
    %v511 = vld [vmem:[%s1 + $0xee0] sm:$0xff]
    %v512 = vld [vmem:[%s1 + $0xee8] sm:$0xff]
    %v513 = vld [vmem:[%s1 + $0xef0] sm:$0xff]
    %v514 = vld [vmem:[%s1 + $0xef8] sm:$0xff]
    %v515 = vld [vmem:[%s1 + $0xf00] sm:$0xff]
    %v516 = vld [vmem:[%s1 + $0xf08] sm:$0xff]
    %v517 = vld [vmem:[%s1 + $0xf10] sm:$0xff]
    %v518 = vld [vmem:[%s1 + $0xf18] sm:$0xff]
    %v519 = vld [vmem:[%s1 + $0xf20] sm:$0xff]
    %v520 = vld [vmem:[%s1 + $0xf28] sm:$0xff]
    %v521 = vld [vmem:[%s1 + $0xf30] sm:$0xff]
    %v522 = vld [vmem:[%s1 + $0xf38] sm:$0xff]
    %v523 = vld [vmem:[%s1 + $0xf40] sm:$0xff]
    %v524 = vld [vmem:[%s1 + $0xf48] sm:$0xff]
    %v525 = vld [vmem:[%s1 + $0xf50] sm:$0xff]
    %v526 = vld [vmem:[%s1 + $0xf58] sm:$0xff]
    %v527 = vld [vmem:[%s1 + $0xf60] sm:$0xff]
    %v528 = vld [vmem:[%s1 + $0xf68] sm:$0xff]
    %v529 = vld [vmem:[%s1 + $0xf70] sm:$0xff]
    %v530 = vld [vmem:[%s1 + $0xf78] sm:$0xff]
    %v531 = vld [vmem:[%s1 + $0xf80] sm:$0xff]
    %v532 = vld [vmem:[%s1 + $0xf88] sm:$0xff]
    %v533 = vld [vmem:[%s1 + $0xf90] sm:$0xff]
    %v534 = vld [vmem:[%s1 + $0xf98] sm:$0xff]
    %v535 = vld [vmem:[%s1 + $0xfa0] sm:$0xff]
    %v536 = vld [vmem:[%s1 + $0xfa8] sm:$0xff]
    %v537 = vld [vmem:[%s1 + $0xfb0] sm:$0xff]
    %v538 = vld [vmem:[%s1 + $0xfb8] sm:$0xff]
    %v539 = vld [vmem:[%s1 + $0xfc0] sm:$0xff]
    %v540 = vld [vmem:[%s1 + $0xfc8] sm:$0xff]
    %v541 = vld [vmem:[%s1 + $0xfd0] sm:$0xff]
    %v542 = vld [vmem:[%s1 + $0xfd8] sm:$0xff]
    %v543 = vld [vmem:[%s1 + $0xfe0] sm:$0xff]
    %v544 = vld [vmem:[%s1 + $0xfe8] sm:$0xff]
    %v545 = vld [vmem:[%s1 + $0xff0] sm:$0xff]
    %v546 = vld [vmem:[%s1 + $0xff8] sm:$0xff]
    %v547 = vld [vmem:[%s1 + $0x1000] sm:$0xff]
    %v548 = vld [vmem:[%s1 + $0x1008] sm:$0xff]
    %v549 = vld [vmem:[%s1 + $0x1010] sm:$0xff]
    %v550 = vld [vmem:[%s1 + $0x1018] sm:$0xff]
    %v551 = vld [vmem:[%s1 + $0x1020] sm:$0xff]
    %v552 = vld [vmem:[%s1 + $0x1028] sm:$0xff]
    %v553 = vld [vmem:[%s1 + $0x1030] sm:$0xff]
    %v554 = vld [vmem:[%s1 + $0x1038] sm:$0xff]
    %v555 = vld [vmem:[%s1 + $0x1040] sm:$0xff]
    %v556 = vld [vmem:[%s1 + $0x1048] sm:$0xff]
    %v557 = vld [vmem:[%s1 + $0x1050] sm:$0xff]
    %v558 = vld [vmem:[%s1 + $0x1058] sm:$0xff]
    %v559 = vld [vmem:[%s1 + $0x1060] sm:$0xff]
    %v560 = vld [vmem:[%s1 + $0x1068] sm:$0xff]
    %v561 = vld [vmem:[%s1 + $0x1070] sm:$0xff]
    %v562 = vld [vmem:[%s1 + $0x1078] sm:$0xff]
    %v563 = vld [vmem:[%s1 + $0x1080] sm:$0xff]
    %v564 = vld [vmem:[%s1 + $0x1088] sm:$0xff]
    %v565 = vld [vmem:[%s1 + $0x1090] sm:$0xff]
    %v566 = vld [vmem:[%s1 + $0x1098] sm:$0xff]
    %v567 = vld [vmem:[%s1 + $0x10a0] sm:$0xff]
    %v568 = vld [vmem:[%s1 + $0x10a8] sm:$0xff]
    %v569 = vld [vmem:[%s1 + $0x10b0] sm:$0xff]
    %v570 = vld [vmem:[%s1 + $0x10b8] sm:$0xff]
    %v571 = vld [vmem:[%s1 + $0x10c0] sm:$0xff]
    %v572 = vld [vmem:[%s1 + $0x10c8] sm:$0xff]
    %v573 = vld [vmem:[%s1 + $0x10d0] sm:$0xff]
    %v574 = vld [vmem:[%s1 + $0x10d8] sm:$0xff]
    %v575 = vld [vmem:[%s1 + $0x10e0] sm:$0xff]
    %v576 = vld [vmem:[%s1 + $0x10e8] sm:$0xff]
    %v577 = vld [vmem:[%s1 + $0x10f0] sm:$0xff]
    %v578 = vld [vmem:[%s1 + $0x10f8] sm:$0xff]
    %v579 = vld [vmem:[%s1 + $0x1100] sm:$0xff]
    %v580 = vld [vmem:[%s1 + $0x1108] sm:$0xff]
    %v581 = vld [vmem:[%s1 + $0x1110] sm:$0xff]
    %v582 = vld [vmem:[%s1 + $0x1118] sm:$0xff]
    %v583 = vld [vmem:[%s1 + $0x1120] sm:$0xff]
    %v584 = vld [vmem:[%s1 + $0x1128] sm:$0xff]
    %v585 = vld [vmem:[%s1 + $0x1130] sm:$0xff]
    %v586 = vld [vmem:[%s1 + $0x1138] sm:$0xff]
    %v587 = vld [vmem:[%s1 + $0x1140] sm:$0xff]
    %v588 = vld [vmem:[%s1 + $0x1148] sm:$0xff]
    %v589 = vld [vmem:[%s1 + $0x1150] sm:$0xff]
    %v590 = vld [vmem:[%s1 + $0x1158] sm:$0xff]
    %v591 = vld [vmem:[%s1 + $0x1160] sm:$0xff]
    %v592 = vld [vmem:[%s1 + $0x1168] sm:$0xff]
    %v593 = vld [vmem:[%s1 + $0x1170] sm:$0xff]
    %v594 = vld [vmem:[%s1 + $0x1178] sm:$0xff]
    %v595 = vld [vmem:[%s1 + $0x1180] sm:$0xff]
    %v596 = vld [vmem:[%s1 + $0x1188] sm:$0xff]
    %v597 = vld [vmem:[%s1 + $0x1190] sm:$0xff]
    %v598 = vld [vmem:[%s1 + $0x1198] sm:$0xff]
    %v599 = vld [vmem:[%s1 + $0x11a0] sm:$0xff]
    %v600 = vld [vmem:[%s1 + $0x11a8] sm:$0xff]
    %v601 = vld [vmem:[%s1 + $0x11b0] sm:$0xff]
    %v602 = vld [vmem:[%s1 + $0x11b8] sm:$0xff]
    %v603 = vld [vmem:[%s1 + $0x11c0] sm:$0xff]
    %v604 = vld [vmem:[%s1 + $0x11c8] sm:$0xff]
    %v605 = vld [vmem:[%s1 + $0x11d0] sm:$0xff]
    %v606 = vld [vmem:[%s1 + $0x11d8] sm:$0xff]
    %v607 = vld [vmem:[%s1 + $0x11e0] sm:$0xff]
    %v608 = vld [vmem:[%s1 + $0x11e8] sm:$0xff]
    %v609 = vld [vmem:[%s1 + $0x11f0] sm:$0xff]
    %v610 = vld [vmem:[%s1 + $0x11f8] sm:$0xff]
    %v611 = vld [vmem:[%s1 + $0x1200] sm:$0xff]
    %v612 = vld [vmem:[%s1 + $0x1208] sm:$0xff]
    %v613 = vld [vmem:[%s1 + $0x1210] sm:$0xff]
    %v614 = vld [vmem:[%s1 + $0x1218] sm:$0xff]
    %v615 = vld [vmem:[%s1 + $0x1220] sm:$0xff]
    %v616 = vld [vmem:[%s1 + $0x1228] sm:$0xff]
    %v617 = vld [vmem:[%s1 + $0x1230] sm:$0xff]
    %v618 = vld [vmem:[%s1 + $0x1238] sm:$0xff]
    %v619 = vld [vmem:[%s1 + $0x1240] sm:$0xff]
    %v620 = vld [vmem:[%s1 + $0x1248] sm:$0xff]
    %v621 = vld [vmem:[%s1 + $0x1250] sm:$0xff]
    %v622 = vld [vmem:[%s1 + $0x1258] sm:$0xff]
    %v623 = vld [vmem:[%s1 + $0x1260] sm:$0xff]
    %v624 = vld [vmem:[%s1 + $0x1268] sm:$0xff]
    %v625 = vld [vmem:[%s1 + $0x1270] sm:$0xff]
    %v626 = vld [vmem:[%s1 + $0x1278] sm:$0xff]
    %v627 = vld [vmem:[%s1 + $0x1280] sm:$0xff]
    %v628 = vld [vmem:[%s1 + $0x1288] sm:$0xff]
    %v629 = vld [vmem:[%s1 + $0x1290] sm:$0xff]
    %v630 = vld [vmem:[%s1 + $0x1298] sm:$0xff]
    %v631 = vld [vmem:[%s1 + $0x12a0] sm:$0xff]
    %v632 = vld [vmem:[%s1 + $0x12a8] sm:$0xff]
    %v633 = vld [vmem:[%s1 + $0x12b0] sm:$0xff]
    %v634 = vld [vmem:[%s1 + $0x12b8] sm:$0xff]
    %v635 = vld [vmem:[%s1 + $0x12c0] sm:$0xff]
    %v636 = vld [vmem:[%s1 + $0x12c8] sm:$0xff]
    %v637 = vld [vmem:[%s1 + $0x12d0] sm:$0xff]
    %v638 = vld [vmem:[%s1 + $0x12d8] sm:$0xff]
    %v639 = vld [vmem:[%s1 + $0x12e0] sm:$0xff]
    %v640 = vld [vmem:[%s1 + $0x12e8] sm:$0xff]
    %v641 = vld [vmem:[%s1 + $0x12f0] sm:$0xff]
    %v642 = vld [vmem:[%s1 + $0x12f8] sm:$0xff]
    %v643 = vld [vmem:[%s1 + $0x1300] sm:$0xff]
    %v644 = vld [vmem:[%s1 + $0x1308] sm:$0xff]
    %v645 = vld [vmem:[%s1 + $0x1310] sm:$0xff]
    %v646 = vld [vmem:[%s1 + $0x1318] sm:$0xff]
    %v647 = vld [vmem:[%s1 + $0x1320] sm:$0xff]
    %v648 = vld [vmem:[%s1 + $0x1328] sm:$0xff]
    %v649 = vld [vmem:[%s1 + $0x1330] sm:$0xff]
    %v650 = vld [vmem:[%s1 + $0x1338] sm:$0xff]
    %v651 = vld [vmem:[%s1 + $0x1340] sm:$0xff]
    %v652 = vld [vmem:[%s1 + $0x1348] sm:$0xff]
    %v653 = vld [vmem:[%s1 + $0x1350] sm:$0xff]
    %v654 = vld [vmem:[%s1 + $0x1358] sm:$0xff]
    %v655 = vld [vmem:[%s1 + $0x1360] sm:$0xff]
    %v656 = vld [vmem:[%s1 + $0x1368] sm:$0xff]
    %v657 = vld [vmem:[%s1 + $0x1370] sm:$0xff]
    %v658 = vld [vmem:[%s1 + $0x1378] sm:$0xff]
    %v659 = vld [vmem:[%s1 + $0x1380] sm:$0xff]
    %v660 = vld [vmem:[%s1 + $0x1388] sm:$0xff]
    %v661 = vld [vmem:[%s1 + $0x1390] sm:$0xff]
    %v662 = vld [vmem:[%s1 + $0x1398] sm:$0xff]
    %v663 = vld [vmem:[%s1 + $0x13a0] sm:$0xff]
    %v664 = vld [vmem:[%s1 + $0x13a8] sm:$0xff]
    %v665 = vld [vmem:[%s1 + $0x13b0] sm:$0xff]
    %v666 = vld [vmem:[%s1 + $0x13b8] sm:$0xff]
    %v667 = vld [vmem:[%s1 + $0x13c0] sm:$0xff]
    %v668 = vld [vmem:[%s1 + $0x13c8] sm:$0xff]
    %v669 = vld [vmem:[%s1 + $0x13d0] sm:$0xff]
    %v670 = vld [vmem:[%s1 + $0x13d8] sm:$0xff]
    %v671 = vld [vmem:[%s1 + $0x13e0] sm:$0xff]
    %v672 = vld [vmem:[%s1 + $0x13e8] sm:$0xff]
    %v673 = vld [vmem:[%s1 + $0x13f0] sm:$0xff]
    %v674 = vld [vmem:[%s1 + $0x13f8] sm:$0xff]
    %v675 = vld [vmem:[%s1 + $0x1400] sm:$0xff]
    %v676 = vld [vmem:[%s1 + $0x1408] sm:$0xff]
    %v677 = vld [vmem:[%s1 + $0x1410] sm:$0xff]
    %v678 = vld [vmem:[%s1 + $0x1418] sm:$0xff]
    %v679 = vld [vmem:[%s1 + $0x1420] sm:$0xff]
    %v680 = vld [vmem:[%s1 + $0x1428] sm:$0xff]
    %v681 = vld [vmem:[%s1 + $0x1430] sm:$0xff]
    %v682 = vld [vmem:[%s1 + $0x1438] sm:$0xff]
    %v683 = vld [vmem:[%s1 + $0x1440] sm:$0xff]
    %v684 = vld [vmem:[%s1 + $0x1448] sm:$0xff]
    %v685 = vld [vmem:[%s1 + $0x1450] sm:$0xff]
    %v686 = vld [vmem:[%s1 + $0x1458] sm:$0xff]
    %v687 = vld [vmem:[%s1 + $0x1460] sm:$0xff]
    %v688 = vld [vmem:[%s1 + $0x1468] sm:$0xff]
    %v689 = vld [vmem:[%s1 + $0x1470] sm:$0xff]
    %v690 = vld [vmem:[%s1 + $0x1478] sm:$0xff]
    %v691 = vld [vmem:[%s1 + $0x1480] sm:$0xff]
    %v692 = vld [vmem:[%s1 + $0x1488] sm:$0xff]
    %v693 = vld [vmem:[%s1 + $0x1490] sm:$0xff]
    %v694 = vld [vmem:[%s1 + $0x1498] sm:$0xff]
    %v695 = vld [vmem:[%s1 + $0x14a0] sm:$0xff]
    %v696 = vld [vmem:[%s1 + $0x14a8] sm:$0xff]
    %v697 = vld [vmem:[%s1 + $0x14b0] sm:$0xff]
    %v698 = vld [vmem:[%s1 + $0x14b8] sm:$0xff]
    %v699 = vld [vmem:[%s1 + $0x14c0] sm:$0xff]
    %v700 = vld [vmem:[%s1 + $0x14c8] sm:$0xff]
    %v701 = vld [vmem:[%s1 + $0x14d0] sm:$0xff]
    %v702 = vld [vmem:[%s1 + $0x14d8] sm:$0xff]
    %v703 = vld [vmem:[%s1 + $0x14e0] sm:$0xff]
    %v704 = vld [vmem:[%s1 + $0x14e8] sm:$0xff]
    %v705 = vld [vmem:[%s1 + $0x14f0] sm:$0xff]
    %v706 = vld [vmem:[%s1 + $0x14f8] sm:$0xff]
    %v707 = vld [vmem:[%s1 + $0x1500] sm:$0xff]
    %v708 = vld [vmem:[%s1 + $0x1508] sm:$0xff]
    %v709 = vld [vmem:[%s1 + $0x1510] sm:$0xff]
    %v710 = vld [vmem:[%s1 + $0x1518] sm:$0xff]
    %v711 = vld [vmem:[%s1 + $0x1520] sm:$0xff]
    %v712 = vld [vmem:[%s1 + $0x1528] sm:$0xff]
    %v713 = vld [vmem:[%s1 + $0x1530] sm:$0xff]
    %v714 = vld [vmem:[%s1 + $0x1538] sm:$0xff]
    %v715 = vld [vmem:[%s1 + $0x1540] sm:$0xff]
    %v716 = vld [vmem:[%s1 + $0x1548] sm:$0xff]
    %v717 = vld [vmem:[%s1 + $0x1550] sm:$0xff]
    %v718 = vld [vmem:[%s1 + $0x1558] sm:$0xff]
    %v719 = vld [vmem:[%s1 + $0x1560] sm:$0xff]
    %v720 = vld [vmem:[%s1 + $0x1568] sm:$0xff]
    %v721 = vld [vmem:[%s1 + $0x1570] sm:$0xff]
    %v722 = vld [vmem:[%s1 + $0x1578] sm:$0xff]
    %v723 = vld [vmem:[%s1 + $0x1580] sm:$0xff]
    %v724 = vld [vmem:[%s1 + $0x1588] sm:$0xff]
    %v725 = vld [vmem:[%s1 + $0x1590] sm:$0xff]
    %v726 = vld [vmem:[%s1 + $0x1598] sm:$0xff]
    %v727 = vld [vmem:[%s1 + $0x15a0] sm:$0xff]
    %v728 = vld [vmem:[%s1 + $0x15a8] sm:$0xff]
    %v729 = vld [vmem:[%s1 + $0x15b0] sm:$0xff]
    %v730 = vld [vmem:[%s1 + $0x15b8] sm:$0xff]
    %v731 = vld [vmem:[%s1 + $0x15c0] sm:$0xff]
    %v732 = vld [vmem:[%s1 + $0x15c8] sm:$0xff]
    %v733 = vld [vmem:[%s1 + $0x15d0] sm:$0xff]
    %v734 = vld [vmem:[%s1 + $0x15d8] sm:$0xff]
    %v735 = vld [vmem:[%s1 + $0x15e0] sm:$0xff]
    %v736 = vld [vmem:[%s1 + $0x15e8] sm:$0xff]
    %v737 = vld [vmem:[%s1 + $0x15f0] sm:$0xff]
    %v738 = vld [vmem:[%s1 + $0x15f8] sm:$0xff]
    %v739 = vld [vmem:[%s1 + $0x1600] sm:$0xff]
    %v740 = vld [vmem:[%s1 + $0x1608] sm:$0xff]
    %v741 = vld [vmem:[%s1 + $0x1610] sm:$0xff]
    %v742 = vld [vmem:[%s1 + $0x1618] sm:$0xff]
    %v743 = vld [vmem:[%s1 + $0x1620] sm:$0xff]
    %v744 = vld [vmem:[%s1 + $0x1628] sm:$0xff]
    %v745 = vld [vmem:[%s1 + $0x1630] sm:$0xff]
    %v746 = vld [vmem:[%s1 + $0x1638] sm:$0xff]
    %v747 = vld [vmem:[%s1 + $0x1640] sm:$0xff]
    %v748 = vld [vmem:[%s1 + $0x1648] sm:$0xff]
    %v749 = vld [vmem:[%s1 + $0x1650] sm:$0xff]
    %v750 = vld [vmem:[%s1 + $0x1658] sm:$0xff]
    %v751 = vld [vmem:[%s1 + $0x1660] sm:$0xff]
    %v752 = vld [vmem:[%s1 + $0x1668] sm:$0xff]
    %v753 = vld [vmem:[%s1 + $0x1670] sm:$0xff]
    %v754 = vld [vmem:[%s1 + $0x1678] sm:$0xff]
    %v755 = vld [vmem:[%s1 + $0x1680] sm:$0xff]
    %v756 = vld [vmem:[%s1 + $0x1688] sm:$0xff]
    %v757 = vld [vmem:[%s1 + $0x1690] sm:$0xff]
    %v758 = vld [vmem:[%s1 + $0x1698] sm:$0xff]
    %v759 = vld [vmem:[%s1 + $0x16a0] sm:$0xff]
    %v760 = vld [vmem:[%s1 + $0x16a8] sm:$0xff]
    %v761 = vld [vmem:[%s1 + $0x16b0] sm:$0xff]
    %v762 = vld [vmem:[%s1 + $0x16b8] sm:$0xff]
    %v763 = vld [vmem:[%s1 + $0x16c0] sm:$0xff]
    %v764 = vld [vmem:[%s1 + $0x16c8] sm:$0xff]
    %v765 = vld [vmem:[%s1 + $0x16d0] sm:$0xff]
    %v766 = vld [vmem:[%s1 + $0x16d8] sm:$0xff]
    %v767 = vld [vmem:[%s1 + $0x16e0] sm:$0xff]
    %v768 = vld [vmem:[%s1 + $0x16e8] sm:$0xff]
    %v769 = vld [vmem:[%s1 + $0x16f0] sm:$0xff]
    %v770 = vld [vmem:[%s1 + $0x16f8] sm:$0xff]
    %v771 = vld [vmem:[%s1 + $0x1700] sm:$0xff]
    %v772 = vld [vmem:[%s1 + $0x1708] sm:$0xff]
    %v773 = vld [vmem:[%s1 + $0x1710] sm:$0xff]
    %v774 = vld [vmem:[%s1 + $0x1718] sm:$0xff]
    %v775 = vld [vmem:[%s1 + $0x1720] sm:$0xff]
    %v776 = vld [vmem:[%s1 + $0x1728] sm:$0xff]
    %v777 = vld [vmem:[%s1 + $0x1730] sm:$0xff]
    %v778 = vld [vmem:[%s1 + $0x1738] sm:$0xff]
    %v779 = vld [vmem:[%s1 + $0x1740] sm:$0xff]
    %v780 = vld [vmem:[%s1 + $0x1748] sm:$0xff]
    %v781 = vld [vmem:[%s1 + $0x1750] sm:$0xff]
    %v782 = vld [vmem:[%s1 + $0x1758] sm:$0xff]
    %v783 = vld [vmem:[%s1 + $0x1760] sm:$0xff]
    %v784 = vld [vmem:[%s1 + $0x1768] sm:$0xff]
    %v785 = vld [vmem:[%s1 + $0x1770] sm:$0xff]
    %v786 = vld [vmem:[%s1 + $0x1778] sm:$0xff]
    %v787 = vld [vmem:[%s1 + $0x1780] sm:$0xff]
    %v788 = vld [vmem:[%s1 + $0x1788] sm:$0xff]
    %v789 = vld [vmem:[%s1 + $0x1790] sm:$0xff]
    %v790 = vld [vmem:[%s1 + $0x1798] sm:$0xff]
    %v791 = vld [vmem:[%s1 + $0x17a0] sm:$0xff]
    %v792 = vld [vmem:[%s1 + $0x17a8] sm:$0xff]
    %v793 = vld [vmem:[%s1 + $0x17b0] sm:$0xff]
    %v794 = vld [vmem:[%s1 + $0x17b8] sm:$0xff]
    %v795 = vld [vmem:[%s1 + $0x17c0] sm:$0xff]
    %v796 = vld [vmem:[%s1 + $0x17c8] sm:$0xff]
    %v797 = vld [vmem:[%s1 + $0x17d0] sm:$0xff]
    %v798 = vld [vmem:[%s1 + $0x17d8] sm:$0xff]
    %v799 = vld [vmem:[%s1 + $0x17e0] sm:$0xff]
    %v800 = vld [vmem:[%s1 + $0x17e8] sm:$0xff]
    %v801 = vld [vmem:[%s1 + $0x17f0] sm:$0xff]
    %v802 = vld [vmem:[%s1 + $0x17f8] sm:$0xff]
    %v803 = vld [vmem:[%s1 + $0x1800] sm:$0xff]
    %v804 = vld [vmem:[%s1 + $0x1808] sm:$0xff]
    %v805 = vld [vmem:[%s1 + $0x1810] sm:$0xff]
    %v806 = vld [vmem:[%s1 + $0x1818] sm:$0xff]
    %v807 = vld [vmem:[%s1 + $0x1820] sm:$0xff]
    %v808 = vld [vmem:[%s1 + $0x1828] sm:$0xff]
    %v809 = vld [vmem:[%s1 + $0x1830] sm:$0xff]
    %v810 = vld [vmem:[%s1 + $0x1838] sm:$0xff]
    %v811 = vld [vmem:[%s1 + $0x1840] sm:$0xff]
    %v812 = vld [vmem:[%s1 + $0x1848] sm:$0xff]
    %v813 = vld [vmem:[%s1 + $0x1850] sm:$0xff]
    %v814 = vld [vmem:[%s1 + $0x1858] sm:$0xff]
    %v815 = vld [vmem:[%s1 + $0x1860] sm:$0xff]
    %v816 = vld [vmem:[%s1 + $0x1868] sm:$0xff]
    %v817 = vld [vmem:[%s1 + $0x1870] sm:$0xff]
    %v818 = vld [vmem:[%s1 + $0x1878] sm:$0xff]
    %v819 = vld [vmem:[%s1 + $0x1880] sm:$0xff]
    %v820 = vld [vmem:[%s1 + $0x1888] sm:$0xff]
    %v821 = vld [vmem:[%s1 + $0x1890] sm:$0xff]
    %v822 = vld [vmem:[%s1 + $0x1898] sm:$0xff]
    %v823 = vld [vmem:[%s1 + $0x18a0] sm:$0xff]
    %v824 = vld [vmem:[%s1 + $0x18a8] sm:$0xff]
    %v825 = vld [vmem:[%s1 + $0x18b0] sm:$0xff]
    %v826 = vld [vmem:[%s1 + $0x18b8] sm:$0xff]
    %v827 = vld [vmem:[%s1 + $0x18c0] sm:$0xff]
    %v828 = vld [vmem:[%s1 + $0x18c8] sm:$0xff]
    %v829 = vld [vmem:[%s1 + $0x18d0] sm:$0xff]
    %v830 = vld [vmem:[%s1 + $0x18d8] sm:$0xff]
    %v831 = vld [vmem:[%s1 + $0x18e0] sm:$0xff]
    %v832 = vld [vmem:[%s1 + $0x18e8] sm:$0xff]
    %v833 = vld [vmem:[%s1 + $0x18f0] sm:$0xff]
    %v834 = vld [vmem:[%s1 + $0x18f8] sm:$0xff]
    %v835 = vld [vmem:[%s1 + $0x1900] sm:$0xff]
    %v836 = vld [vmem:[%s1 + $0x1908] sm:$0xff]
    %v837 = vld [vmem:[%s1 + $0x1910] sm:$0xff]
    %v838 = vld [vmem:[%s1 + $0x1918] sm:$0xff]
    %v839 = vld [vmem:[%s1 + $0x1920] sm:$0xff]
    %v840 = vld [vmem:[%s1 + $0x1928] sm:$0xff]
    %v841 = vld [vmem:[%s1 + $0x1930] sm:$0xff]
    %v842 = vld [vmem:[%s1 + $0x1938] sm:$0xff]
    %v843 = vld [vmem:[%s1 + $0x1940] sm:$0xff]
    %v844 = vld [vmem:[%s1 + $0x1948] sm:$0xff]
    %v845 = vld [vmem:[%s1 + $0x1950] sm:$0xff]
    %v846 = vld [vmem:[%s1 + $0x1958] sm:$0xff]
    %v847 = vld [vmem:[%s1 + $0x1960] sm:$0xff]
    %v848 = vld [vmem:[%s1 + $0x1968] sm:$0xff]
    %v849 = vld [vmem:[%s1 + $0x1970] sm:$0xff]
    %v850 = vld [vmem:[%s1 + $0x1978] sm:$0xff]
    %v851 = vld [vmem:[%s1 + $0x1980] sm:$0xff]
    %v852 = vld [vmem:[%s1 + $0x1988] sm:$0xff]
    %v853 = vld [vmem:[%s1 + $0x1990] sm:$0xff]
    %v854 = vld [vmem:[%s1 + $0x1998] sm:$0xff]
    %v855 = vld [vmem:[%s1 + $0x19a0] sm:$0xff]
    %v856 = vld [vmem:[%s1 + $0x19a8] sm:$0xff]
    %v857 = vld [vmem:[%s1 + $0x19b0] sm:$0xff]
    %v858 = vld [vmem:[%s1 + $0x19b8] sm:$0xff]
    %v859 = vld [vmem:[%s1 + $0x19c0] sm:$0xff]
    %v860 = vld [vmem:[%s1 + $0x19c8] sm:$0xff]
    %v861 = vld [vmem:[%s1 + $0x19d0] sm:$0xff]
    %v862 = vld [vmem:[%s1 + $0x19d8] sm:$0xff]
    %v863 = vld [vmem:[%s1 + $0x19e0] sm:$0xff]
    %v864 = vld [vmem:[%s1 + $0x19e8] sm:$0xff]
    %v865 = vld [vmem:[%s1 + $0x19f0] sm:$0xff]
    %v866 = vld [vmem:[%s1 + $0x19f8] sm:$0xff]
    %v867 = vld [vmem:[%s1 + $0x1a00] sm:$0xff]
    %v868 = vld [vmem:[%s1 + $0x1a08] sm:$0xff]
    %v869 = vld [vmem:[%s1 + $0x1a10] sm:$0xff]
    %v870 = vld [vmem:[%s1 + $0x1a18] sm:$0xff]
    %v871 = vld [vmem:[%s1 + $0x1a20] sm:$0xff]
    %v872 = vld [vmem:[%s1 + $0x1a28] sm:$0xff]
    %v873 = vld [vmem:[%s1 + $0x1a30] sm:$0xff]
    %v874 = vld [vmem:[%s1 + $0x1a38] sm:$0xff]
    %v875 = vld [vmem:[%s1 + $0x1a40] sm:$0xff]
    %v876 = vld [vmem:[%s1 + $0x1a48] sm:$0xff]
    %v877 = vld [vmem:[%s1 + $0x1a50] sm:$0xff]
    %v878 = vld [vmem:[%s1 + $0x1a58] sm:$0xff]
    %v879 = vld [vmem:[%s1 + $0x1a60] sm:$0xff]
    %v880 = vld [vmem:[%s1 + $0x1a68] sm:$0xff]
    %v881 = vld [vmem:[%s1 + $0x1a70] sm:$0xff]
    %v882 = vld [vmem:[%s1 + $0x1a78] sm:$0xff]
    %v883 = vld [vmem:[%s1 + $0x1a80] sm:$0xff]
    %v884 = vld [vmem:[%s1 + $0x1a88] sm:$0xff]
    %v885 = vld [vmem:[%s1 + $0x1a90] sm:$0xff]
    %v886 = vld [vmem:[%s1 + $0x1a98] sm:$0xff]
    %v887 = vld [vmem:[%s1 + $0x1aa0] sm:$0xff]
    %v888 = vld [vmem:[%s1 + $0x1aa8] sm:$0xff]
    %v889 = vld [vmem:[%s1 + $0x1ab0] sm:$0xff]
    %v890 = vld [vmem:[%s1 + $0x1ab8] sm:$0xff]
    %v891 = vld [vmem:[%s1 + $0x1ac0] sm:$0xff]
    %v892 = vld [vmem:[%s1 + $0x1ac8] sm:$0xff]
    %v893 = vld [vmem:[%s1 + $0x1ad0] sm:$0xff]
    %v894 = vld [vmem:[%s1 + $0x1ad8] sm:$0xff]
    %v895 = vld [vmem:[%s1 + $0x1ae0] sm:$0xff]
    %v896 = vld [vmem:[%s1 + $0x1ae8] sm:$0xff]
    %v897 = vld [vmem:[%s1 + $0x1af0] sm:$0xff]
    %v898 = vld [vmem:[%s1 + $0x1af8] sm:$0xff]
    %v899 = vld [vmem:[%s1 + $0x1b00] sm:$0xff]
    %v900 = vld [vmem:[%s1 + $0x1b08] sm:$0xff]
    %v901 = vld [vmem:[%s1 + $0x1b10] sm:$0xff]
    %v902 = vld [vmem:[%s1 + $0x1b18] sm:$0xff]
    %v903 = vld [vmem:[%s1 + $0x1b20] sm:$0xff]
    %v904 = vld [vmem:[%s1 + $0x1b28] sm:$0xff]
    %v905 = vld [vmem:[%s1 + $0x1b30] sm:$0xff]
    %v906 = vld [vmem:[%s1 + $0x1b38] sm:$0xff]
    %v907 = vld [vmem:[%s1 + $0x1b40] sm:$0xff]
    %v908 = vld [vmem:[%s1 + $0x1b48] sm:$0xff]
    %v909 = vld [vmem:[%s1 + $0x1b50] sm:$0xff]
    %v910 = vld [vmem:[%s1 + $0x1b58] sm:$0xff]
    %v911 = vld [vmem:[%s1 + $0x1b60] sm:$0xff]
    %v912 = vld [vmem:[%s1 + $0x1b68] sm:$0xff]
    %v913 = vld [vmem:[%s1 + $0x1b70] sm:$0xff]
    %v914 = vld [vmem:[%s1 + $0x1b78] sm:$0xff]
    %v915 = vld [vmem:[%s1 + $0x1b80] sm:$0xff]
    %v916 = vld [vmem:[%s1 + $0x1b88] sm:$0xff]
    %v917 = vld [vmem:[%s1 + $0x1b90] sm:$0xff]
    %v918 = vld [vmem:[%s1 + $0x1b98] sm:$0xff]
    %v919 = vld [vmem:[%s1 + $0x1ba0] sm:$0xff]
    %v920 = vld [vmem:[%s1 + $0x1ba8] sm:$0xff]
    %v921 = vld [vmem:[%s1 + $0x1bb0] sm:$0xff]
    %v922 = vld [vmem:[%s1 + $0x1bb8] sm:$0xff]
    %v923 = vld [vmem:[%s1 + $0x1bc0] sm:$0xff]
    %v924 = vld [vmem:[%s1 + $0x1bc8] sm:$0xff]
    %v925 = vld [vmem:[%s1 + $0x1bd0] sm:$0xff]
    %v926 = vld [vmem:[%s1 + $0x1bd8] sm:$0xff]
    %v927 = vld [vmem:[%s1 + $0x1be0] sm:$0xff]
    %v928 = vld [vmem:[%s1 + $0x1be8] sm:$0xff]
    %v929 = vld [vmem:[%s1 + $0x1bf0] sm:$0xff]
    %v930 = vld [vmem:[%s1 + $0x1bf8] sm:$0xff]
    %v931 = vld [vmem:[%s2] sm:$0x1]
    %v933 = vlaneseq
    %v934 = vshrl.u32 %v933, 7
    %v935 = vsub.s32 0, %v934
    %v936 = vrot.slane %v931, %v935
    %v952 = vcombine.high %v21, %v21
    %v954 = vunpack.c.l.s4 1983009808
    %v955 = vunpack.c.0.s8 %v954
    %v956 = vlaneseq
    %v957 = vshrl.u32 %v956, 7
    %v958 = vsub.s32 %v955, %v957
    %v959 = vrot.slane %v21, %v958
    %v961 = vunpack.c.l.s4 1983009808
    %v962 = vunpack.c.0.s8 %v961
    %v963 = vlaneseq
    %v964 = vshrl.u32 %v963, 7
    %v965 = vsub.s32 %v962, %v964
    %v966 = vrot.slane %v952, %v965
    %v967 = vcombine.high %v959, %v959
    %v968 = vcombine.high %v966, %v966
    %v969 = vcombine.high %v22, %v22
    %v971 = vunpack.c.l.s4 1983009808
    %v972 = vunpack.c.0.s8 %v971
    %v973 = vlaneseq
    %v974 = vshrl.u32 %v973, 7
    %v975 = vsub.s32 %v972, %v974
    %v976 = vrot.slane %v22, %v975
    %v978 = vunpack.c.l.s4 1983009808
    %v979 = vunpack.c.0.s8 %v978
    %v980 = vlaneseq
    %v981 = vshrl.u32 %v980, 7
    %v982 = vsub.s32 %v979, %v981
    %v983 = vrot.slane %v969, %v982
    %v984 = vcombine.high %v976, %v976
    %v985 = vcombine.high %v983, %v983
    %v986 = vcombine.high %v23, %v23
    %v988 = vunpack.c.l.s4 1983009808
    %v989 = vunpack.c.0.s8 %v988
    %v990 = vlaneseq
    %v991 = vshrl.u32 %v990, 7
    %v992 = vsub.s32 %v989, %v991
    %v993 = vrot.slane %v23, %v992
    %v995 = vunpack.c.l.s4 1983009808
    %v996 = vunpack.c.0.s8 %v995
    %v997 = vlaneseq
    %v998 = vshrl.u32 %v997, 7
    %v999 = vsub.s32 %v996, %v998
    %v1000 = vrot.slane %v986, %v999
    %v1001 = vcombine.high %v993, %v993
    %v1002 = vcombine.high %v1000, %v1000
    %v1003 = vcombine.high %v24, %v24
    %v1005 = vunpack.c.l.s4 1983009808
    %v1006 = vunpack.c.0.s8 %v1005
    %v1007 = vlaneseq
    %v1008 = vshrl.u32 %v1007, 7
    %v1009 = vsub.s32 %v1006, %v1008
    %v1010 = vrot.slane %v24, %v1009
    %v1012 = vunpack.c.l.s4 1983009808
    %v1013 = vunpack.c.0.s8 %v1012
    %v1014 = vlaneseq
    %v1015 = vshrl.u32 %v1014, 7
    %v1016 = vsub.s32 %v1013, %v1015
    %v1017 = vrot.slane %v1003, %v1016
    %v1018 = vcombine.high %v1010, %v1010
    %v1019 = vcombine.high %v1017, %v1017
    %v1020 = vcombine.high %v25, %v25
    %v1022 = vunpack.c.l.s4 1983009808
    %v1023 = vunpack.c.0.s8 %v1022
    %v1024 = vlaneseq
    %v1025 = vshrl.u32 %v1024, 7
    %v1026 = vsub.s32 %v1023, %v1025
    %v1027 = vrot.slane %v25, %v1026
    %v1029 = vunpack.c.l.s4 1983009808
    %v1030 = vunpack.c.0.s8 %v1029
    %v1031 = vlaneseq
    %v1032 = vshrl.u32 %v1031, 7
    %v1033 = vsub.s32 %v1030, %v1032
    %v1034 = vrot.slane %v1020, %v1033
    %v1035 = vcombine.high %v1027, %v1027
    %v1036 = vcombine.high %v1034, %v1034
    %v1037 = vcombine.high %v26, %v26
    %v1039 = vunpack.c.l.s4 1983009808
    %v1040 = vunpack.c.0.s8 %v1039
    %v1041 = vlaneseq
    %v1042 = vshrl.u32 %v1041, 7
    %v1043 = vsub.s32 %v1040, %v1042
    %v1044 = vrot.slane %v26, %v1043
    %v1046 = vunpack.c.l.s4 1983009808
    %v1047 = vunpack.c.0.s8 %v1046
    %v1048 = vlaneseq
    %v1049 = vshrl.u32 %v1048, 7
    %v1050 = vsub.s32 %v1047, %v1049
    %v1051 = vrot.slane %v1037, %v1050
    %v1052 = vcombine.high %v1044, %v1044
    %v1053 = vcombine.high %v1051, %v1051
    %v1054 = vcombine.high %v27, %v27
    %v1056 = vunpack.c.l.s4 1983009808
    %v1057 = vunpack.c.0.s8 %v1056
    %v1058 = vlaneseq
    %v1059 = vshrl.u32 %v1058, 7
    %v1060 = vsub.s32 %v1057, %v1059
    %v1061 = vrot.slane %v27, %v1060
    %v1063 = vunpack.c.l.s4 1983009808
    %v1064 = vunpack.c.0.s8 %v1063
    %v1065 = vlaneseq
    %v1066 = vshrl.u32 %v1065, 7
    %v1067 = vsub.s32 %v1064, %v1066
    %v1068 = vrot.slane %v1054, %v1067
    %v1069 = vcombine.high %v1061, %v1061
    %v1070 = vcombine.high %v1068, %v1068
    %v1071 = vcombine.high %v28, %v28
    %v1073 = vunpack.c.l.s4 1983009808
    %v1074 = vunpack.c.0.s8 %v1073
    %v1075 = vlaneseq
    %v1076 = vshrl.u32 %v1075, 7
    %v1077 = vsub.s32 %v1074, %v1076
    %v1078 = vrot.slane %v28, %v1077
    %v1080 = vunpack.c.l.s4 1983009808
    %v1081 = vunpack.c.0.s8 %v1080
    %v1082 = vlaneseq
    %v1083 = vshrl.u32 %v1082, 7
    %v1084 = vsub.s32 %v1081, %v1083
    %v1085 = vrot.slane %v1071, %v1084
    %v1086 = vcombine.high %v1078, %v1078
    %v1087 = vcombine.high %v1085, %v1085
    %v1088 = vcombine.high %v29, %v29
    %v1090 = vunpack.c.l.s4 1983009808
    %v1091 = vunpack.c.0.s8 %v1090
    %v1092 = vlaneseq
    %v1093 = vshrl.u32 %v1092, 7
    %v1094 = vsub.s32 %v1091, %v1093
    %v1095 = vrot.slane %v29, %v1094
    %v1097 = vunpack.c.l.s4 1983009808
    %v1098 = vunpack.c.0.s8 %v1097
    %v1099 = vlaneseq
    %v1100 = vshrl.u32 %v1099, 7
    %v1101 = vsub.s32 %v1098, %v1100
    %v1102 = vrot.slane %v1088, %v1101
    %v1103 = vcombine.high %v1095, %v1095
    %v1104 = vcombine.high %v1102, %v1102
    %v1105 = vcombine.high %v30, %v30
    %v1107 = vunpack.c.l.s4 1983009808
    %v1108 = vunpack.c.0.s8 %v1107
    %v1109 = vlaneseq
    %v1110 = vshrl.u32 %v1109, 7
    %v1111 = vsub.s32 %v1108, %v1110
    %v1112 = vrot.slane %v30, %v1111
    %v1114 = vunpack.c.l.s4 1983009808
    %v1115 = vunpack.c.0.s8 %v1114
    %v1116 = vlaneseq
    %v1117 = vshrl.u32 %v1116, 7
    %v1118 = vsub.s32 %v1115, %v1117
    %v1119 = vrot.slane %v1105, %v1118
    %v1120 = vcombine.high %v1112, %v1112
    %v1121 = vcombine.high %v1119, %v1119
    %v1122 = vcombine.high %v31, %v31
    %v1124 = vunpack.c.l.s4 1983009808
    %v1125 = vunpack.c.0.s8 %v1124
    %v1126 = vlaneseq
    %v1127 = vshrl.u32 %v1126, 7
    %v1128 = vsub.s32 %v1125, %v1127
    %v1129 = vrot.slane %v31, %v1128
    %v1131 = vunpack.c.l.s4 1983009808
    %v1132 = vunpack.c.0.s8 %v1131
    %v1133 = vlaneseq
    %v1134 = vshrl.u32 %v1133, 7
    %v1135 = vsub.s32 %v1132, %v1134
    %v1136 = vrot.slane %v1122, %v1135
    %v1137 = vcombine.high %v1129, %v1129
    %v1138 = vcombine.high %v1136, %v1136
    %v1139 = vcombine.high %v32, %v32
    %v1141 = vunpack.c.l.s4 1983009808
    %v1142 = vunpack.c.0.s8 %v1141
    %v1143 = vlaneseq
    %v1144 = vshrl.u32 %v1143, 7
    %v1145 = vsub.s32 %v1142, %v1144
    %v1146 = vrot.slane %v32, %v1145
    %v1148 = vunpack.c.l.s4 1983009808
    %v1149 = vunpack.c.0.s8 %v1148
    %v1150 = vlaneseq
    %v1151 = vshrl.u32 %v1150, 7
    %v1152 = vsub.s32 %v1149, %v1151
    %v1153 = vrot.slane %v1139, %v1152
    %v1154 = vcombine.high %v1146, %v1146
    %v1155 = vcombine.high %v1153, %v1153
    %v1156 = vcombine.high %v33, %v33
    %v1158 = vunpack.c.l.s4 1983009808
    %v1159 = vunpack.c.0.s8 %v1158
    %v1160 = vlaneseq
    %v1161 = vshrl.u32 %v1160, 7
    %v1162 = vsub.s32 %v1159, %v1161
    %v1163 = vrot.slane %v33, %v1162
    %v1165 = vunpack.c.l.s4 1983009808
    %v1166 = vunpack.c.0.s8 %v1165
    %v1167 = vlaneseq
    %v1168 = vshrl.u32 %v1167, 7
    %v1169 = vsub.s32 %v1166, %v1168
    %v1170 = vrot.slane %v1156, %v1169
    %v1171 = vcombine.high %v1163, %v1163
    %v1172 = vcombine.high %v1170, %v1170
    %v1173 = vcombine.high %v34, %v34
    %v1175 = vunpack.c.l.s4 1983009808
    %v1176 = vunpack.c.0.s8 %v1175
    %v1177 = vlaneseq
    %v1178 = vshrl.u32 %v1177, 7
    %v1179 = vsub.s32 %v1176, %v1178
    %v1180 = vrot.slane %v34, %v1179
    %v1182 = vunpack.c.l.s4 1983009808
    %v1183 = vunpack.c.0.s8 %v1182
    %v1184 = vlaneseq
    %v1185 = vshrl.u32 %v1184, 7
    %v1186 = vsub.s32 %v1183, %v1185
    %v1187 = vrot.slane %v1173, %v1186
    %v1188 = vcombine.high %v1180, %v1180
    %v1189 = vcombine.high %v1187, %v1187
    %1246 = vmatprep.subr.mxu0 0.0
    %1247 = vmatpush1.msra.mxu0 %v50
    %1248 = vmatprep.subr.mxu0 0.0
    %1249 = vmatpush1.msra.mxu0 %v49
    %1250 = vmatprep.subr.mxu0 0.0
    %1251 = vmatpush1.msra.mxu0 %v48
    %1252 = vmatprep.subr.mxu0 0.0
    %1253 = vmatpush1.msra.mxu0 %v47
    %1254 = vmatprep.subr.mxu0 0.0
    %1255 = vmatpush1.msra.mxu0 %v46
    %1256 = vmatprep.subr.mxu0 0.0
    %1257 = vmatpush1.msra.mxu0 %v45
    %1258 = vmatprep.subr.mxu0 0.0
    %1259 = vmatpush1.msra.mxu0 %v44
    %1260 = vmatprep.subr.mxu0 0.0
    %1261 = vmatpush1.msra.mxu0 %v43
    %1262 = vmatprep.subr.mxu0 0.0
    %1263 = vmatpush1.msra.mxu0 %v42
    %1264 = vmatprep.subr.mxu0 0.0
    %1265 = vmatpush1.msra.mxu0 %v41
    %1266 = vmatprep.subr.mxu0 0.0
    %1267 = vmatpush1.msra.mxu0 %v40
    %1268 = vmatprep.subr.mxu0 0.0
    %1269 = vmatpush1.msra.mxu0 %v39
    %1270 = vmatprep.subr.mxu0 0.0
    %1271 = vmatpush1.msra.mxu0 %v38
    %1272 = vmatprep.subr.mxu0 0.0
    %1273 = vmatpush1.msra.mxu0 %v37
    %1274 = vmatprep.subr.mxu0 0.0
    %1275 = vmatpush1.msra.mxu0 %v36
    %1276 = vmatprep.subr.mxu0 0.0
    %1277 = vmatpush1.msra.mxu0 %v35
    %1278 = vmatprep.subr.mxu0 0.0
    %1279 = vmatpush2.msra.mxu0 %v66
    %1280 = vmatprep.subr.mxu0 0.0
    %1281 = vmatpush2.msra.mxu0 %v65
    %1282 = vmatprep.subr.mxu0 0.0
    %1283 = vmatpush2.msra.mxu0 %v64
    %1284 = vmatprep.subr.mxu0 0.0
    %1285 = vmatpush2.msra.mxu0 %v63
    %1286 = vmatprep.subr.mxu0 0.0
    %1287 = vmatpush2.msra.mxu0 %v62
    %1288 = vmatprep.subr.mxu0 0.0
    %1289 = vmatpush2.msra.mxu0 %v61
    %1290 = vmatprep.subr.mxu0 0.0
    %1291 = vmatpush2.msra.mxu0 %v60
    %1292 = vmatprep.subr.mxu0 0.0
    %1293 = vmatpush2.msra.mxu0 %v59
    %1294 = vmatprep.subr.mxu0 0.0
    %1295 = vmatpush2.msra.mxu0 %v58
    %1296 = vmatprep.subr.mxu0 0.0
    %1297 = vmatpush2.msra.mxu0 %v57
    %1298 = vmatprep.subr.mxu0 0.0
    %1299 = vmatpush2.msra.mxu0 %v56
    %1300 = vmatprep.subr.mxu0 0.0
    %1301 = vmatpush2.msra.mxu0 %v55
    %1302 = vmatprep.subr.mxu0 0.0
    %1303 = vmatpush2.msra.mxu0 %v54
    %1304 = vmatprep.subr.mxu0 0.0
    %1305 = vmatpush2.msra.mxu0 %v53
    %1306 = vmatprep.subr.mxu0 0.0
    %1307 = vmatpush2.msra.mxu0 %v52
    %1308 = vmatprep.subr.mxu0 0.0
    %1309 = vmatpush2.msra.mxu0 %v51
    %1310 = vmatprep.mubr.f32.mxu0 %v967
    %1311 = vmatmul.mubr.f32.gmra.mxu0 %v959
    %v1312 = vpop.f32.mrf.mxu0
    %v1313 = vadd.f32 %v936, %v1312
    %v1314 = vpop.f32.mrf.mxu0
    %1315 = vdwg.mxu0
    %1316 = vmatprep.subr.mxu0 0.0
    %1317 = vmatpush1.msra.mxu0 %v82
    %1318 = vmatprep.subr.mxu0 0.0
    %1319 = vmatpush1.msra.mxu0 %v81
    %1320 = vmatprep.subr.mxu0 0.0
    %1321 = vmatpush1.msra.mxu0 %v80
    %1322 = vmatprep.subr.mxu0 0.0
    %1323 = vmatpush1.msra.mxu0 %v79
    %1324 = vmatprep.subr.mxu0 0.0
    %1325 = vmatpush1.msra.mxu0 %v78
    %1326 = vmatprep.subr.mxu0 0.0
    %1327 = vmatpush1.msra.mxu0 %v77
    %1328 = vmatprep.subr.mxu0 0.0
    %1329 = vmatpush1.msra.mxu0 %v76
    %1330 = vmatprep.subr.mxu0 0.0
    %1331 = vmatpush1.msra.mxu0 %v75
    %1332 = vmatprep.subr.mxu0 0.0
    %1333 = vmatpush1.msra.mxu0 %v74
    %1334 = vmatprep.subr.mxu0 0.0
    %1335 = vmatpush1.msra.mxu0 %v73
    %1336 = vmatprep.subr.mxu0 0.0
    %1337 = vmatpush1.msra.mxu0 %v72
    %1338 = vmatprep.subr.mxu0 0.0
    %1339 = vmatpush1.msra.mxu0 %v71
    %1340 = vmatprep.subr.mxu0 0.0
    %1341 = vmatpush1.msra.mxu0 %v70
    %1342 = vmatprep.subr.mxu0 0.0
    %1343 = vmatpush1.msra.mxu0 %v69
    %1344 = vmatprep.subr.mxu0 0.0
    %1345 = vmatpush1.msra.mxu0 %v68
    %1346 = vmatprep.subr.mxu0 0.0
    %1347 = vmatpush1.msra.mxu0 %v67
    %1348 = vmatprep.subr.mxu0 0.0
    %1349 = vmatpush2.msra.mxu0 %v98
    %1350 = vmatprep.subr.mxu0 0.0
    %1351 = vmatpush2.msra.mxu0 %v97
    %1352 = vmatprep.subr.mxu0 0.0
    %1353 = vmatpush2.msra.mxu0 %v96
    %1354 = vmatprep.subr.mxu0 0.0
    %1355 = vmatpush2.msra.mxu0 %v95
    %1356 = vmatprep.subr.mxu0 0.0
    %1357 = vmatpush2.msra.mxu0 %v94
    %1358 = vmatprep.subr.mxu0 0.0
    %1359 = vmatpush2.msra.mxu0 %v93
    %1360 = vmatprep.subr.mxu0 0.0
    %1361 = vmatpush2.msra.mxu0 %v92
    %1362 = vmatprep.subr.mxu0 0.0
    %1363 = vmatpush2.msra.mxu0 %v91
    %1364 = vmatprep.subr.mxu0 0.0
    %1365 = vmatpush2.msra.mxu0 %v90
    %1366 = vmatprep.subr.mxu0 0.0
    %1367 = vmatpush2.msra.mxu0 %v89
    %1368 = vmatprep.subr.mxu0 0.0
    %1369 = vmatpush2.msra.mxu0 %v88
    %1370 = vmatprep.subr.mxu0 0.0
    %1371 = vmatpush2.msra.mxu0 %v87
    %1372 = vmatprep.subr.mxu0 0.0
    %1373 = vmatpush2.msra.mxu0 %v86
    %1374 = vmatprep.subr.mxu0 0.0
    %1375 = vmatpush2.msra.mxu0 %v85
    %1376 = vmatprep.subr.mxu0 0.0
    %1377 = vmatpush2.msra.mxu0 %v84
    %1378 = vmatprep.subr.mxu0 0.0
    %1379 = vmatpush2.msra.mxu0 %v83
    %1380 = vmatprep.mubr.f32.mxu0 %v968
    %1381 = vmatmul.mubr.f32.gmra.mxu0 %v966
    %v1382 = vpop.f32.mrf.mxu0
    %v1383 = vadd.f32 %v1313, %v1382
    %v1384 = vpop.f32.mrf.mxu0
    %1385 = vdwg.mxu0
    %1386 = vmatprep.subr.mxu0 0.0
    %1387 = vmatpush1.msra.mxu0 %v114
    %1388 = vmatprep.subr.mxu0 0.0
    %1389 = vmatpush1.msra.mxu0 %v113
    %1390 = vmatprep.subr.mxu0 0.0
    %1391 = vmatpush1.msra.mxu0 %v112
    %1392 = vmatprep.subr.mxu0 0.0
    %1393 = vmatpush1.msra.mxu0 %v111
    %1394 = vmatprep.subr.mxu0 0.0
    %1395 = vmatpush1.msra.mxu0 %v110
    %1396 = vmatprep.subr.mxu0 0.0
    %1397 = vmatpush1.msra.mxu0 %v109
    %1398 = vmatprep.subr.mxu0 0.0
    %1399 = vmatpush1.msra.mxu0 %v108
    %1400 = vmatprep.subr.mxu0 0.0
    %1401 = vmatpush1.msra.mxu0 %v107
    %1402 = vmatprep.subr.mxu0 0.0
    %1403 = vmatpush1.msra.mxu0 %v106
    %1404 = vmatprep.subr.mxu0 0.0
    %1405 = vmatpush1.msra.mxu0 %v105
    %1406 = vmatprep.subr.mxu0 0.0
    %1407 = vmatpush1.msra.mxu0 %v104
    %1408 = vmatprep.subr.mxu0 0.0
    %1409 = vmatpush1.msra.mxu0 %v103
    %1410 = vmatprep.subr.mxu0 0.0
    %1411 = vmatpush1.msra.mxu0 %v102
    %1412 = vmatprep.subr.mxu0 0.0
    %1413 = vmatpush1.msra.mxu0 %v101
    %1414 = vmatprep.subr.mxu0 0.0
    %1415 = vmatpush1.msra.mxu0 %v100
    %1416 = vmatprep.subr.mxu0 0.0
    %1417 = vmatpush1.msra.mxu0 %v99
    %1418 = vmatprep.subr.mxu0 0.0
    %1419 = vmatpush2.msra.mxu0 %v130
    %1420 = vmatprep.subr.mxu0 0.0
    %1421 = vmatpush2.msra.mxu0 %v129
    %1422 = vmatprep.subr.mxu0 0.0
    %1423 = vmatpush2.msra.mxu0 %v128
    %1424 = vmatprep.subr.mxu0 0.0
    %1425 = vmatpush2.msra.mxu0 %v127
    %1426 = vmatprep.subr.mxu0 0.0
    %1427 = vmatpush2.msra.mxu0 %v126
    %1428 = vmatprep.subr.mxu0 0.0
    %1429 = vmatpush2.msra.mxu0 %v125
    %1430 = vmatprep.subr.mxu0 0.0
    %1431 = vmatpush2.msra.mxu0 %v124
    %1432 = vmatprep.subr.mxu0 0.0
    %1433 = vmatpush2.msra.mxu0 %v123
    %1434 = vmatprep.subr.mxu0 0.0
    %1435 = vmatpush2.msra.mxu0 %v122
    %1436 = vmatprep.subr.mxu0 0.0
    %1437 = vmatpush2.msra.mxu0 %v121
    %1438 = vmatprep.subr.mxu0 0.0
    %1439 = vmatpush2.msra.mxu0 %v120
    %1440 = vmatprep.subr.mxu0 0.0
    %1441 = vmatpush2.msra.mxu0 %v119
    %1442 = vmatprep.subr.mxu0 0.0
    %1443 = vmatpush2.msra.mxu0 %v118
    %1444 = vmatprep.subr.mxu0 0.0
    %1445 = vmatpush2.msra.mxu0 %v117
    %1446 = vmatprep.subr.mxu0 0.0
    %1447 = vmatpush2.msra.mxu0 %v116
    %1448 = vmatprep.subr.mxu0 0.0
    %1449 = vmatpush2.msra.mxu0 %v115
    %1450 = vmatprep.mubr.f32.mxu0 %v984
    %1451 = vmatmul.mubr.f32.gmra.mxu0 %v976
    %v1452 = vpop.f32.mrf.mxu0
    %v1453 = vadd.f32 %v1383, %v1452
    %v1454 = vpop.f32.mrf.mxu0
    %1455 = vdwg.mxu0
    %1456 = vmatprep.subr.mxu0 0.0
    %1457 = vmatpush1.msra.mxu0 %v146
    %1458 = vmatprep.subr.mxu0 0.0
    %1459 = vmatpush1.msra.mxu0 %v145
    %1460 = vmatprep.subr.mxu0 0.0
    %1461 = vmatpush1.msra.mxu0 %v144
    %1462 = vmatprep.subr.mxu0 0.0
    %1463 = vmatpush1.msra.mxu0 %v143
    %1464 = vmatprep.subr.mxu0 0.0
    %1465 = vmatpush1.msra.mxu0 %v142
    %1466 = vmatprep.subr.mxu0 0.0
    %1467 = vmatpush1.msra.mxu0 %v141
    %1468 = vmatprep.subr.mxu0 0.0
    %1469 = vmatpush1.msra.mxu0 %v140
    %1470 = vmatprep.subr.mxu0 0.0
    %1471 = vmatpush1.msra.mxu0 %v139
    %1472 = vmatprep.subr.mxu0 0.0
    %1473 = vmatpush1.msra.mxu0 %v138
    %1474 = vmatprep.subr.mxu0 0.0
    %1475 = vmatpush1.msra.mxu0 %v137
    %1476 = vmatprep.subr.mxu0 0.0
    %1477 = vmatpush1.msra.mxu0 %v136
    %1478 = vmatprep.subr.mxu0 0.0
    %1479 = vmatpush1.msra.mxu0 %v135
    %1480 = vmatprep.subr.mxu0 0.0
    %1481 = vmatpush1.msra.mxu0 %v134
    %1482 = vmatprep.subr.mxu0 0.0
    %1483 = vmatpush1.msra.mxu0 %v133
    %1484 = vmatprep.subr.mxu0 0.0
    %1485 = vmatpush1.msra.mxu0 %v132
    %1486 = vmatprep.subr.mxu0 0.0
    %1487 = vmatpush1.msra.mxu0 %v131
    %1488 = vmatprep.subr.mxu0 0.0
    %1489 = vmatpush2.msra.mxu0 %v162
    %1490 = vmatprep.subr.mxu0 0.0
    %1491 = vmatpush2.msra.mxu0 %v161
    %1492 = vmatprep.subr.mxu0 0.0
    %1493 = vmatpush2.msra.mxu0 %v160
    %1494 = vmatprep.subr.mxu0 0.0
    %1495 = vmatpush2.msra.mxu0 %v159
    %1496 = vmatprep.subr.mxu0 0.0
    %1497 = vmatpush2.msra.mxu0 %v158
    %1498 = vmatprep.subr.mxu0 0.0
    %1499 = vmatpush2.msra.mxu0 %v157
    %1500 = vmatprep.subr.mxu0 0.0
    %1501 = vmatpush2.msra.mxu0 %v156
    %1502 = vmatprep.subr.mxu0 0.0
    %1503 = vmatpush2.msra.mxu0 %v155
    %1504 = vmatprep.subr.mxu0 0.0
    %1505 = vmatpush2.msra.mxu0 %v154
    %1506 = vmatprep.subr.mxu0 0.0
    %1507 = vmatpush2.msra.mxu0 %v153
    %1508 = vmatprep.subr.mxu0 0.0
    %1509 = vmatpush2.msra.mxu0 %v152
    %1510 = vmatprep.subr.mxu0 0.0
    %1511 = vmatpush2.msra.mxu0 %v151
    %1512 = vmatprep.subr.mxu0 0.0
    %1513 = vmatpush2.msra.mxu0 %v150
    %1514 = vmatprep.subr.mxu0 0.0
    %1515 = vmatpush2.msra.mxu0 %v149
    %1516 = vmatprep.subr.mxu0 0.0
    %1517 = vmatpush2.msra.mxu0 %v148
    %1518 = vmatprep.subr.mxu0 0.0
    %1519 = vmatpush2.msra.mxu0 %v147
    %1520 = vmatprep.mubr.f32.mxu0 %v985
    %1521 = vmatmul.mubr.f32.gmra.mxu0 %v983
    %v1522 = vpop.f32.mrf.mxu0
    %v1523 = vadd.f32 %v1453, %v1522
    %v1524 = vpop.f32.mrf.mxu0
    %1525 = vdwg.mxu0
    %1526 = vmatprep.subr.mxu0 0.0
    %1527 = vmatpush1.msra.mxu0 %v178
    %1528 = vmatprep.subr.mxu0 0.0
    %1529 = vmatpush1.msra.mxu0 %v177
    %1530 = vmatprep.subr.mxu0 0.0
    %1531 = vmatpush1.msra.mxu0 %v176
    %1532 = vmatprep.subr.mxu0 0.0
    %1533 = vmatpush1.msra.mxu0 %v175
    %1534 = vmatprep.subr.mxu0 0.0
    %1535 = vmatpush1.msra.mxu0 %v174
    %1536 = vmatprep.subr.mxu0 0.0
    %1537 = vmatpush1.msra.mxu0 %v173
    %1538 = vmatprep.subr.mxu0 0.0
    %1539 = vmatpush1.msra.mxu0 %v172
    %1540 = vmatprep.subr.mxu0 0.0
    %1541 = vmatpush1.msra.mxu0 %v171
    %1542 = vmatprep.subr.mxu0 0.0
    %1543 = vmatpush1.msra.mxu0 %v170
    %1544 = vmatprep.subr.mxu0 0.0
    %1545 = vmatpush1.msra.mxu0 %v169
    %1546 = vmatprep.subr.mxu0 0.0
    %1547 = vmatpush1.msra.mxu0 %v168
    %1548 = vmatprep.subr.mxu0 0.0
    %1549 = vmatpush1.msra.mxu0 %v167
    %1550 = vmatprep.subr.mxu0 0.0
    %1551 = vmatpush1.msra.mxu0 %v166
    %1552 = vmatprep.subr.mxu0 0.0
    %1553 = vmatpush1.msra.mxu0 %v165
    %1554 = vmatprep.subr.mxu0 0.0
    %1555 = vmatpush1.msra.mxu0 %v164
    %1556 = vmatprep.subr.mxu0 0.0
    %1557 = vmatpush1.msra.mxu0 %v163
    %1558 = vmatprep.subr.mxu0 0.0
    %1559 = vmatpush2.msra.mxu0 %v194
    %1560 = vmatprep.subr.mxu0 0.0
    %1561 = vmatpush2.msra.mxu0 %v193
    %1562 = vmatprep.subr.mxu0 0.0
    %1563 = vmatpush2.msra.mxu0 %v192
    %1564 = vmatprep.subr.mxu0 0.0
    %1565 = vmatpush2.msra.mxu0 %v191
    %1566 = vmatprep.subr.mxu0 0.0
    %1567 = vmatpush2.msra.mxu0 %v190
    %1568 = vmatprep.subr.mxu0 0.0
    %1569 = vmatpush2.msra.mxu0 %v189
    %1570 = vmatprep.subr.mxu0 0.0
    %1571 = vmatpush2.msra.mxu0 %v188
    %1572 = vmatprep.subr.mxu0 0.0
    %1573 = vmatpush2.msra.mxu0 %v187
    %1574 = vmatprep.subr.mxu0 0.0
    %1575 = vmatpush2.msra.mxu0 %v186
    %1576 = vmatprep.subr.mxu0 0.0
    %1577 = vmatpush2.msra.mxu0 %v185
    %1578 = vmatprep.subr.mxu0 0.0
    %1579 = vmatpush2.msra.mxu0 %v184
    %1580 = vmatprep.subr.mxu0 0.0
    %1581 = vmatpush2.msra.mxu0 %v183
    %1582 = vmatprep.subr.mxu0 0.0
    %1583 = vmatpush2.msra.mxu0 %v182
    %1584 = vmatprep.subr.mxu0 0.0
    %1585 = vmatpush2.msra.mxu0 %v181
    %1586 = vmatprep.subr.mxu0 0.0
    %1587 = vmatpush2.msra.mxu0 %v180
    %1588 = vmatprep.subr.mxu0 0.0
    %1589 = vmatpush2.msra.mxu0 %v179
    %1590 = vmatprep.mubr.f32.mxu0 %v1001
    %1591 = vmatmul.mubr.f32.gmra.mxu0 %v993
    %v1592 = vpop.f32.mrf.mxu0
    %v1593 = vadd.f32 %v1523, %v1592
    %v1594 = vpop.f32.mrf.mxu0
    %1595 = vdwg.mxu0
    %1596 = vmatprep.subr.mxu0 0.0
    %1597 = vmatpush1.msra.mxu0 %v210
    %1598 = vmatprep.subr.mxu0 0.0
    %1599 = vmatpush1.msra.mxu0 %v209
    %1600 = vmatprep.subr.mxu0 0.0
    %1601 = vmatpush1.msra.mxu0 %v208
    %1602 = vmatprep.subr.mxu0 0.0
    %1603 = vmatpush1.msra.mxu0 %v207
    %1604 = vmatprep.subr.mxu0 0.0
    %1605 = vmatpush1.msra.mxu0 %v206
    %1606 = vmatprep.subr.mxu0 0.0
    %1607 = vmatpush1.msra.mxu0 %v205
    %1608 = vmatprep.subr.mxu0 0.0
    %1609 = vmatpush1.msra.mxu0 %v204
    %1610 = vmatprep.subr.mxu0 0.0
    %1611 = vmatpush1.msra.mxu0 %v203
    %1612 = vmatprep.subr.mxu0 0.0
    %1613 = vmatpush1.msra.mxu0 %v202
    %1614 = vmatprep.subr.mxu0 0.0
    %1615 = vmatpush1.msra.mxu0 %v201
    %1616 = vmatprep.subr.mxu0 0.0
    %1617 = vmatpush1.msra.mxu0 %v200
    %1618 = vmatprep.subr.mxu0 0.0
    %1619 = vmatpush1.msra.mxu0 %v199
    %1620 = vmatprep.subr.mxu0 0.0
    %1621 = vmatpush1.msra.mxu0 %v198
    %1622 = vmatprep.subr.mxu0 0.0
    %1623 = vmatpush1.msra.mxu0 %v197
    %1624 = vmatprep.subr.mxu0 0.0
    %1625 = vmatpush1.msra.mxu0 %v196
    %1626 = vmatprep.subr.mxu0 0.0
    %1627 = vmatpush1.msra.mxu0 %v195
    %1628 = vmatprep.subr.mxu0 0.0
    %1629 = vmatpush2.msra.mxu0 %v226
    %1630 = vmatprep.subr.mxu0 0.0
    %1631 = vmatpush2.msra.mxu0 %v225
    %1632 = vmatprep.subr.mxu0 0.0
    %1633 = vmatpush2.msra.mxu0 %v224
    %1634 = vmatprep.subr.mxu0 0.0
    %1635 = vmatpush2.msra.mxu0 %v223
    %1636 = vmatprep.subr.mxu0 0.0
    %1637 = vmatpush2.msra.mxu0 %v222
    %1638 = vmatprep.subr.mxu0 0.0
    %1639 = vmatpush2.msra.mxu0 %v221
    %1640 = vmatprep.subr.mxu0 0.0
    %1641 = vmatpush2.msra.mxu0 %v220
    %1642 = vmatprep.subr.mxu0 0.0
    %1643 = vmatpush2.msra.mxu0 %v219
    %1644 = vmatprep.subr.mxu0 0.0
    %1645 = vmatpush2.msra.mxu0 %v218
    %1646 = vmatprep.subr.mxu0 0.0
    %1647 = vmatpush2.msra.mxu0 %v217
    %1648 = vmatprep.subr.mxu0 0.0
    %1649 = vmatpush2.msra.mxu0 %v216
    %1650 = vmatprep.subr.mxu0 0.0
    %1651 = vmatpush2.msra.mxu0 %v215
    %1652 = vmatprep.subr.mxu0 0.0
    %1653 = vmatpush2.msra.mxu0 %v214
    %1654 = vmatprep.subr.mxu0 0.0
    %1655 = vmatpush2.msra.mxu0 %v213
    %1656 = vmatprep.subr.mxu0 0.0
    %1657 = vmatpush2.msra.mxu0 %v212
    %1658 = vmatprep.subr.mxu0 0.0
    %1659 = vmatpush2.msra.mxu0 %v211
    %1660 = vmatprep.mubr.f32.mxu0 %v1002
    %1661 = vmatmul.mubr.f32.gmra.mxu0 %v1000
    %v1662 = vpop.f32.mrf.mxu0
    %v1663 = vadd.f32 %v1593, %v1662
    %v1664 = vpop.f32.mrf.mxu0
    %1665 = vdwg.mxu0
    %1666 = vmatprep.subr.mxu0 0.0
    %1667 = vmatpush1.msra.mxu0 %v242
    %1668 = vmatprep.subr.mxu0 0.0
    %1669 = vmatpush1.msra.mxu0 %v241
    %1670 = vmatprep.subr.mxu0 0.0
    %1671 = vmatpush1.msra.mxu0 %v240
    %1672 = vmatprep.subr.mxu0 0.0
    %1673 = vmatpush1.msra.mxu0 %v239
    %1674 = vmatprep.subr.mxu0 0.0
    %1675 = vmatpush1.msra.mxu0 %v238
    %1676 = vmatprep.subr.mxu0 0.0
    %1677 = vmatpush1.msra.mxu0 %v237
    %1678 = vmatprep.subr.mxu0 0.0
    %1679 = vmatpush1.msra.mxu0 %v236
    %1680 = vmatprep.subr.mxu0 0.0
    %1681 = vmatpush1.msra.mxu0 %v235
    %1682 = vmatprep.subr.mxu0 0.0
    %1683 = vmatpush1.msra.mxu0 %v234
    %1684 = vmatprep.subr.mxu0 0.0
    %1685 = vmatpush1.msra.mxu0 %v233
    %1686 = vmatprep.subr.mxu0 0.0
    %1687 = vmatpush1.msra.mxu0 %v232
    %1688 = vmatprep.subr.mxu0 0.0
    %1689 = vmatpush1.msra.mxu0 %v231
    %1690 = vmatprep.subr.mxu0 0.0
    %1691 = vmatpush1.msra.mxu0 %v230
    %1692 = vmatprep.subr.mxu0 0.0
    %1693 = vmatpush1.msra.mxu0 %v229
    %1694 = vmatprep.subr.mxu0 0.0
    %1695 = vmatpush1.msra.mxu0 %v228
    %1696 = vmatprep.subr.mxu0 0.0
    %1697 = vmatpush1.msra.mxu0 %v227
    %1698 = vmatprep.subr.mxu0 0.0
    %1699 = vmatpush2.msra.mxu0 %v258
    %1700 = vmatprep.subr.mxu0 0.0
    %1701 = vmatpush2.msra.mxu0 %v257
    %1702 = vmatprep.subr.mxu0 0.0
    %1703 = vmatpush2.msra.mxu0 %v256
    %1704 = vmatprep.subr.mxu0 0.0
    %1705 = vmatpush2.msra.mxu0 %v255
    %1706 = vmatprep.subr.mxu0 0.0
    %1707 = vmatpush2.msra.mxu0 %v254
    %1708 = vmatprep.subr.mxu0 0.0
    %1709 = vmatpush2.msra.mxu0 %v253
    %1710 = vmatprep.subr.mxu0 0.0
    %1711 = vmatpush2.msra.mxu0 %v252
    %1712 = vmatprep.subr.mxu0 0.0
    %1713 = vmatpush2.msra.mxu0 %v251
    %1714 = vmatprep.subr.mxu0 0.0
    %1715 = vmatpush2.msra.mxu0 %v250
    %1716 = vmatprep.subr.mxu0 0.0
    %1717 = vmatpush2.msra.mxu0 %v249
    %1718 = vmatprep.subr.mxu0 0.0
    %1719 = vmatpush2.msra.mxu0 %v248
    %1720 = vmatprep.subr.mxu0 0.0
    %1721 = vmatpush2.msra.mxu0 %v247
    %1722 = vmatprep.subr.mxu0 0.0
    %1723 = vmatpush2.msra.mxu0 %v246
    %1724 = vmatprep.subr.mxu0 0.0
    %1725 = vmatpush2.msra.mxu0 %v245
    %1726 = vmatprep.subr.mxu0 0.0
    %1727 = vmatpush2.msra.mxu0 %v244
    %1728 = vmatprep.subr.mxu0 0.0
    %1729 = vmatpush2.msra.mxu0 %v243
    %1730 = vmatprep.mubr.f32.mxu0 %v1018
    %1731 = vmatmul.mubr.f32.gmra.mxu0 %v1010
    %v1732 = vpop.f32.mrf.mxu0
    %v1733 = vadd.f32 %v1663, %v1732
    %v1734 = vpop.f32.mrf.mxu0
    %1735 = vdwg.mxu0
    %1736 = vmatprep.subr.mxu0 0.0
    %1737 = vmatpush1.msra.mxu0 %v274
    %1738 = vmatprep.subr.mxu0 0.0
    %1739 = vmatpush1.msra.mxu0 %v273
    %1740 = vmatprep.subr.mxu0 0.0
    %1741 = vmatpush1.msra.mxu0 %v272
    %1742 = vmatprep.subr.mxu0 0.0
    %1743 = vmatpush1.msra.mxu0 %v271
    %1744 = vmatprep.subr.mxu0 0.0
    %1745 = vmatpush1.msra.mxu0 %v270
    %1746 = vmatprep.subr.mxu0 0.0
    %1747 = vmatpush1.msra.mxu0 %v269
    %1748 = vmatprep.subr.mxu0 0.0
    %1749 = vmatpush1.msra.mxu0 %v268
    %1750 = vmatprep.subr.mxu0 0.0
    %1751 = vmatpush1.msra.mxu0 %v267
    %1752 = vmatprep.subr.mxu0 0.0
    %1753 = vmatpush1.msra.mxu0 %v266
    %1754 = vmatprep.subr.mxu0 0.0
    %1755 = vmatpush1.msra.mxu0 %v265
    %1756 = vmatprep.subr.mxu0 0.0
    %1757 = vmatpush1.msra.mxu0 %v264
    %1758 = vmatprep.subr.mxu0 0.0
    %1759 = vmatpush1.msra.mxu0 %v263
    %1760 = vmatprep.subr.mxu0 0.0
    %1761 = vmatpush1.msra.mxu0 %v262
    %1762 = vmatprep.subr.mxu0 0.0
    %1763 = vmatpush1.msra.mxu0 %v261
    %1764 = vmatprep.subr.mxu0 0.0
    %1765 = vmatpush1.msra.mxu0 %v260
    %1766 = vmatprep.subr.mxu0 0.0
    %1767 = vmatpush1.msra.mxu0 %v259
    %1768 = vmatprep.subr.mxu0 0.0
    %1769 = vmatpush2.msra.mxu0 %v290
    %1770 = vmatprep.subr.mxu0 0.0
    %1771 = vmatpush2.msra.mxu0 %v289
    %1772 = vmatprep.subr.mxu0 0.0
    %1773 = vmatpush2.msra.mxu0 %v288
    %1774 = vmatprep.subr.mxu0 0.0
    %1775 = vmatpush2.msra.mxu0 %v287
    %1776 = vmatprep.subr.mxu0 0.0
    %1777 = vmatpush2.msra.mxu0 %v286
    %1778 = vmatprep.subr.mxu0 0.0
    %1779 = vmatpush2.msra.mxu0 %v285
    %1780 = vmatprep.subr.mxu0 0.0
    %1781 = vmatpush2.msra.mxu0 %v284
    %1782 = vmatprep.subr.mxu0 0.0
    %1783 = vmatpush2.msra.mxu0 %v283
    %1784 = vmatprep.subr.mxu0 0.0
    %1785 = vmatpush2.msra.mxu0 %v282
    %1786 = vmatprep.subr.mxu0 0.0
    %1787 = vmatpush2.msra.mxu0 %v281
    %1788 = vmatprep.subr.mxu0 0.0
    %1789 = vmatpush2.msra.mxu0 %v280
    %1790 = vmatprep.subr.mxu0 0.0
    %1791 = vmatpush2.msra.mxu0 %v279
    %1792 = vmatprep.subr.mxu0 0.0
    %1793 = vmatpush2.msra.mxu0 %v278
    %1794 = vmatprep.subr.mxu0 0.0
    %1795 = vmatpush2.msra.mxu0 %v277
    %1796 = vmatprep.subr.mxu0 0.0
    %1797 = vmatpush2.msra.mxu0 %v276
    %1798 = vmatprep.subr.mxu0 0.0
    %1799 = vmatpush2.msra.mxu0 %v275
    %1800 = vmatprep.mubr.f32.mxu0 %v1019
    %1801 = vmatmul.mubr.f32.gmra.mxu0 %v1017
    %v1802 = vpop.f32.mrf.mxu0
    %v1803 = vadd.f32 %v1733, %v1802
    %v1804 = vpop.f32.mrf.mxu0
    %1805 = vdwg.mxu0
    %1806 = vmatprep.subr.mxu0 0.0
    %1807 = vmatpush1.msra.mxu0 %v306
    %1808 = vmatprep.subr.mxu0 0.0
    %1809 = vmatpush1.msra.mxu0 %v305
    %1810 = vmatprep.subr.mxu0 0.0
    %1811 = vmatpush1.msra.mxu0 %v304
    %1812 = vmatprep.subr.mxu0 0.0
    %1813 = vmatpush1.msra.mxu0 %v303
    %1814 = vmatprep.subr.mxu0 0.0
    %1815 = vmatpush1.msra.mxu0 %v302
    %1816 = vmatprep.subr.mxu0 0.0
    %1817 = vmatpush1.msra.mxu0 %v301
    %1818 = vmatprep.subr.mxu0 0.0
    %1819 = vmatpush1.msra.mxu0 %v300
    %1820 = vmatprep.subr.mxu0 0.0
    %1821 = vmatpush1.msra.mxu0 %v299
    %1822 = vmatprep.subr.mxu0 0.0
    %1823 = vmatpush1.msra.mxu0 %v298
    %1824 = vmatprep.subr.mxu0 0.0
    %1825 = vmatpush1.msra.mxu0 %v297
    %1826 = vmatprep.subr.mxu0 0.0
    %1827 = vmatpush1.msra.mxu0 %v296
    %1828 = vmatprep.subr.mxu0 0.0
    %1829 = vmatpush1.msra.mxu0 %v295
    %1830 = vmatprep.subr.mxu0 0.0
    %1831 = vmatpush1.msra.mxu0 %v294
    %1832 = vmatprep.subr.mxu0 0.0
    %1833 = vmatpush1.msra.mxu0 %v293
    %1834 = vmatprep.subr.mxu0 0.0
    %1835 = vmatpush1.msra.mxu0 %v292
    %1836 = vmatprep.subr.mxu0 0.0
    %1837 = vmatpush1.msra.mxu0 %v291
    %1838 = vmatprep.subr.mxu0 0.0
    %1839 = vmatpush2.msra.mxu0 %v322
    %1840 = vmatprep.subr.mxu0 0.0
    %1841 = vmatpush2.msra.mxu0 %v321
    %1842 = vmatprep.subr.mxu0 0.0
    %1843 = vmatpush2.msra.mxu0 %v320
    %1844 = vmatprep.subr.mxu0 0.0
    %1845 = vmatpush2.msra.mxu0 %v319
    %1846 = vmatprep.subr.mxu0 0.0
    %1847 = vmatpush2.msra.mxu0 %v318
    %1848 = vmatprep.subr.mxu0 0.0
    %1849 = vmatpush2.msra.mxu0 %v317
    %1850 = vmatprep.subr.mxu0 0.0
    %1851 = vmatpush2.msra.mxu0 %v316
    %1852 = vmatprep.subr.mxu0 0.0
    %1853 = vmatpush2.msra.mxu0 %v315
    %1854 = vmatprep.subr.mxu0 0.0
    %1855 = vmatpush2.msra.mxu0 %v314
    %1856 = vmatprep.subr.mxu0 0.0
    %1857 = vmatpush2.msra.mxu0 %v313
    %1858 = vmatprep.subr.mxu0 0.0
    %1859 = vmatpush2.msra.mxu0 %v312
    %1860 = vmatprep.subr.mxu0 0.0
    %1861 = vmatpush2.msra.mxu0 %v311
    %1862 = vmatprep.subr.mxu0 0.0
    %1863 = vmatpush2.msra.mxu0 %v310
    %1864 = vmatprep.subr.mxu0 0.0
    %1865 = vmatpush2.msra.mxu0 %v309
    %1866 = vmatprep.subr.mxu0 0.0
    %1867 = vmatpush2.msra.mxu0 %v308
    %1868 = vmatprep.subr.mxu0 0.0
    %1869 = vmatpush2.msra.mxu0 %v307
    %1870 = vmatprep.mubr.f32.mxu0 %v1035
    %1871 = vmatmul.mubr.f32.gmra.mxu0 %v1027
    %v1872 = vpop.f32.mrf.mxu0
    %v1873 = vadd.f32 %v1803, %v1872
    %v1874 = vpop.f32.mrf.mxu0
    %1875 = vdwg.mxu0
    %1876 = vmatprep.subr.mxu0 0.0
    %1877 = vmatpush1.msra.mxu0 %v338
    %1878 = vmatprep.subr.mxu0 0.0
    %1879 = vmatpush1.msra.mxu0 %v337
    %1880 = vmatprep.subr.mxu0 0.0
    %1881 = vmatpush1.msra.mxu0 %v336
    %1882 = vmatprep.subr.mxu0 0.0
    %1883 = vmatpush1.msra.mxu0 %v335
    %1884 = vmatprep.subr.mxu0 0.0
    %1885 = vmatpush1.msra.mxu0 %v334
    %1886 = vmatprep.subr.mxu0 0.0
    %1887 = vmatpush1.msra.mxu0 %v333
    %1888 = vmatprep.subr.mxu0 0.0
    %1889 = vmatpush1.msra.mxu0 %v332
    %1890 = vmatprep.subr.mxu0 0.0
    %1891 = vmatpush1.msra.mxu0 %v331
    %1892 = vmatprep.subr.mxu0 0.0
    %1893 = vmatpush1.msra.mxu0 %v330
    %1894 = vmatprep.subr.mxu0 0.0
    %1895 = vmatpush1.msra.mxu0 %v329
    %1896 = vmatprep.subr.mxu0 0.0
    %1897 = vmatpush1.msra.mxu0 %v328
    %1898 = vmatprep.subr.mxu0 0.0
    %1899 = vmatpush1.msra.mxu0 %v327
    %1900 = vmatprep.subr.mxu0 0.0
    %1901 = vmatpush1.msra.mxu0 %v326
    %1902 = vmatprep.subr.mxu0 0.0
    %1903 = vmatpush1.msra.mxu0 %v325
    %1904 = vmatprep.subr.mxu0 0.0
    %1905 = vmatpush1.msra.mxu0 %v324
    %1906 = vmatprep.subr.mxu0 0.0
    %1907 = vmatpush1.msra.mxu0 %v323
    %1908 = vmatprep.subr.mxu0 0.0
    %1909 = vmatpush2.msra.mxu0 %v354
    %1910 = vmatprep.subr.mxu0 0.0
    %1911 = vmatpush2.msra.mxu0 %v353
    %1912 = vmatprep.subr.mxu0 0.0
    %1913 = vmatpush2.msra.mxu0 %v352
    %1914 = vmatprep.subr.mxu0 0.0
    %1915 = vmatpush2.msra.mxu0 %v351
    %1916 = vmatprep.subr.mxu0 0.0
    %1917 = vmatpush2.msra.mxu0 %v350
    %1918 = vmatprep.subr.mxu0 0.0
    %1919 = vmatpush2.msra.mxu0 %v349
    %1920 = vmatprep.subr.mxu0 0.0
    %1921 = vmatpush2.msra.mxu0 %v348
    %1922 = vmatprep.subr.mxu0 0.0
    %1923 = vmatpush2.msra.mxu0 %v347
    %1924 = vmatprep.subr.mxu0 0.0
    %1925 = vmatpush2.msra.mxu0 %v346
    %1926 = vmatprep.subr.mxu0 0.0
    %1927 = vmatpush2.msra.mxu0 %v345
    %1928 = vmatprep.subr.mxu0 0.0
    %1929 = vmatpush2.msra.mxu0 %v344
    %1930 = vmatprep.subr.mxu0 0.0
    %1931 = vmatpush2.msra.mxu0 %v343
    %1932 = vmatprep.subr.mxu0 0.0
    %1933 = vmatpush2.msra.mxu0 %v342
    %1934 = vmatprep.subr.mxu0 0.0
    %1935 = vmatpush2.msra.mxu0 %v341
    %1936 = vmatprep.subr.mxu0 0.0
    %1937 = vmatpush2.msra.mxu0 %v340
    %1938 = vmatprep.subr.mxu0 0.0
    %1939 = vmatpush2.msra.mxu0 %v339
    %1940 = vmatprep.mubr.f32.mxu0 %v1036
    %1941 = vmatmul.mubr.f32.gmra.mxu0 %v1034
    %v1942 = vpop.f32.mrf.mxu0
    %v1943 = vadd.f32 %v1873, %v1942
    %v1944 = vpop.f32.mrf.mxu0
    %1945 = vdwg.mxu0
    %1946 = vmatprep.subr.mxu0 0.0
    %1947 = vmatpush1.msra.mxu0 %v370
    %1948 = vmatprep.subr.mxu0 0.0
    %1949 = vmatpush1.msra.mxu0 %v369
    %1950 = vmatprep.subr.mxu0 0.0
    %1951 = vmatpush1.msra.mxu0 %v368
    %1952 = vmatprep.subr.mxu0 0.0
    %1953 = vmatpush1.msra.mxu0 %v367
    %1954 = vmatprep.subr.mxu0 0.0
    %1955 = vmatpush1.msra.mxu0 %v366
    %1956 = vmatprep.subr.mxu0 0.0
    %1957 = vmatpush1.msra.mxu0 %v365
    %1958 = vmatprep.subr.mxu0 0.0
    %1959 = vmatpush1.msra.mxu0 %v364
    %1960 = vmatprep.subr.mxu0 0.0
    %1961 = vmatpush1.msra.mxu0 %v363
    %1962 = vmatprep.subr.mxu0 0.0
    %1963 = vmatpush1.msra.mxu0 %v362
    %1964 = vmatprep.subr.mxu0 0.0
    %1965 = vmatpush1.msra.mxu0 %v361
    %1966 = vmatprep.subr.mxu0 0.0
    %1967 = vmatpush1.msra.mxu0 %v360
    %1968 = vmatprep.subr.mxu0 0.0
    %1969 = vmatpush1.msra.mxu0 %v359
    %1970 = vmatprep.subr.mxu0 0.0
    %1971 = vmatpush1.msra.mxu0 %v358
    %1972 = vmatprep.subr.mxu0 0.0
    %1973 = vmatpush1.msra.mxu0 %v357
    %1974 = vmatprep.subr.mxu0 0.0
    %1975 = vmatpush1.msra.mxu0 %v356
    %1976 = vmatprep.subr.mxu0 0.0
    %1977 = vmatpush1.msra.mxu0 %v355
    %1978 = vmatprep.subr.mxu0 0.0
    %1979 = vmatpush2.msra.mxu0 %v386
    %1980 = vmatprep.subr.mxu0 0.0
    %1981 = vmatpush2.msra.mxu0 %v385
    %1982 = vmatprep.subr.mxu0 0.0
    %1983 = vmatpush2.msra.mxu0 %v384
    %1984 = vmatprep.subr.mxu0 0.0
    %1985 = vmatpush2.msra.mxu0 %v383
    %1986 = vmatprep.subr.mxu0 0.0
    %1987 = vmatpush2.msra.mxu0 %v382
    %1988 = vmatprep.subr.mxu0 0.0
    %1989 = vmatpush2.msra.mxu0 %v381
    %1990 = vmatprep.subr.mxu0 0.0
    %1991 = vmatpush2.msra.mxu0 %v380
    %1992 = vmatprep.subr.mxu0 0.0
    %1993 = vmatpush2.msra.mxu0 %v379
    %1994 = vmatprep.subr.mxu0 0.0
    %1995 = vmatpush2.msra.mxu0 %v378
    %1996 = vmatprep.subr.mxu0 0.0
    %1997 = vmatpush2.msra.mxu0 %v377
    %1998 = vmatprep.subr.mxu0 0.0
    %1999 = vmatpush2.msra.mxu0 %v376
    %2000 = vmatprep.subr.mxu0 0.0
    %2001 = vmatpush2.msra.mxu0 %v375
    %2002 = vmatprep.subr.mxu0 0.0
    %2003 = vmatpush2.msra.mxu0 %v374
    %2004 = vmatprep.subr.mxu0 0.0
    %2005 = vmatpush2.msra.mxu0 %v373
    %2006 = vmatprep.subr.mxu0 0.0
    %2007 = vmatpush2.msra.mxu0 %v372
    %2008 = vmatprep.subr.mxu0 0.0
    %2009 = vmatpush2.msra.mxu0 %v371
    %2010 = vmatprep.mubr.f32.mxu0 %v1052
    %2011 = vmatmul.mubr.f32.gmra.mxu0 %v1044
    %v2012 = vpop.f32.mrf.mxu0
    %v2013 = vadd.f32 %v1943, %v2012
    %v2014 = vpop.f32.mrf.mxu0
    %2015 = vdwg.mxu0
    %2016 = vmatprep.subr.mxu0 0.0
    %2017 = vmatpush1.msra.mxu0 %v402
    %2018 = vmatprep.subr.mxu0 0.0
    %2019 = vmatpush1.msra.mxu0 %v401
    %2020 = vmatprep.subr.mxu0 0.0
    %2021 = vmatpush1.msra.mxu0 %v400
    %2022 = vmatprep.subr.mxu0 0.0
    %2023 = vmatpush1.msra.mxu0 %v399
    %2024 = vmatprep.subr.mxu0 0.0
    %2025 = vmatpush1.msra.mxu0 %v398
    %2026 = vmatprep.subr.mxu0 0.0
    %2027 = vmatpush1.msra.mxu0 %v397
    %2028 = vmatprep.subr.mxu0 0.0
    %2029 = vmatpush1.msra.mxu0 %v396
    %2030 = vmatprep.subr.mxu0 0.0
    %2031 = vmatpush1.msra.mxu0 %v395
    %2032 = vmatprep.subr.mxu0 0.0
    %2033 = vmatpush1.msra.mxu0 %v394
    %2034 = vmatprep.subr.mxu0 0.0
    %2035 = vmatpush1.msra.mxu0 %v393
    %2036 = vmatprep.subr.mxu0 0.0
    %2037 = vmatpush1.msra.mxu0 %v392
    %2038 = vmatprep.subr.mxu0 0.0
    %2039 = vmatpush1.msra.mxu0 %v391
    %2040 = vmatprep.subr.mxu0 0.0
    %2041 = vmatpush1.msra.mxu0 %v390
    %2042 = vmatprep.subr.mxu0 0.0
    %2043 = vmatpush1.msra.mxu0 %v389
    %2044 = vmatprep.subr.mxu0 0.0
    %2045 = vmatpush1.msra.mxu0 %v388
    %2046 = vmatprep.subr.mxu0 0.0
    %2047 = vmatpush1.msra.mxu0 %v387
    %2048 = vmatprep.subr.mxu0 0.0
    %2049 = vmatpush2.msra.mxu0 %v418
    %2050 = vmatprep.subr.mxu0 0.0
    %2051 = vmatpush2.msra.mxu0 %v417
    %2052 = vmatprep.subr.mxu0 0.0
    %2053 = vmatpush2.msra.mxu0 %v416
    %2054 = vmatprep.subr.mxu0 0.0
    %2055 = vmatpush2.msra.mxu0 %v415
    %2056 = vmatprep.subr.mxu0 0.0
    %2057 = vmatpush2.msra.mxu0 %v414
    %2058 = vmatprep.subr.mxu0 0.0
    %2059 = vmatpush2.msra.mxu0 %v413
    %2060 = vmatprep.subr.mxu0 0.0
    %2061 = vmatpush2.msra.mxu0 %v412
    %2062 = vmatprep.subr.mxu0 0.0
    %2063 = vmatpush2.msra.mxu0 %v411
    %2064 = vmatprep.subr.mxu0 0.0
    %2065 = vmatpush2.msra.mxu0 %v410
    %2066 = vmatprep.subr.mxu0 0.0
    %2067 = vmatpush2.msra.mxu0 %v409
    %2068 = vmatprep.subr.mxu0 0.0
    %2069 = vmatpush2.msra.mxu0 %v408
    %2070 = vmatprep.subr.mxu0 0.0
    %2071 = vmatpush2.msra.mxu0 %v407
    %2072 = vmatprep.subr.mxu0 0.0
    %2073 = vmatpush2.msra.mxu0 %v406
    %2074 = vmatprep.subr.mxu0 0.0
    %2075 = vmatpush2.msra.mxu0 %v405
    %2076 = vmatprep.subr.mxu0 0.0
    %2077 = vmatpush2.msra.mxu0 %v404
    %2078 = vmatprep.subr.mxu0 0.0
    %2079 = vmatpush2.msra.mxu0 %v403
    %2080 = vmatprep.mubr.f32.mxu0 %v1053
    %2081 = vmatmul.mubr.f32.gmra.mxu0 %v1051
    %v2082 = vpop.f32.mrf.mxu0
    %v2083 = vadd.f32 %v2013, %v2082
    %v2084 = vpop.f32.mrf.mxu0
    %2085 = vdwg.mxu0
    %2086 = vmatprep.subr.mxu0 0.0
    %2087 = vmatpush1.msra.mxu0 %v434
    %2088 = vmatprep.subr.mxu0 0.0
    %2089 = vmatpush1.msra.mxu0 %v433
    %2090 = vmatprep.subr.mxu0 0.0
    %2091 = vmatpush1.msra.mxu0 %v432
    %2092 = vmatprep.subr.mxu0 0.0
    %2093 = vmatpush1.msra.mxu0 %v431
    %2094 = vmatprep.subr.mxu0 0.0
    %2095 = vmatpush1.msra.mxu0 %v430
    %2096 = vmatprep.subr.mxu0 0.0
    %2097 = vmatpush1.msra.mxu0 %v429
    %2098 = vmatprep.subr.mxu0 0.0
    %2099 = vmatpush1.msra.mxu0 %v428
    %2100 = vmatprep.subr.mxu0 0.0
    %2101 = vmatpush1.msra.mxu0 %v427
    %2102 = vmatprep.subr.mxu0 0.0
    %2103 = vmatpush1.msra.mxu0 %v426
    %2104 = vmatprep.subr.mxu0 0.0
    %2105 = vmatpush1.msra.mxu0 %v425
    %2106 = vmatprep.subr.mxu0 0.0
    %2107 = vmatpush1.msra.mxu0 %v424
    %2108 = vmatprep.subr.mxu0 0.0
    %2109 = vmatpush1.msra.mxu0 %v423
    %2110 = vmatprep.subr.mxu0 0.0
    %2111 = vmatpush1.msra.mxu0 %v422
    %2112 = vmatprep.subr.mxu0 0.0
    %2113 = vmatpush1.msra.mxu0 %v421
    %2114 = vmatprep.subr.mxu0 0.0
    %2115 = vmatpush1.msra.mxu0 %v420
    %2116 = vmatprep.subr.mxu0 0.0
    %2117 = vmatpush1.msra.mxu0 %v419
    %2118 = vmatprep.subr.mxu0 0.0
    %2119 = vmatpush2.msra.mxu0 %v450
    %2120 = vmatprep.subr.mxu0 0.0
    %2121 = vmatpush2.msra.mxu0 %v449
    %2122 = vmatprep.subr.mxu0 0.0
    %2123 = vmatpush2.msra.mxu0 %v448
    %2124 = vmatprep.subr.mxu0 0.0
    %2125 = vmatpush2.msra.mxu0 %v447
    %2126 = vmatprep.subr.mxu0 0.0
    %2127 = vmatpush2.msra.mxu0 %v446
    %2128 = vmatprep.subr.mxu0 0.0
    %2129 = vmatpush2.msra.mxu0 %v445
    %2130 = vmatprep.subr.mxu0 0.0
    %2131 = vmatpush2.msra.mxu0 %v444
    %2132 = vmatprep.subr.mxu0 0.0
    %2133 = vmatpush2.msra.mxu0 %v443
    %2134 = vmatprep.subr.mxu0 0.0
    %2135 = vmatpush2.msra.mxu0 %v442
    %2136 = vmatprep.subr.mxu0 0.0
    %2137 = vmatpush2.msra.mxu0 %v441
    %2138 = vmatprep.subr.mxu0 0.0
    %2139 = vmatpush2.msra.mxu0 %v440
    %2140 = vmatprep.subr.mxu0 0.0
    %2141 = vmatpush2.msra.mxu0 %v439
    %2142 = vmatprep.subr.mxu0 0.0
    %2143 = vmatpush2.msra.mxu0 %v438
    %2144 = vmatprep.subr.mxu0 0.0
    %2145 = vmatpush2.msra.mxu0 %v437
    %2146 = vmatprep.subr.mxu0 0.0
    %2147 = vmatpush2.msra.mxu0 %v436
    %2148 = vmatprep.subr.mxu0 0.0
    %2149 = vmatpush2.msra.mxu0 %v435
    %2150 = vmatprep.mubr.f32.mxu0 %v1069
    %2151 = vmatmul.mubr.f32.gmra.mxu0 %v1061
    %v2152 = vpop.f32.mrf.mxu0
    %v2153 = vadd.f32 %v2083, %v2152
    %v2154 = vpop.f32.mrf.mxu0
    %2155 = vdwg.mxu0
    %2156 = vmatprep.subr.mxu0 0.0
    %2157 = vmatpush1.msra.mxu0 %v466
    %2158 = vmatprep.subr.mxu0 0.0
    %2159 = vmatpush1.msra.mxu0 %v465
    %2160 = vmatprep.subr.mxu0 0.0
    %2161 = vmatpush1.msra.mxu0 %v464
    %2162 = vmatprep.subr.mxu0 0.0
    %2163 = vmatpush1.msra.mxu0 %v463
    %2164 = vmatprep.subr.mxu0 0.0
    %2165 = vmatpush1.msra.mxu0 %v462
    %2166 = vmatprep.subr.mxu0 0.0
    %2167 = vmatpush1.msra.mxu0 %v461
    %2168 = vmatprep.subr.mxu0 0.0
    %2169 = vmatpush1.msra.mxu0 %v460
    %2170 = vmatprep.subr.mxu0 0.0
    %2171 = vmatpush1.msra.mxu0 %v459
    %2172 = vmatprep.subr.mxu0 0.0
    %2173 = vmatpush1.msra.mxu0 %v458
    %2174 = vmatprep.subr.mxu0 0.0
    %2175 = vmatpush1.msra.mxu0 %v457
    %2176 = vmatprep.subr.mxu0 0.0
    %2177 = vmatpush1.msra.mxu0 %v456
    %2178 = vmatprep.subr.mxu0 0.0
    %2179 = vmatpush1.msra.mxu0 %v455
    %2180 = vmatprep.subr.mxu0 0.0
    %2181 = vmatpush1.msra.mxu0 %v454
    %2182 = vmatprep.subr.mxu0 0.0
    %2183 = vmatpush1.msra.mxu0 %v453
    %2184 = vmatprep.subr.mxu0 0.0
    %2185 = vmatpush1.msra.mxu0 %v452
    %2186 = vmatprep.subr.mxu0 0.0
    %2187 = vmatpush1.msra.mxu0 %v451
    %2188 = vmatprep.subr.mxu0 0.0
    %2189 = vmatpush2.msra.mxu0 %v482
    %2190 = vmatprep.subr.mxu0 0.0
    %2191 = vmatpush2.msra.mxu0 %v481
    %2192 = vmatprep.subr.mxu0 0.0
    %2193 = vmatpush2.msra.mxu0 %v480
    %2194 = vmatprep.subr.mxu0 0.0
    %2195 = vmatpush2.msra.mxu0 %v479
    %2196 = vmatprep.subr.mxu0 0.0
    %2197 = vmatpush2.msra.mxu0 %v478
    %2198 = vmatprep.subr.mxu0 0.0
    %2199 = vmatpush2.msra.mxu0 %v477
    %2200 = vmatprep.subr.mxu0 0.0
    %2201 = vmatpush2.msra.mxu0 %v476
    %2202 = vmatprep.subr.mxu0 0.0
    %2203 = vmatpush2.msra.mxu0 %v475
    %2204 = vmatprep.subr.mxu0 0.0
    %2205 = vmatpush2.msra.mxu0 %v474
    %2206 = vmatprep.subr.mxu0 0.0
    %2207 = vmatpush2.msra.mxu0 %v473
    %2208 = vmatprep.subr.mxu0 0.0
    %2209 = vmatpush2.msra.mxu0 %v472
    %2210 = vmatprep.subr.mxu0 0.0
    %2211 = vmatpush2.msra.mxu0 %v471
    %2212 = vmatprep.subr.mxu0 0.0
    %2213 = vmatpush2.msra.mxu0 %v470
    %2214 = vmatprep.subr.mxu0 0.0
    %2215 = vmatpush2.msra.mxu0 %v469
    %2216 = vmatprep.subr.mxu0 0.0
    %2217 = vmatpush2.msra.mxu0 %v468
    %2218 = vmatprep.subr.mxu0 0.0
    %2219 = vmatpush2.msra.mxu0 %v467
    %2220 = vmatprep.mubr.f32.mxu0 %v1070
    %2221 = vmatmul.mubr.f32.gmra.mxu0 %v1068
    %v2222 = vpop.f32.mrf.mxu0
    %v2223 = vadd.f32 %v2153, %v2222
    %v2224 = vpop.f32.mrf.mxu0
    %2225 = vdwg.mxu0
    %2226 = vmatprep.subr.mxu0 0.0
    %2227 = vmatpush1.msra.mxu0 %v498
    %2228 = vmatprep.subr.mxu0 0.0
    %2229 = vmatpush1.msra.mxu0 %v497
    %2230 = vmatprep.subr.mxu0 0.0
    %2231 = vmatpush1.msra.mxu0 %v496
    %2232 = vmatprep.subr.mxu0 0.0
    %2233 = vmatpush1.msra.mxu0 %v495
    %2234 = vmatprep.subr.mxu0 0.0
    %2235 = vmatpush1.msra.mxu0 %v494
    %2236 = vmatprep.subr.mxu0 0.0
    %2237 = vmatpush1.msra.mxu0 %v493
    %2238 = vmatprep.subr.mxu0 0.0
    %2239 = vmatpush1.msra.mxu0 %v492
    %2240 = vmatprep.subr.mxu0 0.0
    %2241 = vmatpush1.msra.mxu0 %v491
    %2242 = vmatprep.subr.mxu0 0.0
    %2243 = vmatpush1.msra.mxu0 %v490
    %2244 = vmatprep.subr.mxu0 0.0
    %2245 = vmatpush1.msra.mxu0 %v489
    %2246 = vmatprep.subr.mxu0 0.0
    %2247 = vmatpush1.msra.mxu0 %v488
    %2248 = vmatprep.subr.mxu0 0.0
    %2249 = vmatpush1.msra.mxu0 %v487
    %2250 = vmatprep.subr.mxu0 0.0
    %2251 = vmatpush1.msra.mxu0 %v486
    %2252 = vmatprep.subr.mxu0 0.0
    %2253 = vmatpush1.msra.mxu0 %v485
    %2254 = vmatprep.subr.mxu0 0.0
    %2255 = vmatpush1.msra.mxu0 %v484
    %2256 = vmatprep.subr.mxu0 0.0
    %2257 = vmatpush1.msra.mxu0 %v483
    %2258 = vmatprep.subr.mxu0 0.0
    %2259 = vmatpush2.msra.mxu0 %v514
    %2260 = vmatprep.subr.mxu0 0.0
    %2261 = vmatpush2.msra.mxu0 %v513
    %2262 = vmatprep.subr.mxu0 0.0
    %2263 = vmatpush2.msra.mxu0 %v512
    %2264 = vmatprep.subr.mxu0 0.0
    %2265 = vmatpush2.msra.mxu0 %v511
    %2266 = vmatprep.subr.mxu0 0.0
    %2267 = vmatpush2.msra.mxu0 %v510
    %2268 = vmatprep.subr.mxu0 0.0
    %2269 = vmatpush2.msra.mxu0 %v509
    %2270 = vmatprep.subr.mxu0 0.0
    %2271 = vmatpush2.msra.mxu0 %v508
    %2272 = vmatprep.subr.mxu0 0.0
    %2273 = vmatpush2.msra.mxu0 %v507
    %2274 = vmatprep.subr.mxu0 0.0
    %2275 = vmatpush2.msra.mxu0 %v506
    %2276 = vmatprep.subr.mxu0 0.0
    %2277 = vmatpush2.msra.mxu0 %v505
    %2278 = vmatprep.subr.mxu0 0.0
    %2279 = vmatpush2.msra.mxu0 %v504
    %2280 = vmatprep.subr.mxu0 0.0
    %2281 = vmatpush2.msra.mxu0 %v503
    %2282 = vmatprep.subr.mxu0 0.0
    %2283 = vmatpush2.msra.mxu0 %v502
    %2284 = vmatprep.subr.mxu0 0.0
    %2285 = vmatpush2.msra.mxu0 %v501
    %2286 = vmatprep.subr.mxu0 0.0
    %2287 = vmatpush2.msra.mxu0 %v500
    %2288 = vmatprep.subr.mxu0 0.0
    %2289 = vmatpush2.msra.mxu0 %v499
    %2290 = vmatprep.mubr.f32.mxu0 %v1086
    %2291 = vmatmul.mubr.f32.gmra.mxu0 %v1078
    %v2292 = vpop.f32.mrf.mxu0
    %v2293 = vadd.f32 %v2223, %v2292
    %v2294 = vpop.f32.mrf.mxu0
    %2295 = vdwg.mxu0
    %2296 = vmatprep.subr.mxu0 0.0
    %2297 = vmatpush1.msra.mxu0 %v530
    %2298 = vmatprep.subr.mxu0 0.0
    %2299 = vmatpush1.msra.mxu0 %v529
    %2300 = vmatprep.subr.mxu0 0.0
    %2301 = vmatpush1.msra.mxu0 %v528
    %2302 = vmatprep.subr.mxu0 0.0
    %2303 = vmatpush1.msra.mxu0 %v527
    %2304 = vmatprep.subr.mxu0 0.0
    %2305 = vmatpush1.msra.mxu0 %v526
    %2306 = vmatprep.subr.mxu0 0.0
    %2307 = vmatpush1.msra.mxu0 %v525
    %2308 = vmatprep.subr.mxu0 0.0
    %2309 = vmatpush1.msra.mxu0 %v524
    %2310 = vmatprep.subr.mxu0 0.0
    %2311 = vmatpush1.msra.mxu0 %v523
    %2312 = vmatprep.subr.mxu0 0.0
    %2313 = vmatpush1.msra.mxu0 %v522
    %2314 = vmatprep.subr.mxu0 0.0
    %2315 = vmatpush1.msra.mxu0 %v521
    %2316 = vmatprep.subr.mxu0 0.0
    %2317 = vmatpush1.msra.mxu0 %v520
    %2318 = vmatprep.subr.mxu0 0.0
    %2319 = vmatpush1.msra.mxu0 %v519
    %2320 = vmatprep.subr.mxu0 0.0
    %2321 = vmatpush1.msra.mxu0 %v518
    %2322 = vmatprep.subr.mxu0 0.0
    %2323 = vmatpush1.msra.mxu0 %v517
    %2324 = vmatprep.subr.mxu0 0.0
    %2325 = vmatpush1.msra.mxu0 %v516
    %2326 = vmatprep.subr.mxu0 0.0
    %2327 = vmatpush1.msra.mxu0 %v515
    %2328 = vmatprep.subr.mxu0 0.0
    %2329 = vmatpush2.msra.mxu0 %v546
    %2330 = vmatprep.subr.mxu0 0.0
    %2331 = vmatpush2.msra.mxu0 %v545
    %2332 = vmatprep.subr.mxu0 0.0
    %2333 = vmatpush2.msra.mxu0 %v544
    %2334 = vmatprep.subr.mxu0 0.0
    %2335 = vmatpush2.msra.mxu0 %v543
    %2336 = vmatprep.subr.mxu0 0.0
    %2337 = vmatpush2.msra.mxu0 %v542
    %2338 = vmatprep.subr.mxu0 0.0
    %2339 = vmatpush2.msra.mxu0 %v541
    %2340 = vmatprep.subr.mxu0 0.0
    %2341 = vmatpush2.msra.mxu0 %v540
    %2342 = vmatprep.subr.mxu0 0.0
    %2343 = vmatpush2.msra.mxu0 %v539
    %2344 = vmatprep.subr.mxu0 0.0
    %2345 = vmatpush2.msra.mxu0 %v538
    %2346 = vmatprep.subr.mxu0 0.0
    %2347 = vmatpush2.msra.mxu0 %v537
    %2348 = vmatprep.subr.mxu0 0.0
    %2349 = vmatpush2.msra.mxu0 %v536
    %2350 = vmatprep.subr.mxu0 0.0
    %2351 = vmatpush2.msra.mxu0 %v535
    %2352 = vmatprep.subr.mxu0 0.0
    %2353 = vmatpush2.msra.mxu0 %v534
    %2354 = vmatprep.subr.mxu0 0.0
    %2355 = vmatpush2.msra.mxu0 %v533
    %2356 = vmatprep.subr.mxu0 0.0
    %2357 = vmatpush2.msra.mxu0 %v532
    %2358 = vmatprep.subr.mxu0 0.0
    %2359 = vmatpush2.msra.mxu0 %v531
    %2360 = vmatprep.mubr.f32.mxu0 %v1087
    %2361 = vmatmul.mubr.f32.gmra.mxu0 %v1085
    %v2362 = vpop.f32.mrf.mxu0
    %v2363 = vadd.f32 %v2293, %v2362
    %v2364 = vpop.f32.mrf.mxu0
    %2365 = vdwg.mxu0
    %2366 = vmatprep.subr.mxu0 0.0
    %2367 = vmatpush1.msra.mxu0 %v562
    %2368 = vmatprep.subr.mxu0 0.0
    %2369 = vmatpush1.msra.mxu0 %v561
    %2370 = vmatprep.subr.mxu0 0.0
    %2371 = vmatpush1.msra.mxu0 %v560
    %2372 = vmatprep.subr.mxu0 0.0
    %2373 = vmatpush1.msra.mxu0 %v559
    %2374 = vmatprep.subr.mxu0 0.0
    %2375 = vmatpush1.msra.mxu0 %v558
    %2376 = vmatprep.subr.mxu0 0.0
    %2377 = vmatpush1.msra.mxu0 %v557
    %2378 = vmatprep.subr.mxu0 0.0
    %2379 = vmatpush1.msra.mxu0 %v556
    %2380 = vmatprep.subr.mxu0 0.0
    %2381 = vmatpush1.msra.mxu0 %v555
    %2382 = vmatprep.subr.mxu0 0.0
    %2383 = vmatpush1.msra.mxu0 %v554
    %2384 = vmatprep.subr.mxu0 0.0
    %2385 = vmatpush1.msra.mxu0 %v553
    %2386 = vmatprep.subr.mxu0 0.0
    %2387 = vmatpush1.msra.mxu0 %v552
    %2388 = vmatprep.subr.mxu0 0.0
    %2389 = vmatpush1.msra.mxu0 %v551
    %2390 = vmatprep.subr.mxu0 0.0
    %2391 = vmatpush1.msra.mxu0 %v550
    %2392 = vmatprep.subr.mxu0 0.0
    %2393 = vmatpush1.msra.mxu0 %v549
    %2394 = vmatprep.subr.mxu0 0.0
    %2395 = vmatpush1.msra.mxu0 %v548
    %2396 = vmatprep.subr.mxu0 0.0
    %2397 = vmatpush1.msra.mxu0 %v547
    %2398 = vmatprep.subr.mxu0 0.0
    %2399 = vmatpush2.msra.mxu0 %v578
    %2400 = vmatprep.subr.mxu0 0.0
    %2401 = vmatpush2.msra.mxu0 %v577
    %2402 = vmatprep.subr.mxu0 0.0
    %2403 = vmatpush2.msra.mxu0 %v576
    %2404 = vmatprep.subr.mxu0 0.0
    %2405 = vmatpush2.msra.mxu0 %v575
    %2406 = vmatprep.subr.mxu0 0.0
    %2407 = vmatpush2.msra.mxu0 %v574
    %2408 = vmatprep.subr.mxu0 0.0
    %2409 = vmatpush2.msra.mxu0 %v573
    %2410 = vmatprep.subr.mxu0 0.0
    %2411 = vmatpush2.msra.mxu0 %v572
    %2412 = vmatprep.subr.mxu0 0.0
    %2413 = vmatpush2.msra.mxu0 %v571
    %2414 = vmatprep.subr.mxu0 0.0
    %2415 = vmatpush2.msra.mxu0 %v570
    %2416 = vmatprep.subr.mxu0 0.0
    %2417 = vmatpush2.msra.mxu0 %v569
    %2418 = vmatprep.subr.mxu0 0.0
    %2419 = vmatpush2.msra.mxu0 %v568
    %2420 = vmatprep.subr.mxu0 0.0
    %2421 = vmatpush2.msra.mxu0 %v567
    %2422 = vmatprep.subr.mxu0 0.0
    %2423 = vmatpush2.msra.mxu0 %v566
    %2424 = vmatprep.subr.mxu0 0.0
    %2425 = vmatpush2.msra.mxu0 %v565
    %2426 = vmatprep.subr.mxu0 0.0
    %2427 = vmatpush2.msra.mxu0 %v564
    %2428 = vmatprep.subr.mxu0 0.0
    %2429 = vmatpush2.msra.mxu0 %v563
    %2430 = vmatprep.mubr.f32.mxu0 %v1103
    %2431 = vmatmul.mubr.f32.gmra.mxu0 %v1095
    %v2432 = vpop.f32.mrf.mxu0
    %v2433 = vadd.f32 %v2363, %v2432
    %v2434 = vpop.f32.mrf.mxu0
    %2435 = vdwg.mxu0
    %2436 = vmatprep.subr.mxu0 0.0
    %2437 = vmatpush1.msra.mxu0 %v594
    %2438 = vmatprep.subr.mxu0 0.0
    %2439 = vmatpush1.msra.mxu0 %v593
    %2440 = vmatprep.subr.mxu0 0.0
    %2441 = vmatpush1.msra.mxu0 %v592
    %2442 = vmatprep.subr.mxu0 0.0
    %2443 = vmatpush1.msra.mxu0 %v591
    %2444 = vmatprep.subr.mxu0 0.0
    %2445 = vmatpush1.msra.mxu0 %v590
    %2446 = vmatprep.subr.mxu0 0.0
    %2447 = vmatpush1.msra.mxu0 %v589
    %2448 = vmatprep.subr.mxu0 0.0
    %2449 = vmatpush1.msra.mxu0 %v588
    %2450 = vmatprep.subr.mxu0 0.0
    %2451 = vmatpush1.msra.mxu0 %v587
    %2452 = vmatprep.subr.mxu0 0.0
    %2453 = vmatpush1.msra.mxu0 %v586
    %2454 = vmatprep.subr.mxu0 0.0
    %2455 = vmatpush1.msra.mxu0 %v585
    %2456 = vmatprep.subr.mxu0 0.0
    %2457 = vmatpush1.msra.mxu0 %v584
    %2458 = vmatprep.subr.mxu0 0.0
    %2459 = vmatpush1.msra.mxu0 %v583
    %2460 = vmatprep.subr.mxu0 0.0
    %2461 = vmatpush1.msra.mxu0 %v582
    %2462 = vmatprep.subr.mxu0 0.0
    %2463 = vmatpush1.msra.mxu0 %v581
    %2464 = vmatprep.subr.mxu0 0.0
    %2465 = vmatpush1.msra.mxu0 %v580
    %2466 = vmatprep.subr.mxu0 0.0
    %2467 = vmatpush1.msra.mxu0 %v579
    %2468 = vmatprep.subr.mxu0 0.0
    %2469 = vmatpush2.msra.mxu0 %v610
    %2470 = vmatprep.subr.mxu0 0.0
    %2471 = vmatpush2.msra.mxu0 %v609
    %2472 = vmatprep.subr.mxu0 0.0
    %2473 = vmatpush2.msra.mxu0 %v608
    %2474 = vmatprep.subr.mxu0 0.0
    %2475 = vmatpush2.msra.mxu0 %v607
    %2476 = vmatprep.subr.mxu0 0.0
    %2477 = vmatpush2.msra.mxu0 %v606
    %2478 = vmatprep.subr.mxu0 0.0
    %2479 = vmatpush2.msra.mxu0 %v605
    %2480 = vmatprep.subr.mxu0 0.0
    %2481 = vmatpush2.msra.mxu0 %v604
    %2482 = vmatprep.subr.mxu0 0.0
    %2483 = vmatpush2.msra.mxu0 %v603
    %2484 = vmatprep.subr.mxu0 0.0
    %2485 = vmatpush2.msra.mxu0 %v602
    %2486 = vmatprep.subr.mxu0 0.0
    %2487 = vmatpush2.msra.mxu0 %v601
    %2488 = vmatprep.subr.mxu0 0.0
    %2489 = vmatpush2.msra.mxu0 %v600
    %2490 = vmatprep.subr.mxu0 0.0
    %2491 = vmatpush2.msra.mxu0 %v599
    %2492 = vmatprep.subr.mxu0 0.0
    %2493 = vmatpush2.msra.mxu0 %v598
    %2494 = vmatprep.subr.mxu0 0.0
    %2495 = vmatpush2.msra.mxu0 %v597
    %2496 = vmatprep.subr.mxu0 0.0
    %2497 = vmatpush2.msra.mxu0 %v596
    %2498 = vmatprep.subr.mxu0 0.0
    %2499 = vmatpush2.msra.mxu0 %v595
    %2500 = vmatprep.mubr.f32.mxu0 %v1104
    %2501 = vmatmul.mubr.f32.gmra.mxu0 %v1102
    %v2502 = vpop.f32.mrf.mxu0
    %v2503 = vadd.f32 %v2433, %v2502
    %v2504 = vpop.f32.mrf.mxu0
    %2505 = vdwg.mxu0
    %2506 = vmatprep.subr.mxu0 0.0
    %2507 = vmatpush1.msra.mxu0 %v626
    %2508 = vmatprep.subr.mxu0 0.0
    %2509 = vmatpush1.msra.mxu0 %v625
    %2510 = vmatprep.subr.mxu0 0.0
    %2511 = vmatpush1.msra.mxu0 %v624
    %2512 = vmatprep.subr.mxu0 0.0
    %2513 = vmatpush1.msra.mxu0 %v623
    %2514 = vmatprep.subr.mxu0 0.0
    %2515 = vmatpush1.msra.mxu0 %v622
    %2516 = vmatprep.subr.mxu0 0.0
    %2517 = vmatpush1.msra.mxu0 %v621
    %2518 = vmatprep.subr.mxu0 0.0
    %2519 = vmatpush1.msra.mxu0 %v620
    %2520 = vmatprep.subr.mxu0 0.0
    %2521 = vmatpush1.msra.mxu0 %v619
    %2522 = vmatprep.subr.mxu0 0.0
    %2523 = vmatpush1.msra.mxu0 %v618
    %2524 = vmatprep.subr.mxu0 0.0
    %2525 = vmatpush1.msra.mxu0 %v617
    %2526 = vmatprep.subr.mxu0 0.0
    %2527 = vmatpush1.msra.mxu0 %v616
    %2528 = vmatprep.subr.mxu0 0.0
    %2529 = vmatpush1.msra.mxu0 %v615
    %2530 = vmatprep.subr.mxu0 0.0
    %2531 = vmatpush1.msra.mxu0 %v614
    %2532 = vmatprep.subr.mxu0 0.0
    %2533 = vmatpush1.msra.mxu0 %v613
    %2534 = vmatprep.subr.mxu0 0.0
    %2535 = vmatpush1.msra.mxu0 %v612
    %2536 = vmatprep.subr.mxu0 0.0
    %2537 = vmatpush1.msra.mxu0 %v611
    %2538 = vmatprep.subr.mxu0 0.0
    %2539 = vmatpush2.msra.mxu0 %v642
    %2540 = vmatprep.subr.mxu0 0.0
    %2541 = vmatpush2.msra.mxu0 %v641
    %2542 = vmatprep.subr.mxu0 0.0
    %2543 = vmatpush2.msra.mxu0 %v640
    %2544 = vmatprep.subr.mxu0 0.0
    %2545 = vmatpush2.msra.mxu0 %v639
    %2546 = vmatprep.subr.mxu0 0.0
    %2547 = vmatpush2.msra.mxu0 %v638
    %2548 = vmatprep.subr.mxu0 0.0
    %2549 = vmatpush2.msra.mxu0 %v637
    %2550 = vmatprep.subr.mxu0 0.0
    %2551 = vmatpush2.msra.mxu0 %v636
    %2552 = vmatprep.subr.mxu0 0.0
    %2553 = vmatpush2.msra.mxu0 %v635
    %2554 = vmatprep.subr.mxu0 0.0
    %2555 = vmatpush2.msra.mxu0 %v634
    %2556 = vmatprep.subr.mxu0 0.0
    %2557 = vmatpush2.msra.mxu0 %v633
    %2558 = vmatprep.subr.mxu0 0.0
    %2559 = vmatpush2.msra.mxu0 %v632
    %2560 = vmatprep.subr.mxu0 0.0
    %2561 = vmatpush2.msra.mxu0 %v631
    %2562 = vmatprep.subr.mxu0 0.0
    %2563 = vmatpush2.msra.mxu0 %v630
    %2564 = vmatprep.subr.mxu0 0.0
    %2565 = vmatpush2.msra.mxu0 %v629
    %2566 = vmatprep.subr.mxu0 0.0
    %2567 = vmatpush2.msra.mxu0 %v628
    %2568 = vmatprep.subr.mxu0 0.0
    %2569 = vmatpush2.msra.mxu0 %v627
    %2570 = vmatprep.mubr.f32.mxu0 %v1120
    %2571 = vmatmul.mubr.f32.gmra.mxu0 %v1112
    %v2572 = vpop.f32.mrf.mxu0
    %v2573 = vadd.f32 %v2503, %v2572
    %v2574 = vpop.f32.mrf.mxu0
    %2575 = vdwg.mxu0
    %2576 = vmatprep.subr.mxu0 0.0
    %2577 = vmatpush1.msra.mxu0 %v658
    %2578 = vmatprep.subr.mxu0 0.0
    %2579 = vmatpush1.msra.mxu0 %v657
    %2580 = vmatprep.subr.mxu0 0.0
    %2581 = vmatpush1.msra.mxu0 %v656
    %2582 = vmatprep.subr.mxu0 0.0
    %2583 = vmatpush1.msra.mxu0 %v655
    %2584 = vmatprep.subr.mxu0 0.0
    %2585 = vmatpush1.msra.mxu0 %v654
    %2586 = vmatprep.subr.mxu0 0.0
    %2587 = vmatpush1.msra.mxu0 %v653
    %2588 = vmatprep.subr.mxu0 0.0
    %2589 = vmatpush1.msra.mxu0 %v652
    %2590 = vmatprep.subr.mxu0 0.0
    %2591 = vmatpush1.msra.mxu0 %v651
    %2592 = vmatprep.subr.mxu0 0.0
    %2593 = vmatpush1.msra.mxu0 %v650
    %2594 = vmatprep.subr.mxu0 0.0
    %2595 = vmatpush1.msra.mxu0 %v649
    %2596 = vmatprep.subr.mxu0 0.0
    %2597 = vmatpush1.msra.mxu0 %v648
    %2598 = vmatprep.subr.mxu0 0.0
    %2599 = vmatpush1.msra.mxu0 %v647
    %2600 = vmatprep.subr.mxu0 0.0
    %2601 = vmatpush1.msra.mxu0 %v646
    %2602 = vmatprep.subr.mxu0 0.0
    %2603 = vmatpush1.msra.mxu0 %v645
    %2604 = vmatprep.subr.mxu0 0.0
    %2605 = vmatpush1.msra.mxu0 %v644
    %2606 = vmatprep.subr.mxu0 0.0
    %2607 = vmatpush1.msra.mxu0 %v643
    %2608 = vmatprep.subr.mxu0 0.0
    %2609 = vmatpush2.msra.mxu0 %v674
    %2610 = vmatprep.subr.mxu0 0.0
    %2611 = vmatpush2.msra.mxu0 %v673
    %2612 = vmatprep.subr.mxu0 0.0
    %2613 = vmatpush2.msra.mxu0 %v672
    %2614 = vmatprep.subr.mxu0 0.0
    %2615 = vmatpush2.msra.mxu0 %v671
    %2616 = vmatprep.subr.mxu0 0.0
    %2617 = vmatpush2.msra.mxu0 %v670
    %2618 = vmatprep.subr.mxu0 0.0
    %2619 = vmatpush2.msra.mxu0 %v669
    %2620 = vmatprep.subr.mxu0 0.0
    %2621 = vmatpush2.msra.mxu0 %v668
    %2622 = vmatprep.subr.mxu0 0.0
    %2623 = vmatpush2.msra.mxu0 %v667
    %2624 = vmatprep.subr.mxu0 0.0
    %2625 = vmatpush2.msra.mxu0 %v666
    %2626 = vmatprep.subr.mxu0 0.0
    %2627 = vmatpush2.msra.mxu0 %v665
    %2628 = vmatprep.subr.mxu0 0.0
    %2629 = vmatpush2.msra.mxu0 %v664
    %2630 = vmatprep.subr.mxu0 0.0
    %2631 = vmatpush2.msra.mxu0 %v663
    %2632 = vmatprep.subr.mxu0 0.0
    %2633 = vmatpush2.msra.mxu0 %v662
    %2634 = vmatprep.subr.mxu0 0.0
    %2635 = vmatpush2.msra.mxu0 %v661
    %2636 = vmatprep.subr.mxu0 0.0
    %2637 = vmatpush2.msra.mxu0 %v660
    %2638 = vmatprep.subr.mxu0 0.0
    %2639 = vmatpush2.msra.mxu0 %v659
    %2640 = vmatprep.mubr.f32.mxu0 %v1121
    %2641 = vmatmul.mubr.f32.gmra.mxu0 %v1119
    %v2642 = vpop.f32.mrf.mxu0
    %v2643 = vadd.f32 %v2573, %v2642
    %v2644 = vpop.f32.mrf.mxu0
    %2645 = vdwg.mxu0
    %2646 = vmatprep.subr.mxu0 0.0
    %2647 = vmatpush1.msra.mxu0 %v690
    %2648 = vmatprep.subr.mxu0 0.0
    %2649 = vmatpush1.msra.mxu0 %v689
    %2650 = vmatprep.subr.mxu0 0.0
    %2651 = vmatpush1.msra.mxu0 %v688
    %2652 = vmatprep.subr.mxu0 0.0
    %2653 = vmatpush1.msra.mxu0 %v687
    %2654 = vmatprep.subr.mxu0 0.0
    %2655 = vmatpush1.msra.mxu0 %v686
    %2656 = vmatprep.subr.mxu0 0.0
    %2657 = vmatpush1.msra.mxu0 %v685
    %2658 = vmatprep.subr.mxu0 0.0
    %2659 = vmatpush1.msra.mxu0 %v684
    %2660 = vmatprep.subr.mxu0 0.0
    %2661 = vmatpush1.msra.mxu0 %v683
    %2662 = vmatprep.subr.mxu0 0.0
    %2663 = vmatpush1.msra.mxu0 %v682
    %2664 = vmatprep.subr.mxu0 0.0
    %2665 = vmatpush1.msra.mxu0 %v681
    %2666 = vmatprep.subr.mxu0 0.0
    %2667 = vmatpush1.msra.mxu0 %v680
    %2668 = vmatprep.subr.mxu0 0.0
    %2669 = vmatpush1.msra.mxu0 %v679
    %2670 = vmatprep.subr.mxu0 0.0
    %2671 = vmatpush1.msra.mxu0 %v678
    %2672 = vmatprep.subr.mxu0 0.0
    %2673 = vmatpush1.msra.mxu0 %v677
    %2674 = vmatprep.subr.mxu0 0.0
    %2675 = vmatpush1.msra.mxu0 %v676
    %2676 = vmatprep.subr.mxu0 0.0
    %2677 = vmatpush1.msra.mxu0 %v675
    %2678 = vmatprep.subr.mxu0 0.0
    %2679 = vmatpush2.msra.mxu0 %v706
    %2680 = vmatprep.subr.mxu0 0.0
    %2681 = vmatpush2.msra.mxu0 %v705
    %2682 = vmatprep.subr.mxu0 0.0
    %2683 = vmatpush2.msra.mxu0 %v704
    %2684 = vmatprep.subr.mxu0 0.0
    %2685 = vmatpush2.msra.mxu0 %v703
    %2686 = vmatprep.subr.mxu0 0.0
    %2687 = vmatpush2.msra.mxu0 %v702
    %2688 = vmatprep.subr.mxu0 0.0
    %2689 = vmatpush2.msra.mxu0 %v701
    %2690 = vmatprep.subr.mxu0 0.0
    %2691 = vmatpush2.msra.mxu0 %v700
    %2692 = vmatprep.subr.mxu0 0.0
    %2693 = vmatpush2.msra.mxu0 %v699
    %2694 = vmatprep.subr.mxu0 0.0
    %2695 = vmatpush2.msra.mxu0 %v698
    %2696 = vmatprep.subr.mxu0 0.0
    %2697 = vmatpush2.msra.mxu0 %v697
    %2698 = vmatprep.subr.mxu0 0.0
    %2699 = vmatpush2.msra.mxu0 %v696
    %2700 = vmatprep.subr.mxu0 0.0
    %2701 = vmatpush2.msra.mxu0 %v695
    %2702 = vmatprep.subr.mxu0 0.0
    %2703 = vmatpush2.msra.mxu0 %v694
    %2704 = vmatprep.subr.mxu0 0.0
    %2705 = vmatpush2.msra.mxu0 %v693
    %2706 = vmatprep.subr.mxu0 0.0
    %2707 = vmatpush2.msra.mxu0 %v692
    %2708 = vmatprep.subr.mxu0 0.0
    %2709 = vmatpush2.msra.mxu0 %v691
    %2710 = vmatprep.mubr.f32.mxu0 %v1137
    %2711 = vmatmul.mubr.f32.gmra.mxu0 %v1129
    %v2712 = vpop.f32.mrf.mxu0
    %v2713 = vadd.f32 %v2643, %v2712
    %v2714 = vpop.f32.mrf.mxu0
    %2715 = vdwg.mxu0
    %2716 = vmatprep.subr.mxu0 0.0
    %2717 = vmatpush1.msra.mxu0 %v722
    %2718 = vmatprep.subr.mxu0 0.0
    %2719 = vmatpush1.msra.mxu0 %v721
    %2720 = vmatprep.subr.mxu0 0.0
    %2721 = vmatpush1.msra.mxu0 %v720
    %2722 = vmatprep.subr.mxu0 0.0
    %2723 = vmatpush1.msra.mxu0 %v719
    %2724 = vmatprep.subr.mxu0 0.0
    %2725 = vmatpush1.msra.mxu0 %v718
    %2726 = vmatprep.subr.mxu0 0.0
    %2727 = vmatpush1.msra.mxu0 %v717
    %2728 = vmatprep.subr.mxu0 0.0
    %2729 = vmatpush1.msra.mxu0 %v716
    %2730 = vmatprep.subr.mxu0 0.0
    %2731 = vmatpush1.msra.mxu0 %v715
    %2732 = vmatprep.subr.mxu0 0.0
    %2733 = vmatpush1.msra.mxu0 %v714
    %2734 = vmatprep.subr.mxu0 0.0
    %2735 = vmatpush1.msra.mxu0 %v713
    %2736 = vmatprep.subr.mxu0 0.0
    %2737 = vmatpush1.msra.mxu0 %v712
    %2738 = vmatprep.subr.mxu0 0.0
    %2739 = vmatpush1.msra.mxu0 %v711
    %2740 = vmatprep.subr.mxu0 0.0
    %2741 = vmatpush1.msra.mxu0 %v710
    %2742 = vmatprep.subr.mxu0 0.0
    %2743 = vmatpush1.msra.mxu0 %v709
    %2744 = vmatprep.subr.mxu0 0.0
    %2745 = vmatpush1.msra.mxu0 %v708
    %2746 = vmatprep.subr.mxu0 0.0
    %2747 = vmatpush1.msra.mxu0 %v707
    %2748 = vmatprep.subr.mxu0 0.0
    %2749 = vmatpush2.msra.mxu0 %v738
    %2750 = vmatprep.subr.mxu0 0.0
    %2751 = vmatpush2.msra.mxu0 %v737
    %2752 = vmatprep.subr.mxu0 0.0
    %2753 = vmatpush2.msra.mxu0 %v736
    %2754 = vmatprep.subr.mxu0 0.0
    %2755 = vmatpush2.msra.mxu0 %v735
    %2756 = vmatprep.subr.mxu0 0.0
    %2757 = vmatpush2.msra.mxu0 %v734
    %2758 = vmatprep.subr.mxu0 0.0
    %2759 = vmatpush2.msra.mxu0 %v733
    %2760 = vmatprep.subr.mxu0 0.0
    %2761 = vmatpush2.msra.mxu0 %v732
    %2762 = vmatprep.subr.mxu0 0.0
    %2763 = vmatpush2.msra.mxu0 %v731
    %2764 = vmatprep.subr.mxu0 0.0
    %2765 = vmatpush2.msra.mxu0 %v730
    %2766 = vmatprep.subr.mxu0 0.0
    %2767 = vmatpush2.msra.mxu0 %v729
    %2768 = vmatprep.subr.mxu0 0.0
    %2769 = vmatpush2.msra.mxu0 %v728
    %2770 = vmatprep.subr.mxu0 0.0
    %2771 = vmatpush2.msra.mxu0 %v727
    %2772 = vmatprep.subr.mxu0 0.0
    %2773 = vmatpush2.msra.mxu0 %v726
    %2774 = vmatprep.subr.mxu0 0.0
    %2775 = vmatpush2.msra.mxu0 %v725
    %2776 = vmatprep.subr.mxu0 0.0
    %2777 = vmatpush2.msra.mxu0 %v724
    %2778 = vmatprep.subr.mxu0 0.0
    %2779 = vmatpush2.msra.mxu0 %v723
    %2780 = vmatprep.mubr.f32.mxu0 %v1138
    %2781 = vmatmul.mubr.f32.gmra.mxu0 %v1136
    %v2782 = vpop.f32.mrf.mxu0
    %v2783 = vadd.f32 %v2713, %v2782
    %v2784 = vpop.f32.mrf.mxu0
    %2785 = vdwg.mxu0
    %2786 = vmatprep.subr.mxu0 0.0
    %2787 = vmatpush1.msra.mxu0 %v754
    %2788 = vmatprep.subr.mxu0 0.0
    %2789 = vmatpush1.msra.mxu0 %v753
    %2790 = vmatprep.subr.mxu0 0.0
    %2791 = vmatpush1.msra.mxu0 %v752
    %2792 = vmatprep.subr.mxu0 0.0
    %2793 = vmatpush1.msra.mxu0 %v751
    %2794 = vmatprep.subr.mxu0 0.0
    %2795 = vmatpush1.msra.mxu0 %v750
    %2796 = vmatprep.subr.mxu0 0.0
    %2797 = vmatpush1.msra.mxu0 %v749
    %2798 = vmatprep.subr.mxu0 0.0
    %2799 = vmatpush1.msra.mxu0 %v748
    %2800 = vmatprep.subr.mxu0 0.0
    %2801 = vmatpush1.msra.mxu0 %v747
    %2802 = vmatprep.subr.mxu0 0.0
    %2803 = vmatpush1.msra.mxu0 %v746
    %2804 = vmatprep.subr.mxu0 0.0
    %2805 = vmatpush1.msra.mxu0 %v745
    %2806 = vmatprep.subr.mxu0 0.0
    %2807 = vmatpush1.msra.mxu0 %v744
    %2808 = vmatprep.subr.mxu0 0.0
    %2809 = vmatpush1.msra.mxu0 %v743
    %2810 = vmatprep.subr.mxu0 0.0
    %2811 = vmatpush1.msra.mxu0 %v742
    %2812 = vmatprep.subr.mxu0 0.0
    %2813 = vmatpush1.msra.mxu0 %v741
    %2814 = vmatprep.subr.mxu0 0.0
    %2815 = vmatpush1.msra.mxu0 %v740
    %2816 = vmatprep.subr.mxu0 0.0
    %2817 = vmatpush1.msra.mxu0 %v739
    %2818 = vmatprep.subr.mxu0 0.0
    %2819 = vmatpush2.msra.mxu0 %v770
    %2820 = vmatprep.subr.mxu0 0.0
    %2821 = vmatpush2.msra.mxu0 %v769
    %2822 = vmatprep.subr.mxu0 0.0
    %2823 = vmatpush2.msra.mxu0 %v768
    %2824 = vmatprep.subr.mxu0 0.0
    %2825 = vmatpush2.msra.mxu0 %v767
    %2826 = vmatprep.subr.mxu0 0.0
    %2827 = vmatpush2.msra.mxu0 %v766
    %2828 = vmatprep.subr.mxu0 0.0
    %2829 = vmatpush2.msra.mxu0 %v765
    %2830 = vmatprep.subr.mxu0 0.0
    %2831 = vmatpush2.msra.mxu0 %v764
    %2832 = vmatprep.subr.mxu0 0.0
    %2833 = vmatpush2.msra.mxu0 %v763
    %2834 = vmatprep.subr.mxu0 0.0
    %2835 = vmatpush2.msra.mxu0 %v762
    %2836 = vmatprep.subr.mxu0 0.0
    %2837 = vmatpush2.msra.mxu0 %v761
    %2838 = vmatprep.subr.mxu0 0.0
    %2839 = vmatpush2.msra.mxu0 %v760
    %2840 = vmatprep.subr.mxu0 0.0
    %2841 = vmatpush2.msra.mxu0 %v759
    %2842 = vmatprep.subr.mxu0 0.0
    %2843 = vmatpush2.msra.mxu0 %v758
    %2844 = vmatprep.subr.mxu0 0.0
    %2845 = vmatpush2.msra.mxu0 %v757
    %2846 = vmatprep.subr.mxu0 0.0
    %2847 = vmatpush2.msra.mxu0 %v756
    %2848 = vmatprep.subr.mxu0 0.0
    %2849 = vmatpush2.msra.mxu0 %v755
    %2850 = vmatprep.mubr.f32.mxu0 %v1154
    %2851 = vmatmul.mubr.f32.gmra.mxu0 %v1146
    %v2852 = vpop.f32.mrf.mxu0
    %v2853 = vadd.f32 %v2783, %v2852
    %v2854 = vpop.f32.mrf.mxu0
    %2855 = vdwg.mxu0
    %2856 = vmatprep.subr.mxu0 0.0
    %2857 = vmatpush1.msra.mxu0 %v786
    %2858 = vmatprep.subr.mxu0 0.0
    %2859 = vmatpush1.msra.mxu0 %v785
    %2860 = vmatprep.subr.mxu0 0.0
    %2861 = vmatpush1.msra.mxu0 %v784
    %2862 = vmatprep.subr.mxu0 0.0
    %2863 = vmatpush1.msra.mxu0 %v783
    %2864 = vmatprep.subr.mxu0 0.0
    %2865 = vmatpush1.msra.mxu0 %v782
    %2866 = vmatprep.subr.mxu0 0.0
    %2867 = vmatpush1.msra.mxu0 %v781
    %2868 = vmatprep.subr.mxu0 0.0
    %2869 = vmatpush1.msra.mxu0 %v780
    %2870 = vmatprep.subr.mxu0 0.0
    %2871 = vmatpush1.msra.mxu0 %v779
    %2872 = vmatprep.subr.mxu0 0.0
    %2873 = vmatpush1.msra.mxu0 %v778
    %2874 = vmatprep.subr.mxu0 0.0
    %2875 = vmatpush1.msra.mxu0 %v777
    %2876 = vmatprep.subr.mxu0 0.0
    %2877 = vmatpush1.msra.mxu0 %v776
    %2878 = vmatprep.subr.mxu0 0.0
    %2879 = vmatpush1.msra.mxu0 %v775
    %2880 = vmatprep.subr.mxu0 0.0
    %2881 = vmatpush1.msra.mxu0 %v774
    %2882 = vmatprep.subr.mxu0 0.0
    %2883 = vmatpush1.msra.mxu0 %v773
    %2884 = vmatprep.subr.mxu0 0.0
    %2885 = vmatpush1.msra.mxu0 %v772
    %2886 = vmatprep.subr.mxu0 0.0
    %2887 = vmatpush1.msra.mxu0 %v771
    %2888 = vmatprep.subr.mxu0 0.0
    %2889 = vmatpush2.msra.mxu0 %v802
    %2890 = vmatprep.subr.mxu0 0.0
    %2891 = vmatpush2.msra.mxu0 %v801
    %2892 = vmatprep.subr.mxu0 0.0
    %2893 = vmatpush2.msra.mxu0 %v800
    %2894 = vmatprep.subr.mxu0 0.0
    %2895 = vmatpush2.msra.mxu0 %v799
    %2896 = vmatprep.subr.mxu0 0.0
    %2897 = vmatpush2.msra.mxu0 %v798
    %2898 = vmatprep.subr.mxu0 0.0
    %2899 = vmatpush2.msra.mxu0 %v797
    %2900 = vmatprep.subr.mxu0 0.0
    %2901 = vmatpush2.msra.mxu0 %v796
    %2902 = vmatprep.subr.mxu0 0.0
    %2903 = vmatpush2.msra.mxu0 %v795
    %2904 = vmatprep.subr.mxu0 0.0
    %2905 = vmatpush2.msra.mxu0 %v794
    %2906 = vmatprep.subr.mxu0 0.0
    %2907 = vmatpush2.msra.mxu0 %v793
    %2908 = vmatprep.subr.mxu0 0.0
    %2909 = vmatpush2.msra.mxu0 %v792
    %2910 = vmatprep.subr.mxu0 0.0
    %2911 = vmatpush2.msra.mxu0 %v791
    %2912 = vmatprep.subr.mxu0 0.0
    %2913 = vmatpush2.msra.mxu0 %v790
    %2914 = vmatprep.subr.mxu0 0.0
    %2915 = vmatpush2.msra.mxu0 %v789
    %2916 = vmatprep.subr.mxu0 0.0
    %2917 = vmatpush2.msra.mxu0 %v788
    %2918 = vmatprep.subr.mxu0 0.0
    %2919 = vmatpush2.msra.mxu0 %v787
    %2920 = vmatprep.mubr.f32.mxu0 %v1155
    %2921 = vmatmul.mubr.f32.gmra.mxu0 %v1153
    %v2922 = vpop.f32.mrf.mxu0
    %v2923 = vadd.f32 %v2853, %v2922
    %v2924 = vpop.f32.mrf.mxu0
    %2925 = vdwg.mxu0
    %2926 = vmatprep.subr.mxu0 0.0
    %2927 = vmatpush1.msra.mxu0 %v818
    %2928 = vmatprep.subr.mxu0 0.0
    %2929 = vmatpush1.msra.mxu0 %v817
    %2930 = vmatprep.subr.mxu0 0.0
    %2931 = vmatpush1.msra.mxu0 %v816
    %2932 = vmatprep.subr.mxu0 0.0
    %2933 = vmatpush1.msra.mxu0 %v815
    %2934 = vmatprep.subr.mxu0 0.0
    %2935 = vmatpush1.msra.mxu0 %v814
    %2936 = vmatprep.subr.mxu0 0.0
    %2937 = vmatpush1.msra.mxu0 %v813
    %2938 = vmatprep.subr.mxu0 0.0
    %2939 = vmatpush1.msra.mxu0 %v812
    %2940 = vmatprep.subr.mxu0 0.0
    %2941 = vmatpush1.msra.mxu0 %v811
    %2942 = vmatprep.subr.mxu0 0.0
    %2943 = vmatpush1.msra.mxu0 %v810
    %2944 = vmatprep.subr.mxu0 0.0
    %2945 = vmatpush1.msra.mxu0 %v809
    %2946 = vmatprep.subr.mxu0 0.0
    %2947 = vmatpush1.msra.mxu0 %v808
    %2948 = vmatprep.subr.mxu0 0.0
    %2949 = vmatpush1.msra.mxu0 %v807
    %2950 = vmatprep.subr.mxu0 0.0
    %2951 = vmatpush1.msra.mxu0 %v806
    %2952 = vmatprep.subr.mxu0 0.0
    %2953 = vmatpush1.msra.mxu0 %v805
    %2954 = vmatprep.subr.mxu0 0.0
    %2955 = vmatpush1.msra.mxu0 %v804
    %2956 = vmatprep.subr.mxu0 0.0
    %2957 = vmatpush1.msra.mxu0 %v803
    %2958 = vmatprep.subr.mxu0 0.0
    %2959 = vmatpush2.msra.mxu0 %v834
    %2960 = vmatprep.subr.mxu0 0.0
    %2961 = vmatpush2.msra.mxu0 %v833
    %2962 = vmatprep.subr.mxu0 0.0
    %2963 = vmatpush2.msra.mxu0 %v832
    %2964 = vmatprep.subr.mxu0 0.0
    %2965 = vmatpush2.msra.mxu0 %v831
    %2966 = vmatprep.subr.mxu0 0.0
    %2967 = vmatpush2.msra.mxu0 %v830
    %2968 = vmatprep.subr.mxu0 0.0
    %2969 = vmatpush2.msra.mxu0 %v829
    %2970 = vmatprep.subr.mxu0 0.0
    %2971 = vmatpush2.msra.mxu0 %v828
    %2972 = vmatprep.subr.mxu0 0.0
    %2973 = vmatpush2.msra.mxu0 %v827
    %2974 = vmatprep.subr.mxu0 0.0
    %2975 = vmatpush2.msra.mxu0 %v826
    %2976 = vmatprep.subr.mxu0 0.0
    %2977 = vmatpush2.msra.mxu0 %v825
    %2978 = vmatprep.subr.mxu0 0.0
    %2979 = vmatpush2.msra.mxu0 %v824
    %2980 = vmatprep.subr.mxu0 0.0
    %2981 = vmatpush2.msra.mxu0 %v823
    %2982 = vmatprep.subr.mxu0 0.0
    %2983 = vmatpush2.msra.mxu0 %v822
    %2984 = vmatprep.subr.mxu0 0.0
    %2985 = vmatpush2.msra.mxu0 %v821
    %2986 = vmatprep.subr.mxu0 0.0
    %2987 = vmatpush2.msra.mxu0 %v820
    %2988 = vmatprep.subr.mxu0 0.0
    %2989 = vmatpush2.msra.mxu0 %v819
    %2990 = vmatprep.mubr.f32.mxu0 %v1171
    %2991 = vmatmul.mubr.f32.gmra.mxu0 %v1163
    %v2992 = vpop.f32.mrf.mxu0
    %v2993 = vadd.f32 %v2923, %v2992
    %v2994 = vpop.f32.mrf.mxu0
    %2995 = vdwg.mxu0
    %2996 = vmatprep.subr.mxu0 0.0
    %2997 = vmatpush1.msra.mxu0 %v850
    %2998 = vmatprep.subr.mxu0 0.0
    %2999 = vmatpush1.msra.mxu0 %v849
    %3000 = vmatprep.subr.mxu0 0.0
    %3001 = vmatpush1.msra.mxu0 %v848
    %3002 = vmatprep.subr.mxu0 0.0
    %3003 = vmatpush1.msra.mxu0 %v847
    %3004 = vmatprep.subr.mxu0 0.0
    %3005 = vmatpush1.msra.mxu0 %v846
    %3006 = vmatprep.subr.mxu0 0.0
    %3007 = vmatpush1.msra.mxu0 %v845
    %3008 = vmatprep.subr.mxu0 0.0
    %3009 = vmatpush1.msra.mxu0 %v844
    %3010 = vmatprep.subr.mxu0 0.0
    %3011 = vmatpush1.msra.mxu0 %v843
    %3012 = vmatprep.subr.mxu0 0.0
    %3013 = vmatpush1.msra.mxu0 %v842
    %3014 = vmatprep.subr.mxu0 0.0
    %3015 = vmatpush1.msra.mxu0 %v841
    %3016 = vmatprep.subr.mxu0 0.0
    %3017 = vmatpush1.msra.mxu0 %v840
    %3018 = vmatprep.subr.mxu0 0.0
    %3019 = vmatpush1.msra.mxu0 %v839
    %3020 = vmatprep.subr.mxu0 0.0
    %3021 = vmatpush1.msra.mxu0 %v838
    %3022 = vmatprep.subr.mxu0 0.0
    %3023 = vmatpush1.msra.mxu0 %v837
    %3024 = vmatprep.subr.mxu0 0.0
    %3025 = vmatpush1.msra.mxu0 %v836
    %3026 = vmatprep.subr.mxu0 0.0
    %3027 = vmatpush1.msra.mxu0 %v835
    %3028 = vmatprep.subr.mxu0 0.0
    %3029 = vmatpush2.msra.mxu0 %v866
    %3030 = vmatprep.subr.mxu0 0.0
    %3031 = vmatpush2.msra.mxu0 %v865
    %3032 = vmatprep.subr.mxu0 0.0
    %3033 = vmatpush2.msra.mxu0 %v864
    %3034 = vmatprep.subr.mxu0 0.0
    %3035 = vmatpush2.msra.mxu0 %v863
    %3036 = vmatprep.subr.mxu0 0.0
    %3037 = vmatpush2.msra.mxu0 %v862
    %3038 = vmatprep.subr.mxu0 0.0
    %3039 = vmatpush2.msra.mxu0 %v861
    %3040 = vmatprep.subr.mxu0 0.0
    %3041 = vmatpush2.msra.mxu0 %v860
    %3042 = vmatprep.subr.mxu0 0.0
    %3043 = vmatpush2.msra.mxu0 %v859
    %3044 = vmatprep.subr.mxu0 0.0
    %3045 = vmatpush2.msra.mxu0 %v858
    %3046 = vmatprep.subr.mxu0 0.0
    %3047 = vmatpush2.msra.mxu0 %v857
    %3048 = vmatprep.subr.mxu0 0.0
    %3049 = vmatpush2.msra.mxu0 %v856
    %3050 = vmatprep.subr.mxu0 0.0
    %3051 = vmatpush2.msra.mxu0 %v855
    %3052 = vmatprep.subr.mxu0 0.0
    %3053 = vmatpush2.msra.mxu0 %v854
    %3054 = vmatprep.subr.mxu0 0.0
    %3055 = vmatpush2.msra.mxu0 %v853
    %3056 = vmatprep.subr.mxu0 0.0
    %3057 = vmatpush2.msra.mxu0 %v852
    %3058 = vmatprep.subr.mxu0 0.0
    %3059 = vmatpush2.msra.mxu0 %v851
    %3060 = vmatprep.mubr.f32.mxu0 %v1172
    %3061 = vmatmul.mubr.f32.gmra.mxu0 %v1170
    %v3062 = vpop.f32.mrf.mxu0
    %v3063 = vadd.f32 %v2993, %v3062
    %v3064 = vpop.f32.mrf.mxu0
    %3065 = vdwg.mxu0
    %3066 = vmatprep.subr.mxu0 0.0
    %3067 = vmatpush1.msra.mxu0 %v882
    %3068 = vmatprep.subr.mxu0 0.0
    %3069 = vmatpush1.msra.mxu0 %v881
    %3070 = vmatprep.subr.mxu0 0.0
    %3071 = vmatpush1.msra.mxu0 %v880
    %3072 = vmatprep.subr.mxu0 0.0
    %3073 = vmatpush1.msra.mxu0 %v879
    %3074 = vmatprep.subr.mxu0 0.0
    %3075 = vmatpush1.msra.mxu0 %v878
    %3076 = vmatprep.subr.mxu0 0.0
    %3077 = vmatpush1.msra.mxu0 %v877
    %3078 = vmatprep.subr.mxu0 0.0
    %3079 = vmatpush1.msra.mxu0 %v876
    %3080 = vmatprep.subr.mxu0 0.0
    %3081 = vmatpush1.msra.mxu0 %v875
    %3082 = vmatprep.subr.mxu0 0.0
    %3083 = vmatpush1.msra.mxu0 %v874
    %3084 = vmatprep.subr.mxu0 0.0
    %3085 = vmatpush1.msra.mxu0 %v873
    %3086 = vmatprep.subr.mxu0 0.0
    %3087 = vmatpush1.msra.mxu0 %v872
    %3088 = vmatprep.subr.mxu0 0.0
    %3089 = vmatpush1.msra.mxu0 %v871
    %3090 = vmatprep.subr.mxu0 0.0
    %3091 = vmatpush1.msra.mxu0 %v870
    %3092 = vmatprep.subr.mxu0 0.0
    %3093 = vmatpush1.msra.mxu0 %v869
    %3094 = vmatprep.subr.mxu0 0.0
    %3095 = vmatpush1.msra.mxu0 %v868
    %3096 = vmatprep.subr.mxu0 0.0
    %3097 = vmatpush1.msra.mxu0 %v867
    %3098 = vmatprep.subr.mxu0 0.0
    %3099 = vmatpush2.msra.mxu0 %v898
    %3100 = vmatprep.subr.mxu0 0.0
    %3101 = vmatpush2.msra.mxu0 %v897
    %3102 = vmatprep.subr.mxu0 0.0
    %3103 = vmatpush2.msra.mxu0 %v896
    %3104 = vmatprep.subr.mxu0 0.0
    %3105 = vmatpush2.msra.mxu0 %v895
    %3106 = vmatprep.subr.mxu0 0.0
    %3107 = vmatpush2.msra.mxu0 %v894
    %3108 = vmatprep.subr.mxu0 0.0
    %3109 = vmatpush2.msra.mxu0 %v893
    %3110 = vmatprep.subr.mxu0 0.0
    %3111 = vmatpush2.msra.mxu0 %v892
    %3112 = vmatprep.subr.mxu0 0.0
    %3113 = vmatpush2.msra.mxu0 %v891
    %3114 = vmatprep.subr.mxu0 0.0
    %3115 = vmatpush2.msra.mxu0 %v890
    %3116 = vmatprep.subr.mxu0 0.0
    %3117 = vmatpush2.msra.mxu0 %v889
    %3118 = vmatprep.subr.mxu0 0.0
    %3119 = vmatpush2.msra.mxu0 %v888
    %3120 = vmatprep.subr.mxu0 0.0
    %3121 = vmatpush2.msra.mxu0 %v887
    %3122 = vmatprep.subr.mxu0 0.0
    %3123 = vmatpush2.msra.mxu0 %v886
    %3124 = vmatprep.subr.mxu0 0.0
    %3125 = vmatpush2.msra.mxu0 %v885
    %3126 = vmatprep.subr.mxu0 0.0
    %3127 = vmatpush2.msra.mxu0 %v884
    %3128 = vmatprep.subr.mxu0 0.0
    %3129 = vmatpush2.msra.mxu0 %v883
    %3130 = vmatprep.mubr.f32.mxu0 %v1188
    %3131 = vmatmul.mubr.f32.gmra.mxu0 %v1180
    %v3132 = vpop.f32.mrf.mxu0
    %v3133 = vadd.f32 %v3063, %v3132
    %v3134 = vpop.f32.mrf.mxu0
    %3135 = vdwg.mxu0
    %3136 = vmatprep.subr.mxu0 0.0
    %3137 = vmatpush1.msra.mxu0 %v914
    %3138 = vmatprep.subr.mxu0 0.0
    %3139 = vmatpush1.msra.mxu0 %v913
    %3140 = vmatprep.subr.mxu0 0.0
    %3141 = vmatpush1.msra.mxu0 %v912
    %3142 = vmatprep.subr.mxu0 0.0
    %3143 = vmatpush1.msra.mxu0 %v911
    %3144 = vmatprep.subr.mxu0 0.0
    %3145 = vmatpush1.msra.mxu0 %v910
    %3146 = vmatprep.subr.mxu0 0.0
    %3147 = vmatpush1.msra.mxu0 %v909
    %3148 = vmatprep.subr.mxu0 0.0
    %3149 = vmatpush1.msra.mxu0 %v908
    %3150 = vmatprep.subr.mxu0 0.0
    %3151 = vmatpush1.msra.mxu0 %v907
    %3152 = vmatprep.subr.mxu0 0.0
    %3153 = vmatpush1.msra.mxu0 %v906
    %3154 = vmatprep.subr.mxu0 0.0
    %3155 = vmatpush1.msra.mxu0 %v905
    %3156 = vmatprep.subr.mxu0 0.0
    %3157 = vmatpush1.msra.mxu0 %v904
    %3158 = vmatprep.subr.mxu0 0.0
    %3159 = vmatpush1.msra.mxu0 %v903
    %3160 = vmatprep.subr.mxu0 0.0
    %3161 = vmatpush1.msra.mxu0 %v902
    %3162 = vmatprep.subr.mxu0 0.0
    %3163 = vmatpush1.msra.mxu0 %v901
    %3164 = vmatprep.subr.mxu0 0.0
    %3165 = vmatpush1.msra.mxu0 %v900
    %3166 = vmatprep.subr.mxu0 0.0
    %3167 = vmatpush1.msra.mxu0 %v899
    %3168 = vmatprep.subr.mxu0 0.0
    %3169 = vmatpush2.msra.mxu0 %v930
    %3170 = vmatprep.subr.mxu0 0.0
    %3171 = vmatpush2.msra.mxu0 %v929
    %3172 = vmatprep.subr.mxu0 0.0
    %3173 = vmatpush2.msra.mxu0 %v928
    %3174 = vmatprep.subr.mxu0 0.0
    %3175 = vmatpush2.msra.mxu0 %v927
    %3176 = vmatprep.subr.mxu0 0.0
    %3177 = vmatpush2.msra.mxu0 %v926
    %3178 = vmatprep.subr.mxu0 0.0
    %3179 = vmatpush2.msra.mxu0 %v925
    %3180 = vmatprep.subr.mxu0 0.0
    %3181 = vmatpush2.msra.mxu0 %v924
    %3182 = vmatprep.subr.mxu0 0.0
    %3183 = vmatpush2.msra.mxu0 %v923
    %3184 = vmatprep.subr.mxu0 0.0
    %3185 = vmatpush2.msra.mxu0 %v922
    %3186 = vmatprep.subr.mxu0 0.0
    %3187 = vmatpush2.msra.mxu0 %v921
    %3188 = vmatprep.subr.mxu0 0.0
    %3189 = vmatpush2.msra.mxu0 %v920
    %3190 = vmatprep.subr.mxu0 0.0
    %3191 = vmatpush2.msra.mxu0 %v919
    %3192 = vmatprep.subr.mxu0 0.0
    %3193 = vmatpush2.msra.mxu0 %v918
    %3194 = vmatprep.subr.mxu0 0.0
    %3195 = vmatpush2.msra.mxu0 %v917
    %3196 = vmatprep.subr.mxu0 0.0
    %3197 = vmatpush2.msra.mxu0 %v916
    %3198 = vmatprep.subr.mxu0 0.0
    %3199 = vmatpush2.msra.mxu0 %v915
    %3200 = vmatprep.mubr.f32.mxu0 %v1189
    %3201 = vmatmul.mubr.f32.gmra.mxu0 %v1187
    %v3202 = vpop.f32.mrf.mxu0
    %v3203 = vadd.f32 %v3133, %v3202
    %v3204 = vpop.f32.mrf.mxu0
    %3205 = vdwg.mxu0
    %v3206 = vmax.f32 %v3203, 0.0
    %v3207 = vld [vmem:[%s3] sm:$0xff]
    %v3208 = vld [vmem:[%s3 + $0x8] sm:$0xff]
    %v3209 = vld [vmem:[%s3 + $0x10] sm:$0xff]
    %v3210 = vld [vmem:[%s3 + $0x18] sm:$0xff]
    %v3211 = vld [vmem:[%s3 + $0x20] sm:$0xff]
    %v3212 = vld [vmem:[%s3 + $0x28] sm:$0xff]
    %v3213 = vld [vmem:[%s3 + $0x30] sm:$0xff]
    %v3214 = vld [vmem:[%s3 + $0x38] sm:$0xff]
    %v3215 = vld [vmem:[%s3 + $0x40] sm:$0xff]
    %v3216 = vld [vmem:[%s3 + $0x48] sm:$0xff]
    %v3217 = vld [vmem:[%s3 + $0x50] sm:$0xff]
    %v3218 = vld [vmem:[%s3 + $0x58] sm:$0xff]
    %v3219 = vld [vmem:[%s3 + $0x60] sm:$0xff]
    %v3220 = vld [vmem:[%s3 + $0x68] sm:$0xff]
    %v3221 = vld [vmem:[%s3 + $0x70] sm:$0xff]
    %v3222 = vld [vmem:[%s3 + $0x78] sm:$0xff]
    %v3223 = vld [vmem:[%s4] sm:$0x1]
    %v3225 = vlaneseq
    %v3226 = vshrl.u32 %v3225, 7
    %v3227 = vsub.s32 0, %v3226
    %v3228 = vrot.slane %v3223, %v3227
    %3230 = vmatprep.subr.mxu0 0.0
    %3231 = vmatpush1.msra.mxu0 %v3222
    %3232 = vmatprep.subr.mxu0 0.0
    %3233 = vmatpush1.msra.mxu0 %v3221
    %3234 = vmatprep.subr.mxu0 0.0
    %3235 = vmatpush1.msra.mxu0 %v3220
    %3236 = vmatprep.subr.mxu0 0.0
    %3237 = vmatpush1.msra.mxu0 %v3219
    %3238 = vmatprep.subr.mxu0 0.0
    %3239 = vmatpush1.msra.mxu0 %v3218
    %3240 = vmatprep.subr.mxu0 0.0
    %3241 = vmatpush1.msra.mxu0 %v3217
    %3242 = vmatprep.subr.mxu0 0.0
    %3243 = vmatpush1.msra.mxu0 %v3216
    %3244 = vmatprep.subr.mxu0 0.0
    %3245 = vmatpush1.msra.mxu0 %v3215
    %3246 = vmatprep.subr.mxu0 0.0
    %3247 = vmatpush1.msra.mxu0 %v3214
    %3248 = vmatprep.subr.mxu0 0.0
    %3249 = vmatpush1.msra.mxu0 %v3213
    %3250 = vmatprep.subr.mxu0 0.0
    %3251 = vmatpush1.msra.mxu0 %v3212
    %3252 = vmatprep.subr.mxu0 0.0
    %3253 = vmatpush1.msra.mxu0 %v3211
    %3254 = vmatprep.subr.mxu0 0.0
    %3255 = vmatpush1.msra.mxu0 %v3210
    %3256 = vmatprep.subr.mxu0 0.0
    %3257 = vmatpush1.msra.mxu0 %v3209
    %3258 = vmatprep.subr.mxu0 0.0
    %3259 = vmatpush1.msra.mxu0 %v3208
    %3260 = vmatprep.subr.mxu0 0.0
    %3261 = vmatpush1.msra.mxu0 %v3207
    %3262 = vmatprep.subr.mxu0 0.0
    %3263 = vmatpush2.msra.mxu0 0.0
    %3264 = vmatprep.subr.mxu0 0.0
    %3265 = vmatpush2.msra.mxu0 0.0
    %3266 = vmatprep.subr.mxu0 0.0
    %3267 = vmatpush2.msra.mxu0 0.0
    %3268 = vmatprep.subr.mxu0 0.0
    %3269 = vmatpush2.msra.mxu0 0.0
    %3270 = vmatprep.subr.mxu0 0.0
    %3271 = vmatpush2.msra.mxu0 0.0
    %3272 = vmatprep.subr.mxu0 0.0
    %3273 = vmatpush2.msra.mxu0 0.0
    %3274 = vmatprep.subr.mxu0 0.0
    %3275 = vmatpush2.msra.mxu0 0.0
    %3276 = vmatprep.subr.mxu0 0.0
    %3277 = vmatpush2.msra.mxu0 0.0
    %3278 = vmatprep.subr.mxu0 0.0
    %3279 = vmatpush2.msra.mxu0 0.0
    %3280 = vmatprep.subr.mxu0 0.0
    %3281 = vmatpush2.msra.mxu0 0.0
    %3282 = vmatprep.subr.mxu0 0.0
    %3283 = vmatpush2.msra.mxu0 0.0
    %3284 = vmatprep.subr.mxu0 0.0
    %3285 = vmatpush2.msra.mxu0 0.0
    %3286 = vmatprep.subr.mxu0 0.0
    %3287 = vmatpush2.msra.mxu0 0.0
    %3288 = vmatprep.subr.mxu0 0.0
    %3289 = vmatpush2.msra.mxu0 0.0
    %3290 = vmatprep.subr.mxu0 0.0
    %3291 = vmatpush2.msra.mxu0 0.0
    %3292 = vmatprep.subr.mxu0 0.0
    %3293 = vmatpush2.msra.mxu0 0.0
    %3294 = vmatprep.mubr.f32.mxu0 0.0
    %3295 = vmatmul.mubr.f32.gmra.mxu0 %v3206
    %v3296 = vpop.f32.mrf.mxu0
    %v3297 = vadd.f32 %v3228, %v3296
    %v3298 = vpop.f32.mrf.mxu0
    %3299 = vdwg.mxu0
    %3300 = vst [vmem:[#allocation2] sm:$0x3] %v3297
    // Predicated region
    $region22: #{mnist_cnn_forward.3} parent=1 // pred_check
      _
    $region23: #{mnist_cnn_forward.3} parent=1 // pred_check_branch
      %3302 = sbr.rel (0) target = $region25
    $region24: #{mnist_cnn_forward.3} parent=1 // pred_region
      %s3304 = ssub.s32 32, 32
      %3305 = vsyncadd [#allocation3], %s3304
      %s3307 = sshll.u32 [#allocation2], 4
      %s3308 = int_to_ptr.vmem [resolvable:$true] %s3307
      %3310 = dma.vmem_to_hbm [thread:$0]  %s3308, 32, %s5, [#allocation3]
    $region25: #{mnist_cnn_forward.3} parent=1 // pred_fallthru
      _
    // Predicated region
    $region26: #{mnist_cnn_forward.3} parent=1 // pred_check
      _
    $region27: #{mnist_cnn_forward.3} parent=1 // pred_check_branch
      %3312 = sbr.rel (0) target = $region29
    $region28: #{mnist_cnn_forward.3} parent=1 // pred_region
      %3313 = dma.done [#allocation3], 32
    $region29: #{mnist_cnn_forward.3} parent=1 // pred_fallthru
      _
    %3314 = vsyncpa [#allocation3], 1

</llo_original>
